<compile_context>
chip_gen: v6e
topology: v6e:2x2x1
jax: 0.10.0
libtpu: 0.0.40
codegen_flags: <defaults>
</compile_context>

<pallas_src>
import functools
import math

import jax
import jax.numpy as jnp
import numpy as np
from jax.experimental import pallas as pl
from jax.experimental.pallas import tpu as pltpu

EPS = 1e-5
LANES = 128
MXU_DTYPE = jnp.bfloat16          # matmul inputs / streamed activations
VMEM_LIMIT = 48 * 1024 * 1024     # fits v7x (64 MiB) as well as v5e/v6e (128 MiB)
TARGET_ROWS = 2048                # ~2k output rows per tile


def _round_up(x, m):
    return (x + m - 1) // m * m


def _cdiv(a, b):
    return -(-a // b)


# ----------------------------------------------------------------------------
# Kernel 1: ConvTranspose2d(kernel=2, stride=2) == 4 independent 1x1 convs,
# fused into one lane-dense MXU matmul: (rows, Cin) @ (Cin, 4*Cout).
# ----------------------------------------------------------------------------
def upsample_matmul_kernel(x_ref, w_ref, b_ref, out_ref):
    out_ref[...] = (jnp.dot(x_ref[...], w_ref[...],
                            preferred_element_type=jnp.float32)
                    + b_ref[...]).astype(out_ref.dtype)


def upsample_forward(up_x, weight, bias):
    """up_x: (N, Cin, H, W) NCHW; weight: (Cin, Cout, 2, 2) (PyTorch layout).
    Returns the upsampled map in NHWC: (N, 2H, 2W, Cout), bf16."""
    N, Cin, H, W = up_x.shape
    Cout = weight.shape[1]
    M = N * H * W
    ncol = 4 * Cout                                  # NOT padded to 128 lanes

    x_flat = jnp.transpose(up_x, (0, 2, 3, 1)).reshape(M, Cin).astype(MXU_DTYPE)
    # columns ordered ((u*2+v)*Cout + o)
    w_mat = jnp.transpose(weight, (0, 2, 3, 1)).reshape(Cin, ncol).astype(MXU_DTYPE)
    b_row = jnp.tile(bias, 4).reshape(1, ncol).astype(jnp.float32)

    # >= 2 grid steps (v7x megacore), 8-aligned row tiles, tail padded up front
    tr = min(TARGET_ROWS, max(8, _round_up(_cdiv(M, 2), 8)))
    Mp = _round_up(M, tr)
    if Mp != M:
        x_flat = jnp.pad(x_flat, ((0, Mp - M), (0, 0)))

    y = pl.pallas_call(
        upsample_matmul_kernel,
        out_shape=jax.ShapeDtypeStruct((Mp, ncol), MXU_DTYPE),
        grid=(Mp // tr,),
        in_specs=[
            pl.BlockSpec((tr, Cin), lambda i: (i, 0)),
            pl.BlockSpec((Cin, ncol), lambda i: (0, 0)),
            pl.BlockSpec((1, ncol), lambda i: (0, 0)),
        ],
        out_specs=pl.BlockSpec((tr, ncol), lambda i: (i, 0)),
        compiler_params=pltpu.CompilerParams(
            dimension_semantics=("parallel",),
            vmem_limit_bytes=VMEM_LIMIT),
    )(x_flat, w_mat, b_row)

    # TODO(synk): the pixel-shuffle (reshape + 6-D transpose) and the later channel
    # concat stay in XLA -- pure data movement, now on a bf16 tensor.
    y = y[:M].reshape(N, H, W, 2, 2, Cout)
    y = jnp.transpose(y, (0, 1, 3, 2, 4, 5)).reshape(N, 2 * H, 2 * W, Cout)
    return y


# ----------------------------------------------------------------------------
# Kernel 2: 3x3 conv (stride 1, 'same' padding baked into the halo window) as ONE
# K = 9*Cin MXU matmul per tile + per-tile BatchNorm partial statistics.
# Optional prologue: previous ConvBlock's fused BN scale/shift + ReLU applied to
# the loaded tile (its zero-pad halo carries a sentinel value so it stays 0).
# ----------------------------------------------------------------------------
def conv3x3_stats_kernel(x_ref, w_ref, scale_ref, shift_ref,
                         out_ref, sum_ref, ssq_ref, panel_ref, *,
                         th, wd, cin, cout, h_valid, apply_prologue, mask_rows):
    """
      x_ref     : (1, 1, th+2, wd+2, cin) bf16 halo window
      w_ref     : (9*cin, Cp)             bf16
      scale_ref : (1, cin) f32  -- previous layer's fused BN scale (prologue)
      shift_ref : (1, cin) f32  -- previous layer's fused BN shift (prologue)
      out_ref   : (th*wd, cout) bf16 raw conv output (pre-BN)
      sum_ref   : (1, 1, Cp) f32 ; ssq_ref : (1, 1, Cp) f32 (per-tile partials)
      panel_ref : (th, wd, 9*cin) bf16 VMEM im2col panel scratch
    """
    x = x_ref[0, 0]                                        # (th+2, wd+2, cin)

    if apply_prologue:
        # Fused BN + ReLU of the previous ConvBlock applied on the fly (f32 math).
        # Halo / tail positions hold a sentinel so max(pad*scale+shift, 0) == 0.
        scale = scale_ref[...].reshape(1, 1, cin)
        shift = shift_ref[...].reshape(1, 1, cin)
        x = jnp.maximum(x.astype(jnp.float32) * scale + shift,
                        0.0).astype(MXU_DTYPE)

    # in-VMEM im2col panel: panel[h, w, (kh*3+kw)*cin + c] = x[h+kh, w+kw, c]
    for kh in range(3):
        for kw in range(3):
            k = kh * 3 + kw
            panel_ref[:, :, k * cin:(k + 1) * cin] = x[kh:kh + th, kw:kw + wd, :]

    panel = panel_ref[...].reshape(th * wd, 9 * cin)
    acc = jnp.dot(panel, w_ref[...],
                  preferred_element_type=jnp.float32)      # (rows, Cp) f32

    if mask_rows:
        # rows past the true image height (tail padding) must not pollute stats
        i = pl.program_id(1)
        r = jax.lax.broadcasted_iota(jnp.int32, (th * wd, 1), 0)
        acc = jnp.where((r // wd + i * th) < h_valid, acc, 0.0)

    out_ref[...] = acc[:, :cout].astype(out_ref.dtype)
    sum_ref[0] = jnp.sum(acc, axis=0, keepdims=True)
    ssq_ref[0] = jnp.sum(acc * acc, axis=0, keepdims=True)


def _conv_tiling(n, h, w):
    """Row-tile th with th*w % 8 == 0, ~TARGET_ROWS rows/tile, and >= 2 parallel
    grid steps when the batch alone does not provide them (v7x megacore)."""
    mult = 8 // math.gcd(w, 8)
    th = max(1, TARGET_ROWS // max(w, 1))
    th = max(mult, (th // mult) * mult)
    th = min(th, _round_up(h, mult))
    if n == 1 and th > mult and _cdiv(h, th) < 2:
        th = max(mult, _round_up(_cdiv(h, 2), mult))
    n_ht = _cdiv(h, th)
    return th, n_ht, n_ht * th


def _build_windows(x_nhwc, th, n_ht, hp, h_valid, pad_value=None):
    """(N, Hin, W, C) -> overlapping halo row windows (N, n_ht, th+2, W+2, C) bf16.
    pad_value (per-channel) is used instead of 0 when the consumer kernel applies a
    BN+ReLU prologue (so the halo stays zero AFTER activation).
    # TODO(synk): a manual halo DMA (memory_space=pl.ANY + make_async_copy) would
    # avoid this ~1.1x materialization pass entirely."""
    n, _, w, c = x_nhwc.shape
    x_valid = x_nhwc[:, :h_valid]
    if pad_value is None:
        xp = jnp.pad(x_valid, ((0, 0), (1, hp + 1 - h_valid), (1, 1), (0, 0)))
    else:
        xp = jnp.broadcast_to(pad_value.reshape(1, 1, 1, c).astype(x_nhwc.dtype),
                              (n, hp + 2, w + 2, c))
        xp = jax.lax.dynamic_update_slice(xp, x_valid, (0, 1, 1, 0))
    wins = jnp.stack([xp[:, i * th:i * th + th + 2] for i in range(n_ht)], axis=1)
    return wins.astype(MXU_DTYPE)


def conv3x3_bn_stats(x_nhwc, weight, gamma, beta, h_valid, th, n_ht, hp,
                     prev_scale=None, prev_shift=None):
    """One ConvBlock conv pass: 3x3 conv (pad 1, stride 1; bias dropped -- it cancels
    under training-mode BN) + batch statistics.  If prev_scale/prev_shift are given,
    x_nhwc is the previous conv's RAW output and its BN+ReLU is applied in-kernel.
    Returns (raw_out (N, hp, W, Cout) bf16, scale (Cout,) f32, shift (Cout,) f32)."""
    n, _, w, cin = x_nhwc.shape
    cout = weight.shape[0]
    cp = _round_up(cout, 256) if cout >= 128 else _round_up(cout, LANES)
    rows = th * w
    g = n * n_ht
    count = n * h_valid * w

    apply_prologue = prev_scale is not None
    if apply_prologue:
        # sentinel pad value v with v*scale + shift == -1  =>  ReLU(...) == 0
        safe = jnp.where(prev_scale == 0.0, 1.0, prev_scale)
        pad_value = jnp.where(prev_scale == 0.0, 0.0, (-prev_shift - 1.0) / safe)
    else:
        pad_value = None
        prev_scale = jnp.ones((cin,), jnp.float32)
        prev_shift = jnp.zeros((cin,), jnp.float32)

    xwin = _build_windows(x_nhwc, th, n_ht, hp, h_valid, pad_value)

    # (Cout, Cin, 3, 3) -> (9*Cin, Cp); row index = (kh*3 + kw)*Cin + c
    w_mat = jnp.transpose(weight, (2, 3, 1, 0)).reshape(9 * cin, cout)
    w_mat = jnp.pad(w_mat, ((0, 0), (0, cp - cout))).astype(MXU_DTYPE)

    kern = functools.partial(
        conv3x3_stats_kernel, th=th, wd=w, cin=cin, cout=cout,
        h_valid=h_valid, apply_prologue=apply_prologue, mask_rows=(hp != h_valid))

    raw, sums, ssqs = pl.pallas_call(
        kern,
        out_shape=(
            jax.ShapeDtypeStruct((g * rows, cout), MXU_DTYPE),
            jax.ShapeDtypeStruct((g, 1, cp), jnp.float32),
            jax.ShapeDtypeStruct((g, 1, cp), jnp.float32),
        ),
        grid=(n, n_ht),
        in_specs=[
            pl.BlockSpec((1, 1, th + 2, w + 2, cin), lambda b, i: (b, i, 0, 0, 0)),
            pl.BlockSpec((9 * cin, cp), lambda b, i: (0, 0)),
            pl.BlockSpec((1, cin), lambda b, i: (0, 0)),
            pl.BlockSpec((1, cin), lambda b, i: (0, 0)),
        ],
        out_specs=(
            pl.BlockSpec((rows, cout), lambda b, i: (b * n_ht + i, 0)),
            pl.BlockSpec((1, 1, cp), lambda b, i: (b * n_ht + i, 0, 0)),
            pl.BlockSpec((1, 1, cp), lambda b, i: (b * n_ht + i, 0, 0)),
        ),
        scratch_shapes=[pltpu.VMEM((th, w, 9 * cin), MXU_DTYPE)],
        compiler_params=pltpu.CompilerParams(
            dimension_semantics=("parallel", "parallel"),
            vmem_limit_bytes=VMEM_LIMIT),
        cost_estimate=pl.CostEstimate(
            flops=2 * g * rows * 9 * cin * cp,
            transcendentals=0,
            bytes_accessed=int(xwin.size) * 2 + int(w_mat.size) * 2
            + g * rows * cout * 2 + 2 * g * cp * 4),
    )(xwin, w_mat, prev_scale.reshape(1, cin), prev_shift.reshape(1, cin))

    # finalize batch statistics (tiny) and fold: scale = gamma*rsqrt(var+eps),
    # shift = beta - mean*scale.  One-pass var (E[x^2]-mean^2) in f32 is adequate
    # for BN-normalized O(1) activations (clamped at 0).
    mean = jnp.sum(sums, axis=(0, 1))[:cout] / count
    var = jnp.maximum(jnp.sum(ssqs, axis=(0, 1))[:cout] / count - mean * mean, 0.0)
    scale = gamma * jax.lax.rsqrt(var + EPS)
    shift = beta - mean * scale
    return raw.reshape(n, hp, w, cout), scale, shift


# ----------------------------------------------------------------------------
# Kernel 3: final fused BatchNorm(apply) + ReLU (no consumer left to fuse into).
# ----------------------------------------------------------------------------
def bn_relu_kernel(x_ref, scale_ref, shift_ref, out_ref):
    out_ref[...] = jnp.maximum(
        x_ref[...].astype(jnp.float32) * scale_ref[...] + shift_ref[...], 0.0)


def bn_relu_apply(raw_nhwc, scale, shift, rows_per_tile):
    n, hp, w, c = raw_nhwc.shape
    m = n * hp * w
    g = m // rows_per_tile
    y = pl.pallas_call(
        bn_relu_kernel,
        out_shape=jax.ShapeDtypeStruct((m, c), jnp.float32),
        grid=(g,),
        in_specs=[
            pl.BlockSpec((rows_per_tile, c), lambda i: (i, 0)),
            pl.BlockSpec((1, c), lambda i: (0, 0)),
            pl.BlockSpec((1, c), lambda i: (0, 0)),
        ],
        out_specs=pl.BlockSpec((rows_per_tile, c), lambda i: (i, 0)),
        compiler_params=pltpu.CompilerParams(
            dimension_semantics=("parallel",),
            vmem_limit_bytes=VMEM_LIMIT),
    )(raw_nhwc.reshape(m, c), scale.reshape(1, c), shift.reshape(1, c))
    return y.reshape(n, hp, w, c)


def upsample_block_forward(up_x, down_x, p):
    """UpsampleBlock.forward: upsample(up_x) -> cat([., down_x], ch) -> ConvBlock x2.
    up_x/down_x are NCHW f32; returns NCHW f32."""
    up = upsample_forward(up_x, p["up_w"], p["up_b"])                 # NHWC bf16
    # TODO(synk): channel concat / NCHW<->NHWC transposes stay in XLA (pure data
    # movement), and BatchNorm running-stat (momentum) buffer updates are a
    # training side effect not produced here.
    skip = jnp.transpose(down_x, (0, 2, 3, 1)).astype(MXU_DTYPE)
    x = jnp.concatenate([up, skip], axis=-1)                          # (N, H, W, C1in)

    n, h, w, _ = x.shape
    th, n_ht, hp = _conv_tiling(n, h, w)

    # c1_b / c2_b are intentionally unused: the conv bias cancels exactly under
    # training-mode BatchNorm (removed together with the batch mean).
    # ConvBlock 1: conv + stats; its BN+ReLU is fused into ConvBlock 2's prologue.
    raw1, scale1, shift1 = conv3x3_bn_stats(
        x, p["c1_w"], p["c1_g"], p["c1_be"], h, th, n_ht, hp)
    # ConvBlock 2: BN1+ReLU prologue + conv + stats.
    raw2, scale2, shift2 = conv3x3_bn_stats(
        raw1, p["c2_w"], p["c2_g"], p["c2_be"], h, th, n_ht, hp,
        prev_scale=scale1, prev_shift=shift1)
    # final BN2 + ReLU elementwise pass (module output, f32).
    y = bn_relu_apply(raw2, scale2, shift2, th * w)
    y = y[:, :h]
    return jnp.transpose(y, (0, 3, 1, 2))


# ----------------------------------------------------------------------------
# Pure-JAX (f32) reference matching the PyTorch module in training mode.
# ----------------------------------------------------------------------------
def _conv_transpose_2x2_ref(x, w, b):
    # out[n, o, 2h+u, 2w+v] = b[o] + sum_i x[n, i, h, w] * w[i, o, u, v]
    y = jnp.einsum("nihw,iouv->nhuwvo", x, w)
    N, H, _, W, _, Cout = y.shape
    y = y.reshape(N, 2 * H, 2 * W, Cout) + b.reshape(1, 1, 1, Cout)
    return jnp.transpose(y, (0, 3, 1, 2))


def _conv_block_ref(x, w, b, gamma, beta):
    Cout = w.shape[0]
    conv = jax.lax.conv_general_dilated(
        x, w, window_strides=(1, 1), padding=((1, 1), (1, 1)),
        dimension_numbers=("NCHW", "OIHW", "NCHW")) + b.reshape(1, Cout, 1, 1)
    mean = jnp.mean(conv, axis=(0, 2, 3), keepdims=True)
    var = jnp.mean((conv - mean) ** 2, axis=(0, 2, 3), keepdims=True)
    y = (conv - mean) * jax.lax.rsqrt(var + EPS)
    y = y * gamma.reshape(1, Cout, 1, 1) + beta.reshape(1, Cout, 1, 1)
    return jnp.maximum(y, 0.0)


def upsample_block_reference(up_x, down_x, p):
    y = _conv_transpose_2x2_ref(up_x, p["up_w"], p["up_b"])
    x = jnp.concatenate([y, down_x], axis=1)
    x = _conv_block_ref(x, p["c1_w"], p["c1_b"], p["c1_g"], p["c1_be"])
    x = _conv_block_ref(x, p["c2_w"], p["c2_b"], p["c2_g"], p["c2_be"])
    return x


if __name__ == "__main__":
    N, H1, W1 = 2, 8, 8
    UP_CIN, UP_COUT, SKIP_C = 16, 8, 8
    IN_C = UP_COUT + SKIP_C        # channels after concat == ConvBlock1 in_channels
    OUT_C = 16

    key = jax.random.PRNGKey(0)
    ks = jax.random.split(key, 12)

    up_x = jax.random.normal(ks[0], (N, UP_CIN, H1, W1), jnp.float32)
    down_x = jax.random.normal(ks[1], (N, SKIP_C, 2 * H1, 2 * W1), jnp.float32)

    params = {
        # nn.ConvTranspose2d(UP_CIN, UP_COUT, kernel_size=2, stride=2)
        "up_w": jax.random.normal(ks[2], (UP_CIN, UP_COUT, 2, 2), jnp.float32)
                / np.sqrt(UP_CIN * 4),
        "up_b": 0.1 * jax.random.normal(ks[3], (UP_COUT,), jnp.float32),
        # ConvBlock(IN_C, OUT_C): nn.Conv2d(IN_C, OUT_C, 3, padding=1) + BatchNorm2d
        "c1_w": jax.random.normal(ks[4], (OUT_C, IN_C, 3, 3), jnp.float32)
                / np.sqrt(IN_C * 9),
        "c1_b": 0.1 * jax.random.normal(ks[5], (OUT_C,), jnp.float32),
        "c1_g": 1.0 + 0.1 * jax.random.normal(ks[6], (OUT_C,), jnp.float32),
        "c1_be": 0.1 * jax.random.normal(ks[7], (OUT_C,), jnp.float32),
        # ConvBlock(OUT_C, OUT_C)
        "c2_w": jax.random.normal(ks[8], (OUT_C, OUT_C, 3, 3), jnp.float32)
                / np.sqrt(OUT_C * 9),
        "c2_b": 0.1 * jax.random.normal(ks[9], (OUT_C,), jnp.float32),
        "c2_g": 1.0 + 0.1 * jax.random.normal(ks[10], (OUT_C,), jnp.float32),
        "c2_be": 0.1 * jax.random.normal(ks[11], (OUT_C,), jnp.float32),
    }

    out = jax.jit(upsample_block_forward)(up_x, down_x, params)
    out = jax.block_until_ready(out)
    assert out.shape == (N, OUT_C, 2 * H1, 2 * W1), out.shape

    ref = upsample_block_reference(up_x, down_x, params)
    # bf16 MXU inputs + bf16 streamed intermediates (f32 accumulation, f32 BN math)
    # vs. a pure-f32 reference on BN-normalized O(1) activations: 5e-2 is the bf16
    # noise floor for two stacked conv layers.
    np.testing.assert_allclose(np.asarray(out), np.asarray(ref), rtol=5e-2, atol=5e-2)

    print("KERNEL_OK")
</pallas_src>

<mosaic_0001>
module attributes {stable_mosaic.version = 11 : i64} {
  func.func @upsample_matmul_kernel(%arg0: i32, %arg1: memref<64x16xbf16, #tpu.memory_space<vmem>>, %arg2: memref<16x32xbf16, #tpu.memory_space<vmem>>, %arg3: memref<1x32xf32, #tpu.memory_space<vmem>>, %arg4: memref<64x32xbf16, #tpu.memory_space<vmem>>) attributes {dimension_semantics = [#tpu.dimension_semantics<parallel>], iteration_bounds = array<i64: 2>, scalar_prefetch = 0 : i64, scratch_operands = 0 : i64, tpu.core_type = #tpu.core_type<tc>, window_params = [{transform_indices = @transform_0, window_bounds = array<i64: 64, 16>}, {pipeline_mode = #tpu.pipeline_mode<synchronous>, transform_indices = @transform_1, window_bounds = array<i64: 16, 32>}, {pipeline_mode = #tpu.pipeline_mode<synchronous>, transform_indices = @transform_2, window_bounds = array<i64: 1, 32>}, {transform_indices = @transform_3, window_bounds = array<i64: 64, 32>}]} {
    %c0 = arith.constant 0 : index
    %c0_0 = arith.constant 0 : index
    %0 = vector.load %arg1[%c0, %c0_0] : memref<64x16xbf16, #tpu.memory_space<vmem>>, vector<64x16xbf16>
    %c0_1 = arith.constant 0 : index
    %c0_2 = arith.constant 0 : index
    %1 = vector.load %arg2[%c0_1, %c0_2] : memref<16x32xbf16, #tpu.memory_space<vmem>>, vector<16x32xbf16>
    %cst = arith.constant dense<0.000000e+00> : vector<64x32xf32>
    %2 = tpu.matmul %0, %1, %cst {dimension_numbers = #tpu.dot_dimension_numbers<[1], [0], [0], [1], [0, 0, 1, 1], [], []>} : vector<64x16xbf16>, vector<16x32xbf16>, vector<64x32xf32> -> vector<64x32xf32>
    %c0_3 = arith.constant 0 : index
    %c0_4 = arith.constant 0 : index
    %3 = vector.load %arg3[%c0_3, %c0_4] : memref<1x32xf32, #tpu.memory_space<vmem>>, vector<1x32xf32>
    %4 = vector.broadcast %3 : vector<1x32xf32> to vector<64x32xf32>
    %5 = arith.addf %2, %4 : vector<64x32xf32>
    %6 = arith.truncf %5 : vector<64x32xf32> to vector<64x32xbf16>
    %c0_5 = arith.constant 0 : index
    %c0_6 = arith.constant 0 : index
    %7 = vector.load %arg4[%c0_5, %c0_6] : memref<64x32xbf16, #tpu.memory_space<vmem>>, vector<64x32xbf16>
    tpu.vector_store %arg4[%c0_5, %c0_6], %6 {strides = array<i32>} : memref<64x32xbf16, #tpu.memory_space<vmem>>, vector<64x32xbf16>,
    return
  }
  func.func @transform_0(%arg0: i32) -> (i32, i32) {
    %c0_i32 = arith.constant 0 : i32
    %c0_i32_0 = arith.constant 0 : i32
    return %arg0, %c0_i32 : i32, i32
  }
  func.func @transform_1(%arg0: i32) -> (i32, i32) {
    %c0_i32 = arith.constant 0 : i32
    %c0_i32_0 = arith.constant 0 : i32
    %c0_i32_1 = arith.constant 0 : i32
    return %c0_i32, %c0_i32_0 : i32, i32
  }
  func.func @transform_2(%arg0: i32) -> (i32, i32) {
    %c0_i32 = arith.constant 0 : i32
    %c0_i32_0 = arith.constant 0 : i32
    %c0_i32_1 = arith.constant 0 : i32
    return %c0_i32, %c0_i32_0 : i32, i32
  }
  func.func @transform_3(%arg0: i32) -> (i32, i32) {
    %c0_i32 = arith.constant 0 : i32
    %c0_i32_0 = arith.constant 0 : i32
    return %arg0, %c0_i32 : i32, i32
  }
}

module attributes {stable_mosaic.version = 11 : i64} {
  func.func @conv3x3_stats_kernel(%arg0: i32, %arg1: i32, %arg2: memref<1x1x18x18x16xbf16, #tpu.memory_space<vmem>>, %arg3: memref<144x128xbf16, #tpu.memory_space<vmem>>, %arg4: memref<1x16xf32, #tpu.memory_space<vmem>>, %arg5: memref<1x16xf32, #tpu.memory_space<vmem>>, %arg6: memref<256x16xbf16, #tpu.memory_space<vmem>>, %arg7: memref<1x1x128xf32, #tpu.memory_space<vmem>>, %arg8: memref<1x1x128xf32, #tpu.memory_space<vmem>>, %arg9: memref<16x16x144xbf16, #tpu.memory_space<vmem>>) attributes {dimension_semantics = [#tpu.dimension_semantics<parallel>, #tpu.dimension_semantics<parallel>], iteration_bounds = array<i64: 2, 1>, scalar_prefetch = 0 : i64, scratch_operands = 1 : i64, tpu.core_type = #tpu.core_type<tc>, window_params = [{transform_indices = @transform_0, window_bounds = array<i64: 1, 1, 18, 18, 16>}, {pipeline_mode = #tpu.pipeline_mode<synchronous>, transform_indices = @transform_1, window_bounds = array<i64: 144, 128>}, {pipeline_mode = #tpu.pipeline_mode<synchronous>, transform_indices = @transform_2, window_bounds = array<i64: 1, 16>}, {pipeline_mode = #tpu.pipeline_mode<synchronous>, transform_indices = @transform_3, window_bounds = array<i64: 1, 16>}, {transform_indices = @transform_4, window_bounds = array<i64: 256, 16>}, {transform_indices = @transform_5, window_bounds = array<i64: 1, 1, 128>}, {transform_indices = @transform_6, window_bounds = array<i64: 1, 1, 128>}]} {
    %c0 = arith.constant 0 : index
    %c0_0 = arith.constant 0 : index
    %c0_1 = arith.constant 0 : index
    %c0_2 = arith.constant 0 : index
    %c0_3 = arith.constant 0 : index
    %0 = vector.load %arg2[%c0, %c0_0, %c0_1, %c0_2, %c0_3] : memref<1x1x18x18x16xbf16, #tpu.memory_space<vmem>>, vector<1x1x18x18x16xbf16>
    %1 = vector.shape_cast %0 : vector<1x1x18x18x16xbf16> to vector<18x18x16xbf16>
    %2 = vector.extract_strided_slice %1 {offsets = [0, 0, 0], sizes = [16, 16, 16], strides = [1, 1, 1]} : vector<18x18x16xbf16> to vector<16x16x16xbf16>
    %c0_4 = arith.constant 0 : index
    %c0_5 = arith.constant 0 : index
    %c0_6 = arith.constant 0 : index
    %3 = vector.load %arg9[%c0_4, %c0_5, %c0_6] : memref<16x16x144xbf16, #tpu.memory_space<vmem>>, vector<16x16x16xbf16>
    tpu.vector_store %arg9[%c0_4, %c0_5, %c0_6], %2 {strides = array<i32>} : memref<16x16x144xbf16, #tpu.memory_space<vmem>>, vector<16x16x16xbf16>,
    %4 = vector.extract_strided_slice %1 {offsets = [0, 1, 0], sizes = [16, 16, 16], strides = [1, 1, 1]} : vector<18x18x16xbf16> to vector<16x16x16xbf16>
    %c0_7 = arith.constant 0 : index
    %c0_8 = arith.constant 0 : index
    %c16 = arith.constant 16 : index
    %5 = vector.load %arg9[%c0_7, %c0_8, %c16] : memref<16x16x144xbf16, #tpu.memory_space<vmem>>, vector<16x16x16xbf16>
    tpu.vector_store %arg9[%c0_7, %c0_8, %c16], %4 {strides = array<i32>} : memref<16x16x144xbf16, #tpu.memory_space<vmem>>, vector<16x16x16xbf16>,
    %6 = vector.extract_strided_slice %1 {offsets = [0, 2, 0], sizes = [16, 16, 16], strides = [1, 1, 1]} : vector<18x18x16xbf16> to vector<16x16x16xbf16>
    %c0_9 = arith.constant 0 : index
    %c0_10 = arith.constant 0 : index
    %c32 = arith.constant 32 : index
    %7 = vector.load %arg9[%c0_9, %c0_10, %c32] : memref<16x16x144xbf16, #tpu.memory_space<vmem>>, vector<16x16x16xbf16>
    tpu.vector_store %arg9[%c0_9, %c0_10, %c32], %6 {strides = array<i32>} : memref<16x16x144xbf16, #tpu.memory_space<vmem>>, vector<16x16x16xbf16>,
    %8 = vector.extract_strided_slice %1 {offsets = [1, 0, 0], sizes = [16, 16, 16], strides = [1, 1, 1]} : vector<18x18x16xbf16> to vector<16x16x16xbf16>
    %c0_11 = arith.constant 0 : index
    %c0_12 = arith.constant 0 : index
    %c48 = arith.constant 48 : index
    %9 = vector.load %arg9[%c0_11, %c0_12, %c48] : memref<16x16x144xbf16, #tpu.memory_space<vmem>>, vector<16x16x16xbf16>
    tpu.vector_store %arg9[%c0_11, %c0_12, %c48], %8 {strides = array<i32>} : memref<16x16x144xbf16, #tpu.memory_space<vmem>>, vector<16x16x16xbf16>,
    %10 = vector.extract_strided_slice %1 {offsets = [1, 1, 0], sizes = [16, 16, 16], strides = [1, 1, 1]} : vector<18x18x16xbf16> to vector<16x16x16xbf16>
    %c0_13 = arith.constant 0 : index
    %c0_14 = arith.constant 0 : index
    %c64 = arith.constant 64 : index
    %11 = vector.load %arg9[%c0_13, %c0_14, %c64] : memref<16x16x144xbf16, #tpu.memory_space<vmem>>, vector<16x16x16xbf16>
    tpu.vector_store %arg9[%c0_13, %c0_14, %c64], %10 {strides = array<i32>} : memref<16x16x144xbf16, #tpu.memory_space<vmem>>, vector<16x16x16xbf16>,
    %12 = vector.extract_strided_slice %1 {offsets = [1, 2, 0], sizes = [16, 16, 16], strides = [1, 1, 1]} : vector<18x18x16xbf16> to vector<16x16x16xbf16>
    %c0_15 = arith.constant 0 : index
    %c0_16 = arith.constant 0 : index
    %c80 = arith.constant 80 : index
    %13 = vector.load %arg9[%c0_15, %c0_16, %c80] : memref<16x16x144xbf16, #tpu.memory_space<vmem>>, vector<16x16x16xbf16>
    tpu.vector_store %arg9[%c0_15, %c0_16, %c80], %12 {strides = array<i32>} : memref<16x16x144xbf16, #tpu.memory_space<vmem>>, vector<16x16x16xbf16>,
    %14 = vector.extract_strided_slice %1 {offsets = [2, 0, 0], sizes = [16, 16, 16], strides = [1, 1, 1]} : vector<18x18x16xbf16> to vector<16x16x16xbf16>
    %c0_17 = arith.constant 0 : index
    %c0_18 = arith.constant 0 : index
    %c96 = arith.constant 96 : index
    %15 = vector.load %arg9[%c0_17, %c0_18, %c96] : memref<16x16x144xbf16, #tpu.memory_space<vmem>>, vector<16x16x16xbf16>
    tpu.vector_store %arg9[%c0_17, %c0_18, %c96], %14 {strides = array<i32>} : memref<16x16x144xbf16, #tpu.memory_space<vmem>>, vector<16x16x16xbf16>,
    %16 = vector.extract_strided_slice %1 {offsets = [2, 1, 0], sizes = [16, 16, 16], strides = [1, 1, 1]} : vector<18x18x16xbf16> to vector<16x16x16xbf16>
    %c0_19 = arith.constant 0 : index
    %c0_20 = arith.constant 0 : index
    %c112 = arith.constant 112 : index
    %17 = vector.load %arg9[%c0_19, %c0_20, %c112] : memref<16x16x144xbf16, #tpu.memory_space<vmem>>, vector<16x16x16xbf16>
    tpu.vector_store %arg9[%c0_19, %c0_20, %c112], %16 {strides = array<i32>} : memref<16x16x144xbf16, #tpu.memory_space<vmem>>, vector<16x16x16xbf16>,
    %18 = vector.extract_strided_slice %1 {offsets = [2, 2, 0], sizes = [16, 16, 16], strides = [1, 1, 1]} : vector<18x18x16xbf16> to vector<16x16x16xbf16>
    %c0_21 = arith.constant 0 : index
    %c0_22 = arith.constant 0 : index
    %c128 = arith.constant 128 : index
    %19 = vector.load %arg9[%c0_21, %c0_22, %c128] : memref<16x16x144xbf16, #tpu.memory_space<vmem>>, vector<16x16x16xbf16>
    tpu.vector_store %arg9[%c0_21, %c0_22, %c128], %18 {strides = array<i32>} : memref<16x16x144xbf16, #tpu.memory_space<vmem>>, vector<16x16x16xbf16>,
    %c0_23 = arith.constant 0 : index
    %c0_24 = arith.constant 0 : index
    %c0_25 = arith.constant 0 : index
    %20 = vector.load %arg9[%c0_23, %c0_24, %c0_25] : memref<16x16x144xbf16, #tpu.memory_space<vmem>>, vector<16x16x144xbf16>
    %21 = vector.shape_cast %20 : vector<16x16x144xbf16> to vector<256x144xbf16>
    %c0_26 = arith.constant 0 : index
    %c0_27 = arith.constant 0 : index
    %22 = vector.load %arg3[%c0_26, %c0_27] : memref<144x128xbf16, #tpu.memory_space<vmem>>, vector<144x128xbf16>
    %cst = arith.constant dense<0.000000e+00> : vector<256x128xf32>
    %23 = tpu.matmul %21, %22, %cst {dimension_numbers = #tpu.dot_dimension_numbers<[1], [0], [0], [1], [0, 0, 1, 1], [], []>} : vector<256x144xbf16>, vector<144x128xbf16>, vector<256x128xf32> -> vector<256x128xf32>
    %24 = vector.extract_strided_slice %23 {offsets = [0, 0], sizes = [256, 16], strides = [1, 1]} : vector<256x128xf32> to vector<256x16xf32>
    %25 = arith.truncf %24 : vector<256x16xf32> to vector<256x16xbf16>
    %c0_28 = arith.constant 0 : index
    %c0_29 = arith.constant 0 : index
    %26 = vector.load %arg6[%c0_28, %c0_29] : memref<256x16xbf16, #tpu.memory_space<vmem>>, vector<256x16xbf16>
    tpu.vector_store %arg6[%c0_28, %c0_29], %25 {strides = array<i32>} : memref<256x16xbf16, #tpu.memory_space<vmem>>, vector<256x16xbf16>,
    %cst_30 = arith.constant dense<0.000000e+00> : vector<128xf32>
    %27 = vector.multi_reduction <add>, %23, %cst_30 [0] : vector<256x128xf32> to vector<128xf32>
    %28 = vector.shape_cast %27 : vector<128xf32> to vector<1x128xf32>
    %c0_31 = arith.constant 0 : index
    %c0_32 = arith.constant 0 : index
    %c0_33 = arith.constant 0 : index
    %29 = vector.load %arg7[%c0_31, %c0_32, %c0_33] : memref<1x1x128xf32, #tpu.memory_space<vmem>>, vector<1x1x128xf32>
    %30 = vector.shape_cast %29 : vector<1x1x128xf32> to vector<1x128xf32>
    %31 = vector.shape_cast %28 : vector<1x128xf32> to vector<1x1x128xf32>
    tpu.vector_store %arg7[%c0_31, %c0_32, %c0_33], %31 {strides = array<i32>} : memref<1x1x128xf32, #tpu.memory_space<vmem>>, vector<1x1x128xf32>,
    %32 = arith.mulf %23, %23 : vector<256x128xf32>
    %cst_34 = arith.constant dense<0.000000e+00> : vector<128xf32>
    %33 = vector.multi_reduction <add>, %32, %cst_34 [0] : vector<256x128xf32> to vector<128xf32>
    %34 = vector.shape_cast %33 : vector<128xf32> to vector<1x128xf32>
    %c0_35 = arith.constant 0 : index
    %c0_36 = arith.constant 0 : index
    %c0_37 = arith.constant 0 : index
    %35 = vector.load %arg8[%c0_35, %c0_36, %c0_37] : memref<1x1x128xf32, #tpu.memory_space<vmem>>, vector<1x1x128xf32>
    %36 = vector.shape_cast %35 : vector<1x1x128xf32> to vector<1x128xf32>
    %37 = vector.shape_cast %34 : vector<1x128xf32> to vector<1x1x128xf32>
    tpu.vector_store %arg8[%c0_35, %c0_36, %c0_37], %37 {strides = array<i32>} : memref<1x1x128xf32, #tpu.memory_space<vmem>>, vector<1x1x128xf32>,
    return
  }
  func.func @transform_0(%arg0: i32, %arg1: i32) -> (i32, i32, i32, i32, i32) {
    %c0_i32 = arith.constant 0 : i32
    %c0_i32_0 = arith.constant 0 : i32
    %c0_i32_1 = arith.constant 0 : i32
    %c0_i32_2 = arith.constant 0 : i32
    return %arg0, %arg1, %c0_i32, %c0_i32_0, %c0_i32_1 : i32, i32, i32, i32, i32
  }
  func.func @transform_1(%arg0: i32, %arg1: i32) -> (i32, i32) {
    %c0_i32 = arith.constant 0 : i32
    %c0_i32_0 = arith.constant 0 : i32
    %c0_i32_1 = arith.constant 0 : i32
    return %c0_i32, %c0_i32_0 : i32, i32
  }
  func.func @transform_2(%arg0: i32, %arg1: i32) -> (i32, i32) {
    %c0_i32 = arith.constant 0 : i32
    %c0_i32_0 = arith.constant 0 : i32
    %c0_i32_1 = arith.constant 0 : i32
    return %c0_i32, %c0_i32_0 : i32, i32
  }
  func.func @transform_3(%arg0: i32, %arg1: i32) -> (i32, i32) {
    %c0_i32 = arith.constant 0 : i32
    %c0_i32_0 = arith.constant 0 : i32
    %c0_i32_1 = arith.constant 0 : i32
    return %c0_i32, %c0_i32_0 : i32, i32
  }
  func.func @transform_4(%arg0: i32, %arg1: i32) -> (i32, i32) {
    %c1_i32 = arith.constant 1 : i32
    %0 = arith.muli %arg0, %c1_i32 : i32
    %1 = arith.addi %0, %arg1 : i32
    %c0_i32 = arith.constant 0 : i32
    %c0_i32_0 = arith.constant 0 : i32
    return %1, %c0_i32 : i32, i32
  }
  func.func @transform_5(%arg0: i32, %arg1: i32) -> (i32, i32, i32) {
    %c1_i32 = arith.constant 1 : i32
    %0 = arith.muli %arg0, %c1_i32 : i32
    %1 = arith.addi %0, %arg1 : i32
    %c0_i32 = arith.constant 0 : i32
    %c0_i32_0 = arith.constant 0 : i32
    %c0_i32_1 = arith.constant 0 : i32
    return %1, %c0_i32, %c0_i32_0 : i32, i32, i32
  }
  func.func @transform_6(%arg0: i32, %arg1: i32) -> (i32, i32, i32) {
    %c1_i32 = arith.constant 1 : i32
    %0 = arith.muli %arg0, %c1_i32 : i32
    %1 = arith.addi %0, %arg1 : i32
    %c0_i32 = arith.constant 0 : i32
    %c0_i32_0 = arith.constant 0 : i32
    %c0_i32_1 = arith.constant 0 : i32
    return %1, %c0_i32, %c0_i32_0 : i32, i32, i32
  }
}

module attributes {stable_mosaic.version = 11 : i64} {
  func.func @bn_relu_kernel(%arg0: i32, %arg1: memref<256x16xbf16, #tpu.memory_space<vmem>>, %arg2: memref<1x16xf32, #tpu.memory_space<vmem>>, %arg3: memref<1x16xf32, #tpu.memory_space<vmem>>, %arg4: memref<256x16xf32, #tpu.memory_space<vmem>>) attributes {dimension_semantics = [#tpu.dimension_semantics<parallel>], iteration_bounds = array<i64: 2>, scalar_prefetch = 0 : i64, scratch_operands = 0 : i64, tpu.core_type = #tpu.core_type<tc>, window_params = [{transform_indices = @transform_0, window_bounds = array<i64: 256, 16>}, {pipeline_mode = #tpu.pipeline_mode<synchronous>, transform_indices = @transform_1, window_bounds = array<i64: 1, 16>}, {pipeline_mode = #tpu.pipeline_mode<synchronous>, transform_indices = @transform_2, window_bounds = array<i64: 1, 16>}, {transform_indices = @transform_3, window_bounds = array<i64: 256, 16>}]} {
    %c0 = arith.constant 0 : index
    %c0_0 = arith.constant 0 : index
    %0 = vector.load %arg1[%c0, %c0_0] : memref<256x16xbf16, #tpu.memory_space<vmem>>, vector<256x16xbf16>
    %1 = arith.extf %0 : vector<256x16xbf16> to vector<256x16xf32>
    %c0_1 = arith.constant 0 : index
    %c0_2 = arith.constant 0 : index
    %2 = vector.load %arg2[%c0_1, %c0_2] : memref<1x16xf32, #tpu.memory_space<vmem>>, vector<1x16xf32>
    %3 = vector.broadcast %2 : vector<1x16xf32> to vector<256x16xf32>
    %4 = arith.mulf %1, %3 : vector<256x16xf32>
    %c0_3 = arith.constant 0 : index
    %c0_4 = arith.constant 0 : index
    %5 = vector.load %arg3[%c0_3, %c0_4] : memref<1x16xf32, #tpu.memory_space<vmem>>, vector<1x16xf32>
    %6 = vector.broadcast %5 : vector<1x16xf32> to vector<256x16xf32>
    %7 = arith.addf %4, %6 : vector<256x16xf32>
    %cst = arith.constant 0.000000e+00 : f32
    %8 = vector.broadcast %cst : f32 to vector<256x16xf32>
    %9 = arith.maximumf %7, %8 : vector<256x16xf32>
    %c0_5 = arith.constant 0 : index
    %c0_6 = arith.constant 0 : index
    %10 = vector.load %arg4[%c0_5, %c0_6] : memref<256x16xf32, #tpu.memory_space<vmem>>, vector<256x16xf32>
    tpu.vector_store %arg4[%c0_5, %c0_6], %9 {strides = array<i32>} : memref<256x16xf32, #tpu.memory_space<vmem>>, vector<256x16xf32>,
    return
  }
  func.func @transform_0(%arg0: i32) -> (i32, i32) {
    %c0_i32 = arith.constant 0 : i32
    %c0_i32_0 = arith.constant 0 : i32
    return %arg0, %c0_i32 : i32, i32
  }
  func.func @transform_1(%arg0: i32) -> (i32, i32) {
    %c0_i32 = arith.constant 0 : i32
    %c0_i32_0 = arith.constant 0 : i32
    %c0_i32_1 = arith.constant 0 : i32
    return %c0_i32, %c0_i32_0 : i32, i32
  }
  func.func @transform_2(%arg0: i32) -> (i32, i32) {
    %c0_i32 = arith.constant 0 : i32
    %c0_i32_0 = arith.constant 0 : i32
    %c0_i32_1 = arith.constant 0 : i32
    return %c0_i32, %c0_i32_0 : i32, i32
  }
  func.func @transform_3(%arg0: i32) -> (i32, i32) {
    %c0_i32 = arith.constant 0 : i32
    %c0_i32_0 = arith.constant 0 : i32
    return %arg0, %c0_i32 : i32, i32
  }
}

module attributes {stable_mosaic.version = 11 : i64} {
  func.func @conv3x3_stats_kernel(%arg0: i32, %arg1: i32, %arg2: memref<1x1x18x18x16xbf16, #tpu.memory_space<vmem>>, %arg3: memref<144x128xbf16, #tpu.memory_space<vmem>>, %arg4: memref<1x16xf32, #tpu.memory_space<vmem>>, %arg5: memref<1x16xf32, #tpu.memory_space<vmem>>, %arg6: memref<256x16xbf16, #tpu.memory_space<vmem>>, %arg7: memref<1x1x128xf32, #tpu.memory_space<vmem>>, %arg8: memref<1x1x128xf32, #tpu.memory_space<vmem>>, %arg9: memref<16x16x144xbf16, #tpu.memory_space<vmem>>) attributes {dimension_semantics = [#tpu.dimension_semantics<parallel>, #tpu.dimension_semantics<parallel>], iteration_bounds = array<i64: 2, 1>, scalar_prefetch = 0 : i64, scratch_operands = 1 : i64, tpu.core_type = #tpu.core_type<tc>, window_params = [{transform_indices = @transform_0, window_bounds = array<i64: 1, 1, 18, 18, 16>}, {pipeline_mode = #tpu.pipeline_mode<synchronous>, transform_indices = @transform_1, window_bounds = array<i64: 144, 128>}, {pipeline_mode = #tpu.pipeline_mode<synchronous>, transform_indices = @transform_2, window_bounds = array<i64: 1, 16>}, {pipeline_mode = #tpu.pipeline_mode<synchronous>, transform_indices = @transform_3, window_bounds = array<i64: 1, 16>}, {transform_indices = @transform_4, window_bounds = array<i64: 256, 16>}, {transform_indices = @transform_5, window_bounds = array<i64: 1, 1, 128>}, {transform_indices = @transform_6, window_bounds = array<i64: 1, 1, 128>}]} {
    %c0 = arith.constant 0 : index
    %c0_0 = arith.constant 0 : index
    %c0_1 = arith.constant 0 : index
    %c0_2 = arith.constant 0 : index
    %c0_3 = arith.constant 0 : index
    %0 = vector.load %arg2[%c0, %c0_0, %c0_1, %c0_2, %c0_3] : memref<1x1x18x18x16xbf16, #tpu.memory_space<vmem>>, vector<1x1x18x18x16xbf16>
    %1 = vector.shape_cast %0 : vector<1x1x18x18x16xbf16> to vector<18x18x16xbf16>
    %c0_4 = arith.constant 0 : index
    %c0_5 = arith.constant 0 : index
    %2 = vector.load %arg4[%c0_4, %c0_5] : memref<1x16xf32, #tpu.memory_space<vmem>>, vector<1x16xf32>
    %3 = vector.shape_cast %2 : vector<1x16xf32> to vector<1x1x16xf32>
    %c0_6 = arith.constant 0 : index
    %c0_7 = arith.constant 0 : index
    %4 = vector.load %arg5[%c0_6, %c0_7] : memref<1x16xf32, #tpu.memory_space<vmem>>, vector<1x16xf32>
    %5 = vector.shape_cast %4 : vector<1x16xf32> to vector<1x1x16xf32>
    %6 = arith.extf %1 : vector<18x18x16xbf16> to vector<18x18x16xf32>
    %7 = vector.broadcast %3 : vector<1x1x16xf32> to vector<18x18x16xf32>
    %8 = arith.mulf %6, %7 : vector<18x18x16xf32>
    %9 = vector.broadcast %5 : vector<1x1x16xf32> to vector<18x18x16xf32>
    %10 = arith.addf %8, %9 : vector<18x18x16xf32>
    %cst = arith.constant 0.000000e+00 : f32
    %11 = vector.broadcast %cst : f32 to vector<18x18x16xf32>
    %12 = arith.maximumf %10, %11 : vector<18x18x16xf32>
    %13 = arith.truncf %12 : vector<18x18x16xf32> to vector<18x18x16xbf16>
    %14 = vector.extract_strided_slice %13 {offsets = [0, 0, 0], sizes = [16, 16, 16], strides = [1, 1, 1]} : vector<18x18x16xbf16> to vector<16x16x16xbf16>
    %c0_8 = arith.constant 0 : index
    %c0_9 = arith.constant 0 : index
    %c0_10 = arith.constant 0 : index
    %15 = vector.load %arg9[%c0_8, %c0_9, %c0_10] : memref<16x16x144xbf16, #tpu.memory_space<vmem>>, vector<16x16x16xbf16>
    tpu.vector_store %arg9[%c0_8, %c0_9, %c0_10], %14 {strides = array<i32>} : memref<16x16x144xbf16, #tpu.memory_space<vmem>>, vector<16x16x16xbf16>,
    %16 = vector.extract_strided_slice %13 {offsets = [0, 1, 0], sizes = [16, 16, 16], strides = [1, 1, 1]} : vector<18x18x16xbf16> to vector<16x16x16xbf16>
    %c0_11 = arith.constant 0 : index
    %c0_12 = arith.constant 0 : index
    %c16 = arith.constant 16 : index
    %17 = vector.load %arg9[%c0_11, %c0_12, %c16] : memref<16x16x144xbf16, #tpu.memory_space<vmem>>, vector<16x16x16xbf16>
    tpu.vector_store %arg9[%c0_11, %c0_12, %c16], %16 {strides = array<i32>} : memref<16x16x144xbf16, #tpu.memory_space<vmem>>, vector<16x16x16xbf16>,
    %18 = vector.extract_strided_slice %13 {offsets = [0, 2, 0], sizes = [16, 16, 16], strides = [1, 1, 1]} : vector<18x18x16xbf16> to vector<16x16x16xbf16>
    %c0_13 = arith.constant 0 : index
    %c0_14 = arith.constant 0 : index
    %c32 = arith.constant 32 : index
    %19 = vector.load %arg9[%c0_13, %c0_14, %c32] : memref<16x16x144xbf16, #tpu.memory_space<vmem>>, vector<16x16x16xbf16>
    tpu.vector_store %arg9[%c0_13, %c0_14, %c32], %18 {strides = array<i32>} : memref<16x16x144xbf16, #tpu.memory_space<vmem>>, vector<16x16x16xbf16>,
    %20 = vector.extract_strided_slice %13 {offsets = [1, 0, 0], sizes = [16, 16, 16], strides = [1, 1, 1]} : vector<18x18x16xbf16> to vector<16x16x16xbf16>
    %c0_15 = arith.constant 0 : index
    %c0_16 = arith.constant 0 : index
    %c48 = arith.constant 48 : index
    %21 = vector.load %arg9[%c0_15, %c0_16, %c48] : memref<16x16x144xbf16, #tpu.memory_space<vmem>>, vector<16x16x16xbf16>
    tpu.vector_store %arg9[%c0_15, %c0_16, %c48], %20 {strides = array<i32>} : memref<16x16x144xbf16, #tpu.memory_space<vmem>>, vector<16x16x16xbf16>,
    %22 = vector.extract_strided_slice %13 {offsets = [1, 1, 0], sizes = [16, 16, 16], strides = [1, 1, 1]} : vector<18x18x16xbf16> to vector<16x16x16xbf16>
    %c0_17 = arith.constant 0 : index
    %c0_18 = arith.constant 0 : index
    %c64 = arith.constant 64 : index
    %23 = vector.load %arg9[%c0_17, %c0_18, %c64] : memref<16x16x144xbf16, #tpu.memory_space<vmem>>, vector<16x16x16xbf16>
    tpu.vector_store %arg9[%c0_17, %c0_18, %c64], %22 {strides = array<i32>} : memref<16x16x144xbf16, #tpu.memory_space<vmem>>, vector<16x16x16xbf16>,
    %24 = vector.extract_strided_slice %13 {offsets = [1, 2, 0], sizes = [16, 16, 16], strides = [1, 1, 1]} : vector<18x18x16xbf16> to vector<16x16x16xbf16>
    %c0_19 = arith.constant 0 : index
    %c0_20 = arith.constant 0 : index
    %c80 = arith.constant 80 : index
    %25 = vector.load %arg9[%c0_19, %c0_20, %c80] : memref<16x16x144xbf16, #tpu.memory_space<vmem>>, vector<16x16x16xbf16>
    tpu.vector_store %arg9[%c0_19, %c0_20, %c80], %24 {strides = array<i32>} : memref<16x16x144xbf16, #tpu.memory_space<vmem>>, vector<16x16x16xbf16>,
    %26 = vector.extract_strided_slice %13 {offsets = [2, 0, 0], sizes = [16, 16, 16], strides = [1, 1, 1]} : vector<18x18x16xbf16> to vector<16x16x16xbf16>
    %c0_21 = arith.constant 0 : index
    %c0_22 = arith.constant 0 : index
    %c96 = arith.constant 96 : index
    %27 = vector.load %arg9[%c0_21, %c0_22, %c96] : memref<16x16x144xbf16, #tpu.memory_space<vmem>>, vector<16x16x16xbf16>
    tpu.vector_store %arg9[%c0_21, %c0_22, %c96], %26 {strides = array<i32>} : memref<16x16x144xbf16, #tpu.memory_space<vmem>>, vector<16x16x16xbf16>,
    %28 = vector.extract_strided_slice %13 {offsets = [2, 1, 0], sizes = [16, 16, 16], strides = [1, 1, 1]} : vector<18x18x16xbf16> to vector<16x16x16xbf16>
    %c0_23 = arith.constant 0 : index
    %c0_24 = arith.constant 0 : index
    %c112 = arith.constant 112 : index
    %29 = vector.load %arg9[%c0_23, %c0_24, %c112] : memref<16x16x144xbf16, #tpu.memory_space<vmem>>, vector<16x16x16xbf16>
    tpu.vector_store %arg9[%c0_23, %c0_24, %c112], %28 {strides = array<i32>} : memref<16x16x144xbf16, #tpu.memory_space<vmem>>, vector<16x16x16xbf16>,
    %30 = vector.extract_strided_slice %13 {offsets = [2, 2, 0], sizes = [16, 16, 16], strides = [1, 1, 1]} : vector<18x18x16xbf16> to vector<16x16x16xbf16>
    %c0_25 = arith.constant 0 : index
    %c0_26 = arith.constant 0 : index
    %c128 = arith.constant 128 : index
    %31 = vector.load %arg9[%c0_25, %c0_26, %c128] : memref<16x16x144xbf16, #tpu.memory_space<vmem>>, vector<16x16x16xbf16>
    tpu.vector_store %arg9[%c0_25, %c0_26, %c128], %30 {strides = array<i32>} : memref<16x16x144xbf16, #tpu.memory_space<vmem>>, vector<16x16x16xbf16>,
    %c0_27 = arith.constant 0 : index
    %c0_28 = arith.constant 0 : index
    %c0_29 = arith.constant 0 : index
    %32 = vector.load %arg9[%c0_27, %c0_28, %c0_29] : memref<16x16x144xbf16, #tpu.memory_space<vmem>>, vector<16x16x144xbf16>
    %33 = vector.shape_cast %32 : vector<16x16x144xbf16> to vector<256x144xbf16>
    %c0_30 = arith.constant 0 : index
    %c0_31 = arith.constant 0 : index
    %34 = vector.load %arg3[%c0_30, %c0_31] : memref<144x128xbf16, #tpu.memory_space<vmem>>, vector<144x128xbf16>
    %cst_32 = arith.constant dense<0.000000e+00> : vector<256x128xf32>
    %35 = tpu.matmul %33, %34, %cst_32 {dimension_numbers = #tpu.dot_dimension_numbers<[1], [0], [0], [1], [0, 0, 1, 1], [], []>} : vector<256x144xbf16>, vector<144x128xbf16>, vector<256x128xf32> -> vector<256x128xf32>
    %36 = vector.extract_strided_slice %35 {offsets = [0, 0], sizes = [256, 16], strides = [1, 1]} : vector<256x128xf32> to vector<256x16xf32>
    %37 = arith.truncf %36 : vector<256x16xf32> to vector<256x16xbf16>
    %c0_33 = arith.constant 0 : index
    %c0_34 = arith.constant 0 : index
    %38 = vector.load %arg6[%c0_33, %c0_34] : memref<256x16xbf16, #tpu.memory_space<vmem>>, vector<256x16xbf16>
    tpu.vector_store %arg6[%c0_33, %c0_34], %37 {strides = array<i32>} : memref<256x16xbf16, #tpu.memory_space<vmem>>, vector<256x16xbf16>,
    %cst_35 = arith.constant dense<0.000000e+00> : vector<128xf32>
    %39 = vector.multi_reduction <add>, %35, %cst_35 [0] : vector<256x128xf32> to vector<128xf32>
    %40 = vector.shape_cast %39 : vector<128xf32> to vector<1x128xf32>
    %c0_36 = arith.constant 0 : index
    %c0_37 = arith.constant 0 : index
    %c0_38 = arith.constant 0 : index
    %41 = vector.load %arg7[%c0_36, %c0_37, %c0_38] : memref<1x1x128xf32, #tpu.memory_space<vmem>>, vector<1x1x128xf32>
    %42 = vector.shape_cast %41 : vector<1x1x128xf32> to vector<1x128xf32>
    %43 = vector.shape_cast %40 : vector<1x128xf32> to vector<1x1x128xf32>
    tpu.vector_store %arg7[%c0_36, %c0_37, %c0_38], %43 {strides = array<i32>} : memref<1x1x128xf32, #tpu.memory_space<vmem>>, vector<1x1x128xf32>,
    %44 = arith.mulf %35, %35 : vector<256x128xf32>
    %cst_39 = arith.constant dense<0.000000e+00> : vector<128xf32>
    %45 = vector.multi_reduction <add>, %44, %cst_39 [0] : vector<256x128xf32> to vector<128xf32>
    %46 = vector.shape_cast %45 : vector<128xf32> to vector<1x128xf32>
    %c0_40 = arith.constant 0 : index
    %c0_41 = arith.constant 0 : index
    %c0_42 = arith.constant 0 : index
    %47 = vector.load %arg8[%c0_40, %c0_41, %c0_42] : memref<1x1x128xf32, #tpu.memory_space<vmem>>, vector<1x1x128xf32>
    %48 = vector.shape_cast %47 : vector<1x1x128xf32> to vector<1x128xf32>
    %49 = vector.shape_cast %46 : vector<1x128xf32> to vector<1x1x128xf32>
    tpu.vector_store %arg8[%c0_40, %c0_41, %c0_42], %49 {strides = array<i32>} : memref<1x1x128xf32, #tpu.memory_space<vmem>>, vector<1x1x128xf32>,
    return
  }
  func.func @transform_0(%arg0: i32, %arg1: i32) -> (i32, i32, i32, i32, i32) {
    %c0_i32 = arith.constant 0 : i32
    %c0_i32_0 = arith.constant 0 : i32
    %c0_i32_1 = arith.constant 0 : i32
    %c0_i32_2 = arith.constant 0 : i32
    return %arg0, %arg1, %c0_i32, %c0_i32_0, %c0_i32_1 : i32, i32, i32, i32, i32
  }
  func.func @transform_1(%arg0: i32, %arg1: i32) -> (i32, i32) {
    %c0_i32 = arith.constant 0 : i32
    %c0_i32_0 = arith.constant 0 : i32
    %c0_i32_1 = arith.constant 0 : i32
    return %c0_i32, %c0_i32_0 : i32, i32
  }
  func.func @transform_2(%arg0: i32, %arg1: i32) -> (i32, i32) {
    %c0_i32 = arith.constant 0 : i32
    %c0_i32_0 = arith.constant 0 : i32
    %c0_i32_1 = arith.constant 0 : i32
    return %c0_i32, %c0_i32_0 : i32, i32
  }
  func.func @transform_3(%arg0: i32, %arg1: i32) -> (i32, i32) {
    %c0_i32 = arith.constant 0 : i32
    %c0_i32_0 = arith.constant 0 : i32
    %c0_i32_1 = arith.constant 0 : i32
    return %c0_i32, %c0_i32_0 : i32, i32
  }
  func.func @transform_4(%arg0: i32, %arg1: i32) -> (i32, i32) {
    %c1_i32 = arith.constant 1 : i32
    %0 = arith.muli %arg0, %c1_i32 : i32
    %1 = arith.addi %0, %arg1 : i32
    %c0_i32 = arith.constant 0 : i32
    %c0_i32_0 = arith.constant 0 : i32
    return %1, %c0_i32 : i32, i32
  }
  func.func @transform_5(%arg0: i32, %arg1: i32) -> (i32, i32, i32) {
    %c1_i32 = arith.constant 1 : i32
    %0 = arith.muli %arg0, %c1_i32 : i32
    %1 = arith.addi %0, %arg1 : i32
    %c0_i32 = arith.constant 0 : i32
    %c0_i32_0 = arith.constant 0 : i32
    %c0_i32_1 = arith.constant 0 : i32
    return %1, %c0_i32, %c0_i32_0 : i32, i32, i32
  }
  func.func @transform_6(%arg0: i32, %arg1: i32) -> (i32, i32, i32) {
    %c1_i32 = arith.constant 1 : i32
    %0 = arith.muli %arg0, %c1_i32 : i32
    %1 = arith.addi %0, %arg1 : i32
    %c0_i32 = arith.constant 0 : i32
    %c0_i32_0 = arith.constant 0 : i32
    %c0_i32_1 = arith.constant 0 : i32
    return %1, %c0_i32, %c0_i32_0 : i32, i32, i32
  }
}

</mosaic_0001>

<llo_original>
// kernel: tile.9
$region0: #{tile.9}
  %s0 = inlined_call_operand.vmem [shape: f32[4,8], index: 0, kind: input, shape index: {}]
  %s1 = inlined_call_operand.vmem [shape: f32[1,32], index: 1, kind: output, shape index: {}]
  $region1: #{tile.9} parent=0
    #allocation0 [shape = 'u8[4096]{0}', space=vmem, size = 0x1000, scoped, tag = 'scoped mem for output reshape']
    #allocation1 [shape = 'u8[4096]{0}', space=vmem, size = 0x1000, scoped, tag = 'scoped mem for input reshape']
    %s3 = sshll.u32 1, 4
    %s4 = ssub.s32 %s3, 1
    %v5 = vld [vmem:[%s0] sm:%s4]
    %6 = vst [vmem:[#allocation1] sm:%s4] %v5
    %v7 = vld [vmem:[#allocation1] sm:$0x1]
    %vm8 = vcmask 64512
    %9 = vst.msk [vmem:[#allocation0] sm:$0x1] %vm8, %v7
    %s10 = scalar_lea.vmem [#allocation1], 3
    %v11 = vld [vmem:[%s10] sm:$0x1]
    %12 = vrot.lane.b32.xlu0 %v11, 24
    %v13 = vpop.permute.xlu0 %12
    %vm14 = vcmask 261312
    %15 = vst.msk [vmem:[#allocation0] sm:$0x1] %vm14, %v13
    %s16 = scalar_lea.vmem [#allocation1], 2
    %v17 = vld [vmem:[%s16] sm:$0x1]
    %18 = vrot.lane.b32.xlu0 %v17, 16
    %v19 = vpop.permute.xlu0 %18
    %vm20 = vcmask 195712
    %21 = vst.msk [vmem:[#allocation0] sm:$0x1] %vm20, %v19
    %s22 = scalar_lea.vmem [#allocation1], 1
    %v23 = vld [vmem:[%s22] sm:$0x1]
    %24 = vrot.lane.b32.xlu0 %v23, 8
    %v25 = vpop.permute.xlu0 %24
    %vm26 = vcmask 130112
    %27 = vst.msk [vmem:[#allocation0] sm:$0x1] %vm26, %v25
    %s29 = sshll.u32 1, 1
    %s30 = ssub.s32 %s29, 1
    %v32 = vld [vmem:[#allocation0] sm:%s30]
    %s33 = sshll.u32 1, 1
    %s34 = ssub.s32 %s33, 1
    %35 = vst [vmem:[%s1] sm:%s34] %v32

// kernel: tile.8
$region0: #{tile.8}
  #allocation0 [shape = 's32[1]{0}', space=sflag, size = 0x4, scoped, tag = 'scoped memory for tile.8']
  %s0 = inlined_call_operand.vmem [shape: f32[8], index: 0, kind: input, shape index: {}]
  %s1 = inlined_call_operand.vmem [shape: f32[4,8], index: 1, kind: output, shape index: {}]
  // Predicated region
  $region2: #{tile.8} parent=0 // pred_check
    _
  $region3: #{tile.8} parent=0 // pred_check_branch
    %3 = sbr.rel (0) target = $region5
  $region4: #{tile.8} parent=0 // pred_region
    _
  $region5: #{tile.8} parent=0 // pred_fallthru
    _
  %v4 = vld [vmem:[%s0] ss:$0 sm:$0xff]
  %5 = vst [vmem:[%s1] sm:$0xf] %v4

// kernel: upsample_block_forward.4
$region0: #{upsample_block_forward.4}
  #allocation0 [shape = 'u32[]', space=smem, size = 0x4, offset = 0x4, fixed_abs, tag = 'smem constant byte address 0x4 - core index']
  #allocation1 [shape = 'u32[144,128]{1,0:T(1,128)}', space=vmem, size = 0x12000, scoped, tag = 'internal scratch']
  %s0 = inlined_call_operand.vmem [shape: bf16[128,16], index: 0, kind: input, shape index: {}]
  %s1 = inlined_call_operand.vmem [shape: bf16[16,32], index: 1, kind: input, shape index: {}]
  %s2 = inlined_call_operand.vmem [shape: f32[1,32], index: 2, kind: input, shape index: {}]
  %s3 = inlined_call_operand.vmem [shape: bf16[128,32], index: 3, kind: output, shape index: {}]
  %s4 = sld [smem:[#allocation0]]
  $region45: #{upsample_block_forward.4} parent=0
    _
  %s6 = ssub.s32 1, %s4
  %s7 = scalar_select 0, %s6, %s4
  loop: start=0, step=1, limit=4
  $region2: #{upsample_block_forward.4} parent=0 // loop_pre_header
    _
  $region3: #{upsample_block_forward.4} parent=0 // loop_header
    %s9 = sphi 0, %s13
    %p10 = scmp.ge.s32.totalorder %s9, 4
    %s19 = sphi 0, %s21
    %s22 = sphi 0, %s19
    %s23 = sphi 0, %s22
    %s39 = sphi 0, %s23
    %s43 = sphi 0, %s43
    %s45 = sphi 0, %s43
    %s46 = sphi 0, %s45
    %s60 = sphi 0, %s46
    %s64 = sphi 0, %s64
    %s66 = sphi 0, %s64
    %s67 = sphi 0, %s66
    %s81 = sphi 0, %s67
    %s87 = sphi 0, %s89
    %s90 = sphi 0, %s87
    %s91 = sphi 0, %s90
    %s107 = sphi 0, %s91
  $region4: #{upsample_block_forward.4} parent=0 // loop_header_branch
    %12 = sbr.rel (%p10) target = $region8
  $region5: #{upsample_block_forward.4} parent=0 // loop_body
    %s14 = ssub.s32 %s9, 1
    %s15 = ssub.s32 %s9, 2
    %s16 = sadd.s32 %s9, 1
    %s17 = ssub.s32 %s9, %s16
    %p18 = scmp.eq.s32.totalorder %s17, 0
    %s20 = sadd.s32 %s19, 1
    %s21 = scalar_select %p18, %s19, %s20
    %p24 = pneg %p18
    %p25 = scmp.eq.s32.totalorder %s9, 1
    %p26 = por %p24, %p25
    %p27 = scmp.ne.s32.totalorder %s19, %s22
    %p28 = scmp.eq.s32.totalorder %s9, 0
    %p29 = por %p27, %p28
    %p30 = scmp.ne.s32.totalorder %s19, %s22
    %p31 = scmp.eq.s32.totalorder %s14, 1
    %p32 = por %p30, %p31
    %p33 = scmp.ne.s32.totalorder %s22, %s23
    %p34 = scmp.eq.s32.totalorder %s14, 0
    %p35 = por %p33, %p34
    %p36 = scmp.ne.s32.totalorder %s22, %s23
    %p37 = scmp.eq.s32.totalorder %s15, 1
    %p38 = por %p36, %p37
    %p40 = scmp.ne.s32.totalorder %s23, %s39
    %p41 = scmp.eq.s32.totalorder %s15, 0
    %p42 = por %p40, %p41
    %s44 = sadd.s32 %s43, 1
    %p47 = scmp.eq.s32.totalorder %s9, 1
    %p48 = scmp.ne.s32.totalorder %s43, %s45
    %p49 = scmp.eq.s32.totalorder %s9, 0
    %p50 = por %p48, %p49
    %p51 = scmp.ne.s32.totalorder %s43, %s45
    %p52 = scmp.eq.s32.totalorder %s14, 1
    %p53 = por %p51, %p52
    %p54 = scmp.ne.s32.totalorder %s45, %s46
    %p55 = scmp.eq.s32.totalorder %s14, 0
    %p56 = por %p54, %p55
    %p57 = scmp.ne.s32.totalorder %s45, %s46
    %p58 = scmp.eq.s32.totalorder %s15, 1
    %p59 = por %p57, %p58
    %p61 = scmp.ne.s32.totalorder %s46, %s60
    %p62 = scmp.eq.s32.totalorder %s15, 0
    %p63 = por %p61, %p62
    %s65 = sadd.s32 %s64, 1
    %p68 = scmp.eq.s32.totalorder %s9, 1
    %p69 = scmp.ne.s32.totalorder %s64, %s66
    %p70 = scmp.eq.s32.totalorder %s9, 0
    %p71 = por %p69, %p70
    %p72 = scmp.ne.s32.totalorder %s64, %s66
    %p73 = scmp.eq.s32.totalorder %s14, 1
    %p74 = por %p72, %p73
    %p75 = scmp.ne.s32.totalorder %s66, %s67
    %p76 = scmp.eq.s32.totalorder %s14, 0
    %p77 = por %p75, %p76
    %p78 = scmp.ne.s32.totalorder %s66, %s67
    %p79 = scmp.eq.s32.totalorder %s15, 1
    %p80 = por %p78, %p79
    %p82 = scmp.ne.s32.totalorder %s67, %s81
    %p83 = scmp.eq.s32.totalorder %s15, 0
    %p84 = por %p82, %p83
    %s85 = ssub.s32 %s9, %s16
    %p86 = scmp.eq.s32.totalorder %s85, 0
    %s88 = sadd.s32 %s87, 1
    %s89 = scalar_select %p86, %s87, %s88
    %p92 = pneg %p86
    %p93 = scmp.eq.s32.totalorder %s9, 1
    %p94 = por %p92, %p93
    %p95 = scmp.ne.s32.totalorder %s87, %s90
    %p96 = scmp.eq.s32.totalorder %s9, 0
    %p97 = por %p95, %p96
    %p98 = scmp.ne.s32.totalorder %s87, %s90
    %p99 = scmp.eq.s32.totalorder %s14, 1
    %p100 = por %p98, %p99
    %p101 = scmp.ne.s32.totalorder %s90, %s91
    %p102 = scmp.eq.s32.totalorder %s14, 0
    %p103 = por %p101, %p102
    %p104 = scmp.ne.s32.totalorder %s90, %s91
    %p105 = scmp.eq.s32.totalorder %s15, 1
    %p106 = por %p104, %p105
    %p108 = scmp.ne.s32.totalorder %s91, %s107
    %p109 = scmp.eq.s32.totalorder %s15, 0
    %p110 = por %p108, %p109
    %p111 = scmp.le.s32.totalorder 1, %s9
    %p112 = scmp.lt.s32.totalorder %s9, 3
    %p113 = pnand %p111, %p112
    %p114 = pneg %p113
    // Predicated region
    $region9: #{upsample_block_forward.4} parent=5 // pred_check
      _
    $region10: #{upsample_block_forward.4} parent=5 // pred_check_branch
      %116 = sbr.rel (%p113) target = $region12
    $region11: #{upsample_block_forward.4} parent=5 // pred_region
      %s117 = ssub.s32 %s9, 1
      // Predicated region
      $region13: #{upsample_block_forward.4} parent=11 // pred_check
        %p118 = pneg %p56
      $region14: #{upsample_block_forward.4} parent=11 // pred_check_branch
        %120 = sbr.rel (%p118) target = $region16
      $region15: #{upsample_block_forward.4} parent=11 // pred_region
        _
      $region16: #{upsample_block_forward.4} parent=11 // pred_fallthru
        _
      // Predicated region
      $region17: #{upsample_block_forward.4} parent=11 // pred_check
        %p121 = pneg %p77
      $region18: #{upsample_block_forward.4} parent=11 // pred_check_branch
        %123 = sbr.rel (%p121) target = $region20
      $region19: #{upsample_block_forward.4} parent=11 // pred_region
        _
      $region20: #{upsample_block_forward.4} parent=11 // pred_fallthru
        _
    $region12: #{upsample_block_forward.4} parent=5 // pred_fallthru
      _
    %p124 = scmp.lt.s32.totalorder %s9, 2
    // Predicated region
    $region21: #{upsample_block_forward.4} parent=5 // pred_check
      %p125 = pneg %p124
    $region22: #{upsample_block_forward.4} parent=5 // pred_check_branch
      %127 = sbr.rel (%p125) target = $region24
    $region23: #{upsample_block_forward.4} parent=5 // pred_region
      // Predicated region
      $region25: #{upsample_block_forward.4} parent=23 // pred_check
        %p128 = pneg %p29
      $region26: #{upsample_block_forward.4} parent=23 // pred_check_branch
        %130 = sbr.rel (%p128) target = $region28
      $region27: #{upsample_block_forward.4} parent=23 // pred_region
        %s131 = smul.u32 8, %s9
        %p132 = scmp.lt.s32.totalorder %s131, 15
        %s133 = scalar_select %p132, %s131, 15
        %s134 = smul.addr %s133, 4
        %s135 = scalar_lea.vmem %s0, %s134
        %s136 = smul.u32 8, %s9
      $region28: #{upsample_block_forward.4} parent=23 // pred_fallthru
        _
    $region24: #{upsample_block_forward.4} parent=5 // pred_fallthru
      _
    %p137 = scmp.le.s32.totalorder 1, %s9
    %p138 = scmp.lt.s32.totalorder %s9, 3
    %p139 = pnand %p137, %p138
    %p140 = pneg %p139
    // Predicated region
    $region29: #{upsample_block_forward.4} parent=5 // pred_check
      _
    $region30: #{upsample_block_forward.4} parent=5 // pred_check_branch
      %142 = sbr.rel (%p139) target = $region32
    $region31: #{upsample_block_forward.4} parent=5 // pred_region
      %s143 = ssub.s32 %s9, 1
      %s144 = smul.u32 8, %s14
      %p145 = scmp.lt.s32.totalorder %s144, 15
      %s146 = scalar_select %p145, %s144, 15
      %s147 = smul.addr %s146, 4
      %s148 = scalar_lea.vmem %s0, %s147
      %p149 = pneg %p35
      %p150 = pneg %p32
      %p151 = pneg %p56
      %p152 = pneg %p53
      %p153 = pneg %p77
      %p154 = pneg %p74
      %p155 = pneg %p103
      %p156 = pneg %p100
      %s157 = smul.u32 8, %s14
      %p158 = scmp.lt.s32.totalorder %s157, 15
      %s159 = scalar_select %p158, %s157, 15
      %s160 = smul.addr %s159, 4
      %s161 = scalar_lea.vmem %s3, %s160
      %s162 = smul.u32 8, %s14
      %p163 = scmp.lt.s32.totalorder %s162, 15
      %s164 = scalar_select %p163, %s162, 15
      %s165 = smul.addr %s164, 4
      %s166 = scalar_lea.vmem %s0, %s165
      %s167 = smul.u32 8, %s14
      %s168 = smul.u32 8, %s14
      %p169 = scmp.lt.s32.totalorder %s168, 15
      %s170 = scalar_select %p169, %s168, 15
      %s171 = smul.addr %s170, 4
      %s172 = scalar_lea.vmem %s3, %s171
      %s173 = smul.u32 8, %s14
      %v175 = vld [vmem:[%s166] sm:$0xf]
      %v176 = vld [vmem:[%s166 + $0x4] sm:$0xf]
      %v177 = vld [vmem:[%s166 + $0x8] sm:$0xf]
      %v178 = vld [vmem:[%s166 + $0xc] sm:$0xf]
      %v179 = vld [vmem:[%s166 + $0x10] sm:$0xf]
      %v180 = vld [vmem:[%s166 + $0x14] sm:$0xf]
      %v181 = vld [vmem:[%s166 + $0x18] sm:$0xf]
      %v182 = vld [vmem:[%s166 + $0x1c] sm:$0xf]
      %v183 = vld [vmem:[%s1] sm:$0xf]
      %v184 = vld [vmem:[%s1 + $0x4] sm:$0xf]
      %v185 = vld [vmem:[%s2] sm:$0x1]
      %v187 = vlaneseq
      %v188 = vshrl.u32 %v187, 7
      %v189 = vsub.s32 0, %v188
      %v190 = vrot.slane %v185, %v189
      %v200 = vunpack.c.l.b16 %v175
      %v201 = vunpack.c.l.b16 %v176
      %v202 = vunpack.c.l.b16 %v177
      %v203 = vunpack.c.l.b16 %v178
      %v204 = vunpack.c.l.b16 %v179
      %v205 = vunpack.c.l.b16 %v180
      %v206 = vunpack.c.l.b16 %v181
      %v207 = vunpack.c.l.b16 %v182
      %v208 = vpack.c.b16 %v201, %v200
      %v209 = vpack.c.b16 %v203, %v202
      %v210 = vpack.c.b16 %v205, %v204
      %v211 = vpack.c.b16 %v207, %v206
      %v214 = vunpack.c.l.b16 %v183
      %v215 = vunpack.c.l.b16 %v184
      %v216 = vpack.c.b16 %v215, %v214
      %vm218 = vcmask 130048
      %v220 = vsel %vm218, %v208, 0
      %v223 = vsel %vm218, %v209, 0
      %v226 = vsel %vm218, %v210, 0
      %v229 = vsel %vm218, %v211, 0
      %231 = vmatprep.subr.bf16.mxu0 0
      %232 = vmatpush1.bf16.msra.mxu0 0
      %233 = vmatprep.subr.bf16.mxu0 0
      %234 = vmatpush1.bf16.msra.mxu0 0
      %235 = vmatprep.subr.bf16.mxu0 0
      %236 = vmatpush1.bf16.msra.mxu0 0
      %237 = vmatprep.subr.bf16.mxu0 0
      %238 = vmatpush1.bf16.msra.mxu0 0
      %239 = vmatprep.subr.bf16.mxu0 0
      %240 = vmatpush1.bf16.msra.mxu0 0
      %241 = vmatprep.subr.bf16.mxu0 0
      %242 = vmatpush1.bf16.msra.mxu0 0
      %243 = vmatprep.subr.bf16.mxu0 0
      %244 = vmatpush1.bf16.msra.mxu0 0
      %245 = vmatprep.subr.bf16.mxu0 0
      %246 = vmatpush1.bf16.msra.mxu0 %v216
      %247 = vmatprep.subr.bf16.mxu0 0
      %248 = vmatpush2.bf16.msra.mxu0 0
      %249 = vmatprep.subr.bf16.mxu0 0
      %250 = vmatpush2.bf16.msra.mxu0 0
      %251 = vmatprep.subr.bf16.mxu0 0
      %252 = vmatpush2.bf16.msra.mxu0 0
      %253 = vmatprep.subr.bf16.mxu0 0
      %254 = vmatpush2.bf16.msra.mxu0 0
      %255 = vmatprep.subr.bf16.mxu0 0
      %256 = vmatpush2.bf16.msra.mxu0 0
      %257 = vmatprep.subr.bf16.mxu0 0
      %258 = vmatpush2.bf16.msra.mxu0 0
      %259 = vmatprep.subr.bf16.mxu0 0
      %260 = vmatpush2.bf16.msra.mxu0 0
      %261 = vmatprep.subr.bf16.mxu0 0
      %262 = vmatpush2.bf16.msra.mxu0 0
      %263 = vmatprep.mubr.bf16.mxu0 0
      %264 = vmatmul.mubr.bf16.gmra.mxu0 %v220
      %v265 = vpop.f32.mrf.mxu0
      %v266 = vadd.f32 %v190, %v265
      %v267 = vpop.f32.mrf.mxu0
      %v268 = vpop.f32.mrf.mxu0
      %v269 = vadd.f32 %v190, %v268
      %v270 = vpop.f32.mrf.mxu0
      %271 = vmatprep.mubr.bf16.mxu0 0
      %272 = vmatmul.mubr.bf16.gmra.mxu0 %v223
      %v273 = vpop.f32.mrf.mxu0
      %v274 = vadd.f32 %v190, %v273
      %v275 = vpop.f32.mrf.mxu0
      %v276 = vpop.f32.mrf.mxu0
      %v277 = vadd.f32 %v190, %v276
      %v278 = vpop.f32.mrf.mxu0
      %279 = vmatprep.mubr.bf16.mxu0 0
      %280 = vmatmul.mubr.bf16.gmra.mxu0 %v226
      %v281 = vpop.f32.mrf.mxu0
      %v282 = vadd.f32 %v190, %v281
      %v283 = vpop.f32.mrf.mxu0
      %v284 = vpop.f32.mrf.mxu0
      %v285 = vadd.f32 %v190, %v284
      %v286 = vpop.f32.mrf.mxu0
      %287 = vmatprep.mubr.bf16.mxu0 0
      %288 = vmatmul.mubr.bf16.gmra.mxu0 %v229
      %v289 = vpop.f32.mrf.mxu0
      %v290 = vadd.f32 %v190, %v289
      %v291 = vpop.f32.mrf.mxu0
      %v292 = vpop.f32.mrf.mxu0
      %v293 = vadd.f32 %v190, %v292
      %v294 = vpop.f32.mrf.mxu0
      %295 = vdwg.mxu0
      %v296 = vpack.c.bf16 %v269, %v266
      %v297 = vpack.c.bf16 %v277, %v274
      %v298 = vpack.c.bf16 %v285, %v282
      %v299 = vpack.c.bf16 %v293, %v290
      %v304 = vunpack.c.l.b16 %v296
      %v305 = vunpack.c.h.b16 %v296
      %v306 = vunpack.c.l.b16 %v297
      %v307 = vunpack.c.h.b16 %v297
      %v308 = vunpack.c.l.b16 %v298
      %v309 = vunpack.c.h.b16 %v298
      %v310 = vunpack.c.l.b16 %v299
      %v311 = vunpack.c.h.b16 %v299
      %v312 = vpack.c.b16 %v304, %v304
      %v313 = vpack.c.b16 %v305, %v305
      %v314 = vpack.c.b16 %v306, %v306
      %v315 = vpack.c.b16 %v307, %v307
      %v316 = vpack.c.b16 %v308, %v308
      %v317 = vpack.c.b16 %v309, %v309
      %v318 = vpack.c.b16 %v310, %v310
      %v319 = vpack.c.b16 %v311, %v311
      %vm328 = vcmask 257024
      %329 = vst.msk [vmem:[%s172] sm:$0xf] %vm328, %v312
      %330 = vst.msk [vmem:[%s172 + $0x4] sm:$0xf] %vm328, %v313
      %331 = vst.msk [vmem:[%s172 + $0x8] sm:$0xf] %vm328, %v314
      %332 = vst.msk [vmem:[%s172 + $0xc] sm:$0xf] %vm328, %v315
      %333 = vst.msk [vmem:[%s172 + $0x10] sm:$0xf] %vm328, %v316
      %334 = vst.msk [vmem:[%s172 + $0x14] sm:$0xf] %vm328, %v317
      %335 = vst.msk [vmem:[%s172 + $0x18] sm:$0xf] %vm328, %v318
      %336 = vst.msk [vmem:[%s172 + $0x1c] sm:$0xf] %vm328, %v319
      %s337 = smul.u32 8, %s14
      %p338 = scmp.lt.s32.totalorder %s337, 15
      %s339 = scalar_select %p338, %s337, 15
      %s340 = smul.addr %s339, 4
      %s341 = scalar_lea.vmem %s3, %s340
      // Predicated region
      $region33: #{upsample_block_forward.4} parent=31 // pred_check
        %p342 = pneg %p100
      $region34: #{upsample_block_forward.4} parent=31 // pred_check_branch
        %344 = sbr.rel (%p342) target = $region36
      $region35: #{upsample_block_forward.4} parent=31 // pred_region
        %s345 = smul.u32 8, %s14
      $region36: #{upsample_block_forward.4} parent=31 // pred_fallthru
        _
    $region32: #{upsample_block_forward.4} parent=5 // pred_fallthru
      _
    %p346 = scmp.le.s32.totalorder 2, %s9
    // Predicated region
    $region37: #{upsample_block_forward.4} parent=5 // pred_check
      %p347 = pneg %p346
    $region38: #{upsample_block_forward.4} parent=5 // pred_check_branch
      %349 = sbr.rel (%p347) target = $region40
    $region39: #{upsample_block_forward.4} parent=5 // pred_region
      %s350 = ssub.s32 %s9, 2
      // Predicated region
      $region41: #{upsample_block_forward.4} parent=39 // pred_check
        %p351 = pneg %p106
      $region42: #{upsample_block_forward.4} parent=39 // pred_check_branch
        %353 = sbr.rel (%p351) target = $region44
      $region43: #{upsample_block_forward.4} parent=39 // pred_region
        %s354 = smul.u32 8, %s15
        %p355 = scmp.lt.s32.totalorder %s354, 15
        %s356 = scalar_select %p355, %s354, 15
        %s357 = smul.addr %s356, 4
        %s358 = scalar_lea.vmem %s3, %s357
      $region44: #{upsample_block_forward.4} parent=39 // pred_fallthru
        _
    $region40: #{upsample_block_forward.4} parent=5 // pred_fallthru
      _
  $region6: #{upsample_block_forward.4} parent=0 // loop_footer
    %s13 = sadd.s32 1, %s9
  $region7: #{upsample_block_forward.4} parent=0 // loop_footer_branch
    %8 = sbr.rel target = $region3
  $region8: #{upsample_block_forward.4} parent=0 // loop_exit
    _

// kernel: upsample_block_forward.7
$region0: #{upsample_block_forward.7}
  #allocation0 [shape = 'u32[]', space=smem, size = 0x4, offset = 0x4, fixed_abs, tag = 'smem constant byte address 0x4 - core index']
  #allocation1 [shape = 'u32[144,128]{1,0:T(1,128)}', space=vmem, size = 0x12000, scoped, tag = 'internal scratch']
  %s0 = inlined_call_operand.vmem [shape: bf16[512,16], index: 0, kind: input, shape index: {}]
  %s1 = inlined_call_operand.vmem [shape: f32[1,16], index: 1, kind: input, shape index: {}]
  %s2 = inlined_call_operand.vmem [shape: f32[1,16], index: 2, kind: input, shape index: {}]
  %s3 = inlined_call_operand.vmem [shape: f32[512,16], index: 3, kind: output, shape index: {}]
  %s4 = sld [smem:[#allocation0]]
  $region45: #{upsample_block_forward.7} parent=0
    _
  %s6 = ssub.s32 1, %s4
  %s7 = scalar_select 0, %s6, %s4
  loop: start=0, step=1, limit=4
  $region2: #{upsample_block_forward.7} parent=0 // loop_pre_header
    _
  $region3: #{upsample_block_forward.7} parent=0 // loop_header
    %s9 = sphi 0, %s13
    %p10 = scmp.ge.s32.totalorder %s9, 4
    %s19 = sphi 0, %s21
    %s22 = sphi 0, %s19
    %s23 = sphi 0, %s22
    %s39 = sphi 0, %s23
    %s43 = sphi 0, %s43
    %s45 = sphi 0, %s43
    %s46 = sphi 0, %s45
    %s60 = sphi 0, %s46
    %s64 = sphi 0, %s64
    %s66 = sphi 0, %s64
    %s67 = sphi 0, %s66
    %s81 = sphi 0, %s67
    %s87 = sphi 0, %s89
    %s90 = sphi 0, %s87
    %s91 = sphi 0, %s90
    %s107 = sphi 0, %s91
  $region4: #{upsample_block_forward.7} parent=0 // loop_header_branch
    %12 = sbr.rel (%p10) target = $region8
  $region5: #{upsample_block_forward.7} parent=0 // loop_body
    %s14 = ssub.s32 %s9, 1
    %s15 = ssub.s32 %s9, 2
    %s16 = sadd.s32 %s9, 1
    %s17 = ssub.s32 %s9, %s16
    %p18 = scmp.eq.s32.totalorder %s17, 0
    %s20 = sadd.s32 %s19, 1
    %s21 = scalar_select %p18, %s19, %s20
    %p24 = pneg %p18
    %p25 = scmp.eq.s32.totalorder %s9, 1
    %p26 = por %p24, %p25
    %p27 = scmp.ne.s32.totalorder %s19, %s22
    %p28 = scmp.eq.s32.totalorder %s9, 0
    %p29 = por %p27, %p28
    %p30 = scmp.ne.s32.totalorder %s19, %s22
    %p31 = scmp.eq.s32.totalorder %s14, 1
    %p32 = por %p30, %p31
    %p33 = scmp.ne.s32.totalorder %s22, %s23
    %p34 = scmp.eq.s32.totalorder %s14, 0
    %p35 = por %p33, %p34
    %p36 = scmp.ne.s32.totalorder %s22, %s23
    %p37 = scmp.eq.s32.totalorder %s15, 1
    %p38 = por %p36, %p37
    %p40 = scmp.ne.s32.totalorder %s23, %s39
    %p41 = scmp.eq.s32.totalorder %s15, 0
    %p42 = por %p40, %p41
    %s44 = sadd.s32 %s43, 1
    %p47 = scmp.eq.s32.totalorder %s9, 1
    %p48 = scmp.ne.s32.totalorder %s43, %s45
    %p49 = scmp.eq.s32.totalorder %s9, 0
    %p50 = por %p48, %p49
    %p51 = scmp.ne.s32.totalorder %s43, %s45
    %p52 = scmp.eq.s32.totalorder %s14, 1
    %p53 = por %p51, %p52
    %p54 = scmp.ne.s32.totalorder %s45, %s46
    %p55 = scmp.eq.s32.totalorder %s14, 0
    %p56 = por %p54, %p55
    %p57 = scmp.ne.s32.totalorder %s45, %s46
    %p58 = scmp.eq.s32.totalorder %s15, 1
    %p59 = por %p57, %p58
    %p61 = scmp.ne.s32.totalorder %s46, %s60
    %p62 = scmp.eq.s32.totalorder %s15, 0
    %p63 = por %p61, %p62
    %s65 = sadd.s32 %s64, 1
    %p68 = scmp.eq.s32.totalorder %s9, 1
    %p69 = scmp.ne.s32.totalorder %s64, %s66
    %p70 = scmp.eq.s32.totalorder %s9, 0
    %p71 = por %p69, %p70
    %p72 = scmp.ne.s32.totalorder %s64, %s66
    %p73 = scmp.eq.s32.totalorder %s14, 1
    %p74 = por %p72, %p73
    %p75 = scmp.ne.s32.totalorder %s66, %s67
    %p76 = scmp.eq.s32.totalorder %s14, 0
    %p77 = por %p75, %p76
    %p78 = scmp.ne.s32.totalorder %s66, %s67
    %p79 = scmp.eq.s32.totalorder %s15, 1
    %p80 = por %p78, %p79
    %p82 = scmp.ne.s32.totalorder %s67, %s81
    %p83 = scmp.eq.s32.totalorder %s15, 0
    %p84 = por %p82, %p83
    %s85 = ssub.s32 %s9, %s16
    %p86 = scmp.eq.s32.totalorder %s85, 0
    %s88 = sadd.s32 %s87, 1
    %s89 = scalar_select %p86, %s87, %s88
    %p92 = pneg %p86
    %p93 = scmp.eq.s32.totalorder %s9, 1
    %p94 = por %p92, %p93
    %p95 = scmp.ne.s32.totalorder %s87, %s90
    %p96 = scmp.eq.s32.totalorder %s9, 0
    %p97 = por %p95, %p96
    %p98 = scmp.ne.s32.totalorder %s87, %s90
    %p99 = scmp.eq.s32.totalorder %s14, 1
    %p100 = por %p98, %p99
    %p101 = scmp.ne.s32.totalorder %s90, %s91
    %p102 = scmp.eq.s32.totalorder %s14, 0
    %p103 = por %p101, %p102
    %p104 = scmp.ne.s32.totalorder %s90, %s91
    %p105 = scmp.eq.s32.totalorder %s15, 1
    %p106 = por %p104, %p105
    %p108 = scmp.ne.s32.totalorder %s91, %s107
    %p109 = scmp.eq.s32.totalorder %s15, 0
    %p110 = por %p108, %p109
    %p111 = scmp.le.s32.totalorder 1, %s9
    %p112 = scmp.lt.s32.totalorder %s9, 3
    %p113 = pnand %p111, %p112
    %p114 = pneg %p113
    // Predicated region
    $region9: #{upsample_block_forward.7} parent=5 // pred_check
      _
    $region10: #{upsample_block_forward.7} parent=5 // pred_check_branch
      %116 = sbr.rel (%p113) target = $region12
    $region11: #{upsample_block_forward.7} parent=5 // pred_region
      %s117 = ssub.s32 %s9, 1
      // Predicated region
      $region13: #{upsample_block_forward.7} parent=11 // pred_check
        %p118 = pneg %p56
      $region14: #{upsample_block_forward.7} parent=11 // pred_check_branch
        %120 = sbr.rel (%p118) target = $region16
      $region15: #{upsample_block_forward.7} parent=11 // pred_region
        _
      $region16: #{upsample_block_forward.7} parent=11 // pred_fallthru
        _
      // Predicated region
      $region17: #{upsample_block_forward.7} parent=11 // pred_check
        %p121 = pneg %p77
      $region18: #{upsample_block_forward.7} parent=11 // pred_check_branch
        %123 = sbr.rel (%p121) target = $region20
      $region19: #{upsample_block_forward.7} parent=11 // pred_region
        _
      $region20: #{upsample_block_forward.7} parent=11 // pred_fallthru
        _
    $region12: #{upsample_block_forward.7} parent=5 // pred_fallthru
      _
    %p124 = scmp.lt.s32.totalorder %s9, 2
    // Predicated region
    $region21: #{upsample_block_forward.7} parent=5 // pred_check
      %p125 = pneg %p124
    $region22: #{upsample_block_forward.7} parent=5 // pred_check_branch
      %127 = sbr.rel (%p125) target = $region24
    $region23: #{upsample_block_forward.7} parent=5 // pred_region
      // Predicated region
      $region25: #{upsample_block_forward.7} parent=23 // pred_check
        %p128 = pneg %p29
      $region26: #{upsample_block_forward.7} parent=23 // pred_check_branch
        %130 = sbr.rel (%p128) target = $region28
      $region27: #{upsample_block_forward.7} parent=23 // pred_region
        %s131 = smul.u32 32, %s9
        %p132 = scmp.lt.s32.totalorder %s131, 63
        %s133 = scalar_select %p132, %s131, 63
        %s134 = smul.addr %s133, 4
        %s135 = scalar_lea.vmem %s0, %s134
        %s136 = smul.u32 32, %s9
      $region28: #{upsample_block_forward.7} parent=23 // pred_fallthru
        _
    $region24: #{upsample_block_forward.7} parent=5 // pred_fallthru
      _
    %p137 = scmp.le.s32.totalorder 1, %s9
    %p138 = scmp.lt.s32.totalorder %s9, 3
    %p139 = pnand %p137, %p138
    %p140 = pneg %p139
    // Predicated region
    $region29: #{upsample_block_forward.7} parent=5 // pred_check
      _
    $region30: #{upsample_block_forward.7} parent=5 // pred_check_branch
      %142 = sbr.rel (%p139) target = $region32
    $region31: #{upsample_block_forward.7} parent=5 // pred_region
      %s143 = ssub.s32 %s9, 1
      %s144 = smul.u32 32, %s14
      %p145 = scmp.lt.s32.totalorder %s144, 63
      %s146 = scalar_select %p145, %s144, 63
      %s147 = smul.addr %s146, 4
      %s148 = scalar_lea.vmem %s0, %s147
      %p149 = pneg %p35
      %p150 = pneg %p32
      %p151 = pneg %p56
      %p152 = pneg %p53
      %p153 = pneg %p77
      %p154 = pneg %p74
      %p155 = pneg %p103
      %p156 = pneg %p100
      %s157 = smul.u32 32, %s14
      %p158 = scmp.lt.s32.totalorder %s157, 63
      %s159 = scalar_select %p158, %s157, 63
      %s160 = smul.addr %s159, 8
      %s161 = scalar_lea.vmem %s3, %s160
      %s162 = smul.u32 32, %s14
      %p163 = scmp.lt.s32.totalorder %s162, 63
      %s164 = scalar_select %p163, %s162, 63
      %s165 = smul.addr %s164, 4
      %s166 = scalar_lea.vmem %s0, %s165
      %s167 = smul.u32 32, %s14
      %s168 = smul.u32 32, %s14
      %p169 = scmp.lt.s32.totalorder %s168, 63
      %s170 = scalar_select %p169, %s168, 63
      %s171 = smul.addr %s170, 8
      %s172 = scalar_lea.vmem %s3, %s171
      %s173 = smul.u32 32, %s14
      %v174 = vld [vmem:[%s166] sm:$0xf]
      %v175 = vld [vmem:[%s166 + $0x4] sm:$0xf]
      %v176 = vld [vmem:[%s166 + $0x8] sm:$0xf]
      %v177 = vld [vmem:[%s166 + $0xc] sm:$0xf]
      %v178 = vld [vmem:[%s166 + $0x10] sm:$0xf]
      %v179 = vld [vmem:[%s166 + $0x14] sm:$0xf]
      %v180 = vld [vmem:[%s166 + $0x18] sm:$0xf]
      %v181 = vld [vmem:[%s166 + $0x1c] sm:$0xf]
      %v182 = vld [vmem:[%s166 + $0x20] sm:$0xf]
      %v183 = vld [vmem:[%s166 + $0x24] sm:$0xf]
      %v184 = vld [vmem:[%s166 + $0x28] sm:$0xf]
      %v185 = vld [vmem:[%s166 + $0x2c] sm:$0xf]
      %v186 = vld [vmem:[%s166 + $0x30] sm:$0xf]
      %v187 = vld [vmem:[%s166 + $0x34] sm:$0xf]
      %v188 = vld [vmem:[%s166 + $0x38] sm:$0xf]
      %v189 = vld [vmem:[%s166 + $0x3c] sm:$0xf]
      %v190 = vld [vmem:[%s166 + $0x40] sm:$0xf]
      %v191 = vld [vmem:[%s166 + $0x44] sm:$0xf]
      %v192 = vld [vmem:[%s166 + $0x48] sm:$0xf]
      %v193 = vld [vmem:[%s166 + $0x4c] sm:$0xf]
      %v194 = vld [vmem:[%s166 + $0x50] sm:$0xf]
      %v195 = vld [vmem:[%s166 + $0x54] sm:$0xf]
      %v196 = vld [vmem:[%s166 + $0x58] sm:$0xf]
      %v197 = vld [vmem:[%s166 + $0x5c] sm:$0xf]
      %v198 = vld [vmem:[%s166 + $0x60] sm:$0xf]
      %v199 = vld [vmem:[%s166 + $0x64] sm:$0xf]
      %v200 = vld [vmem:[%s166 + $0x68] sm:$0xf]
      %v201 = vld [vmem:[%s166 + $0x6c] sm:$0xf]
      %v202 = vld [vmem:[%s166 + $0x70] sm:$0xf]
      %v203 = vld [vmem:[%s166 + $0x74] sm:$0xf]
      %v204 = vld [vmem:[%s166 + $0x78] sm:$0xf]
      %v205 = vld [vmem:[%s166 + $0x7c] sm:$0xf]
      %v206 = vunpack.c.l.bf16 %v174
      %v207 = vunpack.c.l.bf16 %v175
      %v208 = vunpack.c.l.bf16 %v176
      %v209 = vunpack.c.l.bf16 %v177
      %v210 = vunpack.c.l.bf16 %v178
      %v211 = vunpack.c.l.bf16 %v179
      %v212 = vunpack.c.l.bf16 %v180
      %v213 = vunpack.c.l.bf16 %v181
      %v214 = vunpack.c.l.bf16 %v182
      %v215 = vunpack.c.l.bf16 %v183
      %v216 = vunpack.c.l.bf16 %v184
      %v217 = vunpack.c.l.bf16 %v185
      %v218 = vunpack.c.l.bf16 %v186
      %v219 = vunpack.c.l.bf16 %v187
      %v220 = vunpack.c.l.bf16 %v188
      %v221 = vunpack.c.l.bf16 %v189
      %v222 = vunpack.c.l.bf16 %v190
      %v223 = vunpack.c.l.bf16 %v191
      %v224 = vunpack.c.l.bf16 %v192
      %v225 = vunpack.c.l.bf16 %v193
      %v226 = vunpack.c.l.bf16 %v194
      %v227 = vunpack.c.l.bf16 %v195
      %v228 = vunpack.c.l.bf16 %v196
      %v229 = vunpack.c.l.bf16 %v197
      %v230 = vunpack.c.l.bf16 %v198
      %v231 = vunpack.c.l.bf16 %v199
      %v232 = vunpack.c.l.bf16 %v200
      %v233 = vunpack.c.l.bf16 %v201
      %v234 = vunpack.c.l.bf16 %v202
      %v235 = vunpack.c.l.bf16 %v203
      %v236 = vunpack.c.l.bf16 %v204
      %v237 = vunpack.c.l.bf16 %v205
      %v238 = vld [vmem:[%s1] sm:$0x1]
      %v240 = vlaneseq
      %v241 = vshrl.u32 %v240, 7
      %v242 = vsub.s32 0, %v241
      %v243 = vrot.slane %v238, %v242
      %v245 = vmul.f32 %v206, %v243
      %v246 = vmul.f32 %v207, %v243
      %v247 = vmul.f32 %v208, %v243
      %v248 = vmul.f32 %v209, %v243
      %v249 = vmul.f32 %v210, %v243
      %v250 = vmul.f32 %v211, %v243
      %v251 = vmul.f32 %v212, %v243
      %v252 = vmul.f32 %v213, %v243
      %v253 = vmul.f32 %v214, %v243
      %v254 = vmul.f32 %v215, %v243
      %v255 = vmul.f32 %v216, %v243
      %v256 = vmul.f32 %v217, %v243
      %v257 = vmul.f32 %v218, %v243
      %v258 = vmul.f32 %v219, %v243
      %v259 = vmul.f32 %v220, %v243
      %v260 = vmul.f32 %v221, %v243
      %v261 = vmul.f32 %v222, %v243
      %v262 = vmul.f32 %v223, %v243
      %v263 = vmul.f32 %v224, %v243
      %v264 = vmul.f32 %v225, %v243
      %v265 = vmul.f32 %v226, %v243
      %v266 = vmul.f32 %v227, %v243
      %v267 = vmul.f32 %v228, %v243
      %v268 = vmul.f32 %v229, %v243
      %v269 = vmul.f32 %v230, %v243
      %v270 = vmul.f32 %v231, %v243
      %v271 = vmul.f32 %v232, %v243
      %v272 = vmul.f32 %v233, %v243
      %v273 = vmul.f32 %v234, %v243
      %v274 = vmul.f32 %v235, %v243
      %v275 = vmul.f32 %v236, %v243
      %v276 = vmul.f32 %v237, %v243
      %v277 = vld [vmem:[%s2] sm:$0x1]
      %v279 = vlaneseq
      %v280 = vshrl.u32 %v279, 7
      %v281 = vsub.s32 0, %v280
      %v282 = vrot.slane %v277, %v281
      %v284 = vadd.f32 %v245, %v282
      %v285 = vadd.f32 %v246, %v282
      %v286 = vadd.f32 %v247, %v282
      %v287 = vadd.f32 %v248, %v282
      %v288 = vadd.f32 %v249, %v282
      %v289 = vadd.f32 %v250, %v282
      %v290 = vadd.f32 %v251, %v282
      %v291 = vadd.f32 %v252, %v282
      %v292 = vadd.f32 %v253, %v282
      %v293 = vadd.f32 %v254, %v282
      %v294 = vadd.f32 %v255, %v282
      %v295 = vadd.f32 %v256, %v282
      %v296 = vadd.f32 %v257, %v282
      %v297 = vadd.f32 %v258, %v282
      %v298 = vadd.f32 %v259, %v282
      %v299 = vadd.f32 %v260, %v282
      %v300 = vadd.f32 %v261, %v282
      %v301 = vadd.f32 %v262, %v282
      %v302 = vadd.f32 %v263, %v282
      %v303 = vadd.f32 %v264, %v282
      %v304 = vadd.f32 %v265, %v282
      %v305 = vadd.f32 %v266, %v282
      %v306 = vadd.f32 %v267, %v282
      %v307 = vadd.f32 %v268, %v282
      %v308 = vadd.f32 %v269, %v282
      %v309 = vadd.f32 %v270, %v282
      %v310 = vadd.f32 %v271, %v282
      %v311 = vadd.f32 %v272, %v282
      %v312 = vadd.f32 %v273, %v282
      %v313 = vadd.f32 %v274, %v282
      %v314 = vadd.f32 %v275, %v282
      %v315 = vadd.f32 %v276, %v282
      %v316 = vmax.f32 %v284, 0.0
      %v317 = vmax.f32 %v285, 0.0
      %v318 = vmax.f32 %v286, 0.0
      %v319 = vmax.f32 %v287, 0.0
      %v320 = vmax.f32 %v288, 0.0
      %v321 = vmax.f32 %v289, 0.0
      %v322 = vmax.f32 %v290, 0.0
      %v323 = vmax.f32 %v291, 0.0
      %v324 = vmax.f32 %v292, 0.0
      %v325 = vmax.f32 %v293, 0.0
      %v326 = vmax.f32 %v294, 0.0
      %v327 = vmax.f32 %v295, 0.0
      %v328 = vmax.f32 %v296, 0.0
      %v329 = vmax.f32 %v297, 0.0
      %v330 = vmax.f32 %v298, 0.0
      %v331 = vmax.f32 %v299, 0.0
      %v332 = vmax.f32 %v300, 0.0
      %v333 = vmax.f32 %v301, 0.0
      %v334 = vmax.f32 %v302, 0.0
      %v335 = vmax.f32 %v303, 0.0
      %v336 = vmax.f32 %v304, 0.0
      %v337 = vmax.f32 %v305, 0.0
      %v338 = vmax.f32 %v306, 0.0
      %v339 = vmax.f32 %v307, 0.0
      %v340 = vmax.f32 %v308, 0.0
      %v341 = vmax.f32 %v309, 0.0
      %v342 = vmax.f32 %v310, 0.0
      %v343 = vmax.f32 %v311, 0.0
      %v344 = vmax.f32 %v312, 0.0
      %v345 = vmax.f32 %v313, 0.0
      %v346 = vmax.f32 %v314, 0.0
      %v347 = vmax.f32 %v315, 0.0
      %vm348 = vcmask 130048
      %349 = vst.msk [vmem:[%s172] sm:$0xff] %vm348, %v316
      %350 = vst.msk [vmem:[%s172 + $0x8] sm:$0xff] %vm348, %v317
      %351 = vst.msk [vmem:[%s172 + $0x10] sm:$0xff] %vm348, %v318
      %352 = vst.msk [vmem:[%s172 + $0x18] sm:$0xff] %vm348, %v319
      %353 = vst.msk [vmem:[%s172 + $0x20] sm:$0xff] %vm348, %v320
      %354 = vst.msk [vmem:[%s172 + $0x28] sm:$0xff] %vm348, %v321
      %355 = vst.msk [vmem:[%s172 + $0x30] sm:$0xff] %vm348, %v322
      %356 = vst.msk [vmem:[%s172 + $0x38] sm:$0xff] %vm348, %v323
      %357 = vst.msk [vmem:[%s172 + $0x40] sm:$0xff] %vm348, %v324
      %358 = vst.msk [vmem:[%s172 + $0x48] sm:$0xff] %vm348, %v325
      %359 = vst.msk [vmem:[%s172 + $0x50] sm:$0xff] %vm348, %v326
      %360 = vst.msk [vmem:[%s172 + $0x58] sm:$0xff] %vm348, %v327
      %361 = vst.msk [vmem:[%s172 + $0x60] sm:$0xff] %vm348, %v328
      %362 = vst.msk [vmem:[%s172 + $0x68] sm:$0xff] %vm348, %v329
      %363 = vst.msk [vmem:[%s172 + $0x70] sm:$0xff] %vm348, %v330
      %364 = vst.msk [vmem:[%s172 + $0x78] sm:$0xff] %vm348, %v331
      %365 = vst.msk [vmem:[%s172 + $0x80] sm:$0xff] %vm348, %v332
      %366 = vst.msk [vmem:[%s172 + $0x88] sm:$0xff] %vm348, %v333
      %367 = vst.msk [vmem:[%s172 + $0x90] sm:$0xff] %vm348, %v334
      %368 = vst.msk [vmem:[%s172 + $0x98] sm:$0xff] %vm348, %v335
      %369 = vst.msk [vmem:[%s172 + $0xa0] sm:$0xff] %vm348, %v336
      %370 = vst.msk [vmem:[%s172 + $0xa8] sm:$0xff] %vm348, %v337
      %371 = vst.msk [vmem:[%s172 + $0xb0] sm:$0xff] %vm348, %v338
      %372 = vst.msk [vmem:[%s172 + $0xb8] sm:$0xff] %vm348, %v339
      %373 = vst.msk [vmem:[%s172 + $0xc0] sm:$0xff] %vm348, %v340
      %374 = vst.msk [vmem:[%s172 + $0xc8] sm:$0xff] %vm348, %v341
      %375 = vst.msk [vmem:[%s172 + $0xd0] sm:$0xff] %vm348, %v342
      %376 = vst.msk [vmem:[%s172 + $0xd8] sm:$0xff] %vm348, %v343
      %377 = vst.msk [vmem:[%s172 + $0xe0] sm:$0xff] %vm348, %v344
      %378 = vst.msk [vmem:[%s172 + $0xe8] sm:$0xff] %vm348, %v345
      %379 = vst.msk [vmem:[%s172 + $0xf0] sm:$0xff] %vm348, %v346
      %380 = vst.msk [vmem:[%s172 + $0xf8] sm:$0xff] %vm348, %v347
      %s381 = smul.u32 32, %s14
      %p382 = scmp.lt.s32.totalorder %s381, 63
      %s383 = scalar_select %p382, %s381, 63
      %s384 = smul.addr %s383, 8
      %s385 = scalar_lea.vmem %s3, %s384
      // Predicated region
      $region33: #{upsample_block_forward.7} parent=31 // pred_check
        %p386 = pneg %p100
      $region34: #{upsample_block_forward.7} parent=31 // pred_check_branch
        %388 = sbr.rel (%p386) target = $region36
      $region35: #{upsample_block_forward.7} parent=31 // pred_region
        %s389 = smul.u32 32, %s14
      $region36: #{upsample_block_forward.7} parent=31 // pred_fallthru
        _
    $region32: #{upsample_block_forward.7} parent=5 // pred_fallthru
      _
    %p390 = scmp.le.s32.totalorder 2, %s9
    // Predicated region
    $region37: #{upsample_block_forward.7} parent=5 // pred_check
      %p391 = pneg %p390
    $region38: #{upsample_block_forward.7} parent=5 // pred_check_branch
      %393 = sbr.rel (%p391) target = $region40
    $region39: #{upsample_block_forward.7} parent=5 // pred_region
      %s394 = ssub.s32 %s9, 2
      // Predicated region
      $region41: #{upsample_block_forward.7} parent=39 // pred_check
        %p395 = pneg %p106
      $region42: #{upsample_block_forward.7} parent=39 // pred_check_branch
        %397 = sbr.rel (%p395) target = $region44
      $region43: #{upsample_block_forward.7} parent=39 // pred_region
        %s398 = smul.u32 32, %s15
        %p399 = scmp.lt.s32.totalorder %s398, 63
        %s400 = scalar_select %p399, %s398, 63
        %s401 = smul.addr %s400, 8
        %s402 = scalar_lea.vmem %s3, %s401
      $region44: #{upsample_block_forward.7} parent=39 // pred_fallthru
        _
    $region40: #{upsample_block_forward.7} parent=5 // pred_fallthru
      _
  $region6: #{upsample_block_forward.7} parent=0 // loop_footer
    %s13 = sadd.s32 1, %s9
  $region7: #{upsample_block_forward.7} parent=0 // loop_footer_branch
    %8 = sbr.rel target = $region3
  $region8: #{upsample_block_forward.7} parent=0 // loop_exit
    _

// kernel: upsample_block_forward.5
$region0: #{upsample_block_forward.5}
  #allocation0 [shape = 'u32[]', space=smem, size = 0x4, offset = 0x4, fixed_abs, tag = 'smem constant byte address 0x4 - core index']
  #allocation1 [shape = 'u32[144,128]{1,0:T(1,128)}', space=vmem, size = 0x12000, scoped, tag = 'internal scratch']
  #allocation2 [shape = 'bf16[16,16,144]{2,1,0:T(8,128)(2,1)}', space=vmem, size = 0x20000, scoped, tag = 'scratch operand']
  %s0 = inlined_call_operand.vmem [shape: bf16[2,1,18,18,16], index: 0, kind: input, shape index: {}]
  %s1 = inlined_call_operand.vmem [shape: bf16[144,128], index: 1, kind: input, shape index: {}]
  %s2 = inlined_call_operand.vmem [shape: f32[1,16], index: 2, kind: input, shape index: {}]
  %s3 = inlined_call_operand.vmem [shape: f32[1,16], index: 3, kind: input, shape index: {}]
  %s4 = inlined_call_operand.vmem [shape: bf16[512,16], index: 4, kind: output, shape index: {0}]
  %s5 = inlined_call_operand.vmem [shape: f32[2,1,128], index: 5, kind: output, shape index: {1}]
  %s6 = inlined_call_operand.vmem [shape: f32[2,1,128], index: 6, kind: output, shape index: {2}]
  %7 = xla_tuple %s4, %s5, %s6
  %s8 = sld [smem:[#allocation0]]
  $region65: #{upsample_block_forward.5} parent=0
    _
  %s10 = ssub.s32 1, %s8
  %s11 = scalar_select 0, %s10, %s8
  loop: start=0, step=1, limit=4
  $region2: #{upsample_block_forward.5} parent=0 // loop_pre_header
    _
  $region3: #{upsample_block_forward.5} parent=0 // loop_header
    %s13 = sphi 0, %s17
    %p14 = scmp.ge.s32.totalorder %s13, 4
    %s20 = sphi 0, %s32
    %s21 = sphi 0, %s28
    %s22 = sphi 0, %s20
    %s23 = sphi 0, %s21
    %s24 = sphi 0, %s22
    %s25 = sphi 0, %s23
    %s37 = sphi 0, %s39
    %s40 = sphi 0, %s37
    %s41 = sphi 0, %s40
    %s57 = sphi 0, %s41
    %s61 = sphi 0, %s61
    %s63 = sphi 0, %s61
    %s64 = sphi 0, %s63
    %s78 = sphi 0, %s64
    %s82 = sphi 0, %s82
    %s84 = sphi 0, %s82
    %s85 = sphi 0, %s84
    %s99 = sphi 0, %s85
    %s103 = sphi 0, %s103
    %s105 = sphi 0, %s103
    %s106 = sphi 0, %s105
    %s120 = sphi 0, %s106
    %s128 = sphi 0, %s130
    %s131 = sphi 0, %s128
    %s132 = sphi 0, %s131
    %s148 = sphi 0, %s132
    %s156 = sphi 0, %s158
    %s159 = sphi 0, %s156
    %s160 = sphi 0, %s159
    %s176 = sphi 0, %s160
    %s184 = sphi 0, %s186
    %s187 = sphi 0, %s184
    %s188 = sphi 0, %s187
    %s204 = sphi 0, %s188
  $region4: #{upsample_block_forward.5} parent=0 // loop_header_branch
    %16 = sbr.rel (%p14) target = $region8
  $region5: #{upsample_block_forward.5} parent=0 // loop_body
    %s18 = ssub.s32 %s13, 1
    %s19 = ssub.s32 %s13, 2
    %s26 = sadd.s32 1, %s21
    %p27 = scmp.ge.s32.totalorder %s26, 1
    %s28 = scalar_select %p27, 0, %s26
    %s29 = sadd.s32 1, %s20
    %s30 = scalar_select %p27, %s29, %s20
    %p31 = scmp.ge.s32.totalorder %s30, 2
    %s32 = scalar_select %p31, 0, %s30
    %s33 = ssub.s32 %s20, %s32
    %s34 = ssub.s32 %s21, %s28
    %s35 = sor.u32 %s33, %s34
    %p36 = scmp.eq.s32.totalorder %s35, 0
    %s38 = sadd.s32 %s37, 1
    %s39 = scalar_select %p36, %s37, %s38
    %p42 = pneg %p36
    %p43 = scmp.eq.s32.totalorder %s13, 1
    %p44 = por %p42, %p43
    %p45 = scmp.ne.s32.totalorder %s37, %s40
    %p46 = scmp.eq.s32.totalorder %s13, 0
    %p47 = por %p45, %p46
    %p48 = scmp.ne.s32.totalorder %s37, %s40
    %p49 = scmp.eq.s32.totalorder %s18, 1
    %p50 = por %p48, %p49
    %p51 = scmp.ne.s32.totalorder %s40, %s41
    %p52 = scmp.eq.s32.totalorder %s18, 0
    %p53 = por %p51, %p52
    %p54 = scmp.ne.s32.totalorder %s40, %s41
    %p55 = scmp.eq.s32.totalorder %s19, 1
    %p56 = por %p54, %p55
    %p58 = scmp.ne.s32.totalorder %s41, %s57
    %p59 = scmp.eq.s32.totalorder %s19, 0
    %p60 = por %p58, %p59
    %s62 = sadd.s32 %s61, 1
    %p65 = scmp.eq.s32.totalorder %s13, 1
    %p66 = scmp.ne.s32.totalorder %s61, %s63
    %p67 = scmp.eq.s32.totalorder %s13, 0
    %p68 = por %p66, %p67
    %p69 = scmp.ne.s32.totalorder %s61, %s63
    %p70 = scmp.eq.s32.totalorder %s18, 1
    %p71 = por %p69, %p70
    %p72 = scmp.ne.s32.totalorder %s63, %s64
    %p73 = scmp.eq.s32.totalorder %s18, 0
    %p74 = por %p72, %p73
    %p75 = scmp.ne.s32.totalorder %s63, %s64
    %p76 = scmp.eq.s32.totalorder %s19, 1
    %p77 = por %p75, %p76
    %p79 = scmp.ne.s32.totalorder %s64, %s78
    %p80 = scmp.eq.s32.totalorder %s19, 0
    %p81 = por %p79, %p80
    %s83 = sadd.s32 %s82, 1
    %p86 = scmp.eq.s32.totalorder %s13, 1
    %p87 = scmp.ne.s32.totalorder %s82, %s84
    %p88 = scmp.eq.s32.totalorder %s13, 0
    %p89 = por %p87, %p88
    %p90 = scmp.ne.s32.totalorder %s82, %s84
    %p91 = scmp.eq.s32.totalorder %s18, 1
    %p92 = por %p90, %p91
    %p93 = scmp.ne.s32.totalorder %s84, %s85
    %p94 = scmp.eq.s32.totalorder %s18, 0
    %p95 = por %p93, %p94
    %p96 = scmp.ne.s32.totalorder %s84, %s85
    %p97 = scmp.eq.s32.totalorder %s19, 1
    %p98 = por %p96, %p97
    %p100 = scmp.ne.s32.totalorder %s85, %s99
    %p101 = scmp.eq.s32.totalorder %s19, 0
    %p102 = por %p100, %p101
    %s104 = sadd.s32 %s103, 1
    %p107 = scmp.eq.s32.totalorder %s13, 1
    %p108 = scmp.ne.s32.totalorder %s103, %s105
    %p109 = scmp.eq.s32.totalorder %s13, 0
    %p110 = por %p108, %p109
    %p111 = scmp.ne.s32.totalorder %s103, %s105
    %p112 = scmp.eq.s32.totalorder %s18, 1
    %p113 = por %p111, %p112
    %p114 = scmp.ne.s32.totalorder %s105, %s106
    %p115 = scmp.eq.s32.totalorder %s18, 0
    %p116 = por %p114, %p115
    %p117 = scmp.ne.s32.totalorder %s105, %s106
    %p118 = scmp.eq.s32.totalorder %s19, 1
    %p119 = por %p117, %p118
    %p121 = scmp.ne.s32.totalorder %s106, %s120
    %p122 = scmp.eq.s32.totalorder %s19, 0
    %p123 = por %p121, %p122
    %s124 = sadd.s32 %s20, %s21
    %s125 = sadd.s32 %s32, %s28
    %s126 = ssub.s32 %s124, %s125
    %p127 = scmp.eq.s32.totalorder %s126, 0
    %s129 = sadd.s32 %s128, 1
    %s130 = scalar_select %p127, %s128, %s129
    %p133 = pneg %p127
    %p134 = scmp.eq.s32.totalorder %s13, 1
    %p135 = por %p133, %p134
    %p136 = scmp.ne.s32.totalorder %s128, %s131
    %p137 = scmp.eq.s32.totalorder %s13, 0
    %p138 = por %p136, %p137
    %p139 = scmp.ne.s32.totalorder %s128, %s131
    %p140 = scmp.eq.s32.totalorder %s18, 1
    %p141 = por %p139, %p140
    %p142 = scmp.ne.s32.totalorder %s131, %s132
    %p143 = scmp.eq.s32.totalorder %s18, 0
    %p144 = por %p142, %p143
    %p145 = scmp.ne.s32.totalorder %s131, %s132
    %p146 = scmp.eq.s32.totalorder %s19, 1
    %p147 = por %p145, %p146
    %p149 = scmp.ne.s32.totalorder %s132, %s148
    %p150 = scmp.eq.s32.totalorder %s19, 0
    %p151 = por %p149, %p150
    %s152 = sadd.s32 %s20, %s21
    %s153 = sadd.s32 %s32, %s28
    %s154 = ssub.s32 %s152, %s153
    %p155 = scmp.eq.s32.totalorder %s154, 0
    %s157 = sadd.s32 %s156, 1
    %s158 = scalar_select %p155, %s156, %s157
    %p161 = pneg %p155
    %p162 = scmp.eq.s32.totalorder %s13, 1
    %p163 = por %p161, %p162
    %p164 = scmp.ne.s32.totalorder %s156, %s159
    %p165 = scmp.eq.s32.totalorder %s13, 0
    %p166 = por %p164, %p165
    %p167 = scmp.ne.s32.totalorder %s156, %s159
    %p168 = scmp.eq.s32.totalorder %s18, 1
    %p169 = por %p167, %p168
    %p170 = scmp.ne.s32.totalorder %s159, %s160
    %p171 = scmp.eq.s32.totalorder %s18, 0
    %p172 = por %p170, %p171
    %p173 = scmp.ne.s32.totalorder %s159, %s160
    %p174 = scmp.eq.s32.totalorder %s19, 1
    %p175 = por %p173, %p174
    %p177 = scmp.ne.s32.totalorder %s160, %s176
    %p178 = scmp.eq.s32.totalorder %s19, 0
    %p179 = por %p177, %p178
    %s180 = sadd.s32 %s20, %s21
    %s181 = sadd.s32 %s32, %s28
    %s182 = ssub.s32 %s180, %s181
    %p183 = scmp.eq.s32.totalorder %s182, 0
    %s185 = sadd.s32 %s184, 1
    %s186 = scalar_select %p183, %s184, %s185
    %p189 = pneg %p183
    %p190 = scmp.eq.s32.totalorder %s13, 1
    %p191 = por %p189, %p190
    %p192 = scmp.ne.s32.totalorder %s184, %s187
    %p193 = scmp.eq.s32.totalorder %s13, 0
    %p194 = por %p192, %p193
    %p195 = scmp.ne.s32.totalorder %s184, %s187
    %p196 = scmp.eq.s32.totalorder %s18, 1
    %p197 = por %p195, %p196
    %p198 = scmp.ne.s32.totalorder %s187, %s188
    %p199 = scmp.eq.s32.totalorder %s18, 0
    %p200 = por %p198, %p199
    %p201 = scmp.ne.s32.totalorder %s187, %s188
    %p202 = scmp.eq.s32.totalorder %s19, 1
    %p203 = por %p201, %p202
    %p205 = scmp.ne.s32.totalorder %s188, %s204
    %p206 = scmp.eq.s32.totalorder %s19, 0
    %p207 = por %p205, %p206
    %p208 = scmp.le.s32.totalorder 1, %s13
    %p209 = scmp.lt.s32.totalorder %s13, 3
    %p210 = pnand %p208, %p209
    %p211 = pneg %p210
    // Predicated region
    $region9: #{upsample_block_forward.5} parent=5 // pred_check
      _
    $region10: #{upsample_block_forward.5} parent=5 // pred_check_branch
      %213 = sbr.rel (%p210) target = $region12
    $region11: #{upsample_block_forward.5} parent=5 // pred_region
      %s214 = ssub.s32 %s13, 1
      // Predicated region
      $region13: #{upsample_block_forward.5} parent=11 // pred_check
        %p215 = pneg %p74
      $region14: #{upsample_block_forward.5} parent=11 // pred_check_branch
        %217 = sbr.rel (%p215) target = $region16
      $region15: #{upsample_block_forward.5} parent=11 // pred_region
        _
      $region16: #{upsample_block_forward.5} parent=11 // pred_fallthru
        _
      // Predicated region
      $region17: #{upsample_block_forward.5} parent=11 // pred_check
        %p218 = pneg %p95
      $region18: #{upsample_block_forward.5} parent=11 // pred_check_branch
        %220 = sbr.rel (%p218) target = $region20
      $region19: #{upsample_block_forward.5} parent=11 // pred_region
        _
      $region20: #{upsample_block_forward.5} parent=11 // pred_fallthru
        _
      // Predicated region
      $region21: #{upsample_block_forward.5} parent=11 // pred_check
        %p221 = pneg %p116
      $region22: #{upsample_block_forward.5} parent=11 // pred_check_branch
        %223 = sbr.rel (%p221) target = $region24
      $region23: #{upsample_block_forward.5} parent=11 // pred_region
        _
      $region24: #{upsample_block_forward.5} parent=11 // pred_fallthru
        _
    $region12: #{upsample_block_forward.5} parent=5 // pred_fallthru
      _
    %p224 = scmp.lt.s32.totalorder %s13, 2
    // Predicated region
    $region25: #{upsample_block_forward.5} parent=5 // pred_check
      %p225 = pneg %p224
    $region26: #{upsample_block_forward.5} parent=5 // pred_check_branch
      %227 = sbr.rel (%p225) target = $region28
    $region27: #{upsample_block_forward.5} parent=5 // pred_region
      // Predicated region
      $region29: #{upsample_block_forward.5} parent=27 // pred_check
        %p228 = pneg %p47
      $region30: #{upsample_block_forward.5} parent=27 // pred_check_branch
        %230 = sbr.rel (%p228) target = $region32
      $region31: #{upsample_block_forward.5} parent=27 // pred_region
        %p231 = scmp.lt.s32.totalorder %s20, 1
        %s232 = scalar_select %p231, %s20, 1
        %p233 = scmp.lt.s32.totalorder %s21, 0
        %s234 = scalar_select %p233, %s21, 0
        %s235 = smul.addr %s234, 54
        %s236 = smul.addr %s232, 54
        %s237 = sadd.s32 %s235, %s236
        %s238 = smul.addr %s237, 4
        %s239 = scalar_lea.vmem %s0, %s238
      $region32: #{upsample_block_forward.5} parent=27 // pred_fallthru
        _
    $region28: #{upsample_block_forward.5} parent=5 // pred_fallthru
      _
    %p240 = scmp.le.s32.totalorder 1, %s13
    %p241 = scmp.lt.s32.totalorder %s13, 3
    %p242 = pnand %p240, %p241
    %p243 = pneg %p242
    // Predicated region
    $region33: #{upsample_block_forward.5} parent=5 // pred_check
      _
    $region34: #{upsample_block_forward.5} parent=5 // pred_check_branch
      %245 = sbr.rel (%p242) target = $region36
    $region35: #{upsample_block_forward.5} parent=5 // pred_region
      %s246 = ssub.s32 %s13, 1
      %p247 = scmp.lt.s32.totalorder %s22, 1
      %s248 = scalar_select %p247, %s22, 1
      %p249 = scmp.lt.s32.totalorder %s23, 0
      %s250 = scalar_select %p249, %s23, 0
      %s251 = smul.addr %s250, 54
      %s252 = smul.addr %s248, 54
      %s253 = sadd.s32 %s251, %s252
      %s254 = smul.addr %s253, 4
      %s255 = scalar_lea.vmem %s0, %s254
      %p256 = pneg %p53
      %p257 = pneg %p50
      %p258 = pneg %p74
      %p259 = pneg %p71
      %p260 = pneg %p95
      %p261 = pneg %p92
      %p262 = pneg %p116
      %p263 = pneg %p113
      %p264 = pneg %p144
      %p265 = pneg %p141
      %s266 = sadd.s32 %s22, %s23
      %s267 = smul.u32 32, %s266
      %p268 = scmp.lt.s32.totalorder %s267, 63
      %s269 = scalar_select %p268, %s267, 63
      %s270 = smul.addr %s269, 4
      %s271 = scalar_lea.vmem %s4, %s270
      %p272 = pneg %p172
      %p273 = pneg %p169
      %s274 = sadd.s32 %s22, %s23
      %p275 = scmp.lt.s32.totalorder %s274, 1
      %s276 = scalar_select %p275, %s274, 1
      %s277 = scalar_lea.vmem %s5, %s276
      %p278 = pneg %p200
      %p279 = pneg %p197
      %s280 = sadd.s32 %s22, %s23
      %p281 = scmp.lt.s32.totalorder %s280, 1
      %s282 = scalar_select %p281, %s280, 1
      %s283 = scalar_lea.vmem %s6, %s282
      %p284 = scmp.lt.s32.totalorder %s22, 1
      %s285 = scalar_select %p284, %s22, 1
      %p286 = scmp.lt.s32.totalorder %s23, 0
      %s287 = scalar_select %p286, %s23, 0
      %s288 = smul.addr %s287, 54
      %s289 = smul.addr %s285, 54
      %s290 = sadd.s32 %s288, %s289
      %s291 = smul.addr %s290, 4
      %s292 = scalar_lea.vmem %s0, %s291
      %s293 = sadd.s32 %s22, %s23
      %s294 = smul.u32 32, %s293
      %p295 = scmp.lt.s32.totalorder %s294, 63
      %s296 = scalar_select %p295, %s294, 63
      %s297 = smul.addr %s296, 4
      %s298 = scalar_lea.vmem %s4, %s297
      %s299 = sadd.s32 %s22, %s23
      %s300 = smul.u32 32, %s299
      %s301 = sadd.s32 %s22, %s23
      %p302 = scmp.lt.s32.totalorder %s301, 1
      %s303 = scalar_select %p302, %s301, 1
      %s304 = scalar_lea.vmem %s5, %s303
      %s305 = sadd.s32 %s22, %s23
      %s306 = sadd.s32 %s22, %s23
      %p307 = scmp.lt.s32.totalorder %s306, 1
      %s308 = scalar_select %p307, %s306, 1
      %s309 = scalar_lea.vmem %s6, %s308
      %s310 = sadd.s32 %s22, %s23
      %v312 = vld [vmem:[%s292] sm:$0xf]
      %v313 = vld [vmem:[%s292 + $0x4] sm:$0xf]
      %v314 = vld [vmem:[%s292 + $0x8] sm:$0x1]
      %v315 = vld [vmem:[%s292 + $0xc] sm:$0xf]
      %v316 = vld [vmem:[%s292 + $0x10] sm:$0xf]
      %v317 = vld [vmem:[%s292 + $0x14] sm:$0x1]
      %v318 = vld [vmem:[%s292 + $0x18] sm:$0xf]
      %v319 = vld [vmem:[%s292 + $0x1c] sm:$0xf]
      %v320 = vld [vmem:[%s292 + $0x20] sm:$0x1]
      %v321 = vld [vmem:[%s292 + $0x24] sm:$0xf]
      %v322 = vld [vmem:[%s292 + $0x28] sm:$0xf]
      %v323 = vld [vmem:[%s292 + $0x2c] sm:$0x1]
      %v324 = vld [vmem:[%s292 + $0x30] sm:$0xf]
      %v325 = vld [vmem:[%s292 + $0x34] sm:$0xf]
      %v326 = vld [vmem:[%s292 + $0x38] sm:$0x1]
      %v327 = vld [vmem:[%s292 + $0x3c] sm:$0xf]
      %v328 = vld [vmem:[%s292 + $0x40] sm:$0xf]
      %v329 = vld [vmem:[%s292 + $0x44] sm:$0x1]
      %v330 = vld [vmem:[%s292 + $0x48] sm:$0xf]
      %v331 = vld [vmem:[%s292 + $0x4c] sm:$0xf]
      %v332 = vld [vmem:[%s292 + $0x50] sm:$0x1]
      %v333 = vld [vmem:[%s292 + $0x54] sm:$0xf]
      %v334 = vld [vmem:[%s292 + $0x58] sm:$0xf]
      %v335 = vld [vmem:[%s292 + $0x5c] sm:$0x1]
      %v336 = vld [vmem:[%s292 + $0x60] sm:$0xf]
      %v337 = vld [vmem:[%s292 + $0x64] sm:$0xf]
      %v338 = vld [vmem:[%s292 + $0x68] sm:$0x1]
      %v339 = vld [vmem:[%s292 + $0x6c] sm:$0xf]
      %v340 = vld [vmem:[%s292 + $0x70] sm:$0xf]
      %v341 = vld [vmem:[%s292 + $0x74] sm:$0x1]
      %v342 = vld [vmem:[%s292 + $0x78] sm:$0xf]
      %v343 = vld [vmem:[%s292 + $0x7c] sm:$0xf]
      %v344 = vld [vmem:[%s292 + $0x80] sm:$0x1]
      %v345 = vld [vmem:[%s292 + $0x84] sm:$0xf]
      %v346 = vld [vmem:[%s292 + $0x88] sm:$0xf]
      %v347 = vld [vmem:[%s292 + $0x8c] sm:$0x1]
      %v348 = vld [vmem:[%s292 + $0x90] sm:$0xf]
      %v349 = vld [vmem:[%s292 + $0x94] sm:$0xf]
      %v350 = vld [vmem:[%s292 + $0x98] sm:$0x1]
      %v351 = vld [vmem:[%s292 + $0x9c] sm:$0xf]
      %v352 = vld [vmem:[%s292 + $0xa0] sm:$0xf]
      %v353 = vld [vmem:[%s292 + $0xa4] sm:$0x1]
      %v354 = vld [vmem:[%s292 + $0xa8] sm:$0xf]
      %v355 = vld [vmem:[%s292 + $0xac] sm:$0xf]
      %v356 = vld [vmem:[%s292 + $0xb0] sm:$0x1]
      %v357 = vld [vmem:[%s292 + $0xb4] sm:$0xf]
      %v358 = vld [vmem:[%s292 + $0xb8] sm:$0xf]
      %v359 = vld [vmem:[%s292 + $0xbc] sm:$0x1]
      %v360 = vld [vmem:[%s292 + $0xc0] sm:$0xf]
      %v361 = vld [vmem:[%s292 + $0xc4] sm:$0xf]
      %v362 = vld [vmem:[%s292 + $0xc8] sm:$0x1]
      %v363 = vld [vmem:[%s292 + $0xcc] sm:$0xf]
      %v364 = vld [vmem:[%s292 + $0xd0] sm:$0xf]
      %v365 = vld [vmem:[%s292 + $0xd4] sm:$0x1]
      %vm366 = vcmask 125952
      %367 = vst.msk [vmem:[#allocation2] sm:$0xf] %vm366, %v312
      %368 = vst.msk [vmem:[#allocation2 + $0x8] sm:$0xf] %vm366, %v313
      %369 = vst.msk [vmem:[#allocation2 + $0x10] sm:$0xf] %vm366, %v315
      %370 = vst.msk [vmem:[#allocation2 + $0x18] sm:$0xf] %vm366, %v316
      %371 = vst.msk [vmem:[#allocation2 + $0x20] sm:$0xf] %vm366, %v318
      %372 = vst.msk [vmem:[#allocation2 + $0x28] sm:$0xf] %vm366, %v319
      %373 = vst.msk [vmem:[#allocation2 + $0x30] sm:$0xf] %vm366, %v321
      %374 = vst.msk [vmem:[#allocation2 + $0x38] sm:$0xf] %vm366, %v322
      %375 = vst.msk [vmem:[#allocation2 + $0x40] sm:$0xf] %vm366, %v324
      %376 = vst.msk [vmem:[#allocation2 + $0x48] sm:$0xf] %vm366, %v325
      %377 = vst.msk [vmem:[#allocation2 + $0x50] sm:$0xf] %vm366, %v327
      %378 = vst.msk [vmem:[#allocation2 + $0x58] sm:$0xf] %vm366, %v328
      %379 = vst.msk [vmem:[#allocation2 + $0x60] sm:$0xf] %vm366, %v330
      %380 = vst.msk [vmem:[#allocation2 + $0x68] sm:$0xf] %vm366, %v331
      %381 = vst.msk [vmem:[#allocation2 + $0x70] sm:$0xf] %vm366, %v333
      %382 = vst.msk [vmem:[#allocation2 + $0x78] sm:$0xf] %vm366, %v334
      %383 = vst.msk [vmem:[#allocation2 + $0x80] sm:$0xf] %vm366, %v336
      %384 = vst.msk [vmem:[#allocation2 + $0x88] sm:$0xf] %vm366, %v337
      %385 = vst.msk [vmem:[#allocation2 + $0x90] sm:$0xf] %vm366, %v339
      %386 = vst.msk [vmem:[#allocation2 + $0x98] sm:$0xf] %vm366, %v340
      %387 = vst.msk [vmem:[#allocation2 + $0xa0] sm:$0xf] %vm366, %v342
      %388 = vst.msk [vmem:[#allocation2 + $0xa8] sm:$0xf] %vm366, %v343
      %389 = vst.msk [vmem:[#allocation2 + $0xb0] sm:$0xf] %vm366, %v345
      %390 = vst.msk [vmem:[#allocation2 + $0xb8] sm:$0xf] %vm366, %v346
      %391 = vst.msk [vmem:[#allocation2 + $0xc0] sm:$0xf] %vm366, %v348
      %392 = vst.msk [vmem:[#allocation2 + $0xc8] sm:$0xf] %vm366, %v349
      %393 = vst.msk [vmem:[#allocation2 + $0xd0] sm:$0xf] %vm366, %v351
      %394 = vst.msk [vmem:[#allocation2 + $0xd8] sm:$0xf] %vm366, %v352
      %395 = vst.msk [vmem:[#allocation2 + $0xe0] sm:$0xf] %vm366, %v354
      %396 = vst.msk [vmem:[#allocation2 + $0xe8] sm:$0xf] %vm366, %v355
      %397 = vst.msk [vmem:[#allocation2 + $0xf0] sm:$0xf] %vm366, %v357
      %398 = vst.msk [vmem:[#allocation2 + $0xf8] sm:$0xf] %vm366, %v358
      %vm399 = vsmask.f32 3328
      %vm400 = vsmask.f32 7440
      %vm401 = vmor %vm399, %vm400
      %v403 = vshrl.u32 %v312, 16
      %v405 = vrot.slane %v403, 4
      %v406 = vshll.u32 %v312, 16
      %v408 = vrot.slane %v406, 5
      %v409 = vor.u32 %v405, %v408
      %v410 = vrot.slane %v409, 4
      %v412 = vshll.u32 %v313, 16
      %v414 = vrot.slane %v412, 5
      %v415 = vsel %vm401, %v410, %v414
      %v416 = vshrl.u32 %v313, 16
      %v418 = vrot.slane %v416, 4
      %v419 = vor.u32 %v418, %v414
      %v420 = vrot.slane %v419, 4
      %v422 = vshll.u32 %v314, 16
      %v424 = vrot.slane %v422, 5
      %v425 = vsel %vm401, %v420, %v424
      %v427 = vshrl.u32 %v315, 16
      %v429 = vrot.slane %v427, 4
      %v430 = vshll.u32 %v315, 16
      %v432 = vrot.slane %v430, 5
      %v433 = vor.u32 %v429, %v432
      %v434 = vrot.slane %v433, 4
      %v436 = vshll.u32 %v316, 16
      %v438 = vrot.slane %v436, 5
      %v439 = vsel %vm401, %v434, %v438
      %v440 = vshrl.u32 %v316, 16
      %v442 = vrot.slane %v440, 4
      %v443 = vor.u32 %v442, %v438
      %v444 = vrot.slane %v443, 4
      %v446 = vshll.u32 %v317, 16
      %v448 = vrot.slane %v446, 5
      %v449 = vsel %vm401, %v444, %v448
      %v451 = vshrl.u32 %v318, 16
      %v453 = vrot.slane %v451, 4
      %v454 = vshll.u32 %v318, 16
      %v456 = vrot.slane %v454, 5
      %v457 = vor.u32 %v453, %v456
      %v458 = vrot.slane %v457, 4
      %v460 = vshll.u32 %v319, 16
      %v462 = vrot.slane %v460, 5
      %v463 = vsel %vm401, %v458, %v462
      %v464 = vshrl.u32 %v319, 16
      %v466 = vrot.slane %v464, 4
      %v467 = vor.u32 %v466, %v462
      %v468 = vrot.slane %v467, 4
      %v470 = vshll.u32 %v320, 16
      %v472 = vrot.slane %v470, 5
      %v473 = vsel %vm401, %v468, %v472
      %v475 = vshrl.u32 %v321, 16
      %v477 = vrot.slane %v475, 4
      %v478 = vshll.u32 %v321, 16
      %v480 = vrot.slane %v478, 5
      %v481 = vor.u32 %v477, %v480
      %v482 = vrot.slane %v481, 4
      %v484 = vshll.u32 %v322, 16
      %v486 = vrot.slane %v484, 5
      %v487 = vsel %vm401, %v482, %v486
      %v488 = vshrl.u32 %v322, 16
      %v490 = vrot.slane %v488, 4
      %v491 = vor.u32 %v490, %v486
      %v492 = vrot.slane %v491, 4
      %v494 = vshll.u32 %v323, 16
      %v496 = vrot.slane %v494, 5
      %v497 = vsel %vm401, %v492, %v496
      %v499 = vshrl.u32 %v324, 16
      %v501 = vrot.slane %v499, 4
      %v502 = vshll.u32 %v324, 16
      %v504 = vrot.slane %v502, 5
      %v505 = vor.u32 %v501, %v504
      %v506 = vrot.slane %v505, 4
      %v508 = vshll.u32 %v325, 16
      %v510 = vrot.slane %v508, 5
      %v511 = vsel %vm401, %v506, %v510
      %v512 = vshrl.u32 %v325, 16
      %v514 = vrot.slane %v512, 4
      %v515 = vor.u32 %v514, %v510
      %v516 = vrot.slane %v515, 4
      %v518 = vshll.u32 %v326, 16
      %v520 = vrot.slane %v518, 5
      %v521 = vsel %vm401, %v516, %v520
      %v523 = vshrl.u32 %v327, 16
      %v525 = vrot.slane %v523, 4
      %v526 = vshll.u32 %v327, 16
      %v528 = vrot.slane %v526, 5
      %v529 = vor.u32 %v525, %v528
      %v530 = vrot.slane %v529, 4
      %v532 = vshll.u32 %v328, 16
      %v534 = vrot.slane %v532, 5
      %v535 = vsel %vm401, %v530, %v534
      %v536 = vshrl.u32 %v328, 16
      %v538 = vrot.slane %v536, 4
      %v539 = vor.u32 %v538, %v534
      %v540 = vrot.slane %v539, 4
      %v542 = vshll.u32 %v329, 16
      %v544 = vrot.slane %v542, 5
      %v545 = vsel %vm401, %v540, %v544
      %v547 = vshrl.u32 %v330, 16
      %v549 = vrot.slane %v547, 4
      %v550 = vshll.u32 %v330, 16
      %v552 = vrot.slane %v550, 5
      %v553 = vor.u32 %v549, %v552
      %v554 = vrot.slane %v553, 4
      %v556 = vshll.u32 %v331, 16
      %v558 = vrot.slane %v556, 5
      %v559 = vsel %vm401, %v554, %v558
      %v560 = vshrl.u32 %v331, 16
      %v562 = vrot.slane %v560, 4
      %v563 = vor.u32 %v562, %v558
      %v564 = vrot.slane %v563, 4
      %v566 = vshll.u32 %v332, 16
      %v568 = vrot.slane %v566, 5
      %v569 = vsel %vm401, %v564, %v568
      %v571 = vshrl.u32 %v333, 16
      %v573 = vrot.slane %v571, 4
      %v574 = vshll.u32 %v333, 16
      %v576 = vrot.slane %v574, 5
      %v577 = vor.u32 %v573, %v576
      %v578 = vrot.slane %v577, 4
      %v580 = vshll.u32 %v334, 16
      %v582 = vrot.slane %v580, 5
      %v583 = vsel %vm401, %v578, %v582
      %v584 = vshrl.u32 %v334, 16
      %v586 = vrot.slane %v584, 4
      %v587 = vor.u32 %v586, %v582
      %v588 = vrot.slane %v587, 4
      %v590 = vshll.u32 %v335, 16
      %v592 = vrot.slane %v590, 5
      %v593 = vsel %vm401, %v588, %v592
      %v595 = vshrl.u32 %v336, 16
      %v597 = vrot.slane %v595, 4
      %v598 = vshll.u32 %v336, 16
      %v600 = vrot.slane %v598, 5
      %v601 = vor.u32 %v597, %v600
      %v602 = vrot.slane %v601, 4
      %v604 = vshll.u32 %v337, 16
      %v606 = vrot.slane %v604, 5
      %v607 = vsel %vm401, %v602, %v606
      %v608 = vshrl.u32 %v337, 16
      %v610 = vrot.slane %v608, 4
      %v611 = vor.u32 %v610, %v606
      %v612 = vrot.slane %v611, 4
      %v614 = vshll.u32 %v338, 16
      %v616 = vrot.slane %v614, 5
      %v617 = vsel %vm401, %v612, %v616
      %v619 = vshrl.u32 %v339, 16
      %v621 = vrot.slane %v619, 4
      %v622 = vshll.u32 %v339, 16
      %v624 = vrot.slane %v622, 5
      %v625 = vor.u32 %v621, %v624
      %v626 = vrot.slane %v625, 4
      %v628 = vshll.u32 %v340, 16
      %v630 = vrot.slane %v628, 5
      %v631 = vsel %vm401, %v626, %v630
      %v632 = vshrl.u32 %v340, 16
      %v634 = vrot.slane %v632, 4
      %v635 = vor.u32 %v634, %v630
      %v636 = vrot.slane %v635, 4
      %v638 = vshll.u32 %v341, 16
      %v640 = vrot.slane %v638, 5
      %v641 = vsel %vm401, %v636, %v640
      %v643 = vshrl.u32 %v342, 16
      %v645 = vrot.slane %v643, 4
      %v646 = vshll.u32 %v342, 16
      %v648 = vrot.slane %v646, 5
      %v649 = vor.u32 %v645, %v648
      %v650 = vrot.slane %v649, 4
      %v652 = vshll.u32 %v343, 16
      %v654 = vrot.slane %v652, 5
      %v655 = vsel %vm401, %v650, %v654
      %v656 = vshrl.u32 %v343, 16
      %v658 = vrot.slane %v656, 4
      %v659 = vor.u32 %v658, %v654
      %v660 = vrot.slane %v659, 4
      %v662 = vshll.u32 %v344, 16
      %v664 = vrot.slane %v662, 5
      %v665 = vsel %vm401, %v660, %v664
      %v667 = vshrl.u32 %v345, 16
      %v669 = vrot.slane %v667, 4
      %v670 = vshll.u32 %v345, 16
      %v672 = vrot.slane %v670, 5
      %v673 = vor.u32 %v669, %v672
      %v674 = vrot.slane %v673, 4
      %v676 = vshll.u32 %v346, 16
      %v678 = vrot.slane %v676, 5
      %v679 = vsel %vm401, %v674, %v678
      %v680 = vshrl.u32 %v346, 16
      %v682 = vrot.slane %v680, 4
      %v683 = vor.u32 %v682, %v678
      %v684 = vrot.slane %v683, 4
      %v686 = vshll.u32 %v347, 16
      %v688 = vrot.slane %v686, 5
      %v689 = vsel %vm401, %v684, %v688
      %v691 = vshrl.u32 %v348, 16
      %v693 = vrot.slane %v691, 4
      %v694 = vshll.u32 %v348, 16
      %v696 = vrot.slane %v694, 5
      %v697 = vor.u32 %v693, %v696
      %v698 = vrot.slane %v697, 4
      %v700 = vshll.u32 %v349, 16
      %v702 = vrot.slane %v700, 5
      %v703 = vsel %vm401, %v698, %v702
      %v704 = vshrl.u32 %v349, 16
      %v706 = vrot.slane %v704, 4
      %v707 = vor.u32 %v706, %v702
      %v708 = vrot.slane %v707, 4
      %v710 = vshll.u32 %v350, 16
      %v712 = vrot.slane %v710, 5
      %v713 = vsel %vm401, %v708, %v712
      %v715 = vshrl.u32 %v351, 16
      %v717 = vrot.slane %v715, 4
      %v718 = vshll.u32 %v351, 16
      %v720 = vrot.slane %v718, 5
      %v721 = vor.u32 %v717, %v720
      %v722 = vrot.slane %v721, 4
      %v724 = vshll.u32 %v352, 16
      %v726 = vrot.slane %v724, 5
      %v727 = vsel %vm401, %v722, %v726
      %v728 = vshrl.u32 %v352, 16
      %v730 = vrot.slane %v728, 4
      %v731 = vor.u32 %v730, %v726
      %v732 = vrot.slane %v731, 4
      %v734 = vshll.u32 %v353, 16
      %v736 = vrot.slane %v734, 5
      %v737 = vsel %vm401, %v732, %v736
      %v739 = vshrl.u32 %v354, 16
      %v741 = vrot.slane %v739, 4
      %v742 = vshll.u32 %v354, 16
      %v744 = vrot.slane %v742, 5
      %v745 = vor.u32 %v741, %v744
      %v746 = vrot.slane %v745, 4
      %v748 = vshll.u32 %v355, 16
      %v750 = vrot.slane %v748, 5
      %v751 = vsel %vm401, %v746, %v750
      %v752 = vshrl.u32 %v355, 16
      %v754 = vrot.slane %v752, 4
      %v755 = vor.u32 %v754, %v750
      %v756 = vrot.slane %v755, 4
      %v758 = vshll.u32 %v356, 16
      %v760 = vrot.slane %v758, 5
      %v761 = vsel %vm401, %v756, %v760
      %v763 = vshrl.u32 %v357, 16
      %v765 = vrot.slane %v763, 4
      %v766 = vshll.u32 %v357, 16
      %v768 = vrot.slane %v766, 5
      %v769 = vor.u32 %v765, %v768
      %v770 = vrot.slane %v769, 4
      %v772 = vshll.u32 %v358, 16
      %v774 = vrot.slane %v772, 5
      %v775 = vsel %vm401, %v770, %v774
      %v776 = vshrl.u32 %v358, 16
      %v778 = vrot.slane %v776, 4
      %v779 = vor.u32 %v778, %v774
      %v780 = vrot.slane %v779, 4
      %v782 = vshll.u32 %v359, 16
      %v784 = vrot.slane %v782, 5
      %v785 = vsel %vm401, %v780, %v784
      %786 = vrot.lane.b32.xlu0 %v415, 16
      %v787 = vpop.permute.xlu0 %786
      %788 = vrot.lane.b32.xlu0 %v425, 16
      %v789 = vpop.permute.xlu0 %788
      %790 = vrot.lane.b32.xlu0 %v439, 16
      %v791 = vpop.permute.xlu0 %790
      %792 = vrot.lane.b32.xlu0 %v449, 16
      %v793 = vpop.permute.xlu0 %792
      %794 = vrot.lane.b32.xlu0 %v463, 16
      %v795 = vpop.permute.xlu0 %794
      %796 = vrot.lane.b32.xlu0 %v473, 16
      %v797 = vpop.permute.xlu0 %796
      %798 = vrot.lane.b32.xlu0 %v487, 16
      %v799 = vpop.permute.xlu0 %798
      %800 = vrot.lane.b32.xlu0 %v497, 16
      %v801 = vpop.permute.xlu0 %800
      %802 = vrot.lane.b32.xlu0 %v511, 16
      %v803 = vpop.permute.xlu0 %802
      %804 = vrot.lane.b32.xlu0 %v521, 16
      %v805 = vpop.permute.xlu0 %804
      %806 = vrot.lane.b32.xlu0 %v535, 16
      %v807 = vpop.permute.xlu0 %806
      %808 = vrot.lane.b32.xlu0 %v545, 16
      %v809 = vpop.permute.xlu0 %808
      %810 = vrot.lane.b32.xlu0 %v559, 16
      %v811 = vpop.permute.xlu0 %810
      %812 = vrot.lane.b32.xlu0 %v569, 16
      %v813 = vpop.permute.xlu0 %812
      %814 = vrot.lane.b32.xlu0 %v583, 16
      %v815 = vpop.permute.xlu0 %814
      %816 = vrot.lane.b32.xlu0 %v593, 16
      %v817 = vpop.permute.xlu0 %816
      %818 = vrot.lane.b32.xlu0 %v607, 16
      %v819 = vpop.permute.xlu0 %818
      %820 = vrot.lane.b32.xlu0 %v617, 16
      %v821 = vpop.permute.xlu0 %820
      %822 = vrot.lane.b32.xlu0 %v631, 16
      %v823 = vpop.permute.xlu0 %822
      %824 = vrot.lane.b32.xlu0 %v641, 16
      %v825 = vpop.permute.xlu0 %824
      %826 = vrot.lane.b32.xlu0 %v655, 16
      %v827 = vpop.permute.xlu0 %826
      %828 = vrot.lane.b32.xlu0 %v665, 16
      %v829 = vpop.permute.xlu0 %828
      %830 = vrot.lane.b32.xlu0 %v679, 16
      %v831 = vpop.permute.xlu0 %830
      %832 = vrot.lane.b32.xlu0 %v689, 16
      %v833 = vpop.permute.xlu0 %832
      %834 = vrot.lane.b32.xlu0 %v703, 16
      %v835 = vpop.permute.xlu0 %834
      %836 = vrot.lane.b32.xlu0 %v713, 16
      %v837 = vpop.permute.xlu0 %836
      %838 = vrot.lane.b32.xlu0 %v727, 16
      %v839 = vpop.permute.xlu0 %838
      %840 = vrot.lane.b32.xlu0 %v737, 16
      %v841 = vpop.permute.xlu0 %840
      %842 = vrot.lane.b32.xlu0 %v751, 16
      %v843 = vpop.permute.xlu0 %842
      %844 = vrot.lane.b32.xlu0 %v761, 16
      %v845 = vpop.permute.xlu0 %844
      %846 = vrot.lane.b32.xlu0 %v775, 16
      %v847 = vpop.permute.xlu0 %846
      %848 = vrot.lane.b32.xlu0 %v785, 16
      %v849 = vpop.permute.xlu0 %848
      %vm882 = vcmask 257152
      %883 = vst.msk [vmem:[#allocation2] sm:$0xf] %vm882, %v787
      %884 = vst.msk [vmem:[#allocation2 + $0x8] sm:$0xf] %vm882, %v789
      %885 = vst.msk [vmem:[#allocation2 + $0x10] sm:$0xf] %vm882, %v791
      %886 = vst.msk [vmem:[#allocation2 + $0x18] sm:$0xf] %vm882, %v793
      %887 = vst.msk [vmem:[#allocation2 + $0x20] sm:$0xf] %vm882, %v795
      %888 = vst.msk [vmem:[#allocation2 + $0x28] sm:$0xf] %vm882, %v797
      %889 = vst.msk [vmem:[#allocation2 + $0x30] sm:$0xf] %vm882, %v799
      %890 = vst.msk [vmem:[#allocation2 + $0x38] sm:$0xf] %vm882, %v801
      %891 = vst.msk [vmem:[#allocation2 + $0x40] sm:$0xf] %vm882, %v803
      %892 = vst.msk [vmem:[#allocation2 + $0x48] sm:$0xf] %vm882, %v805
      %893 = vst.msk [vmem:[#allocation2 + $0x50] sm:$0xf] %vm882, %v807
      %894 = vst.msk [vmem:[#allocation2 + $0x58] sm:$0xf] %vm882, %v809
      %895 = vst.msk [vmem:[#allocation2 + $0x60] sm:$0xf] %vm882, %v811
      %896 = vst.msk [vmem:[#allocation2 + $0x68] sm:$0xf] %vm882, %v813
      %897 = vst.msk [vmem:[#allocation2 + $0x70] sm:$0xf] %vm882, %v815
      %898 = vst.msk [vmem:[#allocation2 + $0x78] sm:$0xf] %vm882, %v817
      %899 = vst.msk [vmem:[#allocation2 + $0x80] sm:$0xf] %vm882, %v819
      %900 = vst.msk [vmem:[#allocation2 + $0x88] sm:$0xf] %vm882, %v821
      %901 = vst.msk [vmem:[#allocation2 + $0x90] sm:$0xf] %vm882, %v823
      %902 = vst.msk [vmem:[#allocation2 + $0x98] sm:$0xf] %vm882, %v825
      %903 = vst.msk [vmem:[#allocation2 + $0xa0] sm:$0xf] %vm882, %v827
      %904 = vst.msk [vmem:[#allocation2 + $0xa8] sm:$0xf] %vm882, %v829
      %905 = vst.msk [vmem:[#allocation2 + $0xb0] sm:$0xf] %vm882, %v831
      %906 = vst.msk [vmem:[#allocation2 + $0xb8] sm:$0xf] %vm882, %v833
      %907 = vst.msk [vmem:[#allocation2 + $0xc0] sm:$0xf] %vm882, %v835
      %908 = vst.msk [vmem:[#allocation2 + $0xc8] sm:$0xf] %vm882, %v837
      %909 = vst.msk [vmem:[#allocation2 + $0xd0] sm:$0xf] %vm882, %v839
      %910 = vst.msk [vmem:[#allocation2 + $0xd8] sm:$0xf] %vm882, %v841
      %911 = vst.msk [vmem:[#allocation2 + $0xe0] sm:$0xf] %vm882, %v843
      %912 = vst.msk [vmem:[#allocation2 + $0xe8] sm:$0xf] %vm882, %v845
      %913 = vst.msk [vmem:[#allocation2 + $0xf0] sm:$0xf] %vm882, %v847
      %914 = vst.msk [vmem:[#allocation2 + $0xf8] sm:$0xf] %vm882, %v849
      %vm963 = vcmask 1042432
      %vm964 = vcmask 1046532
      %vm965 = vmor %vm963, %vm964
      %v966 = vrot.slane %v312, 5
      %v967 = vrot.slane %v966, 4
      %v968 = vrot.slane %v313, 5
      %v969 = vsel %vm965, %v967, %v968
      %v970 = vrot.slane %v968, 4
      %v971 = vrot.slane %v314, 5
      %v972 = vsel %vm965, %v970, %v971
      %v973 = vrot.slane %v315, 5
      %v974 = vrot.slane %v973, 4
      %v975 = vrot.slane %v316, 5
      %v976 = vsel %vm965, %v974, %v975
      %v977 = vrot.slane %v975, 4
      %v978 = vrot.slane %v317, 5
      %v979 = vsel %vm965, %v977, %v978
      %v980 = vrot.slane %v318, 5
      %v981 = vrot.slane %v980, 4
      %v982 = vrot.slane %v319, 5
      %v983 = vsel %vm965, %v981, %v982
      %v984 = vrot.slane %v982, 4
      %v985 = vrot.slane %v320, 5
      %v986 = vsel %vm965, %v984, %v985
      %v987 = vrot.slane %v321, 5
      %v988 = vrot.slane %v987, 4
      %v989 = vrot.slane %v322, 5
      %v990 = vsel %vm965, %v988, %v989
      %v991 = vrot.slane %v989, 4
      %v992 = vrot.slane %v323, 5
      %v993 = vsel %vm965, %v991, %v992
      %v994 = vrot.slane %v324, 5
      %v995 = vrot.slane %v994, 4
      %v996 = vrot.slane %v325, 5
      %v997 = vsel %vm965, %v995, %v996
      %v998 = vrot.slane %v996, 4
      %v999 = vrot.slane %v326, 5
      %v1000 = vsel %vm965, %v998, %v999
      %v1001 = vrot.slane %v327, 5
      %v1002 = vrot.slane %v1001, 4
      %v1003 = vrot.slane %v328, 5
      %v1004 = vsel %vm965, %v1002, %v1003
      %v1005 = vrot.slane %v1003, 4
      %v1006 = vrot.slane %v329, 5
      %v1007 = vsel %vm965, %v1005, %v1006
      %v1008 = vrot.slane %v330, 5
      %v1009 = vrot.slane %v1008, 4
      %v1010 = vrot.slane %v331, 5
      %v1011 = vsel %vm965, %v1009, %v1010
      %v1012 = vrot.slane %v1010, 4
      %v1013 = vrot.slane %v332, 5
      %v1014 = vsel %vm965, %v1012, %v1013
      %v1015 = vrot.slane %v333, 5
      %v1016 = vrot.slane %v1015, 4
      %v1017 = vrot.slane %v334, 5
      %v1018 = vsel %vm965, %v1016, %v1017
      %v1019 = vrot.slane %v1017, 4
      %v1020 = vrot.slane %v335, 5
      %v1021 = vsel %vm965, %v1019, %v1020
      %v1022 = vrot.slane %v336, 5
      %v1023 = vrot.slane %v1022, 4
      %v1024 = vrot.slane %v337, 5
      %v1025 = vsel %vm965, %v1023, %v1024
      %v1026 = vrot.slane %v1024, 4
      %v1027 = vrot.slane %v338, 5
      %v1028 = vsel %vm965, %v1026, %v1027
      %v1029 = vrot.slane %v339, 5
      %v1030 = vrot.slane %v1029, 4
      %v1031 = vrot.slane %v340, 5
      %v1032 = vsel %vm965, %v1030, %v1031
      %v1033 = vrot.slane %v1031, 4
      %v1034 = vrot.slane %v341, 5
      %v1035 = vsel %vm965, %v1033, %v1034
      %v1036 = vrot.slane %v342, 5
      %v1037 = vrot.slane %v1036, 4
      %v1038 = vrot.slane %v343, 5
      %v1039 = vsel %vm965, %v1037, %v1038
      %v1040 = vrot.slane %v1038, 4
      %v1041 = vrot.slane %v344, 5
      %v1042 = vsel %vm965, %v1040, %v1041
      %v1043 = vrot.slane %v345, 5
      %v1044 = vrot.slane %v1043, 4
      %v1045 = vrot.slane %v346, 5
      %v1046 = vsel %vm965, %v1044, %v1045
      %v1047 = vrot.slane %v1045, 4
      %v1048 = vrot.slane %v347, 5
      %v1049 = vsel %vm965, %v1047, %v1048
      %v1050 = vrot.slane %v348, 5
      %v1051 = vrot.slane %v1050, 4
      %v1052 = vrot.slane %v349, 5
      %v1053 = vsel %vm965, %v1051, %v1052
      %v1054 = vrot.slane %v1052, 4
      %v1055 = vrot.slane %v350, 5
      %v1056 = vsel %vm965, %v1054, %v1055
      %v1057 = vrot.slane %v351, 5
      %v1058 = vrot.slane %v1057, 4
      %v1059 = vrot.slane %v352, 5
      %v1060 = vsel %vm965, %v1058, %v1059
      %v1061 = vrot.slane %v1059, 4
      %v1062 = vrot.slane %v353, 5
      %v1063 = vsel %vm965, %v1061, %v1062
      %v1064 = vrot.slane %v354, 5
      %v1065 = vrot.slane %v1064, 4
      %v1066 = vrot.slane %v355, 5
      %v1067 = vsel %vm965, %v1065, %v1066
      %v1068 = vrot.slane %v1066, 4
      %v1069 = vrot.slane %v356, 5
      %v1070 = vsel %vm965, %v1068, %v1069
      %v1071 = vrot.slane %v357, 5
      %v1072 = vrot.slane %v1071, 4
      %v1073 = vrot.slane %v358, 5
      %v1074 = vsel %vm965, %v1072, %v1073
      %v1075 = vrot.slane %v1073, 4
      %v1076 = vrot.slane %v359, 5
      %v1077 = vsel %vm965, %v1075, %v1076
      %1078 = vrot.lane.b32.xlu0 %v969, 32
      %v1079 = vpop.permute.xlu0 %1078
      %1080 = vrot.lane.b32.xlu0 %v972, 32
      %v1081 = vpop.permute.xlu0 %1080
      %1082 = vrot.lane.b32.xlu0 %v976, 32
      %v1083 = vpop.permute.xlu0 %1082
      %1084 = vrot.lane.b32.xlu0 %v979, 32
      %v1085 = vpop.permute.xlu0 %1084
      %1086 = vrot.lane.b32.xlu0 %v983, 32
      %v1087 = vpop.permute.xlu0 %1086
      %1088 = vrot.lane.b32.xlu0 %v986, 32
      %v1089 = vpop.permute.xlu0 %1088
      %1090 = vrot.lane.b32.xlu0 %v990, 32
      %v1091 = vpop.permute.xlu0 %1090
      %1092 = vrot.lane.b32.xlu0 %v993, 32
      %v1093 = vpop.permute.xlu0 %1092
      %1094 = vrot.lane.b32.xlu0 %v997, 32
      %v1095 = vpop.permute.xlu0 %1094
      %1096 = vrot.lane.b32.xlu0 %v1000, 32
      %v1097 = vpop.permute.xlu0 %1096
      %1098 = vrot.lane.b32.xlu0 %v1004, 32
      %v1099 = vpop.permute.xlu0 %1098
      %1100 = vrot.lane.b32.xlu0 %v1007, 32
      %v1101 = vpop.permute.xlu0 %1100
      %1102 = vrot.lane.b32.xlu0 %v1011, 32
      %v1103 = vpop.permute.xlu0 %1102
      %1104 = vrot.lane.b32.xlu0 %v1014, 32
      %v1105 = vpop.permute.xlu0 %1104
      %1106 = vrot.lane.b32.xlu0 %v1018, 32
      %v1107 = vpop.permute.xlu0 %1106
      %1108 = vrot.lane.b32.xlu0 %v1021, 32
      %v1109 = vpop.permute.xlu0 %1108
      %1110 = vrot.lane.b32.xlu0 %v1025, 32
      %v1111 = vpop.permute.xlu0 %1110
      %1112 = vrot.lane.b32.xlu0 %v1028, 32
      %v1113 = vpop.permute.xlu0 %1112
      %1114 = vrot.lane.b32.xlu0 %v1032, 32
      %v1115 = vpop.permute.xlu0 %1114
      %1116 = vrot.lane.b32.xlu0 %v1035, 32
      %v1117 = vpop.permute.xlu0 %1116
      %1118 = vrot.lane.b32.xlu0 %v1039, 32
      %v1119 = vpop.permute.xlu0 %1118
      %1120 = vrot.lane.b32.xlu0 %v1042, 32
      %v1121 = vpop.permute.xlu0 %1120
      %1122 = vrot.lane.b32.xlu0 %v1046, 32
      %v1123 = vpop.permute.xlu0 %1122
      %1124 = vrot.lane.b32.xlu0 %v1049, 32
      %v1125 = vpop.permute.xlu0 %1124
      %1126 = vrot.lane.b32.xlu0 %v1053, 32
      %v1127 = vpop.permute.xlu0 %1126
      %1128 = vrot.lane.b32.xlu0 %v1056, 32
      %v1129 = vpop.permute.xlu0 %1128
      %1130 = vrot.lane.b32.xlu0 %v1060, 32
      %v1131 = vpop.permute.xlu0 %1130
      %1132 = vrot.lane.b32.xlu0 %v1063, 32
      %v1133 = vpop.permute.xlu0 %1132
      %1134 = vrot.lane.b32.xlu0 %v1067, 32
      %v1135 = vpop.permute.xlu0 %1134
      %1136 = vrot.lane.b32.xlu0 %v1070, 32
      %v1137 = vpop.permute.xlu0 %1136
      %1138 = vrot.lane.b32.xlu0 %v1074, 32
      %v1139 = vpop.permute.xlu0 %1138
      %1140 = vrot.lane.b32.xlu0 %v1077, 32
      %v1141 = vpop.permute.xlu0 %1140
      %vm1174 = vcmask 388352
      %1175 = vst.msk [vmem:[#allocation2] sm:$0xf] %vm1174, %v1079
      %1176 = vst.msk [vmem:[#allocation2 + $0x8] sm:$0xf] %vm1174, %v1081
      %1177 = vst.msk [vmem:[#allocation2 + $0x10] sm:$0xf] %vm1174, %v1083
      %1178 = vst.msk [vmem:[#allocation2 + $0x18] sm:$0xf] %vm1174, %v1085
      %1179 = vst.msk [vmem:[#allocation2 + $0x20] sm:$0xf] %vm1174, %v1087
      %1180 = vst.msk [vmem:[#allocation2 + $0x28] sm:$0xf] %vm1174, %v1089
      %1181 = vst.msk [vmem:[#allocation2 + $0x30] sm:$0xf] %vm1174, %v1091
      %1182 = vst.msk [vmem:[#allocation2 + $0x38] sm:$0xf] %vm1174, %v1093
      %1183 = vst.msk [vmem:[#allocation2 + $0x40] sm:$0xf] %vm1174, %v1095
      %1184 = vst.msk [vmem:[#allocation2 + $0x48] sm:$0xf] %vm1174, %v1097
      %1185 = vst.msk [vmem:[#allocation2 + $0x50] sm:$0xf] %vm1174, %v1099
      %1186 = vst.msk [vmem:[#allocation2 + $0x58] sm:$0xf] %vm1174, %v1101
      %1187 = vst.msk [vmem:[#allocation2 + $0x60] sm:$0xf] %vm1174, %v1103
      %1188 = vst.msk [vmem:[#allocation2 + $0x68] sm:$0xf] %vm1174, %v1105
      %1189 = vst.msk [vmem:[#allocation2 + $0x70] sm:$0xf] %vm1174, %v1107
      %1190 = vst.msk [vmem:[#allocation2 + $0x78] sm:$0xf] %vm1174, %v1109
      %1191 = vst.msk [vmem:[#allocation2 + $0x80] sm:$0xf] %vm1174, %v1111
      %1192 = vst.msk [vmem:[#allocation2 + $0x88] sm:$0xf] %vm1174, %v1113
      %1193 = vst.msk [vmem:[#allocation2 + $0x90] sm:$0xf] %vm1174, %v1115
      %1194 = vst.msk [vmem:[#allocation2 + $0x98] sm:$0xf] %vm1174, %v1117
      %1195 = vst.msk [vmem:[#allocation2 + $0xa0] sm:$0xf] %vm1174, %v1119
      %1196 = vst.msk [vmem:[#allocation2 + $0xa8] sm:$0xf] %vm1174, %v1121
      %1197 = vst.msk [vmem:[#allocation2 + $0xb0] sm:$0xf] %vm1174, %v1123
      %1198 = vst.msk [vmem:[#allocation2 + $0xb8] sm:$0xf] %vm1174, %v1125
      %1199 = vst.msk [vmem:[#allocation2 + $0xc0] sm:$0xf] %vm1174, %v1127
      %1200 = vst.msk [vmem:[#allocation2 + $0xc8] sm:$0xf] %vm1174, %v1129
      %1201 = vst.msk [vmem:[#allocation2 + $0xd0] sm:$0xf] %vm1174, %v1131
      %1202 = vst.msk [vmem:[#allocation2 + $0xd8] sm:$0xf] %vm1174, %v1133
      %1203 = vst.msk [vmem:[#allocation2 + $0xe0] sm:$0xf] %vm1174, %v1135
      %1204 = vst.msk [vmem:[#allocation2 + $0xe8] sm:$0xf] %vm1174, %v1137
      %1205 = vst.msk [vmem:[#allocation2 + $0xf0] sm:$0xf] %vm1174, %v1139
      %1206 = vst.msk [vmem:[#allocation2 + $0xf8] sm:$0xf] %vm1174, %v1141
      %1209 = vrot.lane.b32.xlu0 %v315, 48
      %v1210 = vpop.permute.xlu0 %1209
      %1211 = vrot.lane.b32.xlu0 %v316, 48
      %v1212 = vpop.permute.xlu0 %1211
      %1213 = vrot.lane.b32.xlu0 %v318, 48
      %v1214 = vpop.permute.xlu0 %1213
      %1215 = vrot.lane.b32.xlu0 %v319, 48
      %v1216 = vpop.permute.xlu0 %1215
      %1217 = vrot.lane.b32.xlu0 %v321, 48
      %v1218 = vpop.permute.xlu0 %1217
      %1219 = vrot.lane.b32.xlu0 %v322, 48
      %v1220 = vpop.permute.xlu0 %1219
      %1221 = vrot.lane.b32.xlu0 %v324, 48
      %v1222 = vpop.permute.xlu0 %1221
      %1223 = vrot.lane.b32.xlu0 %v325, 48
      %v1224 = vpop.permute.xlu0 %1223
      %1225 = vrot.lane.b32.xlu0 %v327, 48
      %v1226 = vpop.permute.xlu0 %1225
      %1227 = vrot.lane.b32.xlu0 %v328, 48
      %v1228 = vpop.permute.xlu0 %1227
      %1229 = vrot.lane.b32.xlu0 %v330, 48
      %v1230 = vpop.permute.xlu0 %1229
      %1231 = vrot.lane.b32.xlu0 %v331, 48
      %v1232 = vpop.permute.xlu0 %1231
      %1233 = vrot.lane.b32.xlu0 %v333, 48
      %v1234 = vpop.permute.xlu0 %1233
      %1235 = vrot.lane.b32.xlu0 %v334, 48
      %v1236 = vpop.permute.xlu0 %1235
      %1237 = vrot.lane.b32.xlu0 %v336, 48
      %v1238 = vpop.permute.xlu0 %1237
      %1239 = vrot.lane.b32.xlu0 %v337, 48
      %v1240 = vpop.permute.xlu0 %1239
      %1241 = vrot.lane.b32.xlu0 %v339, 48
      %v1242 = vpop.permute.xlu0 %1241
      %1243 = vrot.lane.b32.xlu0 %v340, 48
      %v1244 = vpop.permute.xlu0 %1243
      %1245 = vrot.lane.b32.xlu0 %v342, 48
      %v1246 = vpop.permute.xlu0 %1245
      %1247 = vrot.lane.b32.xlu0 %v343, 48
      %v1248 = vpop.permute.xlu0 %1247
      %1249 = vrot.lane.b32.xlu0 %v345, 48
      %v1250 = vpop.permute.xlu0 %1249
      %1251 = vrot.lane.b32.xlu0 %v346, 48
      %v1252 = vpop.permute.xlu0 %1251
      %1253 = vrot.lane.b32.xlu0 %v348, 48
      %v1254 = vpop.permute.xlu0 %1253
      %1255 = vrot.lane.b32.xlu0 %v349, 48
      %v1256 = vpop.permute.xlu0 %1255
      %1257 = vrot.lane.b32.xlu0 %v351, 48
      %v1258 = vpop.permute.xlu0 %1257
      %1259 = vrot.lane.b32.xlu0 %v352, 48
      %v1260 = vpop.permute.xlu0 %1259
      %1261 = vrot.lane.b32.xlu0 %v354, 48
      %v1262 = vpop.permute.xlu0 %1261
      %1263 = vrot.lane.b32.xlu0 %v355, 48
      %v1264 = vpop.permute.xlu0 %1263
      %1265 = vrot.lane.b32.xlu0 %v357, 48
      %v1266 = vpop.permute.xlu0 %1265
      %1267 = vrot.lane.b32.xlu0 %v358, 48
      %v1268 = vpop.permute.xlu0 %1267
      %1269 = vrot.lane.b32.xlu0 %v360, 48
      %v1270 = vpop.permute.xlu0 %1269
      %1271 = vrot.lane.b32.xlu0 %v361, 48
      %v1272 = vpop.permute.xlu0 %1271
      %vm1305 = vcmask 519552
      %1306 = vst.msk [vmem:[#allocation2] sm:$0xf] %vm1305, %v1210
      %1307 = vst.msk [vmem:[#allocation2 + $0x8] sm:$0xf] %vm1305, %v1212
      %1308 = vst.msk [vmem:[#allocation2 + $0x10] sm:$0xf] %vm1305, %v1214
      %1309 = vst.msk [vmem:[#allocation2 + $0x18] sm:$0xf] %vm1305, %v1216
      %1310 = vst.msk [vmem:[#allocation2 + $0x20] sm:$0xf] %vm1305, %v1218
      %1311 = vst.msk [vmem:[#allocation2 + $0x28] sm:$0xf] %vm1305, %v1220
      %1312 = vst.msk [vmem:[#allocation2 + $0x30] sm:$0xf] %vm1305, %v1222
      %1313 = vst.msk [vmem:[#allocation2 + $0x38] sm:$0xf] %vm1305, %v1224
      %1314 = vst.msk [vmem:[#allocation2 + $0x40] sm:$0xf] %vm1305, %v1226
      %1315 = vst.msk [vmem:[#allocation2 + $0x48] sm:$0xf] %vm1305, %v1228
      %1316 = vst.msk [vmem:[#allocation2 + $0x50] sm:$0xf] %vm1305, %v1230
      %1317 = vst.msk [vmem:[#allocation2 + $0x58] sm:$0xf] %vm1305, %v1232
      %1318 = vst.msk [vmem:[#allocation2 + $0x60] sm:$0xf] %vm1305, %v1234
      %1319 = vst.msk [vmem:[#allocation2 + $0x68] sm:$0xf] %vm1305, %v1236
      %1320 = vst.msk [vmem:[#allocation2 + $0x70] sm:$0xf] %vm1305, %v1238
      %1321 = vst.msk [vmem:[#allocation2 + $0x78] sm:$0xf] %vm1305, %v1240
      %1322 = vst.msk [vmem:[#allocation2 + $0x80] sm:$0xf] %vm1305, %v1242
      %1323 = vst.msk [vmem:[#allocation2 + $0x88] sm:$0xf] %vm1305, %v1244
      %1324 = vst.msk [vmem:[#allocation2 + $0x90] sm:$0xf] %vm1305, %v1246
      %1325 = vst.msk [vmem:[#allocation2 + $0x98] sm:$0xf] %vm1305, %v1248
      %1326 = vst.msk [vmem:[#allocation2 + $0xa0] sm:$0xf] %vm1305, %v1250
      %1327 = vst.msk [vmem:[#allocation2 + $0xa8] sm:$0xf] %vm1305, %v1252
      %1328 = vst.msk [vmem:[#allocation2 + $0xb0] sm:$0xf] %vm1305, %v1254
      %1329 = vst.msk [vmem:[#allocation2 + $0xb8] sm:$0xf] %vm1305, %v1256
      %1330 = vst.msk [vmem:[#allocation2 + $0xc0] sm:$0xf] %vm1305, %v1258
      %1331 = vst.msk [vmem:[#allocation2 + $0xc8] sm:$0xf] %vm1305, %v1260
      %1332 = vst.msk [vmem:[#allocation2 + $0xd0] sm:$0xf] %vm1305, %v1262
      %1333 = vst.msk [vmem:[#allocation2 + $0xd8] sm:$0xf] %vm1305, %v1264
      %1334 = vst.msk [vmem:[#allocation2 + $0xe0] sm:$0xf] %vm1305, %v1266
      %1335 = vst.msk [vmem:[#allocation2 + $0xe8] sm:$0xf] %vm1305, %v1268
      %1336 = vst.msk [vmem:[#allocation2 + $0xf0] sm:$0xf] %vm1305, %v1270
      %1337 = vst.msk [vmem:[#allocation2 + $0xf8] sm:$0xf] %vm1305, %v1272
      %v1339 = vshrl.u32 %v360, 16
      %v1341 = vrot.slane %v1339, 4
      %v1342 = vshll.u32 %v360, 16
      %v1344 = vrot.slane %v1342, 5
      %v1345 = vor.u32 %v1341, %v1344
      %v1346 = vrot.slane %v1345, 4
      %v1348 = vshll.u32 %v361, 16
      %v1350 = vrot.slane %v1348, 5
      %v1351 = vsel %vm401, %v1346, %v1350
      %v1352 = vshrl.u32 %v361, 16
      %v1354 = vrot.slane %v1352, 4
      %v1355 = vor.u32 %v1354, %v1350
      %v1356 = vrot.slane %v1355, 4
      %v1358 = vshll.u32 %v362, 16
      %v1360 = vrot.slane %v1358, 5
      %v1361 = vsel %vm401, %v1356, %v1360
      %1362 = vrot.lane.b32.xlu0 %v439, 64
      %v1363 = vpop.permute.xlu0 %1362
      %1364 = vrot.lane.b32.xlu0 %v449, 64
      %v1365 = vpop.permute.xlu0 %1364
      %1366 = vrot.lane.b32.xlu0 %v463, 64
      %v1367 = vpop.permute.xlu0 %1366
      %1368 = vrot.lane.b32.xlu0 %v473, 64
      %v1369 = vpop.permute.xlu0 %1368
      %1370 = vrot.lane.b32.xlu0 %v487, 64
      %v1371 = vpop.permute.xlu0 %1370
      %1372 = vrot.lane.b32.xlu0 %v497, 64
      %v1373 = vpop.permute.xlu0 %1372
      %1374 = vrot.lane.b32.xlu0 %v511, 64
      %v1375 = vpop.permute.xlu0 %1374
      %1376 = vrot.lane.b32.xlu0 %v521, 64
      %v1377 = vpop.permute.xlu0 %1376
      %1378 = vrot.lane.b32.xlu0 %v535, 64
      %v1379 = vpop.permute.xlu0 %1378
      %1380 = vrot.lane.b32.xlu0 %v545, 64
      %v1381 = vpop.permute.xlu0 %1380
      %1382 = vrot.lane.b32.xlu0 %v559, 64
      %v1383 = vpop.permute.xlu0 %1382
      %1384 = vrot.lane.b32.xlu0 %v569, 64
      %v1385 = vpop.permute.xlu0 %1384
      %1386 = vrot.lane.b32.xlu0 %v583, 64
      %v1387 = vpop.permute.xlu0 %1386
      %1388 = vrot.lane.b32.xlu0 %v593, 64
      %v1389 = vpop.permute.xlu0 %1388
      %1390 = vrot.lane.b32.xlu0 %v607, 64
      %v1391 = vpop.permute.xlu0 %1390
      %1392 = vrot.lane.b32.xlu0 %v617, 64
      %v1393 = vpop.permute.xlu0 %1392
      %1394 = vrot.lane.b32.xlu0 %v631, 64
      %v1395 = vpop.permute.xlu0 %1394
      %1396 = vrot.lane.b32.xlu0 %v641, 64
      %v1397 = vpop.permute.xlu0 %1396
      %1398 = vrot.lane.b32.xlu0 %v655, 64
      %v1399 = vpop.permute.xlu0 %1398
      %1400 = vrot.lane.b32.xlu0 %v665, 64
      %v1401 = vpop.permute.xlu0 %1400
      %1402 = vrot.lane.b32.xlu0 %v679, 64
      %v1403 = vpop.permute.xlu0 %1402
      %1404 = vrot.lane.b32.xlu0 %v689, 64
      %v1405 = vpop.permute.xlu0 %1404
      %1406 = vrot.lane.b32.xlu0 %v703, 64
      %v1407 = vpop.permute.xlu0 %1406
      %1408 = vrot.lane.b32.xlu0 %v713, 64
      %v1409 = vpop.permute.xlu0 %1408
      %1410 = vrot.lane.b32.xlu0 %v727, 64
      %v1411 = vpop.permute.xlu0 %1410
      %1412 = vrot.lane.b32.xlu0 %v737, 64
      %v1413 = vpop.permute.xlu0 %1412
      %1414 = vrot.lane.b32.xlu0 %v751, 64
      %v1415 = vpop.permute.xlu0 %1414
      %1416 = vrot.lane.b32.xlu0 %v761, 64
      %v1417 = vpop.permute.xlu0 %1416
      %1418 = vrot.lane.b32.xlu0 %v775, 64
      %v1419 = vpop.permute.xlu0 %1418
      %1420 = vrot.lane.b32.xlu0 %v785, 64
      %v1421 = vpop.permute.xlu0 %1420
      %1422 = vrot.lane.b32.xlu0 %v1351, 64
      %v1423 = vpop.permute.xlu0 %1422
      %1424 = vrot.lane.b32.xlu0 %v1361, 64
      %v1425 = vpop.permute.xlu0 %1424
      %vm1458 = vcmask 650752
      %1459 = vst.msk [vmem:[#allocation2] sm:$0xf] %vm1458, %v1363
      %1460 = vst.msk [vmem:[#allocation2 + $0x8] sm:$0xf] %vm1458, %v1365
      %1461 = vst.msk [vmem:[#allocation2 + $0x10] sm:$0xf] %vm1458, %v1367
      %1462 = vst.msk [vmem:[#allocation2 + $0x18] sm:$0xf] %vm1458, %v1369
      %1463 = vst.msk [vmem:[#allocation2 + $0x20] sm:$0xf] %vm1458, %v1371
      %1464 = vst.msk [vmem:[#allocation2 + $0x28] sm:$0xf] %vm1458, %v1373
      %1465 = vst.msk [vmem:[#allocation2 + $0x30] sm:$0xf] %vm1458, %v1375
      %1466 = vst.msk [vmem:[#allocation2 + $0x38] sm:$0xf] %vm1458, %v1377
      %1467 = vst.msk [vmem:[#allocation2 + $0x40] sm:$0xf] %vm1458, %v1379
      %1468 = vst.msk [vmem:[#allocation2 + $0x48] sm:$0xf] %vm1458, %v1381
      %1469 = vst.msk [vmem:[#allocation2 + $0x50] sm:$0xf] %vm1458, %v1383
      %1470 = vst.msk [vmem:[#allocation2 + $0x58] sm:$0xf] %vm1458, %v1385
      %1471 = vst.msk [vmem:[#allocation2 + $0x60] sm:$0xf] %vm1458, %v1387
      %1472 = vst.msk [vmem:[#allocation2 + $0x68] sm:$0xf] %vm1458, %v1389
      %1473 = vst.msk [vmem:[#allocation2 + $0x70] sm:$0xf] %vm1458, %v1391
      %1474 = vst.msk [vmem:[#allocation2 + $0x78] sm:$0xf] %vm1458, %v1393
      %1475 = vst.msk [vmem:[#allocation2 + $0x80] sm:$0xf] %vm1458, %v1395
      %1476 = vst.msk [vmem:[#allocation2 + $0x88] sm:$0xf] %vm1458, %v1397
      %1477 = vst.msk [vmem:[#allocation2 + $0x90] sm:$0xf] %vm1458, %v1399
      %1478 = vst.msk [vmem:[#allocation2 + $0x98] sm:$0xf] %vm1458, %v1401
      %1479 = vst.msk [vmem:[#allocation2 + $0xa0] sm:$0xf] %vm1458, %v1403
      %1480 = vst.msk [vmem:[#allocation2 + $0xa8] sm:$0xf] %vm1458, %v1405
      %1481 = vst.msk [vmem:[#allocation2 + $0xb0] sm:$0xf] %vm1458, %v1407
      %1482 = vst.msk [vmem:[#allocation2 + $0xb8] sm:$0xf] %vm1458, %v1409
      %1483 = vst.msk [vmem:[#allocation2 + $0xc0] sm:$0xf] %vm1458, %v1411
      %1484 = vst.msk [vmem:[#allocation2 + $0xc8] sm:$0xf] %vm1458, %v1413
      %1485 = vst.msk [vmem:[#allocation2 + $0xd0] sm:$0xf] %vm1458, %v1415
      %1486 = vst.msk [vmem:[#allocation2 + $0xd8] sm:$0xf] %vm1458, %v1417
      %1487 = vst.msk [vmem:[#allocation2 + $0xe0] sm:$0xf] %vm1458, %v1419
      %1488 = vst.msk [vmem:[#allocation2 + $0xe8] sm:$0xf] %vm1458, %v1421
      %1489 = vst.msk [vmem:[#allocation2 + $0xf0] sm:$0xf] %vm1458, %v1423
      %1490 = vst.msk [vmem:[#allocation2 + $0xf8] sm:$0xf] %vm1458, %v1425
      %v1492 = vrot.slane %v360, 5
      %v1493 = vrot.slane %v1492, 4
      %v1494 = vrot.slane %v361, 5
      %v1495 = vsel %vm965, %v1493, %v1494
      %v1496 = vrot.slane %v1494, 4
      %v1497 = vrot.slane %v362, 5
      %v1498 = vsel %vm965, %v1496, %v1497
      %1499 = vrot.lane.b32.xlu0 %v976, 80
      %v1500 = vpop.permute.xlu0 %1499
      %1501 = vrot.lane.b32.xlu0 %v979, 80
      %v1502 = vpop.permute.xlu0 %1501
      %1503 = vrot.lane.b32.xlu0 %v983, 80
      %v1504 = vpop.permute.xlu0 %1503
      %1505 = vrot.lane.b32.xlu0 %v986, 80
      %v1506 = vpop.permute.xlu0 %1505
      %1507 = vrot.lane.b32.xlu0 %v990, 80
      %v1508 = vpop.permute.xlu0 %1507
      %1509 = vrot.lane.b32.xlu0 %v993, 80
      %v1510 = vpop.permute.xlu0 %1509
      %1511 = vrot.lane.b32.xlu0 %v997, 80
      %v1512 = vpop.permute.xlu0 %1511
      %1513 = vrot.lane.b32.xlu0 %v1000, 80
      %v1514 = vpop.permute.xlu0 %1513
      %1515 = vrot.lane.b32.xlu0 %v1004, 80
      %v1516 = vpop.permute.xlu0 %1515
      %1517 = vrot.lane.b32.xlu0 %v1007, 80
      %v1518 = vpop.permute.xlu0 %1517
      %1519 = vrot.lane.b32.xlu0 %v1011, 80
      %v1520 = vpop.permute.xlu0 %1519
      %1521 = vrot.lane.b32.xlu0 %v1014, 80
      %v1522 = vpop.permute.xlu0 %1521
      %1523 = vrot.lane.b32.xlu0 %v1018, 80
      %v1524 = vpop.permute.xlu0 %1523
      %1525 = vrot.lane.b32.xlu0 %v1021, 80
      %v1526 = vpop.permute.xlu0 %1525
      %1527 = vrot.lane.b32.xlu0 %v1025, 80
      %v1528 = vpop.permute.xlu0 %1527
      %1529 = vrot.lane.b32.xlu0 %v1028, 80
      %v1530 = vpop.permute.xlu0 %1529
      %1531 = vrot.lane.b32.xlu0 %v1032, 80
      %v1532 = vpop.permute.xlu0 %1531
      %1533 = vrot.lane.b32.xlu0 %v1035, 80
      %v1534 = vpop.permute.xlu0 %1533
      %1535 = vrot.lane.b32.xlu0 %v1039, 80
      %v1536 = vpop.permute.xlu0 %1535
      %1537 = vrot.lane.b32.xlu0 %v1042, 80
      %v1538 = vpop.permute.xlu0 %1537
      %1539 = vrot.lane.b32.xlu0 %v1046, 80
      %v1540 = vpop.permute.xlu0 %1539
      %1541 = vrot.lane.b32.xlu0 %v1049, 80
      %v1542 = vpop.permute.xlu0 %1541
      %1543 = vrot.lane.b32.xlu0 %v1053, 80
      %v1544 = vpop.permute.xlu0 %1543
      %1545 = vrot.lane.b32.xlu0 %v1056, 80
      %v1546 = vpop.permute.xlu0 %1545
      %1547 = vrot.lane.b32.xlu0 %v1060, 80
      %v1548 = vpop.permute.xlu0 %1547
      %1549 = vrot.lane.b32.xlu0 %v1063, 80
      %v1550 = vpop.permute.xlu0 %1549
      %1551 = vrot.lane.b32.xlu0 %v1067, 80
      %v1552 = vpop.permute.xlu0 %1551
      %1553 = vrot.lane.b32.xlu0 %v1070, 80
      %v1554 = vpop.permute.xlu0 %1553
      %1555 = vrot.lane.b32.xlu0 %v1074, 80
      %v1556 = vpop.permute.xlu0 %1555
      %1557 = vrot.lane.b32.xlu0 %v1077, 80
      %v1558 = vpop.permute.xlu0 %1557
      %1559 = vrot.lane.b32.xlu0 %v1495, 80
      %v1560 = vpop.permute.xlu0 %1559
      %1561 = vrot.lane.b32.xlu0 %v1498, 80
      %v1562 = vpop.permute.xlu0 %1561
      %vm1595 = vcmask 781952
      %1596 = vst.msk [vmem:[#allocation2] sm:$0xf] %vm1595, %v1500
      %1597 = vst.msk [vmem:[#allocation2 + $0x8] sm:$0xf] %vm1595, %v1502
      %1598 = vst.msk [vmem:[#allocation2 + $0x10] sm:$0xf] %vm1595, %v1504
      %1599 = vst.msk [vmem:[#allocation2 + $0x18] sm:$0xf] %vm1595, %v1506
      %1600 = vst.msk [vmem:[#allocation2 + $0x20] sm:$0xf] %vm1595, %v1508
      %1601 = vst.msk [vmem:[#allocation2 + $0x28] sm:$0xf] %vm1595, %v1510
      %1602 = vst.msk [vmem:[#allocation2 + $0x30] sm:$0xf] %vm1595, %v1512
      %1603 = vst.msk [vmem:[#allocation2 + $0x38] sm:$0xf] %vm1595, %v1514
      %1604 = vst.msk [vmem:[#allocation2 + $0x40] sm:$0xf] %vm1595, %v1516
      %1605 = vst.msk [vmem:[#allocation2 + $0x48] sm:$0xf] %vm1595, %v1518
      %1606 = vst.msk [vmem:[#allocation2 + $0x50] sm:$0xf] %vm1595, %v1520
      %1607 = vst.msk [vmem:[#allocation2 + $0x58] sm:$0xf] %vm1595, %v1522
      %1608 = vst.msk [vmem:[#allocation2 + $0x60] sm:$0xf] %vm1595, %v1524
      %1609 = vst.msk [vmem:[#allocation2 + $0x68] sm:$0xf] %vm1595, %v1526
      %1610 = vst.msk [vmem:[#allocation2 + $0x70] sm:$0xf] %vm1595, %v1528
      %1611 = vst.msk [vmem:[#allocation2 + $0x78] sm:$0xf] %vm1595, %v1530
      %1612 = vst.msk [vmem:[#allocation2 + $0x80] sm:$0xf] %vm1595, %v1532
      %1613 = vst.msk [vmem:[#allocation2 + $0x88] sm:$0xf] %vm1595, %v1534
      %1614 = vst.msk [vmem:[#allocation2 + $0x90] sm:$0xf] %vm1595, %v1536
      %1615 = vst.msk [vmem:[#allocation2 + $0x98] sm:$0xf] %vm1595, %v1538
      %1616 = vst.msk [vmem:[#allocation2 + $0xa0] sm:$0xf] %vm1595, %v1540
      %1617 = vst.msk [vmem:[#allocation2 + $0xa8] sm:$0xf] %vm1595, %v1542
      %1618 = vst.msk [vmem:[#allocation2 + $0xb0] sm:$0xf] %vm1595, %v1544
      %1619 = vst.msk [vmem:[#allocation2 + $0xb8] sm:$0xf] %vm1595, %v1546
      %1620 = vst.msk [vmem:[#allocation2 + $0xc0] sm:$0xf] %vm1595, %v1548
      %1621 = vst.msk [vmem:[#allocation2 + $0xc8] sm:$0xf] %vm1595, %v1550
      %1622 = vst.msk [vmem:[#allocation2 + $0xd0] sm:$0xf] %vm1595, %v1552
      %1623 = vst.msk [vmem:[#allocation2 + $0xd8] sm:$0xf] %vm1595, %v1554
      %1624 = vst.msk [vmem:[#allocation2 + $0xe0] sm:$0xf] %vm1595, %v1556
      %1625 = vst.msk [vmem:[#allocation2 + $0xe8] sm:$0xf] %vm1595, %v1558
      %1626 = vst.msk [vmem:[#allocation2 + $0xf0] sm:$0xf] %vm1595, %v1560
      %1627 = vst.msk [vmem:[#allocation2 + $0xf8] sm:$0xf] %vm1595, %v1562
      %1630 = vrot.lane.b32.xlu0 %v318, 96
      %v1631 = vpop.permute.xlu0 %1630
      %1632 = vrot.lane.b32.xlu0 %v319, 96
      %v1633 = vpop.permute.xlu0 %1632
      %1634 = vrot.lane.b32.xlu0 %v321, 96
      %v1635 = vpop.permute.xlu0 %1634
      %1636 = vrot.lane.b32.xlu0 %v322, 96
      %v1637 = vpop.permute.xlu0 %1636
      %1638 = vrot.lane.b32.xlu0 %v324, 96
      %v1639 = vpop.permute.xlu0 %1638
      %1640 = vrot.lane.b32.xlu0 %v325, 96
      %v1641 = vpop.permute.xlu0 %1640
      %1642 = vrot.lane.b32.xlu0 %v327, 96
      %v1643 = vpop.permute.xlu0 %1642
      %1644 = vrot.lane.b32.xlu0 %v328, 96
      %v1645 = vpop.permute.xlu0 %1644
      %1646 = vrot.lane.b32.xlu0 %v330, 96
      %v1647 = vpop.permute.xlu0 %1646
      %1648 = vrot.lane.b32.xlu0 %v331, 96
      %v1649 = vpop.permute.xlu0 %1648
      %1650 = vrot.lane.b32.xlu0 %v333, 96
      %v1651 = vpop.permute.xlu0 %1650
      %1652 = vrot.lane.b32.xlu0 %v334, 96
      %v1653 = vpop.permute.xlu0 %1652
      %1654 = vrot.lane.b32.xlu0 %v336, 96
      %v1655 = vpop.permute.xlu0 %1654
      %1656 = vrot.lane.b32.xlu0 %v337, 96
      %v1657 = vpop.permute.xlu0 %1656
      %1658 = vrot.lane.b32.xlu0 %v339, 96
      %v1659 = vpop.permute.xlu0 %1658
      %1660 = vrot.lane.b32.xlu0 %v340, 96
      %v1661 = vpop.permute.xlu0 %1660
      %1662 = vrot.lane.b32.xlu0 %v342, 96
      %v1663 = vpop.permute.xlu0 %1662
      %1664 = vrot.lane.b32.xlu0 %v343, 96
      %v1665 = vpop.permute.xlu0 %1664
      %1666 = vrot.lane.b32.xlu0 %v345, 96
      %v1667 = vpop.permute.xlu0 %1666
      %1668 = vrot.lane.b32.xlu0 %v346, 96
      %v1669 = vpop.permute.xlu0 %1668
      %1670 = vrot.lane.b32.xlu0 %v348, 96
      %v1671 = vpop.permute.xlu0 %1670
      %1672 = vrot.lane.b32.xlu0 %v349, 96
      %v1673 = vpop.permute.xlu0 %1672
      %1674 = vrot.lane.b32.xlu0 %v351, 96
      %v1675 = vpop.permute.xlu0 %1674
      %1676 = vrot.lane.b32.xlu0 %v352, 96
      %v1677 = vpop.permute.xlu0 %1676
      %1678 = vrot.lane.b32.xlu0 %v354, 96
      %v1679 = vpop.permute.xlu0 %1678
      %1680 = vrot.lane.b32.xlu0 %v355, 96
      %v1681 = vpop.permute.xlu0 %1680
      %1682 = vrot.lane.b32.xlu0 %v357, 96
      %v1683 = vpop.permute.xlu0 %1682
      %1684 = vrot.lane.b32.xlu0 %v358, 96
      %v1685 = vpop.permute.xlu0 %1684
      %1686 = vrot.lane.b32.xlu0 %v360, 96
      %v1687 = vpop.permute.xlu0 %1686
      %1688 = vrot.lane.b32.xlu0 %v361, 96
      %v1689 = vpop.permute.xlu0 %1688
      %1690 = vrot.lane.b32.xlu0 %v363, 96
      %v1691 = vpop.permute.xlu0 %1690
      %1692 = vrot.lane.b32.xlu0 %v364, 96
      %v1693 = vpop.permute.xlu0 %1692
      %vm1726 = vcmask 913152
      %1727 = vst.msk [vmem:[#allocation2] sm:$0xf] %vm1726, %v1631
      %1728 = vst.msk [vmem:[#allocation2 + $0x8] sm:$0xf] %vm1726, %v1633
      %1729 = vst.msk [vmem:[#allocation2 + $0x10] sm:$0xf] %vm1726, %v1635
      %1730 = vst.msk [vmem:[#allocation2 + $0x18] sm:$0xf] %vm1726, %v1637
      %1731 = vst.msk [vmem:[#allocation2 + $0x20] sm:$0xf] %vm1726, %v1639
      %1732 = vst.msk [vmem:[#allocation2 + $0x28] sm:$0xf] %vm1726, %v1641
      %1733 = vst.msk [vmem:[#allocation2 + $0x30] sm:$0xf] %vm1726, %v1643
      %1734 = vst.msk [vmem:[#allocation2 + $0x38] sm:$0xf] %vm1726, %v1645
      %1735 = vst.msk [vmem:[#allocation2 + $0x40] sm:$0xf] %vm1726, %v1647
      %1736 = vst.msk [vmem:[#allocation2 + $0x48] sm:$0xf] %vm1726, %v1649
      %1737 = vst.msk [vmem:[#allocation2 + $0x50] sm:$0xf] %vm1726, %v1651
      %1738 = vst.msk [vmem:[#allocation2 + $0x58] sm:$0xf] %vm1726, %v1653
      %1739 = vst.msk [vmem:[#allocation2 + $0x60] sm:$0xf] %vm1726, %v1655
      %1740 = vst.msk [vmem:[#allocation2 + $0x68] sm:$0xf] %vm1726, %v1657
      %1741 = vst.msk [vmem:[#allocation2 + $0x70] sm:$0xf] %vm1726, %v1659
      %1742 = vst.msk [vmem:[#allocation2 + $0x78] sm:$0xf] %vm1726, %v1661
      %1743 = vst.msk [vmem:[#allocation2 + $0x80] sm:$0xf] %vm1726, %v1663
      %1744 = vst.msk [vmem:[#allocation2 + $0x88] sm:$0xf] %vm1726, %v1665
      %1745 = vst.msk [vmem:[#allocation2 + $0x90] sm:$0xf] %vm1726, %v1667
      %1746 = vst.msk [vmem:[#allocation2 + $0x98] sm:$0xf] %vm1726, %v1669
      %1747 = vst.msk [vmem:[#allocation2 + $0xa0] sm:$0xf] %vm1726, %v1671
      %1748 = vst.msk [vmem:[#allocation2 + $0xa8] sm:$0xf] %vm1726, %v1673
      %1749 = vst.msk [vmem:[#allocation2 + $0xb0] sm:$0xf] %vm1726, %v1675
      %1750 = vst.msk [vmem:[#allocation2 + $0xb8] sm:$0xf] %vm1726, %v1677
      %1751 = vst.msk [vmem:[#allocation2 + $0xc0] sm:$0xf] %vm1726, %v1679
      %1752 = vst.msk [vmem:[#allocation2 + $0xc8] sm:$0xf] %vm1726, %v1681
      %1753 = vst.msk [vmem:[#allocation2 + $0xd0] sm:$0xf] %vm1726, %v1683
      %1754 = vst.msk [vmem:[#allocation2 + $0xd8] sm:$0xf] %vm1726, %v1685
      %1755 = vst.msk [vmem:[#allocation2 + $0xe0] sm:$0xf] %vm1726, %v1687
      %1756 = vst.msk [vmem:[#allocation2 + $0xe8] sm:$0xf] %vm1726, %v1689
      %1757 = vst.msk [vmem:[#allocation2 + $0xf0] sm:$0xf] %vm1726, %v1691
      %1758 = vst.msk [vmem:[#allocation2 + $0xf8] sm:$0xf] %vm1726, %v1693
      %v1760 = vshrl.u32 %v363, 16
      %v1762 = vrot.slane %v1760, 4
      %v1763 = vshll.u32 %v363, 16
      %v1765 = vrot.slane %v1763, 5
      %v1766 = vor.u32 %v1762, %v1765
      %v1767 = vrot.slane %v1766, 4
      %v1769 = vshll.u32 %v364, 16
      %v1771 = vrot.slane %v1769, 5
      %v1772 = vsel %vm401, %v1767, %v1771
      %v1773 = vshrl.u32 %v364, 16
      %v1775 = vrot.slane %v1773, 4
      %v1776 = vor.u32 %v1775, %v1771
      %v1777 = vrot.slane %v1776, 4
      %v1779 = vshll.u32 %v365, 16
      %v1781 = vrot.slane %v1779, 5
      %v1782 = vsel %vm401, %v1777, %v1781
      %1783 = vrot.lane.b32.xlu0 %v463, 112
      %v1784 = vpop.permute.xlu0 %1783
      %1785 = vrot.lane.b32.xlu0 %v473, 112
      %v1786 = vpop.permute.xlu0 %1785
      %1787 = vrot.lane.b32.xlu0 %v487, 112
      %v1788 = vpop.permute.xlu0 %1787
      %1789 = vrot.lane.b32.xlu0 %v497, 112
      %v1790 = vpop.permute.xlu0 %1789
      %1791 = vrot.lane.b32.xlu0 %v511, 112
      %v1792 = vpop.permute.xlu0 %1791
      %1793 = vrot.lane.b32.xlu0 %v521, 112
      %v1794 = vpop.permute.xlu0 %1793
      %1795 = vrot.lane.b32.xlu0 %v535, 112
      %v1796 = vpop.permute.xlu0 %1795
      %1797 = vrot.lane.b32.xlu0 %v545, 112
      %v1798 = vpop.permute.xlu0 %1797
      %1799 = vrot.lane.b32.xlu0 %v559, 112
      %v1800 = vpop.permute.xlu0 %1799
      %1801 = vrot.lane.b32.xlu0 %v569, 112
      %v1802 = vpop.permute.xlu0 %1801
      %1803 = vrot.lane.b32.xlu0 %v583, 112
      %v1804 = vpop.permute.xlu0 %1803
      %1805 = vrot.lane.b32.xlu0 %v593, 112
      %v1806 = vpop.permute.xlu0 %1805
      %1807 = vrot.lane.b32.xlu0 %v607, 112
      %v1808 = vpop.permute.xlu0 %1807
      %1809 = vrot.lane.b32.xlu0 %v617, 112
      %v1810 = vpop.permute.xlu0 %1809
      %1811 = vrot.lane.b32.xlu0 %v631, 112
      %v1812 = vpop.permute.xlu0 %1811
      %1813 = vrot.lane.b32.xlu0 %v641, 112
      %v1814 = vpop.permute.xlu0 %1813
      %1815 = vrot.lane.b32.xlu0 %v655, 112
      %v1816 = vpop.permute.xlu0 %1815
      %1817 = vrot.lane.b32.xlu0 %v665, 112
      %v1818 = vpop.permute.xlu0 %1817
      %1819 = vrot.lane.b32.xlu0 %v679, 112
      %v1820 = vpop.permute.xlu0 %1819
      %1821 = vrot.lane.b32.xlu0 %v689, 112
      %v1822 = vpop.permute.xlu0 %1821
      %1823 = vrot.lane.b32.xlu0 %v703, 112
      %v1824 = vpop.permute.xlu0 %1823
      %1825 = vrot.lane.b32.xlu0 %v713, 112
      %v1826 = vpop.permute.xlu0 %1825
      %1827 = vrot.lane.b32.xlu0 %v727, 112
      %v1828 = vpop.permute.xlu0 %1827
      %1829 = vrot.lane.b32.xlu0 %v737, 112
      %v1830 = vpop.permute.xlu0 %1829
      %1831 = vrot.lane.b32.xlu0 %v751, 112
      %v1832 = vpop.permute.xlu0 %1831
      %1833 = vrot.lane.b32.xlu0 %v761, 112
      %v1834 = vpop.permute.xlu0 %1833
      %1835 = vrot.lane.b32.xlu0 %v775, 112
      %v1836 = vpop.permute.xlu0 %1835
      %1837 = vrot.lane.b32.xlu0 %v785, 112
      %v1838 = vpop.permute.xlu0 %1837
      %1839 = vrot.lane.b32.xlu0 %v1351, 112
      %v1840 = vpop.permute.xlu0 %1839
      %1841 = vrot.lane.b32.xlu0 %v1361, 112
      %v1842 = vpop.permute.xlu0 %1841
      %1843 = vrot.lane.b32.xlu0 %v1772, 112
      %v1844 = vpop.permute.xlu0 %1843
      %1845 = vrot.lane.b32.xlu0 %v1782, 112
      %v1846 = vpop.permute.xlu0 %1845
      %vm1879 = vcmask 1044352
      %1880 = vst.msk [vmem:[#allocation2] sm:$0xf] %vm1879, %v1784
      %1881 = vst.msk [vmem:[#allocation2 + $0x8] sm:$0xf] %vm1879, %v1786
      %1882 = vst.msk [vmem:[#allocation2 + $0x10] sm:$0xf] %vm1879, %v1788
      %1883 = vst.msk [vmem:[#allocation2 + $0x18] sm:$0xf] %vm1879, %v1790
      %1884 = vst.msk [vmem:[#allocation2 + $0x20] sm:$0xf] %vm1879, %v1792
      %1885 = vst.msk [vmem:[#allocation2 + $0x28] sm:$0xf] %vm1879, %v1794
      %1886 = vst.msk [vmem:[#allocation2 + $0x30] sm:$0xf] %vm1879, %v1796
      %1887 = vst.msk [vmem:[#allocation2 + $0x38] sm:$0xf] %vm1879, %v1798
      %1888 = vst.msk [vmem:[#allocation2 + $0x40] sm:$0xf] %vm1879, %v1800
      %1889 = vst.msk [vmem:[#allocation2 + $0x48] sm:$0xf] %vm1879, %v1802
      %1890 = vst.msk [vmem:[#allocation2 + $0x50] sm:$0xf] %vm1879, %v1804
      %1891 = vst.msk [vmem:[#allocation2 + $0x58] sm:$0xf] %vm1879, %v1806
      %1892 = vst.msk [vmem:[#allocation2 + $0x60] sm:$0xf] %vm1879, %v1808
      %1893 = vst.msk [vmem:[#allocation2 + $0x68] sm:$0xf] %vm1879, %v1810
      %1894 = vst.msk [vmem:[#allocation2 + $0x70] sm:$0xf] %vm1879, %v1812
      %1895 = vst.msk [vmem:[#allocation2 + $0x78] sm:$0xf] %vm1879, %v1814
      %1896 = vst.msk [vmem:[#allocation2 + $0x80] sm:$0xf] %vm1879, %v1816
      %1897 = vst.msk [vmem:[#allocation2 + $0x88] sm:$0xf] %vm1879, %v1818
      %1898 = vst.msk [vmem:[#allocation2 + $0x90] sm:$0xf] %vm1879, %v1820
      %1899 = vst.msk [vmem:[#allocation2 + $0x98] sm:$0xf] %vm1879, %v1822
      %1900 = vst.msk [vmem:[#allocation2 + $0xa0] sm:$0xf] %vm1879, %v1824
      %1901 = vst.msk [vmem:[#allocation2 + $0xa8] sm:$0xf] %vm1879, %v1826
      %1902 = vst.msk [vmem:[#allocation2 + $0xb0] sm:$0xf] %vm1879, %v1828
      %1903 = vst.msk [vmem:[#allocation2 + $0xb8] sm:$0xf] %vm1879, %v1830
      %1904 = vst.msk [vmem:[#allocation2 + $0xc0] sm:$0xf] %vm1879, %v1832
      %1905 = vst.msk [vmem:[#allocation2 + $0xc8] sm:$0xf] %vm1879, %v1834
      %1906 = vst.msk [vmem:[#allocation2 + $0xd0] sm:$0xf] %vm1879, %v1836
      %1907 = vst.msk [vmem:[#allocation2 + $0xd8] sm:$0xf] %vm1879, %v1838
      %1908 = vst.msk [vmem:[#allocation2 + $0xe0] sm:$0xf] %vm1879, %v1840
      %1909 = vst.msk [vmem:[#allocation2 + $0xe8] sm:$0xf] %vm1879, %v1842
      %1910 = vst.msk [vmem:[#allocation2 + $0xf0] sm:$0xf] %vm1879, %v1844
      %1911 = vst.msk [vmem:[#allocation2 + $0xf8] sm:$0xf] %vm1879, %v1846
      %v1913 = vrot.slane %v363, 5
      %v1914 = vrot.slane %v1913, 4
      %v1915 = vrot.slane %v364, 5
      %v1916 = vsel %vm965, %v1914, %v1915
      %v1917 = vrot.slane %v1915, 4
      %v1918 = vrot.slane %v365, 5
      %v1919 = vsel %vm965, %v1917, %v1918
      %1952 = vst.msk [vmem:[#allocation2 + $0x4] sm:$0xf] %vm366, %v983
      %1953 = vst.msk [vmem:[#allocation2 + $0xc] sm:$0xf] %vm366, %v986
      %1954 = vst.msk [vmem:[#allocation2 + $0x14] sm:$0xf] %vm366, %v990
      %1955 = vst.msk [vmem:[#allocation2 + $0x1c] sm:$0xf] %vm366, %v993
      %1956 = vst.msk [vmem:[#allocation2 + $0x24] sm:$0xf] %vm366, %v997
      %1957 = vst.msk [vmem:[#allocation2 + $0x2c] sm:$0xf] %vm366, %v1000
      %1958 = vst.msk [vmem:[#allocation2 + $0x34] sm:$0xf] %vm366, %v1004
      %1959 = vst.msk [vmem:[#allocation2 + $0x3c] sm:$0xf] %vm366, %v1007
      %1960 = vst.msk [vmem:[#allocation2 + $0x44] sm:$0xf] %vm366, %v1011
      %1961 = vst.msk [vmem:[#allocation2 + $0x4c] sm:$0xf] %vm366, %v1014
      %1962 = vst.msk [vmem:[#allocation2 + $0x54] sm:$0xf] %vm366, %v1018
      %1963 = vst.msk [vmem:[#allocation2 + $0x5c] sm:$0xf] %vm366, %v1021
      %1964 = vst.msk [vmem:[#allocation2 + $0x64] sm:$0xf] %vm366, %v1025
      %1965 = vst.msk [vmem:[#allocation2 + $0x6c] sm:$0xf] %vm366, %v1028
      %1966 = vst.msk [vmem:[#allocation2 + $0x74] sm:$0xf] %vm366, %v1032
      %1967 = vst.msk [vmem:[#allocation2 + $0x7c] sm:$0xf] %vm366, %v1035
      %1968 = vst.msk [vmem:[#allocation2 + $0x84] sm:$0xf] %vm366, %v1039
      %1969 = vst.msk [vmem:[#allocation2 + $0x8c] sm:$0xf] %vm366, %v1042
      %1970 = vst.msk [vmem:[#allocation2 + $0x94] sm:$0xf] %vm366, %v1046
      %1971 = vst.msk [vmem:[#allocation2 + $0x9c] sm:$0xf] %vm366, %v1049
      %1972 = vst.msk [vmem:[#allocation2 + $0xa4] sm:$0xf] %vm366, %v1053
      %1973 = vst.msk [vmem:[#allocation2 + $0xac] sm:$0xf] %vm366, %v1056
      %1974 = vst.msk [vmem:[#allocation2 + $0xb4] sm:$0xf] %vm366, %v1060
      %1975 = vst.msk [vmem:[#allocation2 + $0xbc] sm:$0xf] %vm366, %v1063
      %1976 = vst.msk [vmem:[#allocation2 + $0xc4] sm:$0xf] %vm366, %v1067
      %1977 = vst.msk [vmem:[#allocation2 + $0xcc] sm:$0xf] %vm366, %v1070
      %1978 = vst.msk [vmem:[#allocation2 + $0xd4] sm:$0xf] %vm366, %v1074
      %1979 = vst.msk [vmem:[#allocation2 + $0xdc] sm:$0xf] %vm366, %v1077
      %1980 = vst.msk [vmem:[#allocation2 + $0xe4] sm:$0xf] %vm366, %v1495
      %1981 = vst.msk [vmem:[#allocation2 + $0xec] sm:$0xf] %vm366, %v1498
      %1982 = vst.msk [vmem:[#allocation2 + $0xf4] sm:$0xf] %vm366, %v1916
      %1983 = vst.msk [vmem:[#allocation2 + $0xfc] sm:$0xf] %vm366, %v1919
      %v1984 = vld [vmem:[#allocation2] sm:$0xff]
      %v1985 = vld [vmem:[#allocation2 + $0x8] sm:$0xff]
      %v1986 = vld [vmem:[#allocation2 + $0x10] sm:$0xff]
      %v1987 = vld [vmem:[#allocation2 + $0x18] sm:$0xff]
      %v1988 = vld [vmem:[#allocation2 + $0x20] sm:$0xff]
      %v1989 = vld [vmem:[#allocation2 + $0x28] sm:$0xff]
      %v1990 = vld [vmem:[#allocation2 + $0x30] sm:$0xff]
      %v1991 = vld [vmem:[#allocation2 + $0x38] sm:$0xff]
      %v1992 = vld [vmem:[#allocation2 + $0x40] sm:$0xff]
      %v1993 = vld [vmem:[#allocation2 + $0x48] sm:$0xff]
      %v1994 = vld [vmem:[#allocation2 + $0x50] sm:$0xff]
      %v1995 = vld [vmem:[#allocation2 + $0x58] sm:$0xff]
      %v1996 = vld [vmem:[#allocation2 + $0x60] sm:$0xff]
      %v1997 = vld [vmem:[#allocation2 + $0x68] sm:$0xff]
      %v1998 = vld [vmem:[#allocation2 + $0x70] sm:$0xff]
      %v1999 = vld [vmem:[#allocation2 + $0x78] sm:$0xff]
      %v2000 = vld [vmem:[#allocation2 + $0x80] sm:$0xff]
      %v2001 = vld [vmem:[#allocation2 + $0x88] sm:$0xff]
      %v2002 = vld [vmem:[#allocation2 + $0x90] sm:$0xff]
      %v2003 = vld [vmem:[#allocation2 + $0x98] sm:$0xff]
      %v2004 = vld [vmem:[#allocation2 + $0xa0] sm:$0xff]
      %v2005 = vld [vmem:[#allocation2 + $0xa8] sm:$0xff]
      %v2006 = vld [vmem:[#allocation2 + $0xb0] sm:$0xff]
      %v2007 = vld [vmem:[#allocation2 + $0xb8] sm:$0xff]
      %v2008 = vld [vmem:[#allocation2 + $0xc0] sm:$0xff]
      %v2009 = vld [vmem:[#allocation2 + $0xc8] sm:$0xff]
      %v2010 = vld [vmem:[#allocation2 + $0xd0] sm:$0xff]
      %v2011 = vld [vmem:[#allocation2 + $0xd8] sm:$0xff]
      %v2012 = vld [vmem:[#allocation2 + $0xe0] sm:$0xff]
      %v2013 = vld [vmem:[#allocation2 + $0xe8] sm:$0xff]
      %v2014 = vld [vmem:[#allocation2 + $0xf0] sm:$0xff]
      %v2015 = vld [vmem:[#allocation2 + $0xf8] sm:$0xff]
      %v2016 = vld [vmem:[%s1] sm:$0xf]
      %v2017 = vld [vmem:[%s1 + $0x4] sm:$0xf]
      %v2018 = vld [vmem:[%s1 + $0x8] sm:$0xf]
      %v2019 = vld [vmem:[%s1 + $0xc] sm:$0xf]
      %v2020 = vld [vmem:[%s1 + $0x10] sm:$0xf]
      %v2021 = vld [vmem:[%s1 + $0x14] sm:$0xf]
      %v2022 = vld [vmem:[%s1 + $0x18] sm:$0xf]
      %v2023 = vld [vmem:[%s1 + $0x1c] sm:$0xf]
      %v2024 = vld [vmem:[%s1 + $0x20] sm:$0xf]
      %v2025 = vld [vmem:[%s1 + $0x24] sm:$0xf]
      %v2026 = vld [vmem:[%s1 + $0x28] sm:$0xf]
      %v2027 = vld [vmem:[%s1 + $0x2c] sm:$0xf]
      %v2028 = vld [vmem:[%s1 + $0x30] sm:$0xf]
      %v2029 = vld [vmem:[%s1 + $0x34] sm:$0xf]
      %v2030 = vld [vmem:[%s1 + $0x38] sm:$0xf]
      %v2031 = vld [vmem:[%s1 + $0x3c] sm:$0xf]
      %v2032 = vld [vmem:[%s1 + $0x40] sm:$0xf]
      %v2033 = vld [vmem:[%s1 + $0x44] sm:$0xf]
      %v2066 = vunpack.c.l.b16 %v1984
      %v2067 = vunpack.c.h.b16 %v1984
      %v2068 = vunpack.c.l.b16 %v1985
      %v2069 = vunpack.c.h.b16 %v1985
      %v2070 = vunpack.c.l.b16 %v1986
      %v2071 = vunpack.c.h.b16 %v1986
      %v2072 = vunpack.c.l.b16 %v1987
      %v2073 = vunpack.c.h.b16 %v1987
      %v2074 = vunpack.c.l.b16 %v1988
      %v2075 = vunpack.c.h.b16 %v1988
      %v2076 = vunpack.c.l.b16 %v1989
      %v2077 = vunpack.c.h.b16 %v1989
      %v2078 = vunpack.c.l.b16 %v1990
      %v2079 = vunpack.c.h.b16 %v1990
      %v2080 = vunpack.c.l.b16 %v1991
      %v2081 = vunpack.c.h.b16 %v1991
      %v2082 = vunpack.c.l.b16 %v1992
      %v2083 = vunpack.c.h.b16 %v1992
      %v2084 = vunpack.c.l.b16 %v1993
      %v2085 = vunpack.c.h.b16 %v1993
      %v2086 = vunpack.c.l.b16 %v1994
      %v2087 = vunpack.c.h.b16 %v1994
      %v2088 = vunpack.c.l.b16 %v1995
      %v2089 = vunpack.c.h.b16 %v1995
      %v2090 = vunpack.c.l.b16 %v1996
      %v2091 = vunpack.c.h.b16 %v1996
      %v2092 = vunpack.c.l.b16 %v1997
      %v2093 = vunpack.c.h.b16 %v1997
      %v2094 = vunpack.c.l.b16 %v1998
      %v2095 = vunpack.c.h.b16 %v1998
      %v2096 = vunpack.c.l.b16 %v1999
      %v2097 = vunpack.c.h.b16 %v1999
      %v2098 = vunpack.c.l.b16 %v2000
      %v2099 = vunpack.c.h.b16 %v2000
      %v2100 = vunpack.c.l.b16 %v2001
      %v2101 = vunpack.c.h.b16 %v2001
      %v2102 = vunpack.c.l.b16 %v2002
      %v2103 = vunpack.c.h.b16 %v2002
      %v2104 = vunpack.c.l.b16 %v2003
      %v2105 = vunpack.c.h.b16 %v2003
      %v2106 = vunpack.c.l.b16 %v2004
      %v2107 = vunpack.c.h.b16 %v2004
      %v2108 = vunpack.c.l.b16 %v2005
      %v2109 = vunpack.c.h.b16 %v2005
      %v2110 = vunpack.c.l.b16 %v2006
      %v2111 = vunpack.c.h.b16 %v2006
      %v2112 = vunpack.c.l.b16 %v2007
      %v2113 = vunpack.c.h.b16 %v2007
      %v2114 = vunpack.c.l.b16 %v2008
      %v2115 = vunpack.c.h.b16 %v2008
      %v2116 = vunpack.c.l.b16 %v2009
      %v2117 = vunpack.c.h.b16 %v2009
      %v2118 = vunpack.c.l.b16 %v2010
      %v2119 = vunpack.c.h.b16 %v2010
      %v2120 = vunpack.c.l.b16 %v2011
      %v2121 = vunpack.c.h.b16 %v2011
      %v2122 = vunpack.c.l.b16 %v2012
      %v2123 = vunpack.c.h.b16 %v2012
      %v2124 = vunpack.c.l.b16 %v2013
      %v2125 = vunpack.c.h.b16 %v2013
      %v2126 = vunpack.c.l.b16 %v2014
      %v2127 = vunpack.c.h.b16 %v2014
      %v2128 = vunpack.c.l.b16 %v2015
      %v2129 = vunpack.c.h.b16 %v2015
      %v2130 = vpack.c.b16 %v2068, %v2066
      %v2131 = vpack.c.b16 %v2069, %v2067
      %v2132 = vpack.c.b16 %v2072, %v2070
      %v2133 = vpack.c.b16 %v2073, %v2071
      %v2134 = vpack.c.b16 %v2076, %v2074
      %v2135 = vpack.c.b16 %v2077, %v2075
      %v2136 = vpack.c.b16 %v2080, %v2078
      %v2137 = vpack.c.b16 %v2081, %v2079
      %v2138 = vpack.c.b16 %v2084, %v2082
      %v2139 = vpack.c.b16 %v2085, %v2083
      %v2140 = vpack.c.b16 %v2088, %v2086
      %v2141 = vpack.c.b16 %v2089, %v2087
      %v2142 = vpack.c.b16 %v2092, %v2090
      %v2143 = vpack.c.b16 %v2093, %v2091
      %v2144 = vpack.c.b16 %v2096, %v2094
      %v2145 = vpack.c.b16 %v2097, %v2095
      %v2146 = vpack.c.b16 %v2100, %v2098
      %v2147 = vpack.c.b16 %v2101, %v2099
      %v2148 = vpack.c.b16 %v2104, %v2102
      %v2149 = vpack.c.b16 %v2105, %v2103
      %v2150 = vpack.c.b16 %v2108, %v2106
      %v2151 = vpack.c.b16 %v2109, %v2107
      %v2152 = vpack.c.b16 %v2112, %v2110
      %v2153 = vpack.c.b16 %v2113, %v2111
      %v2154 = vpack.c.b16 %v2116, %v2114
      %v2155 = vpack.c.b16 %v2117, %v2115
      %v2156 = vpack.c.b16 %v2120, %v2118
      %v2157 = vpack.c.b16 %v2121, %v2119
      %v2158 = vpack.c.b16 %v2124, %v2122
      %v2159 = vpack.c.b16 %v2125, %v2123
      %v2160 = vpack.c.b16 %v2128, %v2126
      %v2161 = vpack.c.b16 %v2129, %v2127
      %v2196 = vunpack.c.l.b16 %v2016
      %v2197 = vunpack.c.l.b16 %v2017
      %v2198 = vunpack.c.l.b16 %v2018
      %v2199 = vunpack.c.l.b16 %v2019
      %v2200 = vunpack.c.l.b16 %v2020
      %v2201 = vunpack.c.l.b16 %v2021
      %v2202 = vunpack.c.l.b16 %v2022
      %v2203 = vunpack.c.l.b16 %v2023
      %v2204 = vunpack.c.l.b16 %v2024
      %v2205 = vunpack.c.l.b16 %v2025
      %v2206 = vunpack.c.l.b16 %v2026
      %v2207 = vunpack.c.l.b16 %v2027
      %v2208 = vunpack.c.l.b16 %v2028
      %v2209 = vunpack.c.l.b16 %v2029
      %v2210 = vunpack.c.l.b16 %v2030
      %v2211 = vunpack.c.l.b16 %v2031
      %v2212 = vunpack.c.l.b16 %v2032
      %v2213 = vunpack.c.l.b16 %v2033
      %v2214 = vpack.c.b16 %v2197, %v2196
      %v2215 = vpack.c.b16 %v2199, %v2198
      %v2216 = vpack.c.b16 %v2201, %v2200
      %v2217 = vpack.c.b16 %v2203, %v2202
      %v2218 = vpack.c.b16 %v2205, %v2204
      %v2219 = vpack.c.b16 %v2207, %v2206
      %v2220 = vpack.c.b16 %v2209, %v2208
      %v2221 = vpack.c.b16 %v2211, %v2210
      %v2222 = vpack.c.b16 %v2213, %v2212
      %vm2232 = vcmask 130048
      %v2234 = vsel %vm2232, %v2131, 0
      %v2237 = vsel %vm2232, %v2133, 0
      %v2240 = vsel %vm2232, %v2135, 0
      %v2243 = vsel %vm2232, %v2137, 0
      %v2246 = vsel %vm2232, %v2139, 0
      %v2249 = vsel %vm2232, %v2141, 0
      %v2252 = vsel %vm2232, %v2143, 0
      %v2255 = vsel %vm2232, %v2145, 0
      %v2258 = vsel %vm2232, %v2147, 0
      %v2261 = vsel %vm2232, %v2149, 0
      %v2264 = vsel %vm2232, %v2151, 0
      %v2267 = vsel %vm2232, %v2153, 0
      %v2270 = vsel %vm2232, %v2155, 0
      %v2273 = vsel %vm2232, %v2157, 0
      %v2276 = vsel %vm2232, %v2159, 0
      %v2279 = vsel %vm2232, %v2161, 0
      %2281 = vmatprep.subr.bf16.mxu0 0
      %2282 = vmatpush1.bf16.msra.mxu0 %v2221
      %2283 = vmatprep.subr.bf16.mxu0 0
      %2284 = vmatpush1.bf16.msra.mxu0 %v2220
      %2285 = vmatprep.subr.bf16.mxu0 0
      %2286 = vmatpush1.bf16.msra.mxu0 %v2219
      %2287 = vmatprep.subr.bf16.mxu0 0
      %2288 = vmatpush1.bf16.msra.mxu0 %v2218
      %2289 = vmatprep.subr.bf16.mxu0 0
      %2290 = vmatpush1.bf16.msra.mxu0 %v2217
      %2291 = vmatprep.subr.bf16.mxu0 0
      %2292 = vmatpush1.bf16.msra.mxu0 %v2216
      %2293 = vmatprep.subr.bf16.mxu0 0
      %2294 = vmatpush1.bf16.msra.mxu0 %v2215
      %2295 = vmatprep.subr.bf16.mxu0 0
      %2296 = vmatpush1.bf16.msra.mxu0 %v2214
      %2297 = vmatprep.subr.bf16.mxu0 0
      %2298 = vmatpush2.bf16.msra.mxu0 0
      %2299 = vmatprep.subr.bf16.mxu0 0
      %2300 = vmatpush2.bf16.msra.mxu0 0
      %2301 = vmatprep.subr.bf16.mxu0 0
      %2302 = vmatpush2.bf16.msra.mxu0 0
      %2303 = vmatprep.subr.bf16.mxu0 0
      %2304 = vmatpush2.bf16.msra.mxu0 0
      %2305 = vmatprep.subr.bf16.mxu0 0
      %2306 = vmatpush2.bf16.msra.mxu0 0
      %2307 = vmatprep.subr.bf16.mxu0 0
      %2308 = vmatpush2.bf16.msra.mxu0 0
      %2309 = vmatprep.subr.bf16.mxu0 0
      %2310 = vmatpush2.bf16.msra.mxu0 0
      %2311 = vmatprep.subr.bf16.mxu0 0
      %2312 = vmatpush2.bf16.msra.mxu0 %v2222
      %2313 = vmatprep.mubr.bf16.mxu0 %v2234
      %2314 = vmatmul.mubr.bf16.gmra.mxu0 %v2130
      %v2315 = vpop.f32.mrf.mxu0
      %v2316 = vadd.f32 0.0, %v2315
      %v2317 = vpop.f32.mrf.mxu0
      %v2318 = vpop.f32.mrf.mxu0
      %v2319 = vadd.f32 0.0, %v2318
      %v2320 = vpop.f32.mrf.mxu0
      %2321 = vmatprep.mubr.bf16.mxu0 %v2237
      %2322 = vmatmul.mubr.bf16.gmra.mxu0 %v2132
      %v2323 = vpop.f32.mrf.mxu0
      %v2324 = vadd.f32 0.0, %v2323
      %v2325 = vpop.f32.mrf.mxu0
      %v2326 = vpop.f32.mrf.mxu0
      %v2327 = vadd.f32 0.0, %v2326
      %v2328 = vpop.f32.mrf.mxu0
      %2329 = vmatprep.mubr.bf16.mxu0 %v2240
      %2330 = vmatmul.mubr.bf16.gmra.mxu0 %v2134
      %v2331 = vpop.f32.mrf.mxu0
      %v2332 = vadd.f32 0.0, %v2331
      %v2333 = vpop.f32.mrf.mxu0
      %v2334 = vpop.f32.mrf.mxu0
      %v2335 = vadd.f32 0.0, %v2334
      %v2336 = vpop.f32.mrf.mxu0
      %2337 = vmatprep.mubr.bf16.mxu0 %v2243
      %2338 = vmatmul.mubr.bf16.gmra.mxu0 %v2136
      %v2339 = vpop.f32.mrf.mxu0
      %v2340 = vadd.f32 0.0, %v2339
      %v2341 = vpop.f32.mrf.mxu0
      %v2342 = vpop.f32.mrf.mxu0
      %v2343 = vadd.f32 0.0, %v2342
      %v2344 = vpop.f32.mrf.mxu0
      %2345 = vmatprep.mubr.bf16.mxu0 %v2246
      %2346 = vmatmul.mubr.bf16.gmra.mxu0 %v2138
      %v2347 = vpop.f32.mrf.mxu0
      %v2348 = vadd.f32 0.0, %v2347
      %v2349 = vpop.f32.mrf.mxu0
      %v2350 = vpop.f32.mrf.mxu0
      %v2351 = vadd.f32 0.0, %v2350
      %v2352 = vpop.f32.mrf.mxu0
      %2353 = vmatprep.mubr.bf16.mxu0 %v2249
      %2354 = vmatmul.mubr.bf16.gmra.mxu0 %v2140
      %v2355 = vpop.f32.mrf.mxu0
      %v2356 = vadd.f32 0.0, %v2355
      %v2357 = vpop.f32.mrf.mxu0
      %v2358 = vpop.f32.mrf.mxu0
      %v2359 = vadd.f32 0.0, %v2358
      %v2360 = vpop.f32.mrf.mxu0
      %2361 = vmatprep.mubr.bf16.mxu0 %v2252
      %2362 = vmatmul.mubr.bf16.gmra.mxu0 %v2142
      %v2363 = vpop.f32.mrf.mxu0
      %v2364 = vadd.f32 0.0, %v2363
      %v2365 = vpop.f32.mrf.mxu0
      %v2366 = vpop.f32.mrf.mxu0
      %v2367 = vadd.f32 0.0, %v2366
      %v2368 = vpop.f32.mrf.mxu0
      %2369 = vmatprep.mubr.bf16.mxu0 %v2255
      %2370 = vmatmul.mubr.bf16.gmra.mxu0 %v2144
      %v2371 = vpop.f32.mrf.mxu0
      %v2372 = vadd.f32 0.0, %v2371
      %v2373 = vpop.f32.mrf.mxu0
      %v2374 = vpop.f32.mrf.mxu0
      %v2375 = vadd.f32 0.0, %v2374
      %v2376 = vpop.f32.mrf.mxu0
      %2377 = vmatprep.mubr.bf16.mxu0 %v2258
      %2378 = vmatmul.mubr.bf16.gmra.mxu0 %v2146
      %v2379 = vpop.f32.mrf.mxu0
      %v2380 = vadd.f32 0.0, %v2379
      %v2381 = vpop.f32.mrf.mxu0
      %v2382 = vpop.f32.mrf.mxu0
      %v2383 = vadd.f32 0.0, %v2382
      %v2384 = vpop.f32.mrf.mxu0
      %2385 = vmatprep.mubr.bf16.mxu0 %v2261
      %2386 = vmatmul.mubr.bf16.gmra.mxu0 %v2148
      %v2387 = vpop.f32.mrf.mxu0
      %v2388 = vadd.f32 0.0, %v2387
      %v2389 = vpop.f32.mrf.mxu0
      %v2390 = vpop.f32.mrf.mxu0
      %v2391 = vadd.f32 0.0, %v2390
      %v2392 = vpop.f32.mrf.mxu0
      %2393 = vmatprep.mubr.bf16.mxu0 %v2264
      %2394 = vmatmul.mubr.bf16.gmra.mxu0 %v2150
      %v2395 = vpop.f32.mrf.mxu0
      %v2396 = vadd.f32 0.0, %v2395
      %v2397 = vpop.f32.mrf.mxu0
      %v2398 = vpop.f32.mrf.mxu0
      %v2399 = vadd.f32 0.0, %v2398
      %v2400 = vpop.f32.mrf.mxu0
      %2401 = vmatprep.mubr.bf16.mxu0 %v2267
      %2402 = vmatmul.mubr.bf16.gmra.mxu0 %v2152
      %v2403 = vpop.f32.mrf.mxu0
      %v2404 = vadd.f32 0.0, %v2403
      %v2405 = vpop.f32.mrf.mxu0
      %v2406 = vpop.f32.mrf.mxu0
      %v2407 = vadd.f32 0.0, %v2406
      %v2408 = vpop.f32.mrf.mxu0
      %2409 = vmatprep.mubr.bf16.mxu0 %v2270
      %2410 = vmatmul.mubr.bf16.gmra.mxu0 %v2154
      %v2411 = vpop.f32.mrf.mxu0
      %v2412 = vadd.f32 0.0, %v2411
      %v2413 = vpop.f32.mrf.mxu0
      %v2414 = vpop.f32.mrf.mxu0
      %v2415 = vadd.f32 0.0, %v2414
      %v2416 = vpop.f32.mrf.mxu0
      %2417 = vmatprep.mubr.bf16.mxu0 %v2273
      %2418 = vmatmul.mubr.bf16.gmra.mxu0 %v2156
      %v2419 = vpop.f32.mrf.mxu0
      %v2420 = vadd.f32 0.0, %v2419
      %v2421 = vpop.f32.mrf.mxu0
      %v2422 = vpop.f32.mrf.mxu0
      %v2423 = vadd.f32 0.0, %v2422
      %v2424 = vpop.f32.mrf.mxu0
      %2425 = vmatprep.mubr.bf16.mxu0 %v2276
      %2426 = vmatmul.mubr.bf16.gmra.mxu0 %v2158
      %v2427 = vpop.f32.mrf.mxu0
      %v2428 = vadd.f32 0.0, %v2427
      %v2429 = vpop.f32.mrf.mxu0
      %v2430 = vpop.f32.mrf.mxu0
      %v2431 = vadd.f32 0.0, %v2430
      %v2432 = vpop.f32.mrf.mxu0
      %2433 = vmatprep.mubr.bf16.mxu0 %v2279
      %2434 = vmatmul.mubr.bf16.gmra.mxu0 %v2160
      %v2435 = vpop.f32.mrf.mxu0
      %v2436 = vadd.f32 0.0, %v2435
      %v2437 = vpop.f32.mrf.mxu0
      %v2438 = vpop.f32.mrf.mxu0
      %v2439 = vadd.f32 0.0, %v2438
      %v2440 = vpop.f32.mrf.mxu0
      %2441 = vdwg.mxu0
      %v2442 = vpack.c.bf16 %v2319, %v2316
      %v2443 = vpack.c.bf16 %v2327, %v2324
      %v2444 = vpack.c.bf16 %v2335, %v2332
      %v2445 = vpack.c.bf16 %v2343, %v2340
      %v2446 = vpack.c.bf16 %v2351, %v2348
      %v2447 = vpack.c.bf16 %v2359, %v2356
      %v2448 = vpack.c.bf16 %v2367, %v2364
      %v2449 = vpack.c.bf16 %v2375, %v2372
      %v2450 = vpack.c.bf16 %v2383, %v2380
      %v2451 = vpack.c.bf16 %v2391, %v2388
      %v2452 = vpack.c.bf16 %v2399, %v2396
      %v2453 = vpack.c.bf16 %v2407, %v2404
      %v2454 = vpack.c.bf16 %v2415, %v2412
      %v2455 = vpack.c.bf16 %v2423, %v2420
      %v2456 = vpack.c.bf16 %v2431, %v2428
      %v2457 = vpack.c.bf16 %v2439, %v2436
      %v2474 = vunpack.c.l.b16 %v2442
      %v2475 = vunpack.c.h.b16 %v2442
      %v2476 = vunpack.c.l.b16 %v2443
      %v2477 = vunpack.c.h.b16 %v2443
      %v2478 = vunpack.c.l.b16 %v2444
      %v2479 = vunpack.c.h.b16 %v2444
      %v2480 = vunpack.c.l.b16 %v2445
      %v2481 = vunpack.c.h.b16 %v2445
      %v2482 = vunpack.c.l.b16 %v2446
      %v2483 = vunpack.c.h.b16 %v2446
      %v2484 = vunpack.c.l.b16 %v2447
      %v2485 = vunpack.c.h.b16 %v2447
      %v2486 = vunpack.c.l.b16 %v2448
      %v2487 = vunpack.c.h.b16 %v2448
      %v2488 = vunpack.c.l.b16 %v2449
      %v2489 = vunpack.c.h.b16 %v2449
      %v2490 = vunpack.c.l.b16 %v2450
      %v2491 = vunpack.c.h.b16 %v2450
      %v2492 = vunpack.c.l.b16 %v2451
      %v2493 = vunpack.c.h.b16 %v2451
      %v2494 = vunpack.c.l.b16 %v2452
      %v2495 = vunpack.c.h.b16 %v2452
      %v2496 = vunpack.c.l.b16 %v2453
      %v2497 = vunpack.c.h.b16 %v2453
      %v2498 = vunpack.c.l.b16 %v2454
      %v2499 = vunpack.c.h.b16 %v2454
      %v2500 = vunpack.c.l.b16 %v2455
      %v2501 = vunpack.c.h.b16 %v2455
      %v2502 = vunpack.c.l.b16 %v2456
      %v2503 = vunpack.c.h.b16 %v2456
      %v2504 = vunpack.c.l.b16 %v2457
      %v2505 = vunpack.c.h.b16 %v2457
      %v2506 = vpack.c.b16 %v2474, %v2474
      %v2507 = vpack.c.b16 %v2475, %v2475
      %v2508 = vpack.c.b16 %v2476, %v2476
      %v2509 = vpack.c.b16 %v2477, %v2477
      %v2510 = vpack.c.b16 %v2478, %v2478
      %v2511 = vpack.c.b16 %v2479, %v2479
      %v2512 = vpack.c.b16 %v2480, %v2480
      %v2513 = vpack.c.b16 %v2481, %v2481
      %v2514 = vpack.c.b16 %v2482, %v2482
      %v2515 = vpack.c.b16 %v2483, %v2483
      %v2516 = vpack.c.b16 %v2484, %v2484
      %v2517 = vpack.c.b16 %v2485, %v2485
      %v2518 = vpack.c.b16 %v2486, %v2486
      %v2519 = vpack.c.b16 %v2487, %v2487
      %v2520 = vpack.c.b16 %v2488, %v2488
      %v2521 = vpack.c.b16 %v2489, %v2489
      %v2522 = vpack.c.b16 %v2490, %v2490
      %v2523 = vpack.c.b16 %v2491, %v2491
      %v2524 = vpack.c.b16 %v2492, %v2492
      %v2525 = vpack.c.b16 %v2493, %v2493
      %v2526 = vpack.c.b16 %v2494, %v2494
      %v2527 = vpack.c.b16 %v2495, %v2495
      %v2528 = vpack.c.b16 %v2496, %v2496
      %v2529 = vpack.c.b16 %v2497, %v2497
      %v2530 = vpack.c.b16 %v2498, %v2498
      %v2531 = vpack.c.b16 %v2499, %v2499
      %v2532 = vpack.c.b16 %v2500, %v2500
      %v2533 = vpack.c.b16 %v2501, %v2501
      %v2534 = vpack.c.b16 %v2502, %v2502
      %v2535 = vpack.c.b16 %v2503, %v2503
      %v2536 = vpack.c.b16 %v2504, %v2504
      %v2537 = vpack.c.b16 %v2505, %v2505
      %2570 = vst.msk [vmem:[%s298] sm:$0xf] %vm366, %v2506
      %2571 = vst.msk [vmem:[%s298 + $0x4] sm:$0xf] %vm366, %v2507
      %2572 = vst.msk [vmem:[%s298 + $0x8] sm:$0xf] %vm366, %v2508
      %2573 = vst.msk [vmem:[%s298 + $0xc] sm:$0xf] %vm366, %v2509
      %2574 = vst.msk [vmem:[%s298 + $0x10] sm:$0xf] %vm366, %v2510
      %2575 = vst.msk [vmem:[%s298 + $0x14] sm:$0xf] %vm366, %v2511
      %2576 = vst.msk [vmem:[%s298 + $0x18] sm:$0xf] %vm366, %v2512
      %2577 = vst.msk [vmem:[%s298 + $0x1c] sm:$0xf] %vm366, %v2513
      %2578 = vst.msk [vmem:[%s298 + $0x20] sm:$0xf] %vm366, %v2514
      %2579 = vst.msk [vmem:[%s298 + $0x24] sm:$0xf] %vm366, %v2515
      %2580 = vst.msk [vmem:[%s298 + $0x28] sm:$0xf] %vm366, %v2516
      %2581 = vst.msk [vmem:[%s298 + $0x2c] sm:$0xf] %vm366, %v2517
      %2582 = vst.msk [vmem:[%s298 + $0x30] sm:$0xf] %vm366, %v2518
      %2583 = vst.msk [vmem:[%s298 + $0x34] sm:$0xf] %vm366, %v2519
      %2584 = vst.msk [vmem:[%s298 + $0x38] sm:$0xf] %vm366, %v2520
      %2585 = vst.msk [vmem:[%s298 + $0x3c] sm:$0xf] %vm366, %v2521
      %2586 = vst.msk [vmem:[%s298 + $0x40] sm:$0xf] %vm366, %v2522
      %2587 = vst.msk [vmem:[%s298 + $0x44] sm:$0xf] %vm366, %v2523
      %2588 = vst.msk [vmem:[%s298 + $0x48] sm:$0xf] %vm366, %v2524
      %2589 = vst.msk [vmem:[%s298 + $0x4c] sm:$0xf] %vm366, %v2525
      %2590 = vst.msk [vmem:[%s298 + $0x50] sm:$0xf] %vm366, %v2526
      %2591 = vst.msk [vmem:[%s298 + $0x54] sm:$0xf] %vm366, %v2527
      %2592 = vst.msk [vmem:[%s298 + $0x58] sm:$0xf] %vm366, %v2528
      %2593 = vst.msk [vmem:[%s298 + $0x5c] sm:$0xf] %vm366, %v2529
      %2594 = vst.msk [vmem:[%s298 + $0x60] sm:$0xf] %vm366, %v2530
      %2595 = vst.msk [vmem:[%s298 + $0x64] sm:$0xf] %vm366, %v2531
      %2596 = vst.msk [vmem:[%s298 + $0x68] sm:$0xf] %vm366, %v2532
      %2597 = vst.msk [vmem:[%s298 + $0x6c] sm:$0xf] %vm366, %v2533
      %2598 = vst.msk [vmem:[%s298 + $0x70] sm:$0xf] %vm366, %v2534
      %2599 = vst.msk [vmem:[%s298 + $0x74] sm:$0xf] %vm366, %v2535
      %2600 = vst.msk [vmem:[%s298 + $0x78] sm:$0xf] %vm366, %v2536
      %2601 = vst.msk [vmem:[%s298 + $0x7c] sm:$0xf] %vm366, %v2537
      %v2602 = vadd.f32 %v2316, %v2319
      %v2603 = vadd.f32 %v2602, %v2324
      %v2604 = vadd.f32 %v2603, %v2327
      %v2605 = vadd.f32 %v2604, %v2332
      %v2606 = vadd.f32 %v2605, %v2335
      %v2607 = vadd.f32 %v2606, %v2340
      %v2608 = vadd.f32 %v2607, %v2343
      %v2609 = vadd.f32 %v2608, %v2348
      %v2610 = vadd.f32 %v2609, %v2351
      %v2611 = vadd.f32 %v2610, %v2356
      %v2612 = vadd.f32 %v2611, %v2359
      %v2613 = vadd.f32 %v2612, %v2364
      %v2614 = vadd.f32 %v2613, %v2367
      %v2615 = vadd.f32 %v2614, %v2372
      %v2616 = vadd.f32 %v2615, %v2375
      %v2617 = vadd.f32 %v2616, %v2380
      %v2618 = vadd.f32 %v2617, %v2383
      %v2619 = vadd.f32 %v2618, %v2388
      %v2620 = vadd.f32 %v2619, %v2391
      %v2621 = vadd.f32 %v2620, %v2396
      %v2622 = vadd.f32 %v2621, %v2399
      %v2623 = vadd.f32 %v2622, %v2404
      %v2624 = vadd.f32 %v2623, %v2407
      %v2625 = vadd.f32 %v2624, %v2412
      %v2626 = vadd.f32 %v2625, %v2415
      %v2627 = vadd.f32 %v2626, %v2420
      %v2628 = vadd.f32 %v2627, %v2423
      %v2629 = vadd.f32 %v2628, %v2428
      %v2630 = vadd.f32 %v2629, %v2431
      %v2631 = vadd.f32 %v2630, %v2436
      %v2632 = vadd.f32 %v2631, %v2439
      %v2633 = vrot.slane %v2632, 4
      %v2634 = vadd.f32 %v2632, %v2633
      %v2635 = vrot.slane %v2634, 2
      %v2636 = vadd.f32 %v2634, %v2635
      %v2637 = vrot.slane %v2636, 1
      %v2638 = vadd.f32 %v2636, %v2637
      %2639 = vst [vmem:[%s304] sm:$0x1] %v2638
      %v2640 = vmul.f32 %v2316, %v2316
      %v2641 = vmul.f32 %v2319, %v2319
      %v2642 = vmul.f32 %v2324, %v2324
      %v2643 = vmul.f32 %v2327, %v2327
      %v2644 = vmul.f32 %v2332, %v2332
      %v2645 = vmul.f32 %v2335, %v2335
      %v2646 = vmul.f32 %v2340, %v2340
      %v2647 = vmul.f32 %v2343, %v2343
      %v2648 = vmul.f32 %v2348, %v2348
      %v2649 = vmul.f32 %v2351, %v2351
      %v2650 = vmul.f32 %v2356, %v2356
      %v2651 = vmul.f32 %v2359, %v2359
      %v2652 = vmul.f32 %v2364, %v2364
      %v2653 = vmul.f32 %v2367, %v2367
      %v2654 = vmul.f32 %v2372, %v2372
      %v2655 = vmul.f32 %v2375, %v2375
      %v2656 = vmul.f32 %v2380, %v2380
      %v2657 = vmul.f32 %v2383, %v2383
      %v2658 = vmul.f32 %v2388, %v2388
      %v2659 = vmul.f32 %v2391, %v2391
      %v2660 = vmul.f32 %v2396, %v2396
      %v2661 = vmul.f32 %v2399, %v2399
      %v2662 = vmul.f32 %v2404, %v2404
      %v2663 = vmul.f32 %v2407, %v2407
      %v2664 = vmul.f32 %v2412, %v2412
      %v2665 = vmul.f32 %v2415, %v2415
      %v2666 = vmul.f32 %v2420, %v2420
      %v2667 = vmul.f32 %v2423, %v2423
      %v2668 = vmul.f32 %v2428, %v2428
      %v2669 = vmul.f32 %v2431, %v2431
      %v2670 = vmul.f32 %v2436, %v2436
      %v2671 = vmul.f32 %v2439, %v2439
      %v2672 = vadd.f32 %v2640, %v2641
      %v2673 = vadd.f32 %v2672, %v2642
      %v2674 = vadd.f32 %v2673, %v2643
      %v2675 = vadd.f32 %v2674, %v2644
      %v2676 = vadd.f32 %v2675, %v2645
      %v2677 = vadd.f32 %v2676, %v2646
      %v2678 = vadd.f32 %v2677, %v2647
      %v2679 = vadd.f32 %v2678, %v2648
      %v2680 = vadd.f32 %v2679, %v2649
      %v2681 = vadd.f32 %v2680, %v2650
      %v2682 = vadd.f32 %v2681, %v2651
      %v2683 = vadd.f32 %v2682, %v2652
      %v2684 = vadd.f32 %v2683, %v2653
      %v2685 = vadd.f32 %v2684, %v2654
      %v2686 = vadd.f32 %v2685, %v2655
      %v2687 = vadd.f32 %v2686, %v2656
      %v2688 = vadd.f32 %v2687, %v2657
      %v2689 = vadd.f32 %v2688, %v2658
      %v2690 = vadd.f32 %v2689, %v2659
      %v2691 = vadd.f32 %v2690, %v2660
      %v2692 = vadd.f32 %v2691, %v2661
      %v2693 = vadd.f32 %v2692, %v2662
      %v2694 = vadd.f32 %v2693, %v2663
      %v2695 = vadd.f32 %v2694, %v2664
      %v2696 = vadd.f32 %v2695, %v2665
      %v2697 = vadd.f32 %v2696, %v2666
      %v2698 = vadd.f32 %v2697, %v2667
      %v2699 = vadd.f32 %v2698, %v2668
      %v2700 = vadd.f32 %v2699, %v2669
      %v2701 = vadd.f32 %v2700, %v2670
      %v2702 = vadd.f32 %v2701, %v2671
      %v2703 = vrot.slane %v2702, 4
      %v2704 = vadd.f32 %v2702, %v2703
      %v2705 = vrot.slane %v2704, 2
      %v2706 = vadd.f32 %v2704, %v2705
      %v2707 = vrot.slane %v2706, 1
      %v2708 = vadd.f32 %v2706, %v2707
      %2709 = vst [vmem:[%s309] sm:$0x1] %v2708
      %s2710 = sadd.s32 %s22, %s23
      %s2711 = smul.u32 32, %s2710
      %p2712 = scmp.lt.s32.totalorder %s2711, 63
      %s2713 = scalar_select %p2712, %s2711, 63
      %s2714 = smul.addr %s2713, 4
      %s2715 = scalar_lea.vmem %s4, %s2714
      %s2716 = sadd.s32 %s22, %s23
      %p2717 = scmp.lt.s32.totalorder %s2716, 1
      %s2718 = scalar_select %p2717, %s2716, 1
      %s2719 = scalar_lea.vmem %s5, %s2718
      %s2720 = sadd.s32 %s22, %s23
      %p2721 = scmp.lt.s32.totalorder %s2720, 1
      %s2722 = scalar_select %p2721, %s2720, 1
      %s2723 = scalar_lea.vmem %s6, %s2722
      // Predicated region
      $region37: #{upsample_block_forward.5} parent=35 // pred_check
        %p2724 = pneg %p141
      $region38: #{upsample_block_forward.5} parent=35 // pred_check_branch
        %2726 = sbr.rel (%p2724) target = $region40
      $region39: #{upsample_block_forward.5} parent=35 // pred_region
        %s2727 = sadd.s32 %s22, %s23
        %s2728 = smul.u32 32, %s2727
      $region40: #{upsample_block_forward.5} parent=35 // pred_fallthru
        _
      // Predicated region
      $region41: #{upsample_block_forward.5} parent=35 // pred_check
        %p2729 = pneg %p169
      $region42: #{upsample_block_forward.5} parent=35 // pred_check_branch
        %2731 = sbr.rel (%p2729) target = $region44
      $region43: #{upsample_block_forward.5} parent=35 // pred_region
        %s2732 = sadd.s32 %s22, %s23
      $region44: #{upsample_block_forward.5} parent=35 // pred_fallthru
        _
      // Predicated region
      $region45: #{upsample_block_forward.5} parent=35 // pred_check
        %p2733 = pneg %p197
      $region46: #{upsample_block_forward.5} parent=35 // pred_check_branch
        %2735 = sbr.rel (%p2733) target = $region48
      $region47: #{upsample_block_forward.5} parent=35 // pred_region
        %s2736 = sadd.s32 %s22, %s23
      $region48: #{upsample_block_forward.5} parent=35 // pred_fallthru
        _
    $region36: #{upsample_block_forward.5} parent=5 // pred_fallthru
      _
    %p2737 = scmp.le.s32.totalorder 2, %s13
    // Predicated region
    $region49: #{upsample_block_forward.5} parent=5 // pred_check
      %p2738 = pneg %p2737
    $region50: #{upsample_block_forward.5} parent=5 // pred_check_branch
      %2740 = sbr.rel (%p2738) target = $region52
    $region51: #{upsample_block_forward.5} parent=5 // pred_region
      %s2741 = ssub.s32 %s13, 2
      // Predicated region
      $region53: #{upsample_block_forward.5} parent=51 // pred_check
        %p2742 = pneg %p147
      $region54: #{upsample_block_forward.5} parent=51 // pred_check_branch
        %2744 = sbr.rel (%p2742) target = $region56
      $region55: #{upsample_block_forward.5} parent=51 // pred_region
        %s2745 = sadd.s32 %s24, %s25
        %s2746 = smul.u32 32, %s2745
        %p2747 = scmp.lt.s32.totalorder %s2746, 63
        %s2748 = scalar_select %p2747, %s2746, 63
        %s2749 = smul.addr %s2748, 4
        %s2750 = scalar_lea.vmem %s4, %s2749
      $region56: #{upsample_block_forward.5} parent=51 // pred_fallthru
        _
      // Predicated region
      $region57: #{upsample_block_forward.5} parent=51 // pred_check
        %p2751 = pneg %p175
      $region58: #{upsample_block_forward.5} parent=51 // pred_check_branch
        %2753 = sbr.rel (%p2751) target = $region60
      $region59: #{upsample_block_forward.5} parent=51 // pred_region
        %s2754 = sadd.s32 %s24, %s25
        %p2755 = scmp.lt.s32.totalorder %s2754, 1
        %s2756 = scalar_select %p2755, %s2754, 1
        %s2757 = scalar_lea.vmem %s5, %s2756
      $region60: #{upsample_block_forward.5} parent=51 // pred_fallthru
        _
      // Predicated region
      $region61: #{upsample_block_forward.5} parent=51 // pred_check
        %p2758 = pneg %p203
      $region62: #{upsample_block_forward.5} parent=51 // pred_check_branch
        %2760 = sbr.rel (%p2758) target = $region64
      $region63: #{upsample_block_forward.5} parent=51 // pred_region
        %s2761 = sadd.s32 %s24, %s25
        %p2762 = scmp.lt.s32.totalorder %s2761, 1
        %s2763 = scalar_select %p2762, %s2761, 1
        %s2764 = scalar_lea.vmem %s6, %s2763
      $region64: #{upsample_block_forward.5} parent=51 // pred_fallthru
        _
    $region52: #{upsample_block_forward.5} parent=5 // pred_fallthru
      _
  $region6: #{upsample_block_forward.5} parent=0 // loop_footer
    %s17 = sadd.s32 1, %s13
  $region7: #{upsample_block_forward.5} parent=0 // loop_footer_branch
    %12 = sbr.rel target = $region3
  $region8: #{upsample_block_forward.5} parent=0 // loop_exit
    _

// kernel: upsample_block_forward.6
$region0: #{upsample_block_forward.6}
  #allocation0 [shape = 'u32[]', space=smem, size = 0x4, offset = 0x4, fixed_abs, tag = 'smem constant byte address 0x4 - core index']
  #allocation1 [shape = 'u32[144,128]{1,0:T(1,128)}', space=vmem, size = 0x12000, scoped, tag = 'internal scratch']
  #allocation2 [shape = 'bf16[16,16,144]{2,1,0:T(8,128)(2,1)}', space=vmem, size = 0x20000, scoped, tag = 'scratch operand']
  %s0 = inlined_call_operand.vmem [shape: bf16[2,1,18,18,16], index: 0, kind: input, shape index: {}]
  %s1 = inlined_call_operand.vmem [shape: bf16[144,128], index: 1, kind: input, shape index: {}]
  %s2 = inlined_call_operand.vmem [shape: f32[1,16], index: 2, kind: input, shape index: {}]
  %s3 = inlined_call_operand.vmem [shape: f32[1,16], index: 3, kind: input, shape index: {}]
  %s4 = inlined_call_operand.vmem [shape: bf16[512,16], index: 4, kind: output, shape index: {0}]
  %s5 = inlined_call_operand.vmem [shape: f32[2,1,128], index: 5, kind: output, shape index: {1}]
  %s6 = inlined_call_operand.vmem [shape: f32[2,1,128], index: 6, kind: output, shape index: {2}]
  %7 = xla_tuple %s4, %s5, %s6
  %s8 = sld [smem:[#allocation0]]
  $region65: #{upsample_block_forward.6} parent=0
    _
  %s10 = ssub.s32 1, %s8
  %s11 = scalar_select 0, %s10, %s8
  loop: start=0, step=1, limit=4
  $region2: #{upsample_block_forward.6} parent=0 // loop_pre_header
    _
  $region3: #{upsample_block_forward.6} parent=0 // loop_header
    %s13 = sphi 0, %s17
    %p14 = scmp.ge.s32.totalorder %s13, 4
    %s20 = sphi 0, %s32
    %s21 = sphi 0, %s28
    %s22 = sphi 0, %s20
    %s23 = sphi 0, %s21
    %s24 = sphi 0, %s22
    %s25 = sphi 0, %s23
    %s37 = sphi 0, %s39
    %s40 = sphi 0, %s37
    %s41 = sphi 0, %s40
    %s57 = sphi 0, %s41
    %s61 = sphi 0, %s61
    %s63 = sphi 0, %s61
    %s64 = sphi 0, %s63
    %s78 = sphi 0, %s64
    %s82 = sphi 0, %s82
    %s84 = sphi 0, %s82
    %s85 = sphi 0, %s84
    %s99 = sphi 0, %s85
    %s103 = sphi 0, %s103
    %s105 = sphi 0, %s103
    %s106 = sphi 0, %s105
    %s120 = sphi 0, %s106
    %s128 = sphi 0, %s130
    %s131 = sphi 0, %s128
    %s132 = sphi 0, %s131
    %s148 = sphi 0, %s132
    %s156 = sphi 0, %s158
    %s159 = sphi 0, %s156
    %s160 = sphi 0, %s159
    %s176 = sphi 0, %s160
    %s184 = sphi 0, %s186
    %s187 = sphi 0, %s184
    %s188 = sphi 0, %s187
    %s204 = sphi 0, %s188
  $region4: #{upsample_block_forward.6} parent=0 // loop_header_branch
    %16 = sbr.rel (%p14) target = $region8
  $region5: #{upsample_block_forward.6} parent=0 // loop_body
    %s18 = ssub.s32 %s13, 1
    %s19 = ssub.s32 %s13, 2
    %s26 = sadd.s32 1, %s21
    %p27 = scmp.ge.s32.totalorder %s26, 1
    %s28 = scalar_select %p27, 0, %s26
    %s29 = sadd.s32 1, %s20
    %s30 = scalar_select %p27, %s29, %s20
    %p31 = scmp.ge.s32.totalorder %s30, 2
    %s32 = scalar_select %p31, 0, %s30
    %s33 = ssub.s32 %s20, %s32
    %s34 = ssub.s32 %s21, %s28
    %s35 = sor.u32 %s33, %s34
    %p36 = scmp.eq.s32.totalorder %s35, 0
    %s38 = sadd.s32 %s37, 1
    %s39 = scalar_select %p36, %s37, %s38
    %p42 = pneg %p36
    %p43 = scmp.eq.s32.totalorder %s13, 1
    %p44 = por %p42, %p43
    %p45 = scmp.ne.s32.totalorder %s37, %s40
    %p46 = scmp.eq.s32.totalorder %s13, 0
    %p47 = por %p45, %p46
    %p48 = scmp.ne.s32.totalorder %s37, %s40
    %p49 = scmp.eq.s32.totalorder %s18, 1
    %p50 = por %p48, %p49
    %p51 = scmp.ne.s32.totalorder %s40, %s41
    %p52 = scmp.eq.s32.totalorder %s18, 0
    %p53 = por %p51, %p52
    %p54 = scmp.ne.s32.totalorder %s40, %s41
    %p55 = scmp.eq.s32.totalorder %s19, 1
    %p56 = por %p54, %p55
    %p58 = scmp.ne.s32.totalorder %s41, %s57
    %p59 = scmp.eq.s32.totalorder %s19, 0
    %p60 = por %p58, %p59
    %s62 = sadd.s32 %s61, 1
    %p65 = scmp.eq.s32.totalorder %s13, 1
    %p66 = scmp.ne.s32.totalorder %s61, %s63
    %p67 = scmp.eq.s32.totalorder %s13, 0
    %p68 = por %p66, %p67
    %p69 = scmp.ne.s32.totalorder %s61, %s63
    %p70 = scmp.eq.s32.totalorder %s18, 1
    %p71 = por %p69, %p70
    %p72 = scmp.ne.s32.totalorder %s63, %s64
    %p73 = scmp.eq.s32.totalorder %s18, 0
    %p74 = por %p72, %p73
    %p75 = scmp.ne.s32.totalorder %s63, %s64
    %p76 = scmp.eq.s32.totalorder %s19, 1
    %p77 = por %p75, %p76
    %p79 = scmp.ne.s32.totalorder %s64, %s78
    %p80 = scmp.eq.s32.totalorder %s19, 0
    %p81 = por %p79, %p80
    %s83 = sadd.s32 %s82, 1
    %p86 = scmp.eq.s32.totalorder %s13, 1
    %p87 = scmp.ne.s32.totalorder %s82, %s84
    %p88 = scmp.eq.s32.totalorder %s13, 0
    %p89 = por %p87, %p88
    %p90 = scmp.ne.s32.totalorder %s82, %s84
    %p91 = scmp.eq.s32.totalorder %s18, 1
    %p92 = por %p90, %p91
    %p93 = scmp.ne.s32.totalorder %s84, %s85
    %p94 = scmp.eq.s32.totalorder %s18, 0
    %p95 = por %p93, %p94
    %p96 = scmp.ne.s32.totalorder %s84, %s85
    %p97 = scmp.eq.s32.totalorder %s19, 1
    %p98 = por %p96, %p97
    %p100 = scmp.ne.s32.totalorder %s85, %s99
    %p101 = scmp.eq.s32.totalorder %s19, 0
    %p102 = por %p100, %p101
    %s104 = sadd.s32 %s103, 1
    %p107 = scmp.eq.s32.totalorder %s13, 1
    %p108 = scmp.ne.s32.totalorder %s103, %s105
    %p109 = scmp.eq.s32.totalorder %s13, 0
    %p110 = por %p108, %p109
    %p111 = scmp.ne.s32.totalorder %s103, %s105
    %p112 = scmp.eq.s32.totalorder %s18, 1
    %p113 = por %p111, %p112
    %p114 = scmp.ne.s32.totalorder %s105, %s106
    %p115 = scmp.eq.s32.totalorder %s18, 0
    %p116 = por %p114, %p115
    %p117 = scmp.ne.s32.totalorder %s105, %s106
    %p118 = scmp.eq.s32.totalorder %s19, 1
    %p119 = por %p117, %p118
    %p121 = scmp.ne.s32.totalorder %s106, %s120
    %p122 = scmp.eq.s32.totalorder %s19, 0
    %p123 = por %p121, %p122
    %s124 = sadd.s32 %s20, %s21
    %s125 = sadd.s32 %s32, %s28
    %s126 = ssub.s32 %s124, %s125
    %p127 = scmp.eq.s32.totalorder %s126, 0
    %s129 = sadd.s32 %s128, 1
    %s130 = scalar_select %p127, %s128, %s129
    %p133 = pneg %p127
    %p134 = scmp.eq.s32.totalorder %s13, 1
    %p135 = por %p133, %p134
    %p136 = scmp.ne.s32.totalorder %s128, %s131
    %p137 = scmp.eq.s32.totalorder %s13, 0
    %p138 = por %p136, %p137
    %p139 = scmp.ne.s32.totalorder %s128, %s131
    %p140 = scmp.eq.s32.totalorder %s18, 1
    %p141 = por %p139, %p140
    %p142 = scmp.ne.s32.totalorder %s131, %s132
    %p143 = scmp.eq.s32.totalorder %s18, 0
    %p144 = por %p142, %p143
    %p145 = scmp.ne.s32.totalorder %s131, %s132
    %p146 = scmp.eq.s32.totalorder %s19, 1
    %p147 = por %p145, %p146
    %p149 = scmp.ne.s32.totalorder %s132, %s148
    %p150 = scmp.eq.s32.totalorder %s19, 0
    %p151 = por %p149, %p150
    %s152 = sadd.s32 %s20, %s21
    %s153 = sadd.s32 %s32, %s28
    %s154 = ssub.s32 %s152, %s153
    %p155 = scmp.eq.s32.totalorder %s154, 0
    %s157 = sadd.s32 %s156, 1
    %s158 = scalar_select %p155, %s156, %s157
    %p161 = pneg %p155
    %p162 = scmp.eq.s32.totalorder %s13, 1
    %p163 = por %p161, %p162
    %p164 = scmp.ne.s32.totalorder %s156, %s159
    %p165 = scmp.eq.s32.totalorder %s13, 0
    %p166 = por %p164, %p165
    %p167 = scmp.ne.s32.totalorder %s156, %s159
    %p168 = scmp.eq.s32.totalorder %s18, 1
    %p169 = por %p167, %p168
    %p170 = scmp.ne.s32.totalorder %s159, %s160
    %p171 = scmp.eq.s32.totalorder %s18, 0
    %p172 = por %p170, %p171
    %p173 = scmp.ne.s32.totalorder %s159, %s160
    %p174 = scmp.eq.s32.totalorder %s19, 1
    %p175 = por %p173, %p174
    %p177 = scmp.ne.s32.totalorder %s160, %s176
    %p178 = scmp.eq.s32.totalorder %s19, 0
    %p179 = por %p177, %p178
    %s180 = sadd.s32 %s20, %s21
    %s181 = sadd.s32 %s32, %s28
    %s182 = ssub.s32 %s180, %s181
    %p183 = scmp.eq.s32.totalorder %s182, 0
    %s185 = sadd.s32 %s184, 1
    %s186 = scalar_select %p183, %s184, %s185
    %p189 = pneg %p183
    %p190 = scmp.eq.s32.totalorder %s13, 1
    %p191 = por %p189, %p190
    %p192 = scmp.ne.s32.totalorder %s184, %s187
    %p193 = scmp.eq.s32.totalorder %s13, 0
    %p194 = por %p192, %p193
    %p195 = scmp.ne.s32.totalorder %s184, %s187
    %p196 = scmp.eq.s32.totalorder %s18, 1
    %p197 = por %p195, %p196
    %p198 = scmp.ne.s32.totalorder %s187, %s188
    %p199 = scmp.eq.s32.totalorder %s18, 0
    %p200 = por %p198, %p199
    %p201 = scmp.ne.s32.totalorder %s187, %s188
    %p202 = scmp.eq.s32.totalorder %s19, 1
    %p203 = por %p201, %p202
    %p205 = scmp.ne.s32.totalorder %s188, %s204
    %p206 = scmp.eq.s32.totalorder %s19, 0
    %p207 = por %p205, %p206
    %p208 = scmp.le.s32.totalorder 1, %s13
    %p209 = scmp.lt.s32.totalorder %s13, 3
    %p210 = pnand %p208, %p209
    %p211 = pneg %p210
    // Predicated region
    $region9: #{upsample_block_forward.6} parent=5 // pred_check
      _
    $region10: #{upsample_block_forward.6} parent=5 // pred_check_branch
      %213 = sbr.rel (%p210) target = $region12
    $region11: #{upsample_block_forward.6} parent=5 // pred_region
      %s214 = ssub.s32 %s13, 1
      // Predicated region
      $region13: #{upsample_block_forward.6} parent=11 // pred_check
        %p215 = pneg %p74
      $region14: #{upsample_block_forward.6} parent=11 // pred_check_branch
        %217 = sbr.rel (%p215) target = $region16
      $region15: #{upsample_block_forward.6} parent=11 // pred_region
        _
      $region16: #{upsample_block_forward.6} parent=11 // pred_fallthru
        _
      // Predicated region
      $region17: #{upsample_block_forward.6} parent=11 // pred_check
        %p218 = pneg %p95
      $region18: #{upsample_block_forward.6} parent=11 // pred_check_branch
        %220 = sbr.rel (%p218) target = $region20
      $region19: #{upsample_block_forward.6} parent=11 // pred_region
        _
      $region20: #{upsample_block_forward.6} parent=11 // pred_fallthru
        _
      // Predicated region
      $region21: #{upsample_block_forward.6} parent=11 // pred_check
        %p221 = pneg %p116
      $region22: #{upsample_block_forward.6} parent=11 // pred_check_branch
        %223 = sbr.rel (%p221) target = $region24
      $region23: #{upsample_block_forward.6} parent=11 // pred_region
        _
      $region24: #{upsample_block_forward.6} parent=11 // pred_fallthru
        _
    $region12: #{upsample_block_forward.6} parent=5 // pred_fallthru
      _
    %p224 = scmp.lt.s32.totalorder %s13, 2
    // Predicated region
    $region25: #{upsample_block_forward.6} parent=5 // pred_check
      %p225 = pneg %p224
    $region26: #{upsample_block_forward.6} parent=5 // pred_check_branch
      %227 = sbr.rel (%p225) target = $region28
    $region27: #{upsample_block_forward.6} parent=5 // pred_region
      // Predicated region
      $region29: #{upsample_block_forward.6} parent=27 // pred_check
        %p228 = pneg %p47
      $region30: #{upsample_block_forward.6} parent=27 // pred_check_branch
        %230 = sbr.rel (%p228) target = $region32
      $region31: #{upsample_block_forward.6} parent=27 // pred_region
        %p231 = scmp.lt.s32.totalorder %s20, 1
        %s232 = scalar_select %p231, %s20, 1
        %p233 = scmp.lt.s32.totalorder %s21, 0
        %s234 = scalar_select %p233, %s21, 0
        %s235 = smul.addr %s234, 54
        %s236 = smul.addr %s232, 54
        %s237 = sadd.s32 %s235, %s236
        %s238 = smul.addr %s237, 4
        %s239 = scalar_lea.vmem %s0, %s238
      $region32: #{upsample_block_forward.6} parent=27 // pred_fallthru
        _
    $region28: #{upsample_block_forward.6} parent=5 // pred_fallthru
      _
    %p240 = scmp.le.s32.totalorder 1, %s13
    %p241 = scmp.lt.s32.totalorder %s13, 3
    %p242 = pnand %p240, %p241
    %p243 = pneg %p242
    // Predicated region
    $region33: #{upsample_block_forward.6} parent=5 // pred_check
      _
    $region34: #{upsample_block_forward.6} parent=5 // pred_check_branch
      %245 = sbr.rel (%p242) target = $region36
    $region35: #{upsample_block_forward.6} parent=5 // pred_region
      %s246 = ssub.s32 %s13, 1
      %p247 = scmp.lt.s32.totalorder %s22, 1
      %s248 = scalar_select %p247, %s22, 1
      %p249 = scmp.lt.s32.totalorder %s23, 0
      %s250 = scalar_select %p249, %s23, 0
      %s251 = smul.addr %s250, 54
      %s252 = smul.addr %s248, 54
      %s253 = sadd.s32 %s251, %s252
      %s254 = smul.addr %s253, 4
      %s255 = scalar_lea.vmem %s0, %s254
      %p256 = pneg %p53
      %p257 = pneg %p50
      %p258 = pneg %p74
      %p259 = pneg %p71
      %p260 = pneg %p95
      %p261 = pneg %p92
      %p262 = pneg %p116
      %p263 = pneg %p113
      %p264 = pneg %p144
      %p265 = pneg %p141
      %s266 = sadd.s32 %s22, %s23
      %s267 = smul.u32 32, %s266
      %p268 = scmp.lt.s32.totalorder %s267, 63
      %s269 = scalar_select %p268, %s267, 63
      %s270 = smul.addr %s269, 4
      %s271 = scalar_lea.vmem %s4, %s270
      %p272 = pneg %p172
      %p273 = pneg %p169
      %s274 = sadd.s32 %s22, %s23
      %p275 = scmp.lt.s32.totalorder %s274, 1
      %s276 = scalar_select %p275, %s274, 1
      %s277 = scalar_lea.vmem %s5, %s276
      %p278 = pneg %p200
      %p279 = pneg %p197
      %s280 = sadd.s32 %s22, %s23
      %p281 = scmp.lt.s32.totalorder %s280, 1
      %s282 = scalar_select %p281, %s280, 1
      %s283 = scalar_lea.vmem %s6, %s282
      %p284 = scmp.lt.s32.totalorder %s22, 1
      %s285 = scalar_select %p284, %s22, 1
      %p286 = scmp.lt.s32.totalorder %s23, 0
      %s287 = scalar_select %p286, %s23, 0
      %s288 = smul.addr %s287, 54
      %s289 = smul.addr %s285, 54
      %s290 = sadd.s32 %s288, %s289
      %s291 = smul.addr %s290, 4
      %s292 = scalar_lea.vmem %s0, %s291
      %s293 = sadd.s32 %s22, %s23
      %s294 = smul.u32 32, %s293
      %p295 = scmp.lt.s32.totalorder %s294, 63
      %s296 = scalar_select %p295, %s294, 63
      %s297 = smul.addr %s296, 4
      %s298 = scalar_lea.vmem %s4, %s297
      %s299 = sadd.s32 %s22, %s23
      %s300 = smul.u32 32, %s299
      %s301 = sadd.s32 %s22, %s23
      %p302 = scmp.lt.s32.totalorder %s301, 1
      %s303 = scalar_select %p302, %s301, 1
      %s304 = scalar_lea.vmem %s5, %s303
      %s305 = sadd.s32 %s22, %s23
      %s306 = sadd.s32 %s22, %s23
      %p307 = scmp.lt.s32.totalorder %s306, 1
      %s308 = scalar_select %p307, %s306, 1
      %s309 = scalar_lea.vmem %s6, %s308
      %s310 = sadd.s32 %s22, %s23
      %v312 = vld [vmem:[%s292] sm:$0xf]
      %v313 = vld [vmem:[%s292 + $0x4] sm:$0xf]
      %v314 = vld [vmem:[%s292 + $0x8] sm:$0x1]
      %v315 = vld [vmem:[%s292 + $0xc] sm:$0xf]
      %v316 = vld [vmem:[%s292 + $0x10] sm:$0xf]
      %v317 = vld [vmem:[%s292 + $0x14] sm:$0x1]
      %v318 = vld [vmem:[%s292 + $0x18] sm:$0xf]
      %v319 = vld [vmem:[%s292 + $0x1c] sm:$0xf]
      %v320 = vld [vmem:[%s292 + $0x20] sm:$0x1]
      %v321 = vld [vmem:[%s292 + $0x24] sm:$0xf]
      %v322 = vld [vmem:[%s292 + $0x28] sm:$0xf]
      %v323 = vld [vmem:[%s292 + $0x2c] sm:$0x1]
      %v324 = vld [vmem:[%s292 + $0x30] sm:$0xf]
      %v325 = vld [vmem:[%s292 + $0x34] sm:$0xf]
      %v326 = vld [vmem:[%s292 + $0x38] sm:$0x1]
      %v327 = vld [vmem:[%s292 + $0x3c] sm:$0xf]
      %v328 = vld [vmem:[%s292 + $0x40] sm:$0xf]
      %v329 = vld [vmem:[%s292 + $0x44] sm:$0x1]
      %v330 = vld [vmem:[%s292 + $0x48] sm:$0xf]
      %v331 = vld [vmem:[%s292 + $0x4c] sm:$0xf]
      %v332 = vld [vmem:[%s292 + $0x50] sm:$0x1]
      %v333 = vld [vmem:[%s292 + $0x54] sm:$0xf]
      %v334 = vld [vmem:[%s292 + $0x58] sm:$0xf]
      %v335 = vld [vmem:[%s292 + $0x5c] sm:$0x1]
      %v336 = vld [vmem:[%s292 + $0x60] sm:$0xf]
      %v337 = vld [vmem:[%s292 + $0x64] sm:$0xf]
      %v338 = vld [vmem:[%s292 + $0x68] sm:$0x1]
      %v339 = vld [vmem:[%s292 + $0x6c] sm:$0xf]
      %v340 = vld [vmem:[%s292 + $0x70] sm:$0xf]
      %v341 = vld [vmem:[%s292 + $0x74] sm:$0x1]
      %v342 = vld [vmem:[%s292 + $0x78] sm:$0xf]
      %v343 = vld [vmem:[%s292 + $0x7c] sm:$0xf]
      %v344 = vld [vmem:[%s292 + $0x80] sm:$0x1]
      %v345 = vld [vmem:[%s292 + $0x84] sm:$0xf]
      %v346 = vld [vmem:[%s292 + $0x88] sm:$0xf]
      %v347 = vld [vmem:[%s292 + $0x8c] sm:$0x1]
      %v348 = vld [vmem:[%s292 + $0x90] sm:$0xf]
      %v349 = vld [vmem:[%s292 + $0x94] sm:$0xf]
      %v350 = vld [vmem:[%s292 + $0x98] sm:$0x1]
      %v351 = vld [vmem:[%s292 + $0x9c] sm:$0xf]
      %v352 = vld [vmem:[%s292 + $0xa0] sm:$0xf]
      %v353 = vld [vmem:[%s292 + $0xa4] sm:$0x1]
      %v354 = vld [vmem:[%s292 + $0xa8] sm:$0xf]
      %v355 = vld [vmem:[%s292 + $0xac] sm:$0xf]
      %v356 = vld [vmem:[%s292 + $0xb0] sm:$0x1]
      %v357 = vld [vmem:[%s292 + $0xb4] sm:$0xf]
      %v358 = vld [vmem:[%s292 + $0xb8] sm:$0xf]
      %v359 = vld [vmem:[%s292 + $0xbc] sm:$0x1]
      %v360 = vld [vmem:[%s292 + $0xc0] sm:$0xf]
      %v361 = vld [vmem:[%s292 + $0xc4] sm:$0xf]
      %v362 = vld [vmem:[%s292 + $0xc8] sm:$0x1]
      %v363 = vld [vmem:[%s292 + $0xcc] sm:$0xf]
      %v364 = vld [vmem:[%s292 + $0xd0] sm:$0xf]
      %v365 = vld [vmem:[%s292 + $0xd4] sm:$0x1]
      %v366 = vld [vmem:[%s2] sm:$0x1]
      %v367 = vld [vmem:[%s3] sm:$0x1]
      %v368 = vunpack.c.l.bf16 %v312
      %v369 = vunpack.c.l.bf16 %v313
      %v370 = vunpack.c.l.bf16 %v314
      %v371 = vunpack.c.l.bf16 %v315
      %v372 = vunpack.c.l.bf16 %v316
      %v373 = vunpack.c.l.bf16 %v317
      %v374 = vunpack.c.l.bf16 %v318
      %v375 = vunpack.c.l.bf16 %v319
      %v376 = vunpack.c.l.bf16 %v320
      %v377 = vunpack.c.l.bf16 %v321
      %v378 = vunpack.c.l.bf16 %v322
      %v379 = vunpack.c.l.bf16 %v323
      %v380 = vunpack.c.l.bf16 %v324
      %v381 = vunpack.c.l.bf16 %v325
      %v382 = vunpack.c.l.bf16 %v326
      %v383 = vunpack.c.l.bf16 %v327
      %v384 = vunpack.c.l.bf16 %v328
      %v385 = vunpack.c.l.bf16 %v329
      %v386 = vunpack.c.l.bf16 %v330
      %v387 = vunpack.c.l.bf16 %v331
      %v388 = vunpack.c.l.bf16 %v332
      %v389 = vunpack.c.l.bf16 %v333
      %v390 = vunpack.c.l.bf16 %v334
      %v391 = vunpack.c.l.bf16 %v335
      %v392 = vunpack.c.l.bf16 %v336
      %v393 = vunpack.c.l.bf16 %v337
      %v394 = vunpack.c.l.bf16 %v338
      %v395 = vunpack.c.l.bf16 %v339
      %v396 = vunpack.c.l.bf16 %v340
      %v397 = vunpack.c.l.bf16 %v341
      %v398 = vunpack.c.l.bf16 %v342
      %v399 = vunpack.c.l.bf16 %v343
      %v400 = vunpack.c.l.bf16 %v344
      %v401 = vunpack.c.l.bf16 %v345
      %v402 = vunpack.c.l.bf16 %v346
      %v403 = vunpack.c.l.bf16 %v347
      %v404 = vunpack.c.l.bf16 %v348
      %v405 = vunpack.c.l.bf16 %v349
      %v406 = vunpack.c.l.bf16 %v350
      %v407 = vunpack.c.l.bf16 %v351
      %v408 = vunpack.c.l.bf16 %v352
      %v409 = vunpack.c.l.bf16 %v353
      %v410 = vunpack.c.l.bf16 %v354
      %v411 = vunpack.c.l.bf16 %v355
      %v412 = vunpack.c.l.bf16 %v356
      %v413 = vunpack.c.l.bf16 %v357
      %v414 = vunpack.c.l.bf16 %v358
      %v415 = vunpack.c.l.bf16 %v359
      %v416 = vunpack.c.l.bf16 %v360
      %v417 = vunpack.c.l.bf16 %v361
      %v418 = vunpack.c.l.bf16 %v362
      %v419 = vunpack.c.l.bf16 %v363
      %v420 = vunpack.c.l.bf16 %v364
      %v421 = vunpack.c.l.bf16 %v365
      %v423 = vlaneseq
      %v424 = vshrl.u32 %v423, 7
      %v425 = vsub.s32 0, %v424
      %v426 = vrot.slane %v366, %v425
      %v428 = vmul.f32 %v368, %v426
      %v429 = vmul.f32 %v369, %v426
      %v430 = vmul.f32 %v370, %v426
      %v431 = vmul.f32 %v371, %v426
      %v432 = vmul.f32 %v372, %v426
      %v433 = vmul.f32 %v373, %v426
      %v434 = vmul.f32 %v374, %v426
      %v435 = vmul.f32 %v375, %v426
      %v436 = vmul.f32 %v376, %v426
      %v437 = vmul.f32 %v377, %v426
      %v438 = vmul.f32 %v378, %v426
      %v439 = vmul.f32 %v379, %v426
      %v440 = vmul.f32 %v380, %v426
      %v441 = vmul.f32 %v381, %v426
      %v442 = vmul.f32 %v382, %v426
      %v443 = vmul.f32 %v383, %v426
      %v444 = vmul.f32 %v384, %v426
      %v445 = vmul.f32 %v385, %v426
      %v446 = vmul.f32 %v386, %v426
      %v447 = vmul.f32 %v387, %v426
      %v448 = vmul.f32 %v388, %v426
      %v449 = vmul.f32 %v389, %v426
      %v450 = vmul.f32 %v390, %v426
      %v451 = vmul.f32 %v391, %v426
      %v452 = vmul.f32 %v392, %v426
      %v453 = vmul.f32 %v393, %v426
      %v454 = vmul.f32 %v394, %v426
      %v455 = vmul.f32 %v395, %v426
      %v456 = vmul.f32 %v396, %v426
      %v457 = vmul.f32 %v397, %v426
      %v458 = vmul.f32 %v398, %v426
      %v459 = vmul.f32 %v399, %v426
      %v460 = vmul.f32 %v400, %v426
      %v461 = vmul.f32 %v401, %v426
      %v462 = vmul.f32 %v402, %v426
      %v463 = vmul.f32 %v403, %v426
      %v464 = vmul.f32 %v404, %v426
      %v465 = vmul.f32 %v405, %v426
      %v466 = vmul.f32 %v406, %v426
      %v467 = vmul.f32 %v407, %v426
      %v468 = vmul.f32 %v408, %v426
      %v469 = vmul.f32 %v409, %v426
      %v470 = vmul.f32 %v410, %v426
      %v471 = vmul.f32 %v411, %v426
      %v472 = vmul.f32 %v412, %v426
      %v473 = vmul.f32 %v413, %v426
      %v474 = vmul.f32 %v414, %v426
      %v475 = vmul.f32 %v415, %v426
      %v476 = vmul.f32 %v416, %v426
      %v477 = vmul.f32 %v417, %v426
      %v478 = vmul.f32 %v418, %v426
      %v479 = vmul.f32 %v419, %v426
      %v480 = vmul.f32 %v420, %v426
      %v481 = vmul.f32 %v421, %v426
      %v483 = vlaneseq
      %v484 = vshrl.u32 %v483, 7
      %v485 = vsub.s32 0, %v484
      %v486 = vrot.slane %v367, %v485
      %v488 = vadd.f32 %v428, %v486
      %v489 = vadd.f32 %v429, %v486
      %v490 = vadd.f32 %v430, %v486
      %v491 = vadd.f32 %v431, %v486
      %v492 = vadd.f32 %v432, %v486
      %v493 = vadd.f32 %v433, %v486
      %v494 = vadd.f32 %v434, %v486
      %v495 = vadd.f32 %v435, %v486
      %v496 = vadd.f32 %v436, %v486
      %v497 = vadd.f32 %v437, %v486
      %v498 = vadd.f32 %v438, %v486
      %v499 = vadd.f32 %v439, %v486
      %v500 = vadd.f32 %v440, %v486
      %v501 = vadd.f32 %v441, %v486
      %v502 = vadd.f32 %v442, %v486
      %v503 = vadd.f32 %v443, %v486
      %v504 = vadd.f32 %v444, %v486
      %v505 = vadd.f32 %v445, %v486
      %v506 = vadd.f32 %v446, %v486
      %v507 = vadd.f32 %v447, %v486
      %v508 = vadd.f32 %v448, %v486
      %v509 = vadd.f32 %v449, %v486
      %v510 = vadd.f32 %v450, %v486
      %v511 = vadd.f32 %v451, %v486
      %v512 = vadd.f32 %v452, %v486
      %v513 = vadd.f32 %v453, %v486
      %v514 = vadd.f32 %v454, %v486
      %v515 = vadd.f32 %v455, %v486
      %v516 = vadd.f32 %v456, %v486
      %v517 = vadd.f32 %v457, %v486
      %v518 = vadd.f32 %v458, %v486
      %v519 = vadd.f32 %v459, %v486
      %v520 = vadd.f32 %v460, %v486
      %v521 = vadd.f32 %v461, %v486
      %v522 = vadd.f32 %v462, %v486
      %v523 = vadd.f32 %v463, %v486
      %v524 = vadd.f32 %v464, %v486
      %v525 = vadd.f32 %v465, %v486
      %v526 = vadd.f32 %v466, %v486
      %v527 = vadd.f32 %v467, %v486
      %v528 = vadd.f32 %v468, %v486
      %v529 = vadd.f32 %v469, %v486
      %v530 = vadd.f32 %v470, %v486
      %v531 = vadd.f32 %v471, %v486
      %v532 = vadd.f32 %v472, %v486
      %v533 = vadd.f32 %v473, %v486
      %v534 = vadd.f32 %v474, %v486
      %v535 = vadd.f32 %v475, %v486
      %v536 = vadd.f32 %v476, %v486
      %v537 = vadd.f32 %v477, %v486
      %v538 = vadd.f32 %v478, %v486
      %v539 = vadd.f32 %v479, %v486
      %v540 = vadd.f32 %v480, %v486
      %v541 = vadd.f32 %v481, %v486
      %v542 = vmax.f32 %v488, 0.0
      %v543 = vmax.f32 %v489, 0.0
      %v544 = vmax.f32 %v490, 0.0
      %v545 = vmax.f32 %v491, 0.0
      %v546 = vmax.f32 %v492, 0.0
      %v547 = vmax.f32 %v493, 0.0
      %v548 = vmax.f32 %v494, 0.0
      %v549 = vmax.f32 %v495, 0.0
      %v550 = vmax.f32 %v496, 0.0
      %v551 = vmax.f32 %v497, 0.0
      %v552 = vmax.f32 %v498, 0.0
      %v553 = vmax.f32 %v499, 0.0
      %v554 = vmax.f32 %v500, 0.0
      %v555 = vmax.f32 %v501, 0.0
      %v556 = vmax.f32 %v502, 0.0
      %v557 = vmax.f32 %v503, 0.0
      %v558 = vmax.f32 %v504, 0.0
      %v559 = vmax.f32 %v505, 0.0
      %v560 = vmax.f32 %v506, 0.0
      %v561 = vmax.f32 %v507, 0.0
      %v562 = vmax.f32 %v508, 0.0
      %v563 = vmax.f32 %v509, 0.0
      %v564 = vmax.f32 %v510, 0.0
      %v565 = vmax.f32 %v511, 0.0
      %v566 = vmax.f32 %v512, 0.0
      %v567 = vmax.f32 %v513, 0.0
      %v568 = vmax.f32 %v514, 0.0
      %v569 = vmax.f32 %v515, 0.0
      %v570 = vmax.f32 %v516, 0.0
      %v571 = vmax.f32 %v517, 0.0
      %v572 = vmax.f32 %v518, 0.0
      %v573 = vmax.f32 %v519, 0.0
      %v574 = vmax.f32 %v520, 0.0
      %v575 = vmax.f32 %v521, 0.0
      %v576 = vmax.f32 %v522, 0.0
      %v577 = vmax.f32 %v523, 0.0
      %v578 = vmax.f32 %v524, 0.0
      %v579 = vmax.f32 %v525, 0.0
      %v580 = vmax.f32 %v526, 0.0
      %v581 = vmax.f32 %v527, 0.0
      %v582 = vmax.f32 %v528, 0.0
      %v583 = vmax.f32 %v529, 0.0
      %v584 = vmax.f32 %v530, 0.0
      %v585 = vmax.f32 %v531, 0.0
      %v586 = vmax.f32 %v532, 0.0
      %v587 = vmax.f32 %v533, 0.0
      %v588 = vmax.f32 %v534, 0.0
      %v589 = vmax.f32 %v535, 0.0
      %v590 = vmax.f32 %v536, 0.0
      %v591 = vmax.f32 %v537, 0.0
      %v592 = vmax.f32 %v538, 0.0
      %v593 = vmax.f32 %v539, 0.0
      %v594 = vmax.f32 %v540, 0.0
      %v595 = vmax.f32 %v541, 0.0
      %v596 = vpack.c.bf16 %v543, %v542
      %v597 = vpack.c.bf16 %v544, %v544
      %v598 = vpack.c.bf16 %v546, %v545
      %v599 = vpack.c.bf16 %v547, %v547
      %v600 = vpack.c.bf16 %v549, %v548
      %v601 = vpack.c.bf16 %v550, %v550
      %v602 = vpack.c.bf16 %v552, %v551
      %v603 = vpack.c.bf16 %v553, %v553
      %v604 = vpack.c.bf16 %v555, %v554
      %v605 = vpack.c.bf16 %v556, %v556
      %v606 = vpack.c.bf16 %v558, %v557
      %v607 = vpack.c.bf16 %v559, %v559
      %v608 = vpack.c.bf16 %v561, %v560
      %v609 = vpack.c.bf16 %v562, %v562
      %v610 = vpack.c.bf16 %v564, %v563
      %v611 = vpack.c.bf16 %v565, %v565
      %v612 = vpack.c.bf16 %v567, %v566
      %v613 = vpack.c.bf16 %v568, %v568
      %v614 = vpack.c.bf16 %v570, %v569
      %v615 = vpack.c.bf16 %v571, %v571
      %v616 = vpack.c.bf16 %v573, %v572
      %v617 = vpack.c.bf16 %v574, %v574
      %v618 = vpack.c.bf16 %v576, %v575
      %v619 = vpack.c.bf16 %v577, %v577
      %v620 = vpack.c.bf16 %v579, %v578
      %v621 = vpack.c.bf16 %v580, %v580
      %v622 = vpack.c.bf16 %v582, %v581
      %v623 = vpack.c.bf16 %v583, %v583
      %v624 = vpack.c.bf16 %v585, %v584
      %v625 = vpack.c.bf16 %v586, %v586
      %v626 = vpack.c.bf16 %v588, %v587
      %v627 = vpack.c.bf16 %v589, %v589
      %v628 = vpack.c.bf16 %v591, %v590
      %v629 = vpack.c.bf16 %v592, %v592
      %v630 = vpack.c.bf16 %v594, %v593
      %v631 = vpack.c.bf16 %v595, %v595
      %v648 = vunpack.c.l.b16 %v596
      %v649 = vunpack.c.h.b16 %v596
      %v650 = vunpack.c.l.b16 %v598
      %v651 = vunpack.c.h.b16 %v598
      %v652 = vunpack.c.l.b16 %v600
      %v653 = vunpack.c.h.b16 %v600
      %v654 = vunpack.c.l.b16 %v602
      %v655 = vunpack.c.h.b16 %v602
      %v656 = vunpack.c.l.b16 %v604
      %v657 = vunpack.c.h.b16 %v604
      %v658 = vunpack.c.l.b16 %v606
      %v659 = vunpack.c.h.b16 %v606
      %v660 = vunpack.c.l.b16 %v608
      %v661 = vunpack.c.h.b16 %v608
      %v662 = vunpack.c.l.b16 %v610
      %v663 = vunpack.c.h.b16 %v610
      %v664 = vunpack.c.l.b16 %v612
      %v665 = vunpack.c.h.b16 %v612
      %v666 = vunpack.c.l.b16 %v614
      %v667 = vunpack.c.h.b16 %v614
      %v668 = vunpack.c.l.b16 %v616
      %v669 = vunpack.c.h.b16 %v616
      %v670 = vunpack.c.l.b16 %v618
      %v671 = vunpack.c.h.b16 %v618
      %v672 = vunpack.c.l.b16 %v620
      %v673 = vunpack.c.h.b16 %v620
      %v674 = vunpack.c.l.b16 %v622
      %v675 = vunpack.c.h.b16 %v622
      %v676 = vunpack.c.l.b16 %v624
      %v677 = vunpack.c.h.b16 %v624
      %v678 = vunpack.c.l.b16 %v626
      %v679 = vunpack.c.h.b16 %v626
      %v680 = vpack.c.b16 %v648, %v648
      %v681 = vpack.c.b16 %v649, %v649
      %v682 = vpack.c.b16 %v650, %v650
      %v683 = vpack.c.b16 %v651, %v651
      %v684 = vpack.c.b16 %v652, %v652
      %v685 = vpack.c.b16 %v653, %v653
      %v686 = vpack.c.b16 %v654, %v654
      %v687 = vpack.c.b16 %v655, %v655
      %v688 = vpack.c.b16 %v656, %v656
      %v689 = vpack.c.b16 %v657, %v657
      %v690 = vpack.c.b16 %v658, %v658
      %v691 = vpack.c.b16 %v659, %v659
      %v692 = vpack.c.b16 %v660, %v660
      %v693 = vpack.c.b16 %v661, %v661
      %v694 = vpack.c.b16 %v662, %v662
      %v695 = vpack.c.b16 %v663, %v663
      %v696 = vpack.c.b16 %v664, %v664
      %v697 = vpack.c.b16 %v665, %v665
      %v698 = vpack.c.b16 %v666, %v666
      %v699 = vpack.c.b16 %v667, %v667
      %v700 = vpack.c.b16 %v668, %v668
      %v701 = vpack.c.b16 %v669, %v669
      %v702 = vpack.c.b16 %v670, %v670
      %v703 = vpack.c.b16 %v671, %v671
      %v704 = vpack.c.b16 %v672, %v672
      %v705 = vpack.c.b16 %v673, %v673
      %v706 = vpack.c.b16 %v674, %v674
      %v707 = vpack.c.b16 %v675, %v675
      %v708 = vpack.c.b16 %v676, %v676
      %v709 = vpack.c.b16 %v677, %v677
      %v710 = vpack.c.b16 %v678, %v678
      %v711 = vpack.c.b16 %v679, %v679
      %vm744 = vcmask 125952
      %745 = vst.msk [vmem:[#allocation2] sm:$0xf] %vm744, %v680
      %746 = vst.msk [vmem:[#allocation2 + $0x8] sm:$0xf] %vm744, %v681
      %747 = vst.msk [vmem:[#allocation2 + $0x10] sm:$0xf] %vm744, %v682
      %748 = vst.msk [vmem:[#allocation2 + $0x18] sm:$0xf] %vm744, %v683
      %749 = vst.msk [vmem:[#allocation2 + $0x20] sm:$0xf] %vm744, %v684
      %750 = vst.msk [vmem:[#allocation2 + $0x28] sm:$0xf] %vm744, %v685
      %751 = vst.msk [vmem:[#allocation2 + $0x30] sm:$0xf] %vm744, %v686
      %752 = vst.msk [vmem:[#allocation2 + $0x38] sm:$0xf] %vm744, %v687
      %753 = vst.msk [vmem:[#allocation2 + $0x40] sm:$0xf] %vm744, %v688
      %754 = vst.msk [vmem:[#allocation2 + $0x48] sm:$0xf] %vm744, %v689
      %755 = vst.msk [vmem:[#allocation2 + $0x50] sm:$0xf] %vm744, %v690
      %756 = vst.msk [vmem:[#allocation2 + $0x58] sm:$0xf] %vm744, %v691
      %757 = vst.msk [vmem:[#allocation2 + $0x60] sm:$0xf] %vm744, %v692
      %758 = vst.msk [vmem:[#allocation2 + $0x68] sm:$0xf] %vm744, %v693
      %759 = vst.msk [vmem:[#allocation2 + $0x70] sm:$0xf] %vm744, %v694
      %760 = vst.msk [vmem:[#allocation2 + $0x78] sm:$0xf] %vm744, %v695
      %761 = vst.msk [vmem:[#allocation2 + $0x80] sm:$0xf] %vm744, %v696
      %762 = vst.msk [vmem:[#allocation2 + $0x88] sm:$0xf] %vm744, %v697
      %763 = vst.msk [vmem:[#allocation2 + $0x90] sm:$0xf] %vm744, %v698
      %764 = vst.msk [vmem:[#allocation2 + $0x98] sm:$0xf] %vm744, %v699
      %765 = vst.msk [vmem:[#allocation2 + $0xa0] sm:$0xf] %vm744, %v700
      %766 = vst.msk [vmem:[#allocation2 + $0xa8] sm:$0xf] %vm744, %v701
      %767 = vst.msk [vmem:[#allocation2 + $0xb0] sm:$0xf] %vm744, %v702
      %768 = vst.msk [vmem:[#allocation2 + $0xb8] sm:$0xf] %vm744, %v703
      %769 = vst.msk [vmem:[#allocation2 + $0xc0] sm:$0xf] %vm744, %v704
      %770 = vst.msk [vmem:[#allocation2 + $0xc8] sm:$0xf] %vm744, %v705
      %771 = vst.msk [vmem:[#allocation2 + $0xd0] sm:$0xf] %vm744, %v706
      %772 = vst.msk [vmem:[#allocation2 + $0xd8] sm:$0xf] %vm744, %v707
      %773 = vst.msk [vmem:[#allocation2 + $0xe0] sm:$0xf] %vm744, %v708
      %774 = vst.msk [vmem:[#allocation2 + $0xe8] sm:$0xf] %vm744, %v709
      %775 = vst.msk [vmem:[#allocation2 + $0xf0] sm:$0xf] %vm744, %v710
      %776 = vst.msk [vmem:[#allocation2 + $0xf8] sm:$0xf] %vm744, %v711
      %v793 = vunpack.c.l.b16 %v597
      %v794 = vunpack.c.l.b16 %v599
      %v795 = vunpack.c.l.b16 %v601
      %v796 = vunpack.c.l.b16 %v603
      %v797 = vunpack.c.l.b16 %v605
      %v798 = vunpack.c.l.b16 %v607
      %v799 = vunpack.c.l.b16 %v609
      %v800 = vunpack.c.l.b16 %v611
      %v801 = vunpack.c.l.b16 %v613
      %v802 = vunpack.c.l.b16 %v615
      %v803 = vunpack.c.l.b16 %v617
      %v804 = vunpack.c.l.b16 %v619
      %v805 = vunpack.c.l.b16 %v621
      %v806 = vunpack.c.l.b16 %v623
      %v807 = vunpack.c.l.b16 %v625
      %v808 = vunpack.c.l.b16 %v627
      %v809 = vpack.c.b16 %v793, %v793
      %v810 = vpack.c.b16 %v794, %v794
      %v811 = vpack.c.b16 %v795, %v795
      %v812 = vpack.c.b16 %v796, %v796
      %v813 = vpack.c.b16 %v797, %v797
      %v814 = vpack.c.b16 %v798, %v798
      %v815 = vpack.c.b16 %v799, %v799
      %v816 = vpack.c.b16 %v800, %v800
      %v817 = vpack.c.b16 %v801, %v801
      %v818 = vpack.c.b16 %v802, %v802
      %v819 = vpack.c.b16 %v803, %v803
      %v820 = vpack.c.b16 %v804, %v804
      %v821 = vpack.c.b16 %v805, %v805
      %v822 = vpack.c.b16 %v806, %v806
      %v823 = vpack.c.b16 %v807, %v807
      %v824 = vpack.c.b16 %v808, %v808
      %vm825 = vsmask.f32 3328
      %vm826 = vsmask.f32 7440
      %vm827 = vmor %vm825, %vm826
      %v829 = vshrl.u32 %v680, 16
      %v831 = vrot.slane %v829, 4
      %v832 = vshll.u32 %v680, 16
      %v834 = vrot.slane %v832, 5
      %v835 = vor.u32 %v831, %v834
      %v836 = vrot.slane %v835, 4
      %v838 = vshll.u32 %v681, 16
      %v840 = vrot.slane %v838, 5
      %v841 = vsel %vm827, %v836, %v840
      %v842 = vshrl.u32 %v681, 16
      %v844 = vrot.slane %v842, 4
      %v845 = vor.u32 %v844, %v840
      %v846 = vrot.slane %v845, 4
      %v848 = vshll.u32 %v809, 16
      %v850 = vrot.slane %v848, 5
      %v851 = vsel %vm827, %v846, %v850
      %v853 = vshrl.u32 %v682, 16
      %v855 = vrot.slane %v853, 4
      %v856 = vshll.u32 %v682, 16
      %v858 = vrot.slane %v856, 5
      %v859 = vor.u32 %v855, %v858
      %v860 = vrot.slane %v859, 4
      %v862 = vshll.u32 %v683, 16
      %v864 = vrot.slane %v862, 5
      %v865 = vsel %vm827, %v860, %v864
      %v866 = vshrl.u32 %v683, 16
      %v868 = vrot.slane %v866, 4
      %v869 = vor.u32 %v868, %v864
      %v870 = vrot.slane %v869, 4
      %v872 = vshll.u32 %v810, 16
      %v874 = vrot.slane %v872, 5
      %v875 = vsel %vm827, %v870, %v874
      %v877 = vshrl.u32 %v684, 16
      %v879 = vrot.slane %v877, 4
      %v880 = vshll.u32 %v684, 16
      %v882 = vrot.slane %v880, 5
      %v883 = vor.u32 %v879, %v882
      %v884 = vrot.slane %v883, 4
      %v886 = vshll.u32 %v685, 16
      %v888 = vrot.slane %v886, 5
      %v889 = vsel %vm827, %v884, %v888
      %v890 = vshrl.u32 %v685, 16
      %v892 = vrot.slane %v890, 4
      %v893 = vor.u32 %v892, %v888
      %v894 = vrot.slane %v893, 4
      %v896 = vshll.u32 %v811, 16
      %v898 = vrot.slane %v896, 5
      %v899 = vsel %vm827, %v894, %v898
      %v901 = vshrl.u32 %v686, 16
      %v903 = vrot.slane %v901, 4
      %v904 = vshll.u32 %v686, 16
      %v906 = vrot.slane %v904, 5
      %v907 = vor.u32 %v903, %v906
      %v908 = vrot.slane %v907, 4
      %v910 = vshll.u32 %v687, 16
      %v912 = vrot.slane %v910, 5
      %v913 = vsel %vm827, %v908, %v912
      %v914 = vshrl.u32 %v687, 16
      %v916 = vrot.slane %v914, 4
      %v917 = vor.u32 %v916, %v912
      %v918 = vrot.slane %v917, 4
      %v920 = vshll.u32 %v812, 16
      %v922 = vrot.slane %v920, 5
      %v923 = vsel %vm827, %v918, %v922
      %v925 = vshrl.u32 %v688, 16
      %v927 = vrot.slane %v925, 4
      %v928 = vshll.u32 %v688, 16
      %v930 = vrot.slane %v928, 5
      %v931 = vor.u32 %v927, %v930
      %v932 = vrot.slane %v931, 4
      %v934 = vshll.u32 %v689, 16
      %v936 = vrot.slane %v934, 5
      %v937 = vsel %vm827, %v932, %v936
      %v938 = vshrl.u32 %v689, 16
      %v940 = vrot.slane %v938, 4
      %v941 = vor.u32 %v940, %v936
      %v942 = vrot.slane %v941, 4
      %v944 = vshll.u32 %v813, 16
      %v946 = vrot.slane %v944, 5
      %v947 = vsel %vm827, %v942, %v946
      %v949 = vshrl.u32 %v690, 16
      %v951 = vrot.slane %v949, 4
      %v952 = vshll.u32 %v690, 16
      %v954 = vrot.slane %v952, 5
      %v955 = vor.u32 %v951, %v954
      %v956 = vrot.slane %v955, 4
      %v958 = vshll.u32 %v691, 16
      %v960 = vrot.slane %v958, 5
      %v961 = vsel %vm827, %v956, %v960
      %v962 = vshrl.u32 %v691, 16
      %v964 = vrot.slane %v962, 4
      %v965 = vor.u32 %v964, %v960
      %v966 = vrot.slane %v965, 4
      %v968 = vshll.u32 %v814, 16
      %v970 = vrot.slane %v968, 5
      %v971 = vsel %vm827, %v966, %v970
      %v973 = vshrl.u32 %v692, 16
      %v975 = vrot.slane %v973, 4
      %v976 = vshll.u32 %v692, 16
      %v978 = vrot.slane %v976, 5
      %v979 = vor.u32 %v975, %v978
      %v980 = vrot.slane %v979, 4
      %v982 = vshll.u32 %v693, 16
      %v984 = vrot.slane %v982, 5
      %v985 = vsel %vm827, %v980, %v984
      %v986 = vshrl.u32 %v693, 16
      %v988 = vrot.slane %v986, 4
      %v989 = vor.u32 %v988, %v984
      %v990 = vrot.slane %v989, 4
      %v992 = vshll.u32 %v815, 16
      %v994 = vrot.slane %v992, 5
      %v995 = vsel %vm827, %v990, %v994
      %v997 = vshrl.u32 %v694, 16
      %v999 = vrot.slane %v997, 4
      %v1000 = vshll.u32 %v694, 16
      %v1002 = vrot.slane %v1000, 5
      %v1003 = vor.u32 %v999, %v1002
      %v1004 = vrot.slane %v1003, 4
      %v1006 = vshll.u32 %v695, 16
      %v1008 = vrot.slane %v1006, 5
      %v1009 = vsel %vm827, %v1004, %v1008
      %v1010 = vshrl.u32 %v695, 16
      %v1012 = vrot.slane %v1010, 4
      %v1013 = vor.u32 %v1012, %v1008
      %v1014 = vrot.slane %v1013, 4
      %v1016 = vshll.u32 %v816, 16
      %v1018 = vrot.slane %v1016, 5
      %v1019 = vsel %vm827, %v1014, %v1018
      %v1021 = vshrl.u32 %v696, 16
      %v1023 = vrot.slane %v1021, 4
      %v1024 = vshll.u32 %v696, 16
      %v1026 = vrot.slane %v1024, 5
      %v1027 = vor.u32 %v1023, %v1026
      %v1028 = vrot.slane %v1027, 4
      %v1030 = vshll.u32 %v697, 16
      %v1032 = vrot.slane %v1030, 5
      %v1033 = vsel %vm827, %v1028, %v1032
      %v1034 = vshrl.u32 %v697, 16
      %v1036 = vrot.slane %v1034, 4
      %v1037 = vor.u32 %v1036, %v1032
      %v1038 = vrot.slane %v1037, 4
      %v1040 = vshll.u32 %v817, 16
      %v1042 = vrot.slane %v1040, 5
      %v1043 = vsel %vm827, %v1038, %v1042
      %v1045 = vshrl.u32 %v698, 16
      %v1047 = vrot.slane %v1045, 4
      %v1048 = vshll.u32 %v698, 16
      %v1050 = vrot.slane %v1048, 5
      %v1051 = vor.u32 %v1047, %v1050
      %v1052 = vrot.slane %v1051, 4
      %v1054 = vshll.u32 %v699, 16
      %v1056 = vrot.slane %v1054, 5
      %v1057 = vsel %vm827, %v1052, %v1056
      %v1058 = vshrl.u32 %v699, 16
      %v1060 = vrot.slane %v1058, 4
      %v1061 = vor.u32 %v1060, %v1056
      %v1062 = vrot.slane %v1061, 4
      %v1064 = vshll.u32 %v818, 16
      %v1066 = vrot.slane %v1064, 5
      %v1067 = vsel %vm827, %v1062, %v1066
      %v1069 = vshrl.u32 %v700, 16
      %v1071 = vrot.slane %v1069, 4
      %v1072 = vshll.u32 %v700, 16
      %v1074 = vrot.slane %v1072, 5
      %v1075 = vor.u32 %v1071, %v1074
      %v1076 = vrot.slane %v1075, 4
      %v1078 = vshll.u32 %v701, 16
      %v1080 = vrot.slane %v1078, 5
      %v1081 = vsel %vm827, %v1076, %v1080
      %v1082 = vshrl.u32 %v701, 16
      %v1084 = vrot.slane %v1082, 4
      %v1085 = vor.u32 %v1084, %v1080
      %v1086 = vrot.slane %v1085, 4
      %v1088 = vshll.u32 %v819, 16
      %v1090 = vrot.slane %v1088, 5
      %v1091 = vsel %vm827, %v1086, %v1090
      %v1093 = vshrl.u32 %v702, 16
      %v1095 = vrot.slane %v1093, 4
      %v1096 = vshll.u32 %v702, 16
      %v1098 = vrot.slane %v1096, 5
      %v1099 = vor.u32 %v1095, %v1098
      %v1100 = vrot.slane %v1099, 4
      %v1102 = vshll.u32 %v703, 16
      %v1104 = vrot.slane %v1102, 5
      %v1105 = vsel %vm827, %v1100, %v1104
      %v1106 = vshrl.u32 %v703, 16
      %v1108 = vrot.slane %v1106, 4
      %v1109 = vor.u32 %v1108, %v1104
      %v1110 = vrot.slane %v1109, 4
      %v1112 = vshll.u32 %v820, 16
      %v1114 = vrot.slane %v1112, 5
      %v1115 = vsel %vm827, %v1110, %v1114
      %v1117 = vshrl.u32 %v704, 16
      %v1119 = vrot.slane %v1117, 4
      %v1120 = vshll.u32 %v704, 16
      %v1122 = vrot.slane %v1120, 5
      %v1123 = vor.u32 %v1119, %v1122
      %v1124 = vrot.slane %v1123, 4
      %v1126 = vshll.u32 %v705, 16
      %v1128 = vrot.slane %v1126, 5
      %v1129 = vsel %vm827, %v1124, %v1128
      %v1130 = vshrl.u32 %v705, 16
      %v1132 = vrot.slane %v1130, 4
      %v1133 = vor.u32 %v1132, %v1128
      %v1134 = vrot.slane %v1133, 4
      %v1136 = vshll.u32 %v821, 16
      %v1138 = vrot.slane %v1136, 5
      %v1139 = vsel %vm827, %v1134, %v1138
      %v1141 = vshrl.u32 %v706, 16
      %v1143 = vrot.slane %v1141, 4
      %v1144 = vshll.u32 %v706, 16
      %v1146 = vrot.slane %v1144, 5
      %v1147 = vor.u32 %v1143, %v1146
      %v1148 = vrot.slane %v1147, 4
      %v1150 = vshll.u32 %v707, 16
      %v1152 = vrot.slane %v1150, 5
      %v1153 = vsel %vm827, %v1148, %v1152
      %v1154 = vshrl.u32 %v707, 16
      %v1156 = vrot.slane %v1154, 4
      %v1157 = vor.u32 %v1156, %v1152
      %v1158 = vrot.slane %v1157, 4
      %v1160 = vshll.u32 %v822, 16
      %v1162 = vrot.slane %v1160, 5
      %v1163 = vsel %vm827, %v1158, %v1162
      %v1165 = vshrl.u32 %v708, 16
      %v1167 = vrot.slane %v1165, 4
      %v1168 = vshll.u32 %v708, 16
      %v1170 = vrot.slane %v1168, 5
      %v1171 = vor.u32 %v1167, %v1170
      %v1172 = vrot.slane %v1171, 4
      %v1174 = vshll.u32 %v709, 16
      %v1176 = vrot.slane %v1174, 5
      %v1177 = vsel %vm827, %v1172, %v1176
      %v1178 = vshrl.u32 %v709, 16
      %v1180 = vrot.slane %v1178, 4
      %v1181 = vor.u32 %v1180, %v1176
      %v1182 = vrot.slane %v1181, 4
      %v1184 = vshll.u32 %v823, 16
      %v1186 = vrot.slane %v1184, 5
      %v1187 = vsel %vm827, %v1182, %v1186
      %v1189 = vshrl.u32 %v710, 16
      %v1191 = vrot.slane %v1189, 4
      %v1192 = vshll.u32 %v710, 16
      %v1194 = vrot.slane %v1192, 5
      %v1195 = vor.u32 %v1191, %v1194
      %v1196 = vrot.slane %v1195, 4
      %v1198 = vshll.u32 %v711, 16
      %v1200 = vrot.slane %v1198, 5
      %v1201 = vsel %vm827, %v1196, %v1200
      %v1202 = vshrl.u32 %v711, 16
      %v1204 = vrot.slane %v1202, 4
      %v1205 = vor.u32 %v1204, %v1200
      %v1206 = vrot.slane %v1205, 4
      %v1208 = vshll.u32 %v824, 16
      %v1210 = vrot.slane %v1208, 5
      %v1211 = vsel %vm827, %v1206, %v1210
      %1212 = vrot.lane.b32.xlu0 %v841, 16
      %v1213 = vpop.permute.xlu0 %1212
      %1214 = vrot.lane.b32.xlu0 %v851, 16
      %v1215 = vpop.permute.xlu0 %1214
      %1216 = vrot.lane.b32.xlu0 %v865, 16
      %v1217 = vpop.permute.xlu0 %1216
      %1218 = vrot.lane.b32.xlu0 %v875, 16
      %v1219 = vpop.permute.xlu0 %1218
      %1220 = vrot.lane.b32.xlu0 %v889, 16
      %v1221 = vpop.permute.xlu0 %1220
      %1222 = vrot.lane.b32.xlu0 %v899, 16
      %v1223 = vpop.permute.xlu0 %1222
      %1224 = vrot.lane.b32.xlu0 %v913, 16
      %v1225 = vpop.permute.xlu0 %1224
      %1226 = vrot.lane.b32.xlu0 %v923, 16
      %v1227 = vpop.permute.xlu0 %1226
      %1228 = vrot.lane.b32.xlu0 %v937, 16
      %v1229 = vpop.permute.xlu0 %1228
      %1230 = vrot.lane.b32.xlu0 %v947, 16
      %v1231 = vpop.permute.xlu0 %1230
      %1232 = vrot.lane.b32.xlu0 %v961, 16
      %v1233 = vpop.permute.xlu0 %1232
      %1234 = vrot.lane.b32.xlu0 %v971, 16
      %v1235 = vpop.permute.xlu0 %1234
      %1236 = vrot.lane.b32.xlu0 %v985, 16
      %v1237 = vpop.permute.xlu0 %1236
      %1238 = vrot.lane.b32.xlu0 %v995, 16
      %v1239 = vpop.permute.xlu0 %1238
      %1240 = vrot.lane.b32.xlu0 %v1009, 16
      %v1241 = vpop.permute.xlu0 %1240
      %1242 = vrot.lane.b32.xlu0 %v1019, 16
      %v1243 = vpop.permute.xlu0 %1242
      %1244 = vrot.lane.b32.xlu0 %v1033, 16
      %v1245 = vpop.permute.xlu0 %1244
      %1246 = vrot.lane.b32.xlu0 %v1043, 16
      %v1247 = vpop.permute.xlu0 %1246
      %1248 = vrot.lane.b32.xlu0 %v1057, 16
      %v1249 = vpop.permute.xlu0 %1248
      %1250 = vrot.lane.b32.xlu0 %v1067, 16
      %v1251 = vpop.permute.xlu0 %1250
      %1252 = vrot.lane.b32.xlu0 %v1081, 16
      %v1253 = vpop.permute.xlu0 %1252
      %1254 = vrot.lane.b32.xlu0 %v1091, 16
      %v1255 = vpop.permute.xlu0 %1254
      %1256 = vrot.lane.b32.xlu0 %v1105, 16
      %v1257 = vpop.permute.xlu0 %1256
      %1258 = vrot.lane.b32.xlu0 %v1115, 16
      %v1259 = vpop.permute.xlu0 %1258
      %1260 = vrot.lane.b32.xlu0 %v1129, 16
      %v1261 = vpop.permute.xlu0 %1260
      %1262 = vrot.lane.b32.xlu0 %v1139, 16
      %v1263 = vpop.permute.xlu0 %1262
      %1264 = vrot.lane.b32.xlu0 %v1153, 16
      %v1265 = vpop.permute.xlu0 %1264
      %1266 = vrot.lane.b32.xlu0 %v1163, 16
      %v1267 = vpop.permute.xlu0 %1266
      %1268 = vrot.lane.b32.xlu0 %v1177, 16
      %v1269 = vpop.permute.xlu0 %1268
      %1270 = vrot.lane.b32.xlu0 %v1187, 16
      %v1271 = vpop.permute.xlu0 %1270
      %1272 = vrot.lane.b32.xlu0 %v1201, 16
      %v1273 = vpop.permute.xlu0 %1272
      %1274 = vrot.lane.b32.xlu0 %v1211, 16
      %v1275 = vpop.permute.xlu0 %1274
      %vm1308 = vcmask 257152
      %1309 = vst.msk [vmem:[#allocation2] sm:$0xf] %vm1308, %v1213
      %1310 = vst.msk [vmem:[#allocation2 + $0x8] sm:$0xf] %vm1308, %v1215
      %1311 = vst.msk [vmem:[#allocation2 + $0x10] sm:$0xf] %vm1308, %v1217
      %1312 = vst.msk [vmem:[#allocation2 + $0x18] sm:$0xf] %vm1308, %v1219
      %1313 = vst.msk [vmem:[#allocation2 + $0x20] sm:$0xf] %vm1308, %v1221
      %1314 = vst.msk [vmem:[#allocation2 + $0x28] sm:$0xf] %vm1308, %v1223
      %1315 = vst.msk [vmem:[#allocation2 + $0x30] sm:$0xf] %vm1308, %v1225
      %1316 = vst.msk [vmem:[#allocation2 + $0x38] sm:$0xf] %vm1308, %v1227
      %1317 = vst.msk [vmem:[#allocation2 + $0x40] sm:$0xf] %vm1308, %v1229
      %1318 = vst.msk [vmem:[#allocation2 + $0x48] sm:$0xf] %vm1308, %v1231
      %1319 = vst.msk [vmem:[#allocation2 + $0x50] sm:$0xf] %vm1308, %v1233
      %1320 = vst.msk [vmem:[#allocation2 + $0x58] sm:$0xf] %vm1308, %v1235
      %1321 = vst.msk [vmem:[#allocation2 + $0x60] sm:$0xf] %vm1308, %v1237
      %1322 = vst.msk [vmem:[#allocation2 + $0x68] sm:$0xf] %vm1308, %v1239
      %1323 = vst.msk [vmem:[#allocation2 + $0x70] sm:$0xf] %vm1308, %v1241
      %1324 = vst.msk [vmem:[#allocation2 + $0x78] sm:$0xf] %vm1308, %v1243
      %1325 = vst.msk [vmem:[#allocation2 + $0x80] sm:$0xf] %vm1308, %v1245
      %1326 = vst.msk [vmem:[#allocation2 + $0x88] sm:$0xf] %vm1308, %v1247
      %1327 = vst.msk [vmem:[#allocation2 + $0x90] sm:$0xf] %vm1308, %v1249
      %1328 = vst.msk [vmem:[#allocation2 + $0x98] sm:$0xf] %vm1308, %v1251
      %1329 = vst.msk [vmem:[#allocation2 + $0xa0] sm:$0xf] %vm1308, %v1253
      %1330 = vst.msk [vmem:[#allocation2 + $0xa8] sm:$0xf] %vm1308, %v1255
      %1331 = vst.msk [vmem:[#allocation2 + $0xb0] sm:$0xf] %vm1308, %v1257
      %1332 = vst.msk [vmem:[#allocation2 + $0xb8] sm:$0xf] %vm1308, %v1259
      %1333 = vst.msk [vmem:[#allocation2 + $0xc0] sm:$0xf] %vm1308, %v1261
      %1334 = vst.msk [vmem:[#allocation2 + $0xc8] sm:$0xf] %vm1308, %v1263
      %1335 = vst.msk [vmem:[#allocation2 + $0xd0] sm:$0xf] %vm1308, %v1265
      %1336 = vst.msk [vmem:[#allocation2 + $0xd8] sm:$0xf] %vm1308, %v1267
      %1337 = vst.msk [vmem:[#allocation2 + $0xe0] sm:$0xf] %vm1308, %v1269
      %1338 = vst.msk [vmem:[#allocation2 + $0xe8] sm:$0xf] %vm1308, %v1271
      %1339 = vst.msk [vmem:[#allocation2 + $0xf0] sm:$0xf] %vm1308, %v1273
      %1340 = vst.msk [vmem:[#allocation2 + $0xf8] sm:$0xf] %vm1308, %v1275
      %vm1341 = vcmask 1042432
      %vm1342 = vcmask 1046532
      %vm1343 = vmor %vm1341, %vm1342
      %v1344 = vrot.slane %v680, 5
      %v1345 = vrot.slane %v1344, 4
      %v1346 = vrot.slane %v681, 5
      %v1347 = vsel %vm1343, %v1345, %v1346
      %v1348 = vrot.slane %v1346, 4
      %v1349 = vrot.slane %v809, 5
      %v1350 = vsel %vm1343, %v1348, %v1349
      %v1351 = vrot.slane %v682, 5
      %v1352 = vrot.slane %v1351, 4
      %v1353 = vrot.slane %v683, 5
      %v1354 = vsel %vm1343, %v1352, %v1353
      %v1355 = vrot.slane %v1353, 4
      %v1356 = vrot.slane %v810, 5
      %v1357 = vsel %vm1343, %v1355, %v1356
      %v1358 = vrot.slane %v684, 5
      %v1359 = vrot.slane %v1358, 4
      %v1360 = vrot.slane %v685, 5
      %v1361 = vsel %vm1343, %v1359, %v1360
      %v1362 = vrot.slane %v1360, 4
      %v1363 = vrot.slane %v811, 5
      %v1364 = vsel %vm1343, %v1362, %v1363
      %v1365 = vrot.slane %v686, 5
      %v1366 = vrot.slane %v1365, 4
      %v1367 = vrot.slane %v687, 5
      %v1368 = vsel %vm1343, %v1366, %v1367
      %v1369 = vrot.slane %v1367, 4
      %v1370 = vrot.slane %v812, 5
      %v1371 = vsel %vm1343, %v1369, %v1370
      %v1372 = vrot.slane %v688, 5
      %v1373 = vrot.slane %v1372, 4
      %v1374 = vrot.slane %v689, 5
      %v1375 = vsel %vm1343, %v1373, %v1374
      %v1376 = vrot.slane %v1374, 4
      %v1377 = vrot.slane %v813, 5
      %v1378 = vsel %vm1343, %v1376, %v1377
      %v1379 = vrot.slane %v690, 5
      %v1380 = vrot.slane %v1379, 4
      %v1381 = vrot.slane %v691, 5
      %v1382 = vsel %vm1343, %v1380, %v1381
      %v1383 = vrot.slane %v1381, 4
      %v1384 = vrot.slane %v814, 5
      %v1385 = vsel %vm1343, %v1383, %v1384
      %v1386 = vrot.slane %v692, 5
      %v1387 = vrot.slane %v1386, 4
      %v1388 = vrot.slane %v693, 5
      %v1389 = vsel %vm1343, %v1387, %v1388
      %v1390 = vrot.slane %v1388, 4
      %v1391 = vrot.slane %v815, 5
      %v1392 = vsel %vm1343, %v1390, %v1391
      %v1393 = vrot.slane %v694, 5
      %v1394 = vrot.slane %v1393, 4
      %v1395 = vrot.slane %v695, 5
      %v1396 = vsel %vm1343, %v1394, %v1395
      %v1397 = vrot.slane %v1395, 4
      %v1398 = vrot.slane %v816, 5
      %v1399 = vsel %vm1343, %v1397, %v1398
      %v1400 = vrot.slane %v696, 5
      %v1401 = vrot.slane %v1400, 4
      %v1402 = vrot.slane %v697, 5
      %v1403 = vsel %vm1343, %v1401, %v1402
      %v1404 = vrot.slane %v1402, 4
      %v1405 = vrot.slane %v817, 5
      %v1406 = vsel %vm1343, %v1404, %v1405
      %v1407 = vrot.slane %v698, 5
      %v1408 = vrot.slane %v1407, 4
      %v1409 = vrot.slane %v699, 5
      %v1410 = vsel %vm1343, %v1408, %v1409
      %v1411 = vrot.slane %v1409, 4
      %v1412 = vrot.slane %v818, 5
      %v1413 = vsel %vm1343, %v1411, %v1412
      %v1414 = vrot.slane %v700, 5
      %v1415 = vrot.slane %v1414, 4
      %v1416 = vrot.slane %v701, 5
      %v1417 = vsel %vm1343, %v1415, %v1416
      %v1418 = vrot.slane %v1416, 4
      %v1419 = vrot.slane %v819, 5
      %v1420 = vsel %vm1343, %v1418, %v1419
      %v1421 = vrot.slane %v702, 5
      %v1422 = vrot.slane %v1421, 4
      %v1423 = vrot.slane %v703, 5
      %v1424 = vsel %vm1343, %v1422, %v1423
      %v1425 = vrot.slane %v1423, 4
      %v1426 = vrot.slane %v820, 5
      %v1427 = vsel %vm1343, %v1425, %v1426
      %v1428 = vrot.slane %v704, 5
      %v1429 = vrot.slane %v1428, 4
      %v1430 = vrot.slane %v705, 5
      %v1431 = vsel %vm1343, %v1429, %v1430
      %v1432 = vrot.slane %v1430, 4
      %v1433 = vrot.slane %v821, 5
      %v1434 = vsel %vm1343, %v1432, %v1433
      %v1435 = vrot.slane %v706, 5
      %v1436 = vrot.slane %v1435, 4
      %v1437 = vrot.slane %v707, 5
      %v1438 = vsel %vm1343, %v1436, %v1437
      %v1439 = vrot.slane %v1437, 4
      %v1440 = vrot.slane %v822, 5
      %v1441 = vsel %vm1343, %v1439, %v1440
      %v1442 = vrot.slane %v708, 5
      %v1443 = vrot.slane %v1442, 4
      %v1444 = vrot.slane %v709, 5
      %v1445 = vsel %vm1343, %v1443, %v1444
      %v1446 = vrot.slane %v1444, 4
      %v1447 = vrot.slane %v823, 5
      %v1448 = vsel %vm1343, %v1446, %v1447
      %v1449 = vrot.slane %v710, 5
      %v1450 = vrot.slane %v1449, 4
      %v1451 = vrot.slane %v711, 5
      %v1452 = vsel %vm1343, %v1450, %v1451
      %v1453 = vrot.slane %v1451, 4
      %v1454 = vrot.slane %v824, 5
      %v1455 = vsel %vm1343, %v1453, %v1454
      %1456 = vrot.lane.b32.xlu0 %v1347, 32
      %v1457 = vpop.permute.xlu0 %1456
      %1458 = vrot.lane.b32.xlu0 %v1350, 32
      %v1459 = vpop.permute.xlu0 %1458
      %1460 = vrot.lane.b32.xlu0 %v1354, 32
      %v1461 = vpop.permute.xlu0 %1460
      %1462 = vrot.lane.b32.xlu0 %v1357, 32
      %v1463 = vpop.permute.xlu0 %1462
      %1464 = vrot.lane.b32.xlu0 %v1361, 32
      %v1465 = vpop.permute.xlu0 %1464
      %1466 = vrot.lane.b32.xlu0 %v1364, 32
      %v1467 = vpop.permute.xlu0 %1466
      %1468 = vrot.lane.b32.xlu0 %v1368, 32
      %v1469 = vpop.permute.xlu0 %1468
      %1470 = vrot.lane.b32.xlu0 %v1371, 32
      %v1471 = vpop.permute.xlu0 %1470
      %1472 = vrot.lane.b32.xlu0 %v1375, 32
      %v1473 = vpop.permute.xlu0 %1472
      %1474 = vrot.lane.b32.xlu0 %v1378, 32
      %v1475 = vpop.permute.xlu0 %1474
      %1476 = vrot.lane.b32.xlu0 %v1382, 32
      %v1477 = vpop.permute.xlu0 %1476
      %1478 = vrot.lane.b32.xlu0 %v1385, 32
      %v1479 = vpop.permute.xlu0 %1478
      %1480 = vrot.lane.b32.xlu0 %v1389, 32
      %v1481 = vpop.permute.xlu0 %1480
      %1482 = vrot.lane.b32.xlu0 %v1392, 32
      %v1483 = vpop.permute.xlu0 %1482
      %1484 = vrot.lane.b32.xlu0 %v1396, 32
      %v1485 = vpop.permute.xlu0 %1484
      %1486 = vrot.lane.b32.xlu0 %v1399, 32
      %v1487 = vpop.permute.xlu0 %1486
      %1488 = vrot.lane.b32.xlu0 %v1403, 32
      %v1489 = vpop.permute.xlu0 %1488
      %1490 = vrot.lane.b32.xlu0 %v1406, 32
      %v1491 = vpop.permute.xlu0 %1490
      %1492 = vrot.lane.b32.xlu0 %v1410, 32
      %v1493 = vpop.permute.xlu0 %1492
      %1494 = vrot.lane.b32.xlu0 %v1413, 32
      %v1495 = vpop.permute.xlu0 %1494
      %1496 = vrot.lane.b32.xlu0 %v1417, 32
      %v1497 = vpop.permute.xlu0 %1496
      %1498 = vrot.lane.b32.xlu0 %v1420, 32
      %v1499 = vpop.permute.xlu0 %1498
      %1500 = vrot.lane.b32.xlu0 %v1424, 32
      %v1501 = vpop.permute.xlu0 %1500
      %1502 = vrot.lane.b32.xlu0 %v1427, 32
      %v1503 = vpop.permute.xlu0 %1502
      %1504 = vrot.lane.b32.xlu0 %v1431, 32
      %v1505 = vpop.permute.xlu0 %1504
      %1506 = vrot.lane.b32.xlu0 %v1434, 32
      %v1507 = vpop.permute.xlu0 %1506
      %1508 = vrot.lane.b32.xlu0 %v1438, 32
      %v1509 = vpop.permute.xlu0 %1508
      %1510 = vrot.lane.b32.xlu0 %v1441, 32
      %v1511 = vpop.permute.xlu0 %1510
      %1512 = vrot.lane.b32.xlu0 %v1445, 32
      %v1513 = vpop.permute.xlu0 %1512
      %1514 = vrot.lane.b32.xlu0 %v1448, 32
      %v1515 = vpop.permute.xlu0 %1514
      %1516 = vrot.lane.b32.xlu0 %v1452, 32
      %v1517 = vpop.permute.xlu0 %1516
      %1518 = vrot.lane.b32.xlu0 %v1455, 32
      %v1519 = vpop.permute.xlu0 %1518
      %vm1552 = vcmask 388352
      %1553 = vst.msk [vmem:[#allocation2] sm:$0xf] %vm1552, %v1457
      %1554 = vst.msk [vmem:[#allocation2 + $0x8] sm:$0xf] %vm1552, %v1459
      %1555 = vst.msk [vmem:[#allocation2 + $0x10] sm:$0xf] %vm1552, %v1461
      %1556 = vst.msk [vmem:[#allocation2 + $0x18] sm:$0xf] %vm1552, %v1463
      %1557 = vst.msk [vmem:[#allocation2 + $0x20] sm:$0xf] %vm1552, %v1465
      %1558 = vst.msk [vmem:[#allocation2 + $0x28] sm:$0xf] %vm1552, %v1467
      %1559 = vst.msk [vmem:[#allocation2 + $0x30] sm:$0xf] %vm1552, %v1469
      %1560 = vst.msk [vmem:[#allocation2 + $0x38] sm:$0xf] %vm1552, %v1471
      %1561 = vst.msk [vmem:[#allocation2 + $0x40] sm:$0xf] %vm1552, %v1473
      %1562 = vst.msk [vmem:[#allocation2 + $0x48] sm:$0xf] %vm1552, %v1475
      %1563 = vst.msk [vmem:[#allocation2 + $0x50] sm:$0xf] %vm1552, %v1477
      %1564 = vst.msk [vmem:[#allocation2 + $0x58] sm:$0xf] %vm1552, %v1479
      %1565 = vst.msk [vmem:[#allocation2 + $0x60] sm:$0xf] %vm1552, %v1481
      %1566 = vst.msk [vmem:[#allocation2 + $0x68] sm:$0xf] %vm1552, %v1483
      %1567 = vst.msk [vmem:[#allocation2 + $0x70] sm:$0xf] %vm1552, %v1485
      %1568 = vst.msk [vmem:[#allocation2 + $0x78] sm:$0xf] %vm1552, %v1487
      %1569 = vst.msk [vmem:[#allocation2 + $0x80] sm:$0xf] %vm1552, %v1489
      %1570 = vst.msk [vmem:[#allocation2 + $0x88] sm:$0xf] %vm1552, %v1491
      %1571 = vst.msk [vmem:[#allocation2 + $0x90] sm:$0xf] %vm1552, %v1493
      %1572 = vst.msk [vmem:[#allocation2 + $0x98] sm:$0xf] %vm1552, %v1495
      %1573 = vst.msk [vmem:[#allocation2 + $0xa0] sm:$0xf] %vm1552, %v1497
      %1574 = vst.msk [vmem:[#allocation2 + $0xa8] sm:$0xf] %vm1552, %v1499
      %1575 = vst.msk [vmem:[#allocation2 + $0xb0] sm:$0xf] %vm1552, %v1501
      %1576 = vst.msk [vmem:[#allocation2 + $0xb8] sm:$0xf] %vm1552, %v1503
      %1577 = vst.msk [vmem:[#allocation2 + $0xc0] sm:$0xf] %vm1552, %v1505
      %1578 = vst.msk [vmem:[#allocation2 + $0xc8] sm:$0xf] %vm1552, %v1507
      %1579 = vst.msk [vmem:[#allocation2 + $0xd0] sm:$0xf] %vm1552, %v1509
      %1580 = vst.msk [vmem:[#allocation2 + $0xd8] sm:$0xf] %vm1552, %v1511
      %1581 = vst.msk [vmem:[#allocation2 + $0xe0] sm:$0xf] %vm1552, %v1513
      %1582 = vst.msk [vmem:[#allocation2 + $0xe8] sm:$0xf] %vm1552, %v1515
      %1583 = vst.msk [vmem:[#allocation2 + $0xf0] sm:$0xf] %vm1552, %v1517
      %1584 = vst.msk [vmem:[#allocation2 + $0xf8] sm:$0xf] %vm1552, %v1519
      %v1586 = vunpack.c.l.b16 %v628
      %v1587 = vunpack.c.h.b16 %v628
      %v1588 = vpack.c.b16 %v1586, %v1586
      %v1589 = vpack.c.b16 %v1587, %v1587
      %1590 = vrot.lane.b32.xlu0 %v682, 48
      %v1591 = vpop.permute.xlu0 %1590
      %1592 = vrot.lane.b32.xlu0 %v683, 48
      %v1593 = vpop.permute.xlu0 %1592
      %1594 = vrot.lane.b32.xlu0 %v684, 48
      %v1595 = vpop.permute.xlu0 %1594
      %1596 = vrot.lane.b32.xlu0 %v685, 48
      %v1597 = vpop.permute.xlu0 %1596
      %1598 = vrot.lane.b32.xlu0 %v686, 48
      %v1599 = vpop.permute.xlu0 %1598
      %1600 = vrot.lane.b32.xlu0 %v687, 48
      %v1601 = vpop.permute.xlu0 %1600
      %1602 = vrot.lane.b32.xlu0 %v688, 48
      %v1603 = vpop.permute.xlu0 %1602
      %1604 = vrot.lane.b32.xlu0 %v689, 48
      %v1605 = vpop.permute.xlu0 %1604
      %1606 = vrot.lane.b32.xlu0 %v690, 48
      %v1607 = vpop.permute.xlu0 %1606
      %1608 = vrot.lane.b32.xlu0 %v691, 48
      %v1609 = vpop.permute.xlu0 %1608
      %1610 = vrot.lane.b32.xlu0 %v692, 48
      %v1611 = vpop.permute.xlu0 %1610
      %1612 = vrot.lane.b32.xlu0 %v693, 48
      %v1613 = vpop.permute.xlu0 %1612
      %1614 = vrot.lane.b32.xlu0 %v694, 48
      %v1615 = vpop.permute.xlu0 %1614
      %1616 = vrot.lane.b32.xlu0 %v695, 48
      %v1617 = vpop.permute.xlu0 %1616
      %1618 = vrot.lane.b32.xlu0 %v696, 48
      %v1619 = vpop.permute.xlu0 %1618
      %1620 = vrot.lane.b32.xlu0 %v697, 48
      %v1621 = vpop.permute.xlu0 %1620
      %1622 = vrot.lane.b32.xlu0 %v698, 48
      %v1623 = vpop.permute.xlu0 %1622
      %1624 = vrot.lane.b32.xlu0 %v699, 48
      %v1625 = vpop.permute.xlu0 %1624
      %1626 = vrot.lane.b32.xlu0 %v700, 48
      %v1627 = vpop.permute.xlu0 %1626
      %1628 = vrot.lane.b32.xlu0 %v701, 48
      %v1629 = vpop.permute.xlu0 %1628
      %1630 = vrot.lane.b32.xlu0 %v702, 48
      %v1631 = vpop.permute.xlu0 %1630
      %1632 = vrot.lane.b32.xlu0 %v703, 48
      %v1633 = vpop.permute.xlu0 %1632
      %1634 = vrot.lane.b32.xlu0 %v704, 48
      %v1635 = vpop.permute.xlu0 %1634
      %1636 = vrot.lane.b32.xlu0 %v705, 48
      %v1637 = vpop.permute.xlu0 %1636
      %1638 = vrot.lane.b32.xlu0 %v706, 48
      %v1639 = vpop.permute.xlu0 %1638
      %1640 = vrot.lane.b32.xlu0 %v707, 48
      %v1641 = vpop.permute.xlu0 %1640
      %1642 = vrot.lane.b32.xlu0 %v708, 48
      %v1643 = vpop.permute.xlu0 %1642
      %1644 = vrot.lane.b32.xlu0 %v709, 48
      %v1645 = vpop.permute.xlu0 %1644
      %1646 = vrot.lane.b32.xlu0 %v710, 48
      %v1647 = vpop.permute.xlu0 %1646
      %1648 = vrot.lane.b32.xlu0 %v711, 48
      %v1649 = vpop.permute.xlu0 %1648
      %1650 = vrot.lane.b32.xlu0 %v1588, 48
      %v1651 = vpop.permute.xlu0 %1650
      %1652 = vrot.lane.b32.xlu0 %v1589, 48
      %v1653 = vpop.permute.xlu0 %1652
      %vm1686 = vcmask 519552
      %1687 = vst.msk [vmem:[#allocation2] sm:$0xf] %vm1686, %v1591
      %1688 = vst.msk [vmem:[#allocation2 + $0x8] sm:$0xf] %vm1686, %v1593
      %1689 = vst.msk [vmem:[#allocation2 + $0x10] sm:$0xf] %vm1686, %v1595
      %1690 = vst.msk [vmem:[#allocation2 + $0x18] sm:$0xf] %vm1686, %v1597
      %1691 = vst.msk [vmem:[#allocation2 + $0x20] sm:$0xf] %vm1686, %v1599
      %1692 = vst.msk [vmem:[#allocation2 + $0x28] sm:$0xf] %vm1686, %v1601
      %1693 = vst.msk [vmem:[#allocation2 + $0x30] sm:$0xf] %vm1686, %v1603
      %1694 = vst.msk [vmem:[#allocation2 + $0x38] sm:$0xf] %vm1686, %v1605
      %1695 = vst.msk [vmem:[#allocation2 + $0x40] sm:$0xf] %vm1686, %v1607
      %1696 = vst.msk [vmem:[#allocation2 + $0x48] sm:$0xf] %vm1686, %v1609
      %1697 = vst.msk [vmem:[#allocation2 + $0x50] sm:$0xf] %vm1686, %v1611
      %1698 = vst.msk [vmem:[#allocation2 + $0x58] sm:$0xf] %vm1686, %v1613
      %1699 = vst.msk [vmem:[#allocation2 + $0x60] sm:$0xf] %vm1686, %v1615
      %1700 = vst.msk [vmem:[#allocation2 + $0x68] sm:$0xf] %vm1686, %v1617
      %1701 = vst.msk [vmem:[#allocation2 + $0x70] sm:$0xf] %vm1686, %v1619
      %1702 = vst.msk [vmem:[#allocation2 + $0x78] sm:$0xf] %vm1686, %v1621
      %1703 = vst.msk [vmem:[#allocation2 + $0x80] sm:$0xf] %vm1686, %v1623
      %1704 = vst.msk [vmem:[#allocation2 + $0x88] sm:$0xf] %vm1686, %v1625
      %1705 = vst.msk [vmem:[#allocation2 + $0x90] sm:$0xf] %vm1686, %v1627
      %1706 = vst.msk [vmem:[#allocation2 + $0x98] sm:$0xf] %vm1686, %v1629
      %1707 = vst.msk [vmem:[#allocation2 + $0xa0] sm:$0xf] %vm1686, %v1631
      %1708 = vst.msk [vmem:[#allocation2 + $0xa8] sm:$0xf] %vm1686, %v1633
      %1709 = vst.msk [vmem:[#allocation2 + $0xb0] sm:$0xf] %vm1686, %v1635
      %1710 = vst.msk [vmem:[#allocation2 + $0xb8] sm:$0xf] %vm1686, %v1637
      %1711 = vst.msk [vmem:[#allocation2 + $0xc0] sm:$0xf] %vm1686, %v1639
      %1712 = vst.msk [vmem:[#allocation2 + $0xc8] sm:$0xf] %vm1686, %v1641
      %1713 = vst.msk [vmem:[#allocation2 + $0xd0] sm:$0xf] %vm1686, %v1643
      %1714 = vst.msk [vmem:[#allocation2 + $0xd8] sm:$0xf] %vm1686, %v1645
      %1715 = vst.msk [vmem:[#allocation2 + $0xe0] sm:$0xf] %vm1686, %v1647
      %1716 = vst.msk [vmem:[#allocation2 + $0xe8] sm:$0xf] %vm1686, %v1649
      %1717 = vst.msk [vmem:[#allocation2 + $0xf0] sm:$0xf] %vm1686, %v1651
      %1718 = vst.msk [vmem:[#allocation2 + $0xf8] sm:$0xf] %vm1686, %v1653
      %v1720 = vunpack.c.l.b16 %v629
      %v1721 = vpack.c.b16 %v1720, %v1720
      %v1723 = vshrl.u32 %v1588, 16
      %v1725 = vrot.slane %v1723, 4
      %v1726 = vshll.u32 %v1588, 16
      %v1728 = vrot.slane %v1726, 5
      %v1729 = vor.u32 %v1725, %v1728
      %v1730 = vrot.slane %v1729, 4
      %v1732 = vshll.u32 %v1589, 16
      %v1734 = vrot.slane %v1732, 5
      %v1735 = vsel %vm827, %v1730, %v1734
      %v1736 = vshrl.u32 %v1589, 16
      %v1738 = vrot.slane %v1736, 4
      %v1739 = vor.u32 %v1738, %v1734
      %v1740 = vrot.slane %v1739, 4
      %v1742 = vshll.u32 %v1721, 16
      %v1744 = vrot.slane %v1742, 5
      %v1745 = vsel %vm827, %v1740, %v1744
      %1746 = vrot.lane.b32.xlu0 %v865, 64
      %v1747 = vpop.permute.xlu0 %1746
      %1748 = vrot.lane.b32.xlu0 %v875, 64
      %v1749 = vpop.permute.xlu0 %1748
      %1750 = vrot.lane.b32.xlu0 %v889, 64
      %v1751 = vpop.permute.xlu0 %1750
      %1752 = vrot.lane.b32.xlu0 %v899, 64
      %v1753 = vpop.permute.xlu0 %1752
      %1754 = vrot.lane.b32.xlu0 %v913, 64
      %v1755 = vpop.permute.xlu0 %1754
      %1756 = vrot.lane.b32.xlu0 %v923, 64
      %v1757 = vpop.permute.xlu0 %1756
      %1758 = vrot.lane.b32.xlu0 %v937, 64
      %v1759 = vpop.permute.xlu0 %1758
      %1760 = vrot.lane.b32.xlu0 %v947, 64
      %v1761 = vpop.permute.xlu0 %1760
      %1762 = vrot.lane.b32.xlu0 %v961, 64
      %v1763 = vpop.permute.xlu0 %1762
      %1764 = vrot.lane.b32.xlu0 %v971, 64
      %v1765 = vpop.permute.xlu0 %1764
      %1766 = vrot.lane.b32.xlu0 %v985, 64
      %v1767 = vpop.permute.xlu0 %1766
      %1768 = vrot.lane.b32.xlu0 %v995, 64
      %v1769 = vpop.permute.xlu0 %1768
      %1770 = vrot.lane.b32.xlu0 %v1009, 64
      %v1771 = vpop.permute.xlu0 %1770
      %1772 = vrot.lane.b32.xlu0 %v1019, 64
      %v1773 = vpop.permute.xlu0 %1772
      %1774 = vrot.lane.b32.xlu0 %v1033, 64
      %v1775 = vpop.permute.xlu0 %1774
      %1776 = vrot.lane.b32.xlu0 %v1043, 64
      %v1777 = vpop.permute.xlu0 %1776
      %1778 = vrot.lane.b32.xlu0 %v1057, 64
      %v1779 = vpop.permute.xlu0 %1778
      %1780 = vrot.lane.b32.xlu0 %v1067, 64
      %v1781 = vpop.permute.xlu0 %1780
      %1782 = vrot.lane.b32.xlu0 %v1081, 64
      %v1783 = vpop.permute.xlu0 %1782
      %1784 = vrot.lane.b32.xlu0 %v1091, 64
      %v1785 = vpop.permute.xlu0 %1784
      %1786 = vrot.lane.b32.xlu0 %v1105, 64
      %v1787 = vpop.permute.xlu0 %1786
      %1788 = vrot.lane.b32.xlu0 %v1115, 64
      %v1789 = vpop.permute.xlu0 %1788
      %1790 = vrot.lane.b32.xlu0 %v1129, 64
      %v1791 = vpop.permute.xlu0 %1790
      %1792 = vrot.lane.b32.xlu0 %v1139, 64
      %v1793 = vpop.permute.xlu0 %1792
      %1794 = vrot.lane.b32.xlu0 %v1153, 64
      %v1795 = vpop.permute.xlu0 %1794
      %1796 = vrot.lane.b32.xlu0 %v1163, 64
      %v1797 = vpop.permute.xlu0 %1796
      %1798 = vrot.lane.b32.xlu0 %v1177, 64
      %v1799 = vpop.permute.xlu0 %1798
      %1800 = vrot.lane.b32.xlu0 %v1187, 64
      %v1801 = vpop.permute.xlu0 %1800
      %1802 = vrot.lane.b32.xlu0 %v1201, 64
      %v1803 = vpop.permute.xlu0 %1802
      %1804 = vrot.lane.b32.xlu0 %v1211, 64
      %v1805 = vpop.permute.xlu0 %1804
      %1806 = vrot.lane.b32.xlu0 %v1735, 64
      %v1807 = vpop.permute.xlu0 %1806
      %1808 = vrot.lane.b32.xlu0 %v1745, 64
      %v1809 = vpop.permute.xlu0 %1808
      %vm1842 = vcmask 650752
      %1843 = vst.msk [vmem:[#allocation2] sm:$0xf] %vm1842, %v1747
      %1844 = vst.msk [vmem:[#allocation2 + $0x8] sm:$0xf] %vm1842, %v1749
      %1845 = vst.msk [vmem:[#allocation2 + $0x10] sm:$0xf] %vm1842, %v1751
      %1846 = vst.msk [vmem:[#allocation2 + $0x18] sm:$0xf] %vm1842, %v1753
      %1847 = vst.msk [vmem:[#allocation2 + $0x20] sm:$0xf] %vm1842, %v1755
      %1848 = vst.msk [vmem:[#allocation2 + $0x28] sm:$0xf] %vm1842, %v1757
      %1849 = vst.msk [vmem:[#allocation2 + $0x30] sm:$0xf] %vm1842, %v1759
      %1850 = vst.msk [vmem:[#allocation2 + $0x38] sm:$0xf] %vm1842, %v1761
      %1851 = vst.msk [vmem:[#allocation2 + $0x40] sm:$0xf] %vm1842, %v1763
      %1852 = vst.msk [vmem:[#allocation2 + $0x48] sm:$0xf] %vm1842, %v1765
      %1853 = vst.msk [vmem:[#allocation2 + $0x50] sm:$0xf] %vm1842, %v1767
      %1854 = vst.msk [vmem:[#allocation2 + $0x58] sm:$0xf] %vm1842, %v1769
      %1855 = vst.msk [vmem:[#allocation2 + $0x60] sm:$0xf] %vm1842, %v1771
      %1856 = vst.msk [vmem:[#allocation2 + $0x68] sm:$0xf] %vm1842, %v1773
      %1857 = vst.msk [vmem:[#allocation2 + $0x70] sm:$0xf] %vm1842, %v1775
      %1858 = vst.msk [vmem:[#allocation2 + $0x78] sm:$0xf] %vm1842, %v1777
      %1859 = vst.msk [vmem:[#allocation2 + $0x80] sm:$0xf] %vm1842, %v1779
      %1860 = vst.msk [vmem:[#allocation2 + $0x88] sm:$0xf] %vm1842, %v1781
      %1861 = vst.msk [vmem:[#allocation2 + $0x90] sm:$0xf] %vm1842, %v1783
      %1862 = vst.msk [vmem:[#allocation2 + $0x98] sm:$0xf] %vm1842, %v1785
      %1863 = vst.msk [vmem:[#allocation2 + $0xa0] sm:$0xf] %vm1842, %v1787
      %1864 = vst.msk [vmem:[#allocation2 + $0xa8] sm:$0xf] %vm1842, %v1789
      %1865 = vst.msk [vmem:[#allocation2 + $0xb0] sm:$0xf] %vm1842, %v1791
      %1866 = vst.msk [vmem:[#allocation2 + $0xb8] sm:$0xf] %vm1842, %v1793
      %1867 = vst.msk [vmem:[#allocation2 + $0xc0] sm:$0xf] %vm1842, %v1795
      %1868 = vst.msk [vmem:[#allocation2 + $0xc8] sm:$0xf] %vm1842, %v1797
      %1869 = vst.msk [vmem:[#allocation2 + $0xd0] sm:$0xf] %vm1842, %v1799
      %1870 = vst.msk [vmem:[#allocation2 + $0xd8] sm:$0xf] %vm1842, %v1801
      %1871 = vst.msk [vmem:[#allocation2 + $0xe0] sm:$0xf] %vm1842, %v1803
      %1872 = vst.msk [vmem:[#allocation2 + $0xe8] sm:$0xf] %vm1842, %v1805
      %1873 = vst.msk [vmem:[#allocation2 + $0xf0] sm:$0xf] %vm1842, %v1807
      %1874 = vst.msk [vmem:[#allocation2 + $0xf8] sm:$0xf] %vm1842, %v1809
      %v1875 = vrot.slane %v1588, 5
      %v1876 = vrot.slane %v1875, 4
      %v1877 = vrot.slane %v1589, 5
      %v1878 = vsel %vm1343, %v1876, %v1877
      %v1879 = vrot.slane %v1877, 4
      %v1880 = vrot.slane %v1721, 5
      %v1881 = vsel %vm1343, %v1879, %v1880
      %1882 = vrot.lane.b32.xlu0 %v1354, 80
      %v1883 = vpop.permute.xlu0 %1882
      %1884 = vrot.lane.b32.xlu0 %v1357, 80
      %v1885 = vpop.permute.xlu0 %1884
      %1886 = vrot.lane.b32.xlu0 %v1361, 80
      %v1887 = vpop.permute.xlu0 %1886
      %1888 = vrot.lane.b32.xlu0 %v1364, 80
      %v1889 = vpop.permute.xlu0 %1888
      %1890 = vrot.lane.b32.xlu0 %v1368, 80
      %v1891 = vpop.permute.xlu0 %1890
      %1892 = vrot.lane.b32.xlu0 %v1371, 80
      %v1893 = vpop.permute.xlu0 %1892
      %1894 = vrot.lane.b32.xlu0 %v1375, 80
      %v1895 = vpop.permute.xlu0 %1894
      %1896 = vrot.lane.b32.xlu0 %v1378, 80
      %v1897 = vpop.permute.xlu0 %1896
      %1898 = vrot.lane.b32.xlu0 %v1382, 80
      %v1899 = vpop.permute.xlu0 %1898
      %1900 = vrot.lane.b32.xlu0 %v1385, 80
      %v1901 = vpop.permute.xlu0 %1900
      %1902 = vrot.lane.b32.xlu0 %v1389, 80
      %v1903 = vpop.permute.xlu0 %1902
      %1904 = vrot.lane.b32.xlu0 %v1392, 80
      %v1905 = vpop.permute.xlu0 %1904
      %1906 = vrot.lane.b32.xlu0 %v1396, 80
      %v1907 = vpop.permute.xlu0 %1906
      %1908 = vrot.lane.b32.xlu0 %v1399, 80
      %v1909 = vpop.permute.xlu0 %1908
      %1910 = vrot.lane.b32.xlu0 %v1403, 80
      %v1911 = vpop.permute.xlu0 %1910
      %1912 = vrot.lane.b32.xlu0 %v1406, 80
      %v1913 = vpop.permute.xlu0 %1912
      %1914 = vrot.lane.b32.xlu0 %v1410, 80
      %v1915 = vpop.permute.xlu0 %1914
      %1916 = vrot.lane.b32.xlu0 %v1413, 80
      %v1917 = vpop.permute.xlu0 %1916
      %1918 = vrot.lane.b32.xlu0 %v1417, 80
      %v1919 = vpop.permute.xlu0 %1918
      %1920 = vrot.lane.b32.xlu0 %v1420, 80
      %v1921 = vpop.permute.xlu0 %1920
      %1922 = vrot.lane.b32.xlu0 %v1424, 80
      %v1923 = vpop.permute.xlu0 %1922
      %1924 = vrot.lane.b32.xlu0 %v1427, 80
      %v1925 = vpop.permute.xlu0 %1924
      %1926 = vrot.lane.b32.xlu0 %v1431, 80
      %v1927 = vpop.permute.xlu0 %1926
      %1928 = vrot.lane.b32.xlu0 %v1434, 80
      %v1929 = vpop.permute.xlu0 %1928
      %1930 = vrot.lane.b32.xlu0 %v1438, 80
      %v1931 = vpop.permute.xlu0 %1930
      %1932 = vrot.lane.b32.xlu0 %v1441, 80
      %v1933 = vpop.permute.xlu0 %1932
      %1934 = vrot.lane.b32.xlu0 %v1445, 80
      %v1935 = vpop.permute.xlu0 %1934
      %1936 = vrot.lane.b32.xlu0 %v1448, 80
      %v1937 = vpop.permute.xlu0 %1936
      %1938 = vrot.lane.b32.xlu0 %v1452, 80
      %v1939 = vpop.permute.xlu0 %1938
      %1940 = vrot.lane.b32.xlu0 %v1455, 80
      %v1941 = vpop.permute.xlu0 %1940
      %1942 = vrot.lane.b32.xlu0 %v1878, 80
      %v1943 = vpop.permute.xlu0 %1942
      %1944 = vrot.lane.b32.xlu0 %v1881, 80
      %v1945 = vpop.permute.xlu0 %1944
      %vm1978 = vcmask 781952
      %1979 = vst.msk [vmem:[#allocation2] sm:$0xf] %vm1978, %v1883
      %1980 = vst.msk [vmem:[#allocation2 + $0x8] sm:$0xf] %vm1978, %v1885
      %1981 = vst.msk [vmem:[#allocation2 + $0x10] sm:$0xf] %vm1978, %v1887
      %1982 = vst.msk [vmem:[#allocation2 + $0x18] sm:$0xf] %vm1978, %v1889
      %1983 = vst.msk [vmem:[#allocation2 + $0x20] sm:$0xf] %vm1978, %v1891
      %1984 = vst.msk [vmem:[#allocation2 + $0x28] sm:$0xf] %vm1978, %v1893
      %1985 = vst.msk [vmem:[#allocation2 + $0x30] sm:$0xf] %vm1978, %v1895
      %1986 = vst.msk [vmem:[#allocation2 + $0x38] sm:$0xf] %vm1978, %v1897
      %1987 = vst.msk [vmem:[#allocation2 + $0x40] sm:$0xf] %vm1978, %v1899
      %1988 = vst.msk [vmem:[#allocation2 + $0x48] sm:$0xf] %vm1978, %v1901
      %1989 = vst.msk [vmem:[#allocation2 + $0x50] sm:$0xf] %vm1978, %v1903
      %1990 = vst.msk [vmem:[#allocation2 + $0x58] sm:$0xf] %vm1978, %v1905
      %1991 = vst.msk [vmem:[#allocation2 + $0x60] sm:$0xf] %vm1978, %v1907
      %1992 = vst.msk [vmem:[#allocation2 + $0x68] sm:$0xf] %vm1978, %v1909
      %1993 = vst.msk [vmem:[#allocation2 + $0x70] sm:$0xf] %vm1978, %v1911
      %1994 = vst.msk [vmem:[#allocation2 + $0x78] sm:$0xf] %vm1978, %v1913
      %1995 = vst.msk [vmem:[#allocation2 + $0x80] sm:$0xf] %vm1978, %v1915
      %1996 = vst.msk [vmem:[#allocation2 + $0x88] sm:$0xf] %vm1978, %v1917
      %1997 = vst.msk [vmem:[#allocation2 + $0x90] sm:$0xf] %vm1978, %v1919
      %1998 = vst.msk [vmem:[#allocation2 + $0x98] sm:$0xf] %vm1978, %v1921
      %1999 = vst.msk [vmem:[#allocation2 + $0xa0] sm:$0xf] %vm1978, %v1923
      %2000 = vst.msk [vmem:[#allocation2 + $0xa8] sm:$0xf] %vm1978, %v1925
      %2001 = vst.msk [vmem:[#allocation2 + $0xb0] sm:$0xf] %vm1978, %v1927
      %2002 = vst.msk [vmem:[#allocation2 + $0xb8] sm:$0xf] %vm1978, %v1929
      %2003 = vst.msk [vmem:[#allocation2 + $0xc0] sm:$0xf] %vm1978, %v1931
      %2004 = vst.msk [vmem:[#allocation2 + $0xc8] sm:$0xf] %vm1978, %v1933
      %2005 = vst.msk [vmem:[#allocation2 + $0xd0] sm:$0xf] %vm1978, %v1935
      %2006 = vst.msk [vmem:[#allocation2 + $0xd8] sm:$0xf] %vm1978, %v1937
      %2007 = vst.msk [vmem:[#allocation2 + $0xe0] sm:$0xf] %vm1978, %v1939
      %2008 = vst.msk [vmem:[#allocation2 + $0xe8] sm:$0xf] %vm1978, %v1941
      %2009 = vst.msk [vmem:[#allocation2 + $0xf0] sm:$0xf] %vm1978, %v1943
      %2010 = vst.msk [vmem:[#allocation2 + $0xf8] sm:$0xf] %vm1978, %v1945
      %v2012 = vunpack.c.l.b16 %v630
      %v2013 = vunpack.c.h.b16 %v630
      %v2014 = vpack.c.b16 %v2012, %v2012
      %v2015 = vpack.c.b16 %v2013, %v2013
      %2016 = vrot.lane.b32.xlu0 %v684, 96
      %v2017 = vpop.permute.xlu0 %2016
      %2018 = vrot.lane.b32.xlu0 %v685, 96
      %v2019 = vpop.permute.xlu0 %2018
      %2020 = vrot.lane.b32.xlu0 %v686, 96
      %v2021 = vpop.permute.xlu0 %2020
      %2022 = vrot.lane.b32.xlu0 %v687, 96
      %v2023 = vpop.permute.xlu0 %2022
      %2024 = vrot.lane.b32.xlu0 %v688, 96
      %v2025 = vpop.permute.xlu0 %2024
      %2026 = vrot.lane.b32.xlu0 %v689, 96
      %v2027 = vpop.permute.xlu0 %2026
      %2028 = vrot.lane.b32.xlu0 %v690, 96
      %v2029 = vpop.permute.xlu0 %2028
      %2030 = vrot.lane.b32.xlu0 %v691, 96
      %v2031 = vpop.permute.xlu0 %2030
      %2032 = vrot.lane.b32.xlu0 %v692, 96
      %v2033 = vpop.permute.xlu0 %2032
      %2034 = vrot.lane.b32.xlu0 %v693, 96
      %v2035 = vpop.permute.xlu0 %2034
      %2036 = vrot.lane.b32.xlu0 %v694, 96
      %v2037 = vpop.permute.xlu0 %2036
      %2038 = vrot.lane.b32.xlu0 %v695, 96
      %v2039 = vpop.permute.xlu0 %2038
      %2040 = vrot.lane.b32.xlu0 %v696, 96
      %v2041 = vpop.permute.xlu0 %2040
      %2042 = vrot.lane.b32.xlu0 %v697, 96
      %v2043 = vpop.permute.xlu0 %2042
      %2044 = vrot.lane.b32.xlu0 %v698, 96
      %v2045 = vpop.permute.xlu0 %2044
      %2046 = vrot.lane.b32.xlu0 %v699, 96
      %v2047 = vpop.permute.xlu0 %2046
      %2048 = vrot.lane.b32.xlu0 %v700, 96
      %v2049 = vpop.permute.xlu0 %2048
      %2050 = vrot.lane.b32.xlu0 %v701, 96
      %v2051 = vpop.permute.xlu0 %2050
      %2052 = vrot.lane.b32.xlu0 %v702, 96
      %v2053 = vpop.permute.xlu0 %2052
      %2054 = vrot.lane.b32.xlu0 %v703, 96
      %v2055 = vpop.permute.xlu0 %2054
      %2056 = vrot.lane.b32.xlu0 %v704, 96
      %v2057 = vpop.permute.xlu0 %2056
      %2058 = vrot.lane.b32.xlu0 %v705, 96
      %v2059 = vpop.permute.xlu0 %2058
      %2060 = vrot.lane.b32.xlu0 %v706, 96
      %v2061 = vpop.permute.xlu0 %2060
      %2062 = vrot.lane.b32.xlu0 %v707, 96
      %v2063 = vpop.permute.xlu0 %2062
      %2064 = vrot.lane.b32.xlu0 %v708, 96
      %v2065 = vpop.permute.xlu0 %2064
      %2066 = vrot.lane.b32.xlu0 %v709, 96
      %v2067 = vpop.permute.xlu0 %2066
      %2068 = vrot.lane.b32.xlu0 %v710, 96
      %v2069 = vpop.permute.xlu0 %2068
      %2070 = vrot.lane.b32.xlu0 %v711, 96
      %v2071 = vpop.permute.xlu0 %2070
      %2072 = vrot.lane.b32.xlu0 %v1588, 96
      %v2073 = vpop.permute.xlu0 %2072
      %2074 = vrot.lane.b32.xlu0 %v1589, 96
      %v2075 = vpop.permute.xlu0 %2074
      %2076 = vrot.lane.b32.xlu0 %v2014, 96
      %v2077 = vpop.permute.xlu0 %2076
      %2078 = vrot.lane.b32.xlu0 %v2015, 96
      %v2079 = vpop.permute.xlu0 %2078
      %vm2112 = vcmask 913152
      %2113 = vst.msk [vmem:[#allocation2] sm:$0xf] %vm2112, %v2017
      %2114 = vst.msk [vmem:[#allocation2 + $0x8] sm:$0xf] %vm2112, %v2019
      %2115 = vst.msk [vmem:[#allocation2 + $0x10] sm:$0xf] %vm2112, %v2021
      %2116 = vst.msk [vmem:[#allocation2 + $0x18] sm:$0xf] %vm2112, %v2023
      %2117 = vst.msk [vmem:[#allocation2 + $0x20] sm:$0xf] %vm2112, %v2025
      %2118 = vst.msk [vmem:[#allocation2 + $0x28] sm:$0xf] %vm2112, %v2027
      %2119 = vst.msk [vmem:[#allocation2 + $0x30] sm:$0xf] %vm2112, %v2029
      %2120 = vst.msk [vmem:[#allocation2 + $0x38] sm:$0xf] %vm2112, %v2031
      %2121 = vst.msk [vmem:[#allocation2 + $0x40] sm:$0xf] %vm2112, %v2033
      %2122 = vst.msk [vmem:[#allocation2 + $0x48] sm:$0xf] %vm2112, %v2035
      %2123 = vst.msk [vmem:[#allocation2 + $0x50] sm:$0xf] %vm2112, %v2037
      %2124 = vst.msk [vmem:[#allocation2 + $0x58] sm:$0xf] %vm2112, %v2039
      %2125 = vst.msk [vmem:[#allocation2 + $0x60] sm:$0xf] %vm2112, %v2041
      %2126 = vst.msk [vmem:[#allocation2 + $0x68] sm:$0xf] %vm2112, %v2043
      %2127 = vst.msk [vmem:[#allocation2 + $0x70] sm:$0xf] %vm2112, %v2045
      %2128 = vst.msk [vmem:[#allocation2 + $0x78] sm:$0xf] %vm2112, %v2047
      %2129 = vst.msk [vmem:[#allocation2 + $0x80] sm:$0xf] %vm2112, %v2049
      %2130 = vst.msk [vmem:[#allocation2 + $0x88] sm:$0xf] %vm2112, %v2051
      %2131 = vst.msk [vmem:[#allocation2 + $0x90] sm:$0xf] %vm2112, %v2053
      %2132 = vst.msk [vmem:[#allocation2 + $0x98] sm:$0xf] %vm2112, %v2055
      %2133 = vst.msk [vmem:[#allocation2 + $0xa0] sm:$0xf] %vm2112, %v2057
      %2134 = vst.msk [vmem:[#allocation2 + $0xa8] sm:$0xf] %vm2112, %v2059
      %2135 = vst.msk [vmem:[#allocation2 + $0xb0] sm:$0xf] %vm2112, %v2061
      %2136 = vst.msk [vmem:[#allocation2 + $0xb8] sm:$0xf] %vm2112, %v2063
      %2137 = vst.msk [vmem:[#allocation2 + $0xc0] sm:$0xf] %vm2112, %v2065
      %2138 = vst.msk [vmem:[#allocation2 + $0xc8] sm:$0xf] %vm2112, %v2067
      %2139 = vst.msk [vmem:[#allocation2 + $0xd0] sm:$0xf] %vm2112, %v2069
      %2140 = vst.msk [vmem:[#allocation2 + $0xd8] sm:$0xf] %vm2112, %v2071
      %2141 = vst.msk [vmem:[#allocation2 + $0xe0] sm:$0xf] %vm2112, %v2073
      %2142 = vst.msk [vmem:[#allocation2 + $0xe8] sm:$0xf] %vm2112, %v2075
      %2143 = vst.msk [vmem:[#allocation2 + $0xf0] sm:$0xf] %vm2112, %v2077
      %2144 = vst.msk [vmem:[#allocation2 + $0xf8] sm:$0xf] %vm2112, %v2079
      %v2146 = vunpack.c.l.b16 %v631
      %v2147 = vpack.c.b16 %v2146, %v2146
      %v2149 = vshrl.u32 %v2014, 16
      %v2151 = vrot.slane %v2149, 4
      %v2152 = vshll.u32 %v2014, 16
      %v2154 = vrot.slane %v2152, 5
      %v2155 = vor.u32 %v2151, %v2154
      %v2156 = vrot.slane %v2155, 4
      %v2158 = vshll.u32 %v2015, 16
      %v2160 = vrot.slane %v2158, 5
      %v2161 = vsel %vm827, %v2156, %v2160
      %v2162 = vshrl.u32 %v2015, 16
      %v2164 = vrot.slane %v2162, 4
      %v2165 = vor.u32 %v2164, %v2160
      %v2166 = vrot.slane %v2165, 4
      %v2168 = vshll.u32 %v2147, 16
      %v2170 = vrot.slane %v2168, 5
      %v2171 = vsel %vm827, %v2166, %v2170
      %2172 = vrot.lane.b32.xlu0 %v889, 112
      %v2173 = vpop.permute.xlu0 %2172
      %2174 = vrot.lane.b32.xlu0 %v899, 112
      %v2175 = vpop.permute.xlu0 %2174
      %2176 = vrot.lane.b32.xlu0 %v913, 112
      %v2177 = vpop.permute.xlu0 %2176
      %2178 = vrot.lane.b32.xlu0 %v923, 112
      %v2179 = vpop.permute.xlu0 %2178
      %2180 = vrot.lane.b32.xlu0 %v937, 112
      %v2181 = vpop.permute.xlu0 %2180
      %2182 = vrot.lane.b32.xlu0 %v947, 112
      %v2183 = vpop.permute.xlu0 %2182
      %2184 = vrot.lane.b32.xlu0 %v961, 112
      %v2185 = vpop.permute.xlu0 %2184
      %2186 = vrot.lane.b32.xlu0 %v971, 112
      %v2187 = vpop.permute.xlu0 %2186
      %2188 = vrot.lane.b32.xlu0 %v985, 112
      %v2189 = vpop.permute.xlu0 %2188
      %2190 = vrot.lane.b32.xlu0 %v995, 112
      %v2191 = vpop.permute.xlu0 %2190
      %2192 = vrot.lane.b32.xlu0 %v1009, 112
      %v2193 = vpop.permute.xlu0 %2192
      %2194 = vrot.lane.b32.xlu0 %v1019, 112
      %v2195 = vpop.permute.xlu0 %2194
      %2196 = vrot.lane.b32.xlu0 %v1033, 112
      %v2197 = vpop.permute.xlu0 %2196
      %2198 = vrot.lane.b32.xlu0 %v1043, 112
      %v2199 = vpop.permute.xlu0 %2198
      %2200 = vrot.lane.b32.xlu0 %v1057, 112
      %v2201 = vpop.permute.xlu0 %2200
      %2202 = vrot.lane.b32.xlu0 %v1067, 112
      %v2203 = vpop.permute.xlu0 %2202
      %2204 = vrot.lane.b32.xlu0 %v1081, 112
      %v2205 = vpop.permute.xlu0 %2204
      %2206 = vrot.lane.b32.xlu0 %v1091, 112
      %v2207 = vpop.permute.xlu0 %2206
      %2208 = vrot.lane.b32.xlu0 %v1105, 112
      %v2209 = vpop.permute.xlu0 %2208
      %2210 = vrot.lane.b32.xlu0 %v1115, 112
      %v2211 = vpop.permute.xlu0 %2210
      %2212 = vrot.lane.b32.xlu0 %v1129, 112
      %v2213 = vpop.permute.xlu0 %2212
      %2214 = vrot.lane.b32.xlu0 %v1139, 112
      %v2215 = vpop.permute.xlu0 %2214
      %2216 = vrot.lane.b32.xlu0 %v1153, 112
      %v2217 = vpop.permute.xlu0 %2216
      %2218 = vrot.lane.b32.xlu0 %v1163, 112
      %v2219 = vpop.permute.xlu0 %2218
      %2220 = vrot.lane.b32.xlu0 %v1177, 112
      %v2221 = vpop.permute.xlu0 %2220
      %2222 = vrot.lane.b32.xlu0 %v1187, 112
      %v2223 = vpop.permute.xlu0 %2222
      %2224 = vrot.lane.b32.xlu0 %v1201, 112
      %v2225 = vpop.permute.xlu0 %2224
      %2226 = vrot.lane.b32.xlu0 %v1211, 112
      %v2227 = vpop.permute.xlu0 %2226
      %2228 = vrot.lane.b32.xlu0 %v1735, 112
      %v2229 = vpop.permute.xlu0 %2228
      %2230 = vrot.lane.b32.xlu0 %v1745, 112
      %v2231 = vpop.permute.xlu0 %2230
      %2232 = vrot.lane.b32.xlu0 %v2161, 112
      %v2233 = vpop.permute.xlu0 %2232
      %2234 = vrot.lane.b32.xlu0 %v2171, 112
      %v2235 = vpop.permute.xlu0 %2234
      %vm2268 = vcmask 1044352
      %2269 = vst.msk [vmem:[#allocation2] sm:$0xf] %vm2268, %v2173
      %2270 = vst.msk [vmem:[#allocation2 + $0x8] sm:$0xf] %vm2268, %v2175
      %2271 = vst.msk [vmem:[#allocation2 + $0x10] sm:$0xf] %vm2268, %v2177
      %2272 = vst.msk [vmem:[#allocation2 + $0x18] sm:$0xf] %vm2268, %v2179
      %2273 = vst.msk [vmem:[#allocation2 + $0x20] sm:$0xf] %vm2268, %v2181
      %2274 = vst.msk [vmem:[#allocation2 + $0x28] sm:$0xf] %vm2268, %v2183
      %2275 = vst.msk [vmem:[#allocation2 + $0x30] sm:$0xf] %vm2268, %v2185
      %2276 = vst.msk [vmem:[#allocation2 + $0x38] sm:$0xf] %vm2268, %v2187
      %2277 = vst.msk [vmem:[#allocation2 + $0x40] sm:$0xf] %vm2268, %v2189
      %2278 = vst.msk [vmem:[#allocation2 + $0x48] sm:$0xf] %vm2268, %v2191
      %2279 = vst.msk [vmem:[#allocation2 + $0x50] sm:$0xf] %vm2268, %v2193
      %2280 = vst.msk [vmem:[#allocation2 + $0x58] sm:$0xf] %vm2268, %v2195
      %2281 = vst.msk [vmem:[#allocation2 + $0x60] sm:$0xf] %vm2268, %v2197
      %2282 = vst.msk [vmem:[#allocation2 + $0x68] sm:$0xf] %vm2268, %v2199
      %2283 = vst.msk [vmem:[#allocation2 + $0x70] sm:$0xf] %vm2268, %v2201
      %2284 = vst.msk [vmem:[#allocation2 + $0x78] sm:$0xf] %vm2268, %v2203
      %2285 = vst.msk [vmem:[#allocation2 + $0x80] sm:$0xf] %vm2268, %v2205
      %2286 = vst.msk [vmem:[#allocation2 + $0x88] sm:$0xf] %vm2268, %v2207
      %2287 = vst.msk [vmem:[#allocation2 + $0x90] sm:$0xf] %vm2268, %v2209
      %2288 = vst.msk [vmem:[#allocation2 + $0x98] sm:$0xf] %vm2268, %v2211
      %2289 = vst.msk [vmem:[#allocation2 + $0xa0] sm:$0xf] %vm2268, %v2213
      %2290 = vst.msk [vmem:[#allocation2 + $0xa8] sm:$0xf] %vm2268, %v2215
      %2291 = vst.msk [vmem:[#allocation2 + $0xb0] sm:$0xf] %vm2268, %v2217
      %2292 = vst.msk [vmem:[#allocation2 + $0xb8] sm:$0xf] %vm2268, %v2219
      %2293 = vst.msk [vmem:[#allocation2 + $0xc0] sm:$0xf] %vm2268, %v2221
      %2294 = vst.msk [vmem:[#allocation2 + $0xc8] sm:$0xf] %vm2268, %v2223
      %2295 = vst.msk [vmem:[#allocation2 + $0xd0] sm:$0xf] %vm2268, %v2225
      %2296 = vst.msk [vmem:[#allocation2 + $0xd8] sm:$0xf] %vm2268, %v2227
      %2297 = vst.msk [vmem:[#allocation2 + $0xe0] sm:$0xf] %vm2268, %v2229
      %2298 = vst.msk [vmem:[#allocation2 + $0xe8] sm:$0xf] %vm2268, %v2231
      %2299 = vst.msk [vmem:[#allocation2 + $0xf0] sm:$0xf] %vm2268, %v2233
      %2300 = vst.msk [vmem:[#allocation2 + $0xf8] sm:$0xf] %vm2268, %v2235
      %v2301 = vrot.slane %v2014, 5
      %v2302 = vrot.slane %v2301, 4
      %v2303 = vrot.slane %v2015, 5
      %v2304 = vsel %vm1343, %v2302, %v2303
      %v2305 = vrot.slane %v2303, 4
      %v2306 = vrot.slane %v2147, 5
      %v2307 = vsel %vm1343, %v2305, %v2306
      %2340 = vst.msk [vmem:[#allocation2 + $0x4] sm:$0xf] %vm744, %v1361
      %2341 = vst.msk [vmem:[#allocation2 + $0xc] sm:$0xf] %vm744, %v1364
      %2342 = vst.msk [vmem:[#allocation2 + $0x14] sm:$0xf] %vm744, %v1368
      %2343 = vst.msk [vmem:[#allocation2 + $0x1c] sm:$0xf] %vm744, %v1371
      %2344 = vst.msk [vmem:[#allocation2 + $0x24] sm:$0xf] %vm744, %v1375
      %2345 = vst.msk [vmem:[#allocation2 + $0x2c] sm:$0xf] %vm744, %v1378
      %2346 = vst.msk [vmem:[#allocation2 + $0x34] sm:$0xf] %vm744, %v1382
      %2347 = vst.msk [vmem:[#allocation2 + $0x3c] sm:$0xf] %vm744, %v1385
      %2348 = vst.msk [vmem:[#allocation2 + $0x44] sm:$0xf] %vm744, %v1389
      %2349 = vst.msk [vmem:[#allocation2 + $0x4c] sm:$0xf] %vm744, %v1392
      %2350 = vst.msk [vmem:[#allocation2 + $0x54] sm:$0xf] %vm744, %v1396
      %2351 = vst.msk [vmem:[#allocation2 + $0x5c] sm:$0xf] %vm744, %v1399
      %2352 = vst.msk [vmem:[#allocation2 + $0x64] sm:$0xf] %vm744, %v1403
      %2353 = vst.msk [vmem:[#allocation2 + $0x6c] sm:$0xf] %vm744, %v1406
      %2354 = vst.msk [vmem:[#allocation2 + $0x74] sm:$0xf] %vm744, %v1410
      %2355 = vst.msk [vmem:[#allocation2 + $0x7c] sm:$0xf] %vm744, %v1413
      %2356 = vst.msk [vmem:[#allocation2 + $0x84] sm:$0xf] %vm744, %v1417
      %2357 = vst.msk [vmem:[#allocation2 + $0x8c] sm:$0xf] %vm744, %v1420
      %2358 = vst.msk [vmem:[#allocation2 + $0x94] sm:$0xf] %vm744, %v1424
      %2359 = vst.msk [vmem:[#allocation2 + $0x9c] sm:$0xf] %vm744, %v1427
      %2360 = vst.msk [vmem:[#allocation2 + $0xa4] sm:$0xf] %vm744, %v1431
      %2361 = vst.msk [vmem:[#allocation2 + $0xac] sm:$0xf] %vm744, %v1434
      %2362 = vst.msk [vmem:[#allocation2 + $0xb4] sm:$0xf] %vm744, %v1438
      %2363 = vst.msk [vmem:[#allocation2 + $0xbc] sm:$0xf] %vm744, %v1441
      %2364 = vst.msk [vmem:[#allocation2 + $0xc4] sm:$0xf] %vm744, %v1445
      %2365 = vst.msk [vmem:[#allocation2 + $0xcc] sm:$0xf] %vm744, %v1448
      %2366 = vst.msk [vmem:[#allocation2 + $0xd4] sm:$0xf] %vm744, %v1452
      %2367 = vst.msk [vmem:[#allocation2 + $0xdc] sm:$0xf] %vm744, %v1455
      %2368 = vst.msk [vmem:[#allocation2 + $0xe4] sm:$0xf] %vm744, %v1878
      %2369 = vst.msk [vmem:[#allocation2 + $0xec] sm:$0xf] %vm744, %v1881
      %2370 = vst.msk [vmem:[#allocation2 + $0xf4] sm:$0xf] %vm744, %v2304
      %2371 = vst.msk [vmem:[#allocation2 + $0xfc] sm:$0xf] %vm744, %v2307
      %v2372 = vld [vmem:[#allocation2] sm:$0xff]
      %v2373 = vld [vmem:[#allocation2 + $0x8] sm:$0xff]
      %v2374 = vld [vmem:[#allocation2 + $0x10] sm:$0xff]
      %v2375 = vld [vmem:[#allocation2 + $0x18] sm:$0xff]
      %v2376 = vld [vmem:[#allocation2 + $0x20] sm:$0xff]
      %v2377 = vld [vmem:[#allocation2 + $0x28] sm:$0xff]
      %v2378 = vld [vmem:[#allocation2 + $0x30] sm:$0xff]
      %v2379 = vld [vmem:[#allocation2 + $0x38] sm:$0xff]
      %v2380 = vld [vmem:[#allocation2 + $0x40] sm:$0xff]
      %v2381 = vld [vmem:[#allocation2 + $0x48] sm:$0xff]
      %v2382 = vld [vmem:[#allocation2 + $0x50] sm:$0xff]
      %v2383 = vld [vmem:[#allocation2 + $0x58] sm:$0xff]
      %v2384 = vld [vmem:[#allocation2 + $0x60] sm:$0xff]
      %v2385 = vld [vmem:[#allocation2 + $0x68] sm:$0xff]
      %v2386 = vld [vmem:[#allocation2 + $0x70] sm:$0xff]
      %v2387 = vld [vmem:[#allocation2 + $0x78] sm:$0xff]
      %v2388 = vld [vmem:[#allocation2 + $0x80] sm:$0xff]
      %v2389 = vld [vmem:[#allocation2 + $0x88] sm:$0xff]
      %v2390 = vld [vmem:[#allocation2 + $0x90] sm:$0xff]
      %v2391 = vld [vmem:[#allocation2 + $0x98] sm:$0xff]
      %v2392 = vld [vmem:[#allocation2 + $0xa0] sm:$0xff]
      %v2393 = vld [vmem:[#allocation2 + $0xa8] sm:$0xff]
      %v2394 = vld [vmem:[#allocation2 + $0xb0] sm:$0xff]
      %v2395 = vld [vmem:[#allocation2 + $0xb8] sm:$0xff]
      %v2396 = vld [vmem:[#allocation2 + $0xc0] sm:$0xff]
      %v2397 = vld [vmem:[#allocation2 + $0xc8] sm:$0xff]
      %v2398 = vld [vmem:[#allocation2 + $0xd0] sm:$0xff]
      %v2399 = vld [vmem:[#allocation2 + $0xd8] sm:$0xff]
      %v2400 = vld [vmem:[#allocation2 + $0xe0] sm:$0xff]
      %v2401 = vld [vmem:[#allocation2 + $0xe8] sm:$0xff]
      %v2402 = vld [vmem:[#allocation2 + $0xf0] sm:$0xff]
      %v2403 = vld [vmem:[#allocation2 + $0xf8] sm:$0xff]
      %v2404 = vld [vmem:[%s1] sm:$0xf]
      %v2405 = vld [vmem:[%s1 + $0x4] sm:$0xf]
      %v2406 = vld [vmem:[%s1 + $0x8] sm:$0xf]
      %v2407 = vld [vmem:[%s1 + $0xc] sm:$0xf]
      %v2408 = vld [vmem:[%s1 + $0x10] sm:$0xf]
      %v2409 = vld [vmem:[%s1 + $0x14] sm:$0xf]
      %v2410 = vld [vmem:[%s1 + $0x18] sm:$0xf]
      %v2411 = vld [vmem:[%s1 + $0x1c] sm:$0xf]
      %v2412 = vld [vmem:[%s1 + $0x20] sm:$0xf]
      %v2413 = vld [vmem:[%s1 + $0x24] sm:$0xf]
      %v2414 = vld [vmem:[%s1 + $0x28] sm:$0xf]
      %v2415 = vld [vmem:[%s1 + $0x2c] sm:$0xf]
      %v2416 = vld [vmem:[%s1 + $0x30] sm:$0xf]
      %v2417 = vld [vmem:[%s1 + $0x34] sm:$0xf]
      %v2418 = vld [vmem:[%s1 + $0x38] sm:$0xf]
      %v2419 = vld [vmem:[%s1 + $0x3c] sm:$0xf]
      %v2420 = vld [vmem:[%s1 + $0x40] sm:$0xf]
      %v2421 = vld [vmem:[%s1 + $0x44] sm:$0xf]
      %v2454 = vunpack.c.l.b16 %v2372
      %v2455 = vunpack.c.h.b16 %v2372
      %v2456 = vunpack.c.l.b16 %v2373
      %v2457 = vunpack.c.h.b16 %v2373
      %v2458 = vunpack.c.l.b16 %v2374
      %v2459 = vunpack.c.h.b16 %v2374
      %v2460 = vunpack.c.l.b16 %v2375
      %v2461 = vunpack.c.h.b16 %v2375
      %v2462 = vunpack.c.l.b16 %v2376
      %v2463 = vunpack.c.h.b16 %v2376
      %v2464 = vunpack.c.l.b16 %v2377
      %v2465 = vunpack.c.h.b16 %v2377
      %v2466 = vunpack.c.l.b16 %v2378
      %v2467 = vunpack.c.h.b16 %v2378
      %v2468 = vunpack.c.l.b16 %v2379
      %v2469 = vunpack.c.h.b16 %v2379
      %v2470 = vunpack.c.l.b16 %v2380
      %v2471 = vunpack.c.h.b16 %v2380
      %v2472 = vunpack.c.l.b16 %v2381
      %v2473 = vunpack.c.h.b16 %v2381
      %v2474 = vunpack.c.l.b16 %v2382
      %v2475 = vunpack.c.h.b16 %v2382
      %v2476 = vunpack.c.l.b16 %v2383
      %v2477 = vunpack.c.h.b16 %v2383
      %v2478 = vunpack.c.l.b16 %v2384
      %v2479 = vunpack.c.h.b16 %v2384
      %v2480 = vunpack.c.l.b16 %v2385
      %v2481 = vunpack.c.h.b16 %v2385
      %v2482 = vunpack.c.l.b16 %v2386
      %v2483 = vunpack.c.h.b16 %v2386
      %v2484 = vunpack.c.l.b16 %v2387
      %v2485 = vunpack.c.h.b16 %v2387
      %v2486 = vunpack.c.l.b16 %v2388
      %v2487 = vunpack.c.h.b16 %v2388
      %v2488 = vunpack.c.l.b16 %v2389
      %v2489 = vunpack.c.h.b16 %v2389
      %v2490 = vunpack.c.l.b16 %v2390
      %v2491 = vunpack.c.h.b16 %v2390
      %v2492 = vunpack.c.l.b16 %v2391
      %v2493 = vunpack.c.h.b16 %v2391
      %v2494 = vunpack.c.l.b16 %v2392
      %v2495 = vunpack.c.h.b16 %v2392
      %v2496 = vunpack.c.l.b16 %v2393
      %v2497 = vunpack.c.h.b16 %v2393
      %v2498 = vunpack.c.l.b16 %v2394
      %v2499 = vunpack.c.h.b16 %v2394
      %v2500 = vunpack.c.l.b16 %v2395
      %v2501 = vunpack.c.h.b16 %v2395
      %v2502 = vunpack.c.l.b16 %v2396
      %v2503 = vunpack.c.h.b16 %v2396
      %v2504 = vunpack.c.l.b16 %v2397
      %v2505 = vunpack.c.h.b16 %v2397
      %v2506 = vunpack.c.l.b16 %v2398
      %v2507 = vunpack.c.h.b16 %v2398
      %v2508 = vunpack.c.l.b16 %v2399
      %v2509 = vunpack.c.h.b16 %v2399
      %v2510 = vunpack.c.l.b16 %v2400
      %v2511 = vunpack.c.h.b16 %v2400
      %v2512 = vunpack.c.l.b16 %v2401
      %v2513 = vunpack.c.h.b16 %v2401
      %v2514 = vunpack.c.l.b16 %v2402
      %v2515 = vunpack.c.h.b16 %v2402
      %v2516 = vunpack.c.l.b16 %v2403
      %v2517 = vunpack.c.h.b16 %v2403
      %v2518 = vpack.c.b16 %v2456, %v2454
      %v2519 = vpack.c.b16 %v2457, %v2455
      %v2520 = vpack.c.b16 %v2460, %v2458
      %v2521 = vpack.c.b16 %v2461, %v2459
      %v2522 = vpack.c.b16 %v2464, %v2462
      %v2523 = vpack.c.b16 %v2465, %v2463
      %v2524 = vpack.c.b16 %v2468, %v2466
      %v2525 = vpack.c.b16 %v2469, %v2467
      %v2526 = vpack.c.b16 %v2472, %v2470
      %v2527 = vpack.c.b16 %v2473, %v2471
      %v2528 = vpack.c.b16 %v2476, %v2474
      %v2529 = vpack.c.b16 %v2477, %v2475
      %v2530 = vpack.c.b16 %v2480, %v2478
      %v2531 = vpack.c.b16 %v2481, %v2479
      %v2532 = vpack.c.b16 %v2484, %v2482
      %v2533 = vpack.c.b16 %v2485, %v2483
      %v2534 = vpack.c.b16 %v2488, %v2486
      %v2535 = vpack.c.b16 %v2489, %v2487
      %v2536 = vpack.c.b16 %v2492, %v2490
      %v2537 = vpack.c.b16 %v2493, %v2491
      %v2538 = vpack.c.b16 %v2496, %v2494
      %v2539 = vpack.c.b16 %v2497, %v2495
      %v2540 = vpack.c.b16 %v2500, %v2498
      %v2541 = vpack.c.b16 %v2501, %v2499
      %v2542 = vpack.c.b16 %v2504, %v2502
      %v2543 = vpack.c.b16 %v2505, %v2503
      %v2544 = vpack.c.b16 %v2508, %v2506
      %v2545 = vpack.c.b16 %v2509, %v2507
      %v2546 = vpack.c.b16 %v2512, %v2510
      %v2547 = vpack.c.b16 %v2513, %v2511
      %v2548 = vpack.c.b16 %v2516, %v2514
      %v2549 = vpack.c.b16 %v2517, %v2515
      %v2584 = vunpack.c.l.b16 %v2404
      %v2585 = vunpack.c.l.b16 %v2405
      %v2586 = vunpack.c.l.b16 %v2406
      %v2587 = vunpack.c.l.b16 %v2407
      %v2588 = vunpack.c.l.b16 %v2408
      %v2589 = vunpack.c.l.b16 %v2409
      %v2590 = vunpack.c.l.b16 %v2410
      %v2591 = vunpack.c.l.b16 %v2411
      %v2592 = vunpack.c.l.b16 %v2412
      %v2593 = vunpack.c.l.b16 %v2413
      %v2594 = vunpack.c.l.b16 %v2414
      %v2595 = vunpack.c.l.b16 %v2415
      %v2596 = vunpack.c.l.b16 %v2416
      %v2597 = vunpack.c.l.b16 %v2417
      %v2598 = vunpack.c.l.b16 %v2418
      %v2599 = vunpack.c.l.b16 %v2419
      %v2600 = vunpack.c.l.b16 %v2420
      %v2601 = vunpack.c.l.b16 %v2421
      %v2602 = vpack.c.b16 %v2585, %v2584
      %v2603 = vpack.c.b16 %v2587, %v2586
      %v2604 = vpack.c.b16 %v2589, %v2588
      %v2605 = vpack.c.b16 %v2591, %v2590
      %v2606 = vpack.c.b16 %v2593, %v2592
      %v2607 = vpack.c.b16 %v2595, %v2594
      %v2608 = vpack.c.b16 %v2597, %v2596
      %v2609 = vpack.c.b16 %v2599, %v2598
      %v2610 = vpack.c.b16 %v2601, %v2600
      %vm2620 = vcmask 130048
      %v2622 = vsel %vm2620, %v2519, 0
      %v2625 = vsel %vm2620, %v2521, 0
      %v2628 = vsel %vm2620, %v2523, 0
      %v2631 = vsel %vm2620, %v2525, 0
      %v2634 = vsel %vm2620, %v2527, 0
      %v2637 = vsel %vm2620, %v2529, 0
      %v2640 = vsel %vm2620, %v2531, 0
      %v2643 = vsel %vm2620, %v2533, 0
      %v2646 = vsel %vm2620, %v2535, 0
      %v2649 = vsel %vm2620, %v2537, 0
      %v2652 = vsel %vm2620, %v2539, 0
      %v2655 = vsel %vm2620, %v2541, 0
      %v2658 = vsel %vm2620, %v2543, 0
      %v2661 = vsel %vm2620, %v2545, 0
      %v2664 = vsel %vm2620, %v2547, 0
      %v2667 = vsel %vm2620, %v2549, 0
      %2669 = vmatprep.subr.bf16.mxu0 0
      %2670 = vmatpush1.bf16.msra.mxu0 %v2609
      %2671 = vmatprep.subr.bf16.mxu0 0
      %2672 = vmatpush1.bf16.msra.mxu0 %v2608
      %2673 = vmatprep.subr.bf16.mxu0 0
      %2674 = vmatpush1.bf16.msra.mxu0 %v2607
      %2675 = vmatprep.subr.bf16.mxu0 0
      %2676 = vmatpush1.bf16.msra.mxu0 %v2606
      %2677 = vmatprep.subr.bf16.mxu0 0
      %2678 = vmatpush1.bf16.msra.mxu0 %v2605
      %2679 = vmatprep.subr.bf16.mxu0 0
      %2680 = vmatpush1.bf16.msra.mxu0 %v2604
      %2681 = vmatprep.subr.bf16.mxu0 0
      %2682 = vmatpush1.bf16.msra.mxu0 %v2603
      %2683 = vmatprep.subr.bf16.mxu0 0
      %2684 = vmatpush1.bf16.msra.mxu0 %v2602
      %2685 = vmatprep.subr.bf16.mxu0 0
      %2686 = vmatpush2.bf16.msra.mxu0 0
      %2687 = vmatprep.subr.bf16.mxu0 0
      %2688 = vmatpush2.bf16.msra.mxu0 0
      %2689 = vmatprep.subr.bf16.mxu0 0
      %2690 = vmatpush2.bf16.msra.mxu0 0
      %2691 = vmatprep.subr.bf16.mxu0 0
      %2692 = vmatpush2.bf16.msra.mxu0 0
      %2693 = vmatprep.subr.bf16.mxu0 0
      %2694 = vmatpush2.bf16.msra.mxu0 0
      %2695 = vmatprep.subr.bf16.mxu0 0
      %2696 = vmatpush2.bf16.msra.mxu0 0
      %2697 = vmatprep.subr.bf16.mxu0 0
      %2698 = vmatpush2.bf16.msra.mxu0 0
      %2699 = vmatprep.subr.bf16.mxu0 0
      %2700 = vmatpush2.bf16.msra.mxu0 %v2610
      %2701 = vmatprep.mubr.bf16.mxu0 %v2622
      %2702 = vmatmul.mubr.bf16.gmra.mxu0 %v2518
      %v2703 = vpop.f32.mrf.mxu0
      %v2704 = vadd.f32 0.0, %v2703
      %v2705 = vpop.f32.mrf.mxu0
      %v2706 = vpop.f32.mrf.mxu0
      %v2707 = vadd.f32 0.0, %v2706
      %v2708 = vpop.f32.mrf.mxu0
      %2709 = vmatprep.mubr.bf16.mxu0 %v2625
      %2710 = vmatmul.mubr.bf16.gmra.mxu0 %v2520
      %v2711 = vpop.f32.mrf.mxu0
      %v2712 = vadd.f32 0.0, %v2711
      %v2713 = vpop.f32.mrf.mxu0
      %v2714 = vpop.f32.mrf.mxu0
      %v2715 = vadd.f32 0.0, %v2714
      %v2716 = vpop.f32.mrf.mxu0
      %2717 = vmatprep.mubr.bf16.mxu0 %v2628
      %2718 = vmatmul.mubr.bf16.gmra.mxu0 %v2522
      %v2719 = vpop.f32.mrf.mxu0
      %v2720 = vadd.f32 0.0, %v2719
      %v2721 = vpop.f32.mrf.mxu0
      %v2722 = vpop.f32.mrf.mxu0
      %v2723 = vadd.f32 0.0, %v2722
      %v2724 = vpop.f32.mrf.mxu0
      %2725 = vmatprep.mubr.bf16.mxu0 %v2631
      %2726 = vmatmul.mubr.bf16.gmra.mxu0 %v2524
      %v2727 = vpop.f32.mrf.mxu0
      %v2728 = vadd.f32 0.0, %v2727
      %v2729 = vpop.f32.mrf.mxu0
      %v2730 = vpop.f32.mrf.mxu0
      %v2731 = vadd.f32 0.0, %v2730
      %v2732 = vpop.f32.mrf.mxu0
      %2733 = vmatprep.mubr.bf16.mxu0 %v2634
      %2734 = vmatmul.mubr.bf16.gmra.mxu0 %v2526
      %v2735 = vpop.f32.mrf.mxu0
      %v2736 = vadd.f32 0.0, %v2735
      %v2737 = vpop.f32.mrf.mxu0
      %v2738 = vpop.f32.mrf.mxu0
      %v2739 = vadd.f32 0.0, %v2738
      %v2740 = vpop.f32.mrf.mxu0
      %2741 = vmatprep.mubr.bf16.mxu0 %v2637
      %2742 = vmatmul.mubr.bf16.gmra.mxu0 %v2528
      %v2743 = vpop.f32.mrf.mxu0
      %v2744 = vadd.f32 0.0, %v2743
      %v2745 = vpop.f32.mrf.mxu0
      %v2746 = vpop.f32.mrf.mxu0
      %v2747 = vadd.f32 0.0, %v2746
      %v2748 = vpop.f32.mrf.mxu0
      %2749 = vmatprep.mubr.bf16.mxu0 %v2640
      %2750 = vmatmul.mubr.bf16.gmra.mxu0 %v2530
      %v2751 = vpop.f32.mrf.mxu0
      %v2752 = vadd.f32 0.0, %v2751
      %v2753 = vpop.f32.mrf.mxu0
      %v2754 = vpop.f32.mrf.mxu0
      %v2755 = vadd.f32 0.0, %v2754
      %v2756 = vpop.f32.mrf.mxu0
      %2757 = vmatprep.mubr.bf16.mxu0 %v2643
      %2758 = vmatmul.mubr.bf16.gmra.mxu0 %v2532
      %v2759 = vpop.f32.mrf.mxu0
      %v2760 = vadd.f32 0.0, %v2759
      %v2761 = vpop.f32.mrf.mxu0
      %v2762 = vpop.f32.mrf.mxu0
      %v2763 = vadd.f32 0.0, %v2762
      %v2764 = vpop.f32.mrf.mxu0
      %2765 = vmatprep.mubr.bf16.mxu0 %v2646
      %2766 = vmatmul.mubr.bf16.gmra.mxu0 %v2534
      %v2767 = vpop.f32.mrf.mxu0
      %v2768 = vadd.f32 0.0, %v2767
      %v2769 = vpop.f32.mrf.mxu0
      %v2770 = vpop.f32.mrf.mxu0
      %v2771 = vadd.f32 0.0, %v2770
      %v2772 = vpop.f32.mrf.mxu0
      %2773 = vmatprep.mubr.bf16.mxu0 %v2649
      %2774 = vmatmul.mubr.bf16.gmra.mxu0 %v2536
      %v2775 = vpop.f32.mrf.mxu0
      %v2776 = vadd.f32 0.0, %v2775
      %v2777 = vpop.f32.mrf.mxu0
      %v2778 = vpop.f32.mrf.mxu0
      %v2779 = vadd.f32 0.0, %v2778
      %v2780 = vpop.f32.mrf.mxu0
      %2781 = vmatprep.mubr.bf16.mxu0 %v2652
      %2782 = vmatmul.mubr.bf16.gmra.mxu0 %v2538
      %v2783 = vpop.f32.mrf.mxu0
      %v2784 = vadd.f32 0.0, %v2783
      %v2785 = vpop.f32.mrf.mxu0
      %v2786 = vpop.f32.mrf.mxu0
      %v2787 = vadd.f32 0.0, %v2786
      %v2788 = vpop.f32.mrf.mxu0
      %2789 = vmatprep.mubr.bf16.mxu0 %v2655
      %2790 = vmatmul.mubr.bf16.gmra.mxu0 %v2540
      %v2791 = vpop.f32.mrf.mxu0
      %v2792 = vadd.f32 0.0, %v2791
      %v2793 = vpop.f32.mrf.mxu0
      %v2794 = vpop.f32.mrf.mxu0
      %v2795 = vadd.f32 0.0, %v2794
      %v2796 = vpop.f32.mrf.mxu0
      %2797 = vmatprep.mubr.bf16.mxu0 %v2658
      %2798 = vmatmul.mubr.bf16.gmra.mxu0 %v2542
      %v2799 = vpop.f32.mrf.mxu0
      %v2800 = vadd.f32 0.0, %v2799
      %v2801 = vpop.f32.mrf.mxu0
      %v2802 = vpop.f32.mrf.mxu0
      %v2803 = vadd.f32 0.0, %v2802
      %v2804 = vpop.f32.mrf.mxu0
      %2805 = vmatprep.mubr.bf16.mxu0 %v2661
      %2806 = vmatmul.mubr.bf16.gmra.mxu0 %v2544
      %v2807 = vpop.f32.mrf.mxu0
      %v2808 = vadd.f32 0.0, %v2807
      %v2809 = vpop.f32.mrf.mxu0
      %v2810 = vpop.f32.mrf.mxu0
      %v2811 = vadd.f32 0.0, %v2810
      %v2812 = vpop.f32.mrf.mxu0
      %2813 = vmatprep.mubr.bf16.mxu0 %v2664
      %2814 = vmatmul.mubr.bf16.gmra.mxu0 %v2546
      %v2815 = vpop.f32.mrf.mxu0
      %v2816 = vadd.f32 0.0, %v2815
      %v2817 = vpop.f32.mrf.mxu0
      %v2818 = vpop.f32.mrf.mxu0
      %v2819 = vadd.f32 0.0, %v2818
      %v2820 = vpop.f32.mrf.mxu0
      %2821 = vmatprep.mubr.bf16.mxu0 %v2667
      %2822 = vmatmul.mubr.bf16.gmra.mxu0 %v2548
      %v2823 = vpop.f32.mrf.mxu0
      %v2824 = vadd.f32 0.0, %v2823
      %v2825 = vpop.f32.mrf.mxu0
      %v2826 = vpop.f32.mrf.mxu0
      %v2827 = vadd.f32 0.0, %v2826
      %v2828 = vpop.f32.mrf.mxu0
      %2829 = vdwg.mxu0
      %v2830 = vpack.c.bf16 %v2707, %v2704
      %v2831 = vpack.c.bf16 %v2715, %v2712
      %v2832 = vpack.c.bf16 %v2723, %v2720
      %v2833 = vpack.c.bf16 %v2731, %v2728
      %v2834 = vpack.c.bf16 %v2739, %v2736
      %v2835 = vpack.c.bf16 %v2747, %v2744
      %v2836 = vpack.c.bf16 %v2755, %v2752
      %v2837 = vpack.c.bf16 %v2763, %v2760
      %v2838 = vpack.c.bf16 %v2771, %v2768
      %v2839 = vpack.c.bf16 %v2779, %v2776
      %v2840 = vpack.c.bf16 %v2787, %v2784
      %v2841 = vpack.c.bf16 %v2795, %v2792
      %v2842 = vpack.c.bf16 %v2803, %v2800
      %v2843 = vpack.c.bf16 %v2811, %v2808
      %v2844 = vpack.c.bf16 %v2819, %v2816
      %v2845 = vpack.c.bf16 %v2827, %v2824
      %v2862 = vunpack.c.l.b16 %v2830
      %v2863 = vunpack.c.h.b16 %v2830
      %v2864 = vunpack.c.l.b16 %v2831
      %v2865 = vunpack.c.h.b16 %v2831
      %v2866 = vunpack.c.l.b16 %v2832
      %v2867 = vunpack.c.h.b16 %v2832
      %v2868 = vunpack.c.l.b16 %v2833
      %v2869 = vunpack.c.h.b16 %v2833
      %v2870 = vunpack.c.l.b16 %v2834
      %v2871 = vunpack.c.h.b16 %v2834
      %v2872 = vunpack.c.l.b16 %v2835
      %v2873 = vunpack.c.h.b16 %v2835
      %v2874 = vunpack.c.l.b16 %v2836
      %v2875 = vunpack.c.h.b16 %v2836
      %v2876 = vunpack.c.l.b16 %v2837
      %v2877 = vunpack.c.h.b16 %v2837
      %v2878 = vunpack.c.l.b16 %v2838
      %v2879 = vunpack.c.h.b16 %v2838
      %v2880 = vunpack.c.l.b16 %v2839
      %v2881 = vunpack.c.h.b16 %v2839
      %v2882 = vunpack.c.l.b16 %v2840
      %v2883 = vunpack.c.h.b16 %v2840
      %v2884 = vunpack.c.l.b16 %v2841
      %v2885 = vunpack.c.h.b16 %v2841
      %v2886 = vunpack.c.l.b16 %v2842
      %v2887 = vunpack.c.h.b16 %v2842
      %v2888 = vunpack.c.l.b16 %v2843
      %v2889 = vunpack.c.h.b16 %v2843
      %v2890 = vunpack.c.l.b16 %v2844
      %v2891 = vunpack.c.h.b16 %v2844
      %v2892 = vunpack.c.l.b16 %v2845
      %v2893 = vunpack.c.h.b16 %v2845
      %v2894 = vpack.c.b16 %v2862, %v2862
      %v2895 = vpack.c.b16 %v2863, %v2863
      %v2896 = vpack.c.b16 %v2864, %v2864
      %v2897 = vpack.c.b16 %v2865, %v2865
      %v2898 = vpack.c.b16 %v2866, %v2866
      %v2899 = vpack.c.b16 %v2867, %v2867
      %v2900 = vpack.c.b16 %v2868, %v2868
      %v2901 = vpack.c.b16 %v2869, %v2869
      %v2902 = vpack.c.b16 %v2870, %v2870
      %v2903 = vpack.c.b16 %v2871, %v2871
      %v2904 = vpack.c.b16 %v2872, %v2872
      %v2905 = vpack.c.b16 %v2873, %v2873
      %v2906 = vpack.c.b16 %v2874, %v2874
      %v2907 = vpack.c.b16 %v2875, %v2875
      %v2908 = vpack.c.b16 %v2876, %v2876
      %v2909 = vpack.c.b16 %v2877, %v2877
      %v2910 = vpack.c.b16 %v2878, %v2878
      %v2911 = vpack.c.b16 %v2879, %v2879
      %v2912 = vpack.c.b16 %v2880, %v2880
      %v2913 = vpack.c.b16 %v2881, %v2881
      %v2914 = vpack.c.b16 %v2882, %v2882
      %v2915 = vpack.c.b16 %v2883, %v2883
      %v2916 = vpack.c.b16 %v2884, %v2884
      %v2917 = vpack.c.b16 %v2885, %v2885
      %v2918 = vpack.c.b16 %v2886, %v2886
      %v2919 = vpack.c.b16 %v2887, %v2887
      %v2920 = vpack.c.b16 %v2888, %v2888
      %v2921 = vpack.c.b16 %v2889, %v2889
      %v2922 = vpack.c.b16 %v2890, %v2890
      %v2923 = vpack.c.b16 %v2891, %v2891
      %v2924 = vpack.c.b16 %v2892, %v2892
      %v2925 = vpack.c.b16 %v2893, %v2893
      %2958 = vst.msk [vmem:[%s298] sm:$0xf] %vm744, %v2894
      %2959 = vst.msk [vmem:[%s298 + $0x4] sm:$0xf] %vm744, %v2895
      %2960 = vst.msk [vmem:[%s298 + $0x8] sm:$0xf] %vm744, %v2896
      %2961 = vst.msk [vmem:[%s298 + $0xc] sm:$0xf] %vm744, %v2897
      %2962 = vst.msk [vmem:[%s298 + $0x10] sm:$0xf] %vm744, %v2898
      %2963 = vst.msk [vmem:[%s298 + $0x14] sm:$0xf] %vm744, %v2899
      %2964 = vst.msk [vmem:[%s298 + $0x18] sm:$0xf] %vm744, %v2900
      %2965 = vst.msk [vmem:[%s298 + $0x1c] sm:$0xf] %vm744, %v2901
      %2966 = vst.msk [vmem:[%s298 + $0x20] sm:$0xf] %vm744, %v2902
      %2967 = vst.msk [vmem:[%s298 + $0x24] sm:$0xf] %vm744, %v2903
      %2968 = vst.msk [vmem:[%s298 + $0x28] sm:$0xf] %vm744, %v2904
      %2969 = vst.msk [vmem:[%s298 + $0x2c] sm:$0xf] %vm744, %v2905
      %2970 = vst.msk [vmem:[%s298 + $0x30] sm:$0xf] %vm744, %v2906
      %2971 = vst.msk [vmem:[%s298 + $0x34] sm:$0xf] %vm744, %v2907
      %2972 = vst.msk [vmem:[%s298 + $0x38] sm:$0xf] %vm744, %v2908
      %2973 = vst.msk [vmem:[%s298 + $0x3c] sm:$0xf] %vm744, %v2909
      %2974 = vst.msk [vmem:[%s298 + $0x40] sm:$0xf] %vm744, %v2910
      %2975 = vst.msk [vmem:[%s298 + $0x44] sm:$0xf] %vm744, %v2911
      %2976 = vst.msk [vmem:[%s298 + $0x48] sm:$0xf] %vm744, %v2912
      %2977 = vst.msk [vmem:[%s298 + $0x4c] sm:$0xf] %vm744, %v2913
      %2978 = vst.msk [vmem:[%s298 + $0x50] sm:$0xf] %vm744, %v2914
      %2979 = vst.msk [vmem:[%s298 + $0x54] sm:$0xf] %vm744, %v2915
      %2980 = vst.msk [vmem:[%s298 + $0x58] sm:$0xf] %vm744, %v2916
      %2981 = vst.msk [vmem:[%s298 + $0x5c] sm:$0xf] %vm744, %v2917
      %2982 = vst.msk [vmem:[%s298 + $0x60] sm:$0xf] %vm744, %v2918
      %2983 = vst.msk [vmem:[%s298 + $0x64] sm:$0xf] %vm744, %v2919
      %2984 = vst.msk [vmem:[%s298 + $0x68] sm:$0xf] %vm744, %v2920
      %2985 = vst.msk [vmem:[%s298 + $0x6c] sm:$0xf] %vm744, %v2921
      %2986 = vst.msk [vmem:[%s298 + $0x70] sm:$0xf] %vm744, %v2922
      %2987 = vst.msk [vmem:[%s298 + $0x74] sm:$0xf] %vm744, %v2923
      %2988 = vst.msk [vmem:[%s298 + $0x78] sm:$0xf] %vm744, %v2924
      %2989 = vst.msk [vmem:[%s298 + $0x7c] sm:$0xf] %vm744, %v2925
      %v2990 = vadd.f32 %v2704, %v2707
      %v2991 = vadd.f32 %v2990, %v2712
      %v2992 = vadd.f32 %v2991, %v2715
      %v2993 = vadd.f32 %v2992, %v2720
      %v2994 = vadd.f32 %v2993, %v2723
      %v2995 = vadd.f32 %v2994, %v2728
      %v2996 = vadd.f32 %v2995, %v2731
      %v2997 = vadd.f32 %v2996, %v2736
      %v2998 = vadd.f32 %v2997, %v2739
      %v2999 = vadd.f32 %v2998, %v2744
      %v3000 = vadd.f32 %v2999, %v2747
      %v3001 = vadd.f32 %v3000, %v2752
      %v3002 = vadd.f32 %v3001, %v2755
      %v3003 = vadd.f32 %v3002, %v2760
      %v3004 = vadd.f32 %v3003, %v2763
      %v3005 = vadd.f32 %v3004, %v2768
      %v3006 = vadd.f32 %v3005, %v2771
      %v3007 = vadd.f32 %v3006, %v2776
      %v3008 = vadd.f32 %v3007, %v2779
      %v3009 = vadd.f32 %v3008, %v2784
      %v3010 = vadd.f32 %v3009, %v2787
      %v3011 = vadd.f32 %v3010, %v2792
      %v3012 = vadd.f32 %v3011, %v2795
      %v3013 = vadd.f32 %v3012, %v2800
      %v3014 = vadd.f32 %v3013, %v2803
      %v3015 = vadd.f32 %v3014, %v2808
      %v3016 = vadd.f32 %v3015, %v2811
      %v3017 = vadd.f32 %v3016, %v2816
      %v3018 = vadd.f32 %v3017, %v2819
      %v3019 = vadd.f32 %v3018, %v2824
      %v3020 = vadd.f32 %v3019, %v2827
      %v3021 = vrot.slane %v3020, 4
      %v3022 = vadd.f32 %v3020, %v3021
      %v3023 = vrot.slane %v3022, 2
      %v3024 = vadd.f32 %v3022, %v3023
      %v3025 = vrot.slane %v3024, 1
      %v3026 = vadd.f32 %v3024, %v3025
      %3027 = vst [vmem:[%s304] sm:$0x1] %v3026
      %v3028 = vmul.f32 %v2704, %v2704
      %v3029 = vmul.f32 %v2707, %v2707
      %v3030 = vmul.f32 %v2712, %v2712
      %v3031 = vmul.f32 %v2715, %v2715
      %v3032 = vmul.f32 %v2720, %v2720
      %v3033 = vmul.f32 %v2723, %v2723
      %v3034 = vmul.f32 %v2728, %v2728
      %v3035 = vmul.f32 %v2731, %v2731
      %v3036 = vmul.f32 %v2736, %v2736
      %v3037 = vmul.f32 %v2739, %v2739
      %v3038 = vmul.f32 %v2744, %v2744
      %v3039 = vmul.f32 %v2747, %v2747
      %v3040 = vmul.f32 %v2752, %v2752
      %v3041 = vmul.f32 %v2755, %v2755
      %v3042 = vmul.f32 %v2760, %v2760
      %v3043 = vmul.f32 %v2763, %v2763
      %v3044 = vmul.f32 %v2768, %v2768
      %v3045 = vmul.f32 %v2771, %v2771
      %v3046 = vmul.f32 %v2776, %v2776
      %v3047 = vmul.f32 %v2779, %v2779
      %v3048 = vmul.f32 %v2784, %v2784
      %v3049 = vmul.f32 %v2787, %v2787
      %v3050 = vmul.f32 %v2792, %v2792
      %v3051 = vmul.f32 %v2795, %v2795
      %v3052 = vmul.f32 %v2800, %v2800
      %v3053 = vmul.f32 %v2803, %v2803
      %v3054 = vmul.f32 %v2808, %v2808
      %v3055 = vmul.f32 %v2811, %v2811
      %v3056 = vmul.f32 %v2816, %v2816
      %v3057 = vmul.f32 %v2819, %v2819
      %v3058 = vmul.f32 %v2824, %v2824
      %v3059 = vmul.f32 %v2827, %v2827
      %v3060 = vadd.f32 %v3028, %v3029
      %v3061 = vadd.f32 %v3060, %v3030
      %v3062 = vadd.f32 %v3061, %v3031
      %v3063 = vadd.f32 %v3062, %v3032
      %v3064 = vadd.f32 %v3063, %v3033
      %v3065 = vadd.f32 %v3064, %v3034
      %v3066 = vadd.f32 %v3065, %v3035
      %v3067 = vadd.f32 %v3066, %v3036
      %v3068 = vadd.f32 %v3067, %v3037
      %v3069 = vadd.f32 %v3068, %v3038
      %v3070 = vadd.f32 %v3069, %v3039
      %v3071 = vadd.f32 %v3070, %v3040
      %v3072 = vadd.f32 %v3071, %v3041
      %v3073 = vadd.f32 %v3072, %v3042
      %v3074 = vadd.f32 %v3073, %v3043
      %v3075 = vadd.f32 %v3074, %v3044
      %v3076 = vadd.f32 %v3075, %v3045
      %v3077 = vadd.f32 %v3076, %v3046
      %v3078 = vadd.f32 %v3077, %v3047
      %v3079 = vadd.f32 %v3078, %v3048
      %v3080 = vadd.f32 %v3079, %v3049
      %v3081 = vadd.f32 %v3080, %v3050
      %v3082 = vadd.f32 %v3081, %v3051
      %v3083 = vadd.f32 %v3082, %v3052
      %v3084 = vadd.f32 %v3083, %v3053
      %v3085 = vadd.f32 %v3084, %v3054
      %v3086 = vadd.f32 %v3085, %v3055
      %v3087 = vadd.f32 %v3086, %v3056
      %v3088 = vadd.f32 %v3087, %v3057
      %v3089 = vadd.f32 %v3088, %v3058
      %v3090 = vadd.f32 %v3089, %v3059
      %v3091 = vrot.slane %v3090, 4
      %v3092 = vadd.f32 %v3090, %v3091
      %v3093 = vrot.slane %v3092, 2
      %v3094 = vadd.f32 %v3092, %v3093
      %v3095 = vrot.slane %v3094, 1
      %v3096 = vadd.f32 %v3094, %v3095
      %3097 = vst [vmem:[%s309] sm:$0x1] %v3096
      %s3098 = sadd.s32 %s22, %s23
      %s3099 = smul.u32 32, %s3098
      %p3100 = scmp.lt.s32.totalorder %s3099, 63
      %s3101 = scalar_select %p3100, %s3099, 63
      %s3102 = smul.addr %s3101, 4
      %s3103 = scalar_lea.vmem %s4, %s3102
      %s3104 = sadd.s32 %s22, %s23
      %p3105 = scmp.lt.s32.totalorder %s3104, 1
      %s3106 = scalar_select %p3105, %s3104, 1
      %s3107 = scalar_lea.vmem %s5, %s3106
      %s3108 = sadd.s32 %s22, %s23
      %p3109 = scmp.lt.s32.totalorder %s3108, 1
      %s3110 = scalar_select %p3109, %s3108, 1
      %s3111 = scalar_lea.vmem %s6, %s3110
      // Predicated region
      $region37: #{upsample_block_forward.6} parent=35 // pred_check
        %p3112 = pneg %p141
      $region38: #{upsample_block_forward.6} parent=35 // pred_check_branch
        %3114 = sbr.rel (%p3112) target = $region40
      $region39: #{upsample_block_forward.6} parent=35 // pred_region
        %s3115 = sadd.s32 %s22, %s23
        %s3116 = smul.u32 32, %s3115
      $region40: #{upsample_block_forward.6} parent=35 // pred_fallthru
        _
      // Predicated region
      $region41: #{upsample_block_forward.6} parent=35 // pred_check
        %p3117 = pneg %p169
      $region42: #{upsample_block_forward.6} parent=35 // pred_check_branch
        %3119 = sbr.rel (%p3117) target = $region44
      $region43: #{upsample_block_forward.6} parent=35 // pred_region
        %s3120 = sadd.s32 %s22, %s23
      $region44: #{upsample_block_forward.6} parent=35 // pred_fallthru
        _
      // Predicated region
      $region45: #{upsample_block_forward.6} parent=35 // pred_check
        %p3121 = pneg %p197
      $region46: #{upsample_block_forward.6} parent=35 // pred_check_branch
        %3123 = sbr.rel (%p3121) target = $region48
      $region47: #{upsample_block_forward.6} parent=35 // pred_region
        %s3124 = sadd.s32 %s22, %s23
      $region48: #{upsample_block_forward.6} parent=35 // pred_fallthru
        _
    $region36: #{upsample_block_forward.6} parent=5 // pred_fallthru
      _
    %p3125 = scmp.le.s32.totalorder 2, %s13
    // Predicated region
    $region49: #{upsample_block_forward.6} parent=5 // pred_check
      %p3126 = pneg %p3125
    $region50: #{upsample_block_forward.6} parent=5 // pred_check_branch
      %3128 = sbr.rel (%p3126) target = $region52
    $region51: #{upsample_block_forward.6} parent=5 // pred_region
      %s3129 = ssub.s32 %s13, 2
      // Predicated region
      $region53: #{upsample_block_forward.6} parent=51 // pred_check
        %p3130 = pneg %p147
      $region54: #{upsample_block_forward.6} parent=51 // pred_check_branch
        %3132 = sbr.rel (%p3130) target = $region56
      $region55: #{upsample_block_forward.6} parent=51 // pred_region
        %s3133 = sadd.s32 %s24, %s25
        %s3134 = smul.u32 32, %s3133
        %p3135 = scmp.lt.s32.totalorder %s3134, 63
        %s3136 = scalar_select %p3135, %s3134, 63
        %s3137 = smul.addr %s3136, 4
        %s3138 = scalar_lea.vmem %s4, %s3137
      $region56: #{upsample_block_forward.6} parent=51 // pred_fallthru
        _
      // Predicated region
      $region57: #{upsample_block_forward.6} parent=51 // pred_check
        %p3139 = pneg %p175
      $region58: #{upsample_block_forward.6} parent=51 // pred_check_branch
        %3141 = sbr.rel (%p3139) target = $region60
      $region59: #{upsample_block_forward.6} parent=51 // pred_region
        %s3142 = sadd.s32 %s24, %s25
        %p3143 = scmp.lt.s32.totalorder %s3142, 1
        %s3144 = scalar_select %p3143, %s3142, 1
        %s3145 = scalar_lea.vmem %s5, %s3144
      $region60: #{upsample_block_forward.6} parent=51 // pred_fallthru
        _
      // Predicated region
      $region61: #{upsample_block_forward.6} parent=51 // pred_check
        %p3146 = pneg %p203
      $region62: #{upsample_block_forward.6} parent=51 // pred_check_branch
        %3148 = sbr.rel (%p3146) target = $region64
      $region63: #{upsample_block_forward.6} parent=51 // pred_region
        %s3149 = sadd.s32 %s24, %s25
        %p3150 = scmp.lt.s32.totalorder %s3149, 1
        %s3151 = scalar_select %p3150, %s3149, 1
        %s3152 = scalar_lea.vmem %s6, %s3151
      $region64: #{upsample_block_forward.6} parent=51 // pred_fallthru
        _
    $region52: #{upsample_block_forward.6} parent=5 // pred_fallthru
      _
  $region6: #{upsample_block_forward.6} parent=0 // loop_footer
    %s17 = sadd.s32 1, %s13
  $region7: #{upsample_block_forward.6} parent=0 // loop_footer_branch
    %12 = sbr.rel target = $region3
  $region8: #{upsample_block_forward.6} parent=0 // loop_exit
    _

</llo_original>
